<compile_context>
chip_gen: v7x
topology: tpu7x:2x2x1
jax: 0.10.0
libtpu: 0.0.40
codegen_flags: <defaults>
</compile_context>

<pallas_src>
import sys
import numpy as np
import jax
import jax.numpy as jnp
from jax import lax
from jax.experimental import pallas as pl
from jax.experimental.pallas import tpu as pltpu

# NOTE: the original module adds sys.float_info.epsilon (float64 eps ~2.2e-16)
# to a float32 tensor, which is numerically a no-op; we keep it to match spec.
EPS = sys.float_info.epsilon
HIDDEN = 128          # self.hidden_size
NUM_RNN = 2           # self.num_rnn
NG = 8                # num_gaussians
ENV_EMBED = 32
STATE_EMBED = 16


# ---------------------------------------------------------------------------
# Pallas kernel: whole forward (all timesteps) in one invocation.
# ---------------------------------------------------------------------------
def gru_predictor_kernel(
    # inputs
    states_ref,                 # (T*B, state_size)  time-major flattened
    envs_ref,                   # (B, env_size)
    W_env_ref, b_env_ref,       # env embedder
    Wih0e_ref,                  # env-embed  -> layer0 gates   (32, 3H)
    W_s2g_ref, b_gi0_ref,       # state -> layer0 gates (folded through W_se)
    Whh0_ref, bhh0_ref,         # layer0 recurrent
    Wih1_ref, bih1_ref,         # layer1 input
    Whh1_ref, bhh1_ref,         # layer1 recurrent
    Wm1_ref, bm1_ref,           # MDN hidden layer
    W_head_ref, b_head_ref,     # fused [Wa|Wm|Ws]  (H, 6*NG)
    # outputs
    out_ref,                    # (T*B, 6*NG)  = [a | m | s]
    # scratch
    gi0_scr,                    # VMEM (T*B, 3H) f32
    h1_scr,                     # VMEM (T*B, H)  f32
):
    f32 = jnp.float32
    mxu_dtype = W_env_ref.dtype          # bf16 (or f32 if caller disabled cast)
    H = HIDDEN
    B = envs_ref.shape[0]
    TB = states_ref.shape[0]
    T = TB // B

    # ---- hoisted, non-recurrent precompute (large MXU-efficient matmuls) ----
    henv = jnp.maximum(
        jnp.dot(envs_ref[...], W_env_ref[...], preferred_element_type=f32)
        + b_env_ref[...], 0.0)                                        # (B, 32)
    gi0_base = (jnp.dot(henv.astype(mxu_dtype), Wih0e_ref[...],
                        preferred_element_type=f32)
                + b_gi0_ref[...])                                     # (B, 3H)
    # layer-0 input-gate contribution of ALL timesteps in a single matmul
    gi0_scr[...] = jnp.dot(states_ref[...], W_s2g_ref[...],
                           preferred_element_type=f32)                # (T*B, 3H)

    def gru_cell(gi, gh, h_prev):
        r = jax.nn.sigmoid(gi[:, :H] + gh[:, :H])
        z = jax.nn.sigmoid(gi[:, H:2 * H] + gh[:, H:2 * H])
        n = jnp.tanh(gi[:, 2 * H:] + r * gh[:, 2 * H:])
        return (1.0 - z) * n + z * h_prev

    # ---- serial recurrence: only gh0 / gi1 / gh1 + gate math per step -------
    def step(t, carry):
        h0, h1 = carry                                   # f32 (B, H) each
        row = t * B
        gi0 = gi0_scr[pl.ds(row, B), :] + gi0_base
        gh0 = jnp.dot(h0.astype(mxu_dtype), Whh0_ref[...],
                      preferred_element_type=f32) + bhh0_ref[...]
        h0 = gru_cell(gi0, gh0, h0)

        gi1 = jnp.dot(h0.astype(mxu_dtype), Wih1_ref[...],
                      preferred_element_type=f32) + bih1_ref[...]
        gh1 = jnp.dot(h1.astype(mxu_dtype), Whh1_ref[...],
                      preferred_element_type=f32) + bhh1_ref[...]
        h1 = gru_cell(gi1, gh1, h1)

        h1_scr[pl.ds(row, B), :] = h1
        return (h0, h1)

    h_init = jnp.zeros((B, H), f32)                      # trainable_h0=False
    lax.fori_loop(0, T, step, (h_init, h_init), unroll=True)

    # ---- MDN head, batched over all T*B rows (off the serial path) ----------
    h1_all = h1_scr[...]
    hid = jnp.maximum(
        jnp.dot(h1_all.astype(mxu_dtype), Wm1_ref[...],
                preferred_element_type=f32) + bm1_ref[...], 0.0)
    head = jnp.dot(hid.astype(mxu_dtype), W_head_ref[...],
                   preferred_element_type=f32) + b_head_ref[...]      # (T*B, 48)

    a_logits = head[:, :NG]
    a_exp = jnp.exp(a_logits - jnp.max(a_logits, axis=-1, keepdims=True))
    denom = jnp.sum(a_exp, axis=-1, keepdims=True)
    out_ref[:, :NG] = a_exp * pl.reciprocal(denom, approx=True)       # softmax
    out_ref[:, NG:3 * NG] = head[:, NG:3 * NG]                        # means
    out_ref[:, 3 * NG:] = jax.nn.softplus(head[:, 3 * NG:]) + EPS     # scales


# ---------------------------------------------------------------------------
# Parameter folding / dtype prep for the kernel
# ---------------------------------------------------------------------------
def prepare_kernel_params(p, w_dtype=jnp.bfloat16):
    # fold state embedder into the layer-0 input gates (no activation between)
    W_s2g = p["W_se"] @ p["Wih0s"]                         # (S, 3H)
    b_gi0 = p["b_se"] @ p["Wih0s"] + p["bih0"]             # (1, 3H)
    # fuse the three MDN heads into one weight/bias
    W_head = jnp.concatenate([p["Wa"], p["Wm"], p["Ws"]], axis=1)   # (H, 48)
    b_head = jnp.concatenate([p["ba"], p["bm"], p["bs"]], axis=1)   # (1, 48)
    return [
        p["W_env"].astype(w_dtype), p["b_env"],
        p["Wih0e"].astype(w_dtype),
        W_s2g.astype(w_dtype), b_gi0,
        p["Whh0"].astype(w_dtype), p["bhh0"],
        p["Wih1"].astype(w_dtype), p["bih1"],
        p["Whh1"].astype(w_dtype), p["bhh1"],
        p["Wm1"].astype(w_dtype), p["bm1"],
        W_head.astype(w_dtype), b_head,
    ]


# ---------------------------------------------------------------------------
# Wrapper
# ---------------------------------------------------------------------------
def gru_predictor_forward(envs, states, params, w_dtype=jnp.bfloat16):
    """envs: (B, env_size), states: (B, T, state_size).

    Returns GaussianMixture parameters:
      a: (B, T, NG), m: (B, T, NG, 2), s: (B, T, NG, 3)
    """
    B, T, S = states.shape
    kp = prepare_kernel_params(params, w_dtype)

    # time-major flatten so rows [t*B : (t+1)*B] belong to timestep t
    states_flat = jnp.transpose(states, (1, 0, 2)).reshape(T * B, S).astype(w_dtype)
    envs_in = envs.astype(w_dtype)

    n_in = 2 + len(kp)
    vmem_spec = pl.BlockSpec(memory_space=pltpu.MemorySpace.VMEM)

    out = pl.pallas_call(
        gru_predictor_kernel,
        out_shape=jax.ShapeDtypeStruct((T * B, 6 * NG), jnp.float32),
        in_specs=[vmem_spec] * n_in,          # whole arrays, single-buffered
        out_specs=vmem_spec,
        scratch_shapes=[
            pltpu.VMEM((T * B, 3 * HIDDEN), jnp.float32),   # gi0 for all steps
            pltpu.VMEM((T * B, HIDDEN), jnp.float32),       # h1 for all steps
        ],
    )(states_flat, envs_in, *kp)

    # glue: back to batch-major and split the fused [a|m|s] slab
    out = jnp.transpose(out.reshape(T, B, 6 * NG), (1, 0, 2))    # (B, T, 48)
    a = out[..., :NG]
    m = out[..., NG:3 * NG].reshape(B, T, NG, 2)
    s = out[..., 3 * NG:].reshape(B, T, NG, 3)
    return a, m, s


# ---------------------------------------------------------------------------
# Deterministic parameter construction (PyTorch-style uniform init)
# ---------------------------------------------------------------------------
def init_params(key, env_size, state_size):
    def uni(k, shape, fan_in):
        b = 1.0 / np.sqrt(fan_in)
        return jax.random.uniform(k, shape, jnp.float32, -b, b)

    ks = iter(jax.random.split(key, 32))
    H = HIDDEN
    in0 = ENV_EMBED + STATE_EMBED

    # full layer-0 input weight, then split into env / state halves
    Wih0 = uni(next(ks), (in0, 3 * H), H)

    p = {
        "W_env": uni(next(ks), (env_size, ENV_EMBED), env_size),
        "b_env": uni(next(ks), (1, ENV_EMBED), env_size),
        "W_se":  uni(next(ks), (state_size, STATE_EMBED), state_size),
        "b_se":  uni(next(ks), (1, STATE_EMBED), state_size),
        "Wih0e": Wih0[:ENV_EMBED],
        "Wih0s": Wih0[ENV_EMBED:],
        "Whh0":  uni(next(ks), (H, 3 * H), H),
        "bih0":  uni(next(ks), (1, 3 * H), H),
        "bhh0":  uni(next(ks), (1, 3 * H), H),
        "Wih1":  uni(next(ks), (H, 3 * H), H),
        "Whh1":  uni(next(ks), (H, 3 * H), H),
        "bih1":  uni(next(ks), (1, 3 * H), H),
        "bhh1":  uni(next(ks), (1, 3 * H), H),
        "Wm1":   uni(next(ks), (H, H), H),
        "bm1":   uni(next(ks), (1, H), H),
        "Wa":    uni(next(ks), (H, NG), H),
        "ba":    uni(next(ks), (1, NG), H),
        "Wm":    uni(next(ks), (H, NG * 2), H),
        "bm":    uni(next(ks), (1, NG * 2), H),
        "Ws":    uni(next(ks), (H, NG * 3), H),
        "bs":    uni(next(ks), (1, NG * 3), H),
    }
    return p


# ---------------------------------------------------------------------------
# Pure-JAX f32 reference (original unfused structure) for a correctness check
# ---------------------------------------------------------------------------
def reference_forward(envs, states, p):
    B, T, _ = states.shape
    H = HIDDEN
    henv = jax.nn.relu(envs @ p["W_env"] + p["b_env"][0])
    h0 = jnp.zeros((B, H), jnp.float32)
    h1 = jnp.zeros((B, H), jnp.float32)
    a_l, m_l, s_l = [], [], []
    for t in range(T):
        s_emb = states[:, t] @ p["W_se"] + p["b_se"][0]
        gi0 = henv @ p["Wih0e"] + s_emb @ p["Wih0s"] + p["bih0"][0]
        gh0 = h0 @ p["Whh0"] + p["bhh0"][0]
        r = jax.nn.sigmoid(gi0[:, :H] + gh0[:, :H])
        z = jax.nn.sigmoid(gi0[:, H:2*H] + gh0[:, H:2*H])
        n = jnp.tanh(gi0[:, 2*H:] + r * gh0[:, 2*H:])
        h0 = (1 - z) * n + z * h0
        gi1 = h0 @ p["Wih1"] + p["bih1"][0]
        gh1 = h1 @ p["Whh1"] + p["bhh1"][0]
        r = jax.nn.sigmoid(gi1[:, :H] + gh1[:, :H])
        z = jax.nn.sigmoid(gi1[:, H:2*H] + gh1[:, H:2*H])
        n = jnp.tanh(gi1[:, 2*H:] + r * gh1[:, 2*H:])
        h1 = (1 - z) * n + z * h1
        hid = jax.nn.relu(h1 @ p["Wm1"] + p["bm1"][0])
        a_l.append(jax.nn.softmax(hid @ p["Wa"] + p["ba"][0], axis=-1))
        m_l.append(hid @ p["Wm"] + p["bm"][0])
        s_l.append(jax.nn.softplus(hid @ p["Ws"] + p["bs"][0]) + EPS)
    a = jnp.stack(a_l, axis=1)
    m = jnp.stack(m_l, axis=1).reshape(B, T, NG, 2)
    s = jnp.stack(s_l, axis=1).reshape(B, T, NG, 3)
    return a, m, s


if __name__ == "__main__":
    # TODO(synk): predict_t > 0 branch (ancestral sampling from the
    # GaussianMixture) is not implemented — only the predict_t == 0 path.
    B, T = 8, 8
    env_size, state_size = 16, 2

    key = jax.random.PRNGKey(0)
    k_env, k_state, k_param = jax.random.split(key, 3)
    envs = jax.random.normal(k_env, (B, env_size), jnp.float32)
    states = jax.random.normal(k_state, (B, T, state_size), jnp.float32)
    params = init_params(k_param, env_size, state_size)

    a, m, s = jax.block_until_ready(gru_predictor_forward(envs, states, params))

    # f32 reference vs bf16-MXU kernel (f32 accumulation): loose-ish tolerance
    a_ref, m_ref, s_ref = reference_forward(envs, states, params)
    np.testing.assert_allclose(np.asarray(a), np.asarray(a_ref), rtol=2e-2, atol=2e-2)
    np.testing.assert_allclose(np.asarray(m), np.asarray(m_ref), rtol=2e-2, atol=2e-2)
    np.testing.assert_allclose(np.asarray(s), np.asarray(s_ref), rtol=2e-2, atol=2e-2)

    assert a.shape == (B, T, NG) and m.shape == (B, T, NG, 2) and s.shape == (B, T, NG, 3)
    print("KERNEL_OK")
</pallas_src>

<mosaic_0001>
module attributes {stable_mosaic.version = 11 : i64} {
  func.func @gru_predictor_kernel(%arg0: memref<64x2xbf16, #tpu.memory_space<vmem>>, %arg1: memref<8x16xbf16, #tpu.memory_space<vmem>>, %arg2: memref<16x32xbf16, #tpu.memory_space<vmem>>, %arg3: memref<1x32xf32, #tpu.memory_space<vmem>>, %arg4: memref<32x384xbf16, #tpu.memory_space<vmem>>, %arg5: memref<2x384xbf16, #tpu.memory_space<vmem>>, %arg6: memref<1x384xf32, #tpu.memory_space<vmem>>, %arg7: memref<128x384xbf16, #tpu.memory_space<vmem>>, %arg8: memref<1x384xf32, #tpu.memory_space<vmem>>, %arg9: memref<128x384xbf16, #tpu.memory_space<vmem>>, %arg10: memref<1x384xf32, #tpu.memory_space<vmem>>, %arg11: memref<128x384xbf16, #tpu.memory_space<vmem>>, %arg12: memref<1x384xf32, #tpu.memory_space<vmem>>, %arg13: memref<128x128xbf16, #tpu.memory_space<vmem>>, %arg14: memref<1x128xf32, #tpu.memory_space<vmem>>, %arg15: memref<128x48xbf16, #tpu.memory_space<vmem>>, %arg16: memref<1x48xf32, #tpu.memory_space<vmem>>, %arg17: memref<64x48xf32, #tpu.memory_space<vmem>>, %arg18: memref<64x384xf32, #tpu.memory_space<vmem>>, %arg19: memref<64x128xf32, #tpu.memory_space<vmem>>) attributes {dimension_semantics = [], scalar_prefetch = 0 : i64, scratch_operands = 2 : i64, tpu.core_type = #tpu.core_type<tc>} {
    %c0 = arith.constant 0 : index
    %c0_0 = arith.constant 0 : index
    %0 = vector.load %arg1[%c0, %c0_0] : memref<8x16xbf16, #tpu.memory_space<vmem>>, vector<8x16xbf16>
    %c0_1 = arith.constant 0 : index
    %c0_2 = arith.constant 0 : index
    %1 = vector.load %arg2[%c0_1, %c0_2] : memref<16x32xbf16, #tpu.memory_space<vmem>>, vector<16x32xbf16>
    %cst = arith.constant dense<0.000000e+00> : vector<8x32xf32>
    %2 = tpu.matmul %0, %1, %cst {dimension_numbers = #tpu.dot_dimension_numbers<[1], [0], [0], [1], [0, 0, 1, 1], [], []>} : vector<8x16xbf16>, vector<16x32xbf16>, vector<8x32xf32> -> vector<8x32xf32>
    %c0_3 = arith.constant 0 : index
    %c0_4 = arith.constant 0 : index
    %3 = vector.load %arg3[%c0_3, %c0_4] : memref<1x32xf32, #tpu.memory_space<vmem>>, vector<1x32xf32>
    %4 = vector.broadcast %3 : vector<1x32xf32> to vector<8x32xf32>
    %5 = arith.addf %2, %4 : vector<8x32xf32>
    %cst_5 = arith.constant 0.000000e+00 : f32
    %6 = vector.broadcast %cst_5 : f32 to vector<8x32xf32>
    %7 = arith.maximumf %5, %6 : vector<8x32xf32>
    %8 = arith.truncf %7 : vector<8x32xf32> to vector<8x32xbf16>
    %c0_6 = arith.constant 0 : index
    %c0_7 = arith.constant 0 : index
    %9 = vector.load %arg4[%c0_6, %c0_7] : memref<32x384xbf16, #tpu.memory_space<vmem>>, vector<32x384xbf16>
    %cst_8 = arith.constant dense<0.000000e+00> : vector<8x384xf32>
    %10 = tpu.matmul %8, %9, %cst_8 {dimension_numbers = #tpu.dot_dimension_numbers<[1], [0], [0], [1], [0, 0, 1, 1], [], []>} : vector<8x32xbf16>, vector<32x384xbf16>, vector<8x384xf32> -> vector<8x384xf32>
    %c0_9 = arith.constant 0 : index
    %c0_10 = arith.constant 0 : index
    %11 = vector.load %arg6[%c0_9, %c0_10] : memref<1x384xf32, #tpu.memory_space<vmem>>, vector<1x384xf32>
    %12 = vector.broadcast %11 : vector<1x384xf32> to vector<8x384xf32>
    %13 = arith.addf %10, %12 : vector<8x384xf32>
    %c0_11 = arith.constant 0 : index
    %c0_12 = arith.constant 0 : index
    %14 = vector.load %arg0[%c0_11, %c0_12] : memref<64x2xbf16, #tpu.memory_space<vmem>>, vector<64x2xbf16>
    %c0_13 = arith.constant 0 : index
    %c0_14 = arith.constant 0 : index
    %15 = vector.load %arg5[%c0_13, %c0_14] : memref<2x384xbf16, #tpu.memory_space<vmem>>, vector<2x384xbf16>
    %cst_15 = arith.constant dense<0.000000e+00> : vector<64x384xf32>
    %16 = tpu.matmul %14, %15, %cst_15 {dimension_numbers = #tpu.dot_dimension_numbers<[1], [0], [0], [1], [0, 0, 1, 1], [], []>} : vector<64x2xbf16>, vector<2x384xbf16>, vector<64x384xf32> -> vector<64x384xf32>
    %c0_16 = arith.constant 0 : index
    %c0_17 = arith.constant 0 : index
    %17 = vector.load %arg18[%c0_16, %c0_17] : memref<64x384xf32, #tpu.memory_space<vmem>>, vector<64x384xf32>
    tpu.vector_store %arg18[%c0_16, %c0_17], %16 {strides = array<i32>} : memref<64x384xf32, #tpu.memory_space<vmem>>, vector<64x384xf32>,
    %cst_18 = arith.constant 0.000000e+00 : f32
    %18 = vector.broadcast %cst_18 : f32 to vector<8x128xf32>
    %c0_i32 = arith.constant 0 : i32
    %c8_i32 = arith.constant 8 : i32
    %19 = arith.muli %c0_i32, %c8_i32 : i32
    %20 = arith.index_cast %19 : i32 to index
    %c0_19 = arith.constant 0 : index
    %21 = vector.load %arg18[%20, %c0_19] : memref<64x384xf32, #tpu.memory_space<vmem>>, vector<8x384xf32>
    %22 = arith.addf %21, %13 : vector<8x384xf32>
    %23 = arith.truncf %18 : vector<8x128xf32> to vector<8x128xbf16>
    %c0_20 = arith.constant 0 : index
    %c0_21 = arith.constant 0 : index
    %24 = vector.load %arg7[%c0_20, %c0_21] : memref<128x384xbf16, #tpu.memory_space<vmem>>, vector<128x384xbf16>
    %cst_22 = arith.constant dense<0.000000e+00> : vector<8x384xf32>
    %25 = tpu.matmul %23, %24, %cst_22 {dimension_numbers = #tpu.dot_dimension_numbers<[1], [0], [0], [1], [0, 0, 1, 1], [], []>} : vector<8x128xbf16>, vector<128x384xbf16>, vector<8x384xf32> -> vector<8x384xf32>
    %c0_23 = arith.constant 0 : index
    %c0_24 = arith.constant 0 : index
    %26 = vector.load %arg8[%c0_23, %c0_24] : memref<1x384xf32, #tpu.memory_space<vmem>>, vector<1x384xf32>
    %27 = vector.broadcast %26 : vector<1x384xf32> to vector<8x384xf32>
    %28 = arith.addf %25, %27 : vector<8x384xf32>
    %29 = vector.extract_strided_slice %22 {offsets = [0, 0], sizes = [8, 128], strides = [1, 1]} : vector<8x384xf32> to vector<8x128xf32>
    %30 = vector.extract_strided_slice %28 {offsets = [0, 0], sizes = [8, 128], strides = [1, 1]} : vector<8x384xf32> to vector<8x128xf32>
    %31 = arith.addf %29, %30 : vector<8x128xf32>
    %32 = arith.negf %31 : vector<8x128xf32>
    %33 = math.exp %32 : vector<8x128xf32>
    %cst_25 = arith.constant 1.000000e+00 : f32
    %34 = vector.broadcast %cst_25 : f32 to vector<8x128xf32>
    %35 = arith.addf %34, %33 : vector<8x128xf32>
    %36 = arith.divf %34, %35 : vector<8x128xf32>
    %37 = vector.extract_strided_slice %22 {offsets = [0, 128], sizes = [8, 128], strides = [1, 1]} : vector<8x384xf32> to vector<8x128xf32>
    %38 = vector.extract_strided_slice %28 {offsets = [0, 128], sizes = [8, 128], strides = [1, 1]} : vector<8x384xf32> to vector<8x128xf32>
    %39 = arith.addf %37, %38 : vector<8x128xf32>
    %40 = arith.negf %39 : vector<8x128xf32>
    %41 = math.exp %40 : vector<8x128xf32>
    %cst_26 = arith.constant 1.000000e+00 : f32
    %42 = vector.broadcast %cst_26 : f32 to vector<8x128xf32>
    %43 = arith.addf %42, %41 : vector<8x128xf32>
    %44 = arith.divf %42, %43 : vector<8x128xf32>
    %45 = vector.extract_strided_slice %22 {offsets = [0, 256], sizes = [8, 128], strides = [1, 1]} : vector<8x384xf32> to vector<8x128xf32>
    %46 = vector.extract_strided_slice %28 {offsets = [0, 256], sizes = [8, 128], strides = [1, 1]} : vector<8x384xf32> to vector<8x128xf32>
    %47 = arith.mulf %36, %46 : vector<8x128xf32>
    %48 = arith.addf %45, %47 : vector<8x128xf32>
    %49 = math.tanh %48 : vector<8x128xf32>
    %cst_27 = arith.constant 1.000000e+00 : f32
    %50 = vector.broadcast %cst_27 : f32 to vector<8x128xf32>
    %51 = arith.subf %50, %44 : vector<8x128xf32>
    %52 = arith.mulf %51, %49 : vector<8x128xf32>
    %53 = arith.mulf %44, %18 : vector<8x128xf32>
    %54 = arith.addf %52, %53 : vector<8x128xf32>
    %55 = arith.truncf %54 : vector<8x128xf32> to vector<8x128xbf16>
    %c0_28 = arith.constant 0 : index
    %c0_29 = arith.constant 0 : index
    %56 = vector.load %arg9[%c0_28, %c0_29] : memref<128x384xbf16, #tpu.memory_space<vmem>>, vector<128x384xbf16>
    %cst_30 = arith.constant dense<0.000000e+00> : vector<8x384xf32>
    %57 = tpu.matmul %55, %56, %cst_30 {dimension_numbers = #tpu.dot_dimension_numbers<[1], [0], [0], [1], [0, 0, 1, 1], [], []>} : vector<8x128xbf16>, vector<128x384xbf16>, vector<8x384xf32> -> vector<8x384xf32>
    %c0_31 = arith.constant 0 : index
    %c0_32 = arith.constant 0 : index
    %58 = vector.load %arg10[%c0_31, %c0_32] : memref<1x384xf32, #tpu.memory_space<vmem>>, vector<1x384xf32>
    %59 = vector.broadcast %58 : vector<1x384xf32> to vector<8x384xf32>
    %60 = arith.addf %57, %59 : vector<8x384xf32>
    %61 = arith.truncf %18 : vector<8x128xf32> to vector<8x128xbf16>
    %c0_33 = arith.constant 0 : index
    %c0_34 = arith.constant 0 : index
    %62 = vector.load %arg11[%c0_33, %c0_34] : memref<128x384xbf16, #tpu.memory_space<vmem>>, vector<128x384xbf16>
    %cst_35 = arith.constant dense<0.000000e+00> : vector<8x384xf32>
    %63 = tpu.matmul %61, %62, %cst_35 {dimension_numbers = #tpu.dot_dimension_numbers<[1], [0], [0], [1], [0, 0, 1, 1], [], []>} : vector<8x128xbf16>, vector<128x384xbf16>, vector<8x384xf32> -> vector<8x384xf32>
    %c0_36 = arith.constant 0 : index
    %c0_37 = arith.constant 0 : index
    %64 = vector.load %arg12[%c0_36, %c0_37] : memref<1x384xf32, #tpu.memory_space<vmem>>, vector<1x384xf32>
    %65 = vector.broadcast %64 : vector<1x384xf32> to vector<8x384xf32>
    %66 = arith.addf %63, %65 : vector<8x384xf32>
    %67 = vector.extract_strided_slice %60 {offsets = [0, 0], sizes = [8, 128], strides = [1, 1]} : vector<8x384xf32> to vector<8x128xf32>
    %68 = vector.extract_strided_slice %66 {offsets = [0, 0], sizes = [8, 128], strides = [1, 1]} : vector<8x384xf32> to vector<8x128xf32>
    %69 = arith.addf %67, %68 : vector<8x128xf32>
    %70 = arith.negf %69 : vector<8x128xf32>
    %71 = math.exp %70 : vector<8x128xf32>
    %cst_38 = arith.constant 1.000000e+00 : f32
    %72 = vector.broadcast %cst_38 : f32 to vector<8x128xf32>
    %73 = arith.addf %72, %71 : vector<8x128xf32>
    %74 = arith.divf %72, %73 : vector<8x128xf32>
    %75 = vector.extract_strided_slice %60 {offsets = [0, 128], sizes = [8, 128], strides = [1, 1]} : vector<8x384xf32> to vector<8x128xf32>
    %76 = vector.extract_strided_slice %66 {offsets = [0, 128], sizes = [8, 128], strides = [1, 1]} : vector<8x384xf32> to vector<8x128xf32>
    %77 = arith.addf %75, %76 : vector<8x128xf32>
    %78 = arith.negf %77 : vector<8x128xf32>
    %79 = math.exp %78 : vector<8x128xf32>
    %cst_39 = arith.constant 1.000000e+00 : f32
    %80 = vector.broadcast %cst_39 : f32 to vector<8x128xf32>
    %81 = arith.addf %80, %79 : vector<8x128xf32>
    %82 = arith.divf %80, %81 : vector<8x128xf32>
    %83 = vector.extract_strided_slice %60 {offsets = [0, 256], sizes = [8, 128], strides = [1, 1]} : vector<8x384xf32> to vector<8x128xf32>
    %84 = vector.extract_strided_slice %66 {offsets = [0, 256], sizes = [8, 128], strides = [1, 1]} : vector<8x384xf32> to vector<8x128xf32>
    %85 = arith.mulf %74, %84 : vector<8x128xf32>
    %86 = arith.addf %83, %85 : vector<8x128xf32>
    %87 = math.tanh %86 : vector<8x128xf32>
    %cst_40 = arith.constant 1.000000e+00 : f32
    %88 = vector.broadcast %cst_40 : f32 to vector<8x128xf32>
    %89 = arith.subf %88, %82 : vector<8x128xf32>
    %90 = arith.mulf %89, %87 : vector<8x128xf32>
    %91 = arith.mulf %82, %18 : vector<8x128xf32>
    %92 = arith.addf %90, %91 : vector<8x128xf32>
    %93 = arith.index_cast %19 : i32 to index
    %c0_41 = arith.constant 0 : index
    %94 = vector.load %arg19[%93, %c0_41] : memref<64x128xf32, #tpu.memory_space<vmem>>, vector<8x128xf32>
    tpu.vector_store %arg19[%93, %c0_41], %92 {strides = array<i32>} : memref<64x128xf32, #tpu.memory_space<vmem>>, vector<8x128xf32>,
    %c1_i32 = arith.constant 1 : i32
    %c8_i32_42 = arith.constant 8 : i32
    %95 = arith.muli %c1_i32, %c8_i32_42 : i32
    %96 = arith.index_cast %95 : i32 to index
    %c0_43 = arith.constant 0 : index
    %97 = vector.load %arg18[%96, %c0_43] : memref<64x384xf32, #tpu.memory_space<vmem>>, vector<8x384xf32>
    %98 = arith.addf %97, %13 : vector<8x384xf32>
    %99 = arith.truncf %54 : vector<8x128xf32> to vector<8x128xbf16>
    %c0_44 = arith.constant 0 : index
    %c0_45 = arith.constant 0 : index
    %100 = vector.load %arg7[%c0_44, %c0_45] : memref<128x384xbf16, #tpu.memory_space<vmem>>, vector<128x384xbf16>
    %cst_46 = arith.constant dense<0.000000e+00> : vector<8x384xf32>
    %101 = tpu.matmul %99, %100, %cst_46 {dimension_numbers = #tpu.dot_dimension_numbers<[1], [0], [0], [1], [0, 0, 1, 1], [], []>} : vector<8x128xbf16>, vector<128x384xbf16>, vector<8x384xf32> -> vector<8x384xf32>
    %c0_47 = arith.constant 0 : index
    %c0_48 = arith.constant 0 : index
    %102 = vector.load %arg8[%c0_47, %c0_48] : memref<1x384xf32, #tpu.memory_space<vmem>>, vector<1x384xf32>
    %103 = vector.broadcast %102 : vector<1x384xf32> to vector<8x384xf32>
    %104 = arith.addf %101, %103 : vector<8x384xf32>
    %105 = vector.extract_strided_slice %98 {offsets = [0, 0], sizes = [8, 128], strides = [1, 1]} : vector<8x384xf32> to vector<8x128xf32>
    %106 = vector.extract_strided_slice %104 {offsets = [0, 0], sizes = [8, 128], strides = [1, 1]} : vector<8x384xf32> to vector<8x128xf32>
    %107 = arith.addf %105, %106 : vector<8x128xf32>
    %108 = arith.negf %107 : vector<8x128xf32>
    %109 = math.exp %108 : vector<8x128xf32>
    %cst_49 = arith.constant 1.000000e+00 : f32
    %110 = vector.broadcast %cst_49 : f32 to vector<8x128xf32>
    %111 = arith.addf %110, %109 : vector<8x128xf32>
    %112 = arith.divf %110, %111 : vector<8x128xf32>
    %113 = vector.extract_strided_slice %98 {offsets = [0, 128], sizes = [8, 128], strides = [1, 1]} : vector<8x384xf32> to vector<8x128xf32>
    %114 = vector.extract_strided_slice %104 {offsets = [0, 128], sizes = [8, 128], strides = [1, 1]} : vector<8x384xf32> to vector<8x128xf32>
    %115 = arith.addf %113, %114 : vector<8x128xf32>
    %116 = arith.negf %115 : vector<8x128xf32>
    %117 = math.exp %116 : vector<8x128xf32>
    %cst_50 = arith.constant 1.000000e+00 : f32
    %118 = vector.broadcast %cst_50 : f32 to vector<8x128xf32>
    %119 = arith.addf %118, %117 : vector<8x128xf32>
    %120 = arith.divf %118, %119 : vector<8x128xf32>
    %121 = vector.extract_strided_slice %98 {offsets = [0, 256], sizes = [8, 128], strides = [1, 1]} : vector<8x384xf32> to vector<8x128xf32>
    %122 = vector.extract_strided_slice %104 {offsets = [0, 256], sizes = [8, 128], strides = [1, 1]} : vector<8x384xf32> to vector<8x128xf32>
    %123 = arith.mulf %112, %122 : vector<8x128xf32>
    %124 = arith.addf %121, %123 : vector<8x128xf32>
    %125 = math.tanh %124 : vector<8x128xf32>
    %cst_51 = arith.constant 1.000000e+00 : f32
    %126 = vector.broadcast %cst_51 : f32 to vector<8x128xf32>
    %127 = arith.subf %126, %120 : vector<8x128xf32>
    %128 = arith.mulf %127, %125 : vector<8x128xf32>
    %129 = arith.mulf %120, %54 : vector<8x128xf32>
    %130 = arith.addf %128, %129 : vector<8x128xf32>
    %131 = arith.truncf %130 : vector<8x128xf32> to vector<8x128xbf16>
    %c0_52 = arith.constant 0 : index
    %c0_53 = arith.constant 0 : index
    %132 = vector.load %arg9[%c0_52, %c0_53] : memref<128x384xbf16, #tpu.memory_space<vmem>>, vector<128x384xbf16>
    %cst_54 = arith.constant dense<0.000000e+00> : vector<8x384xf32>
    %133 = tpu.matmul %131, %132, %cst_54 {dimension_numbers = #tpu.dot_dimension_numbers<[1], [0], [0], [1], [0, 0, 1, 1], [], []>} : vector<8x128xbf16>, vector<128x384xbf16>, vector<8x384xf32> -> vector<8x384xf32>
    %c0_55 = arith.constant 0 : index
    %c0_56 = arith.constant 0 : index
    %134 = vector.load %arg10[%c0_55, %c0_56] : memref<1x384xf32, #tpu.memory_space<vmem>>, vector<1x384xf32>
    %135 = vector.broadcast %134 : vector<1x384xf32> to vector<8x384xf32>
    %136 = arith.addf %133, %135 : vector<8x384xf32>
    %137 = arith.truncf %92 : vector<8x128xf32> to vector<8x128xbf16>
    %c0_57 = arith.constant 0 : index
    %c0_58 = arith.constant 0 : index
    %138 = vector.load %arg11[%c0_57, %c0_58] : memref<128x384xbf16, #tpu.memory_space<vmem>>, vector<128x384xbf16>
    %cst_59 = arith.constant dense<0.000000e+00> : vector<8x384xf32>
    %139 = tpu.matmul %137, %138, %cst_59 {dimension_numbers = #tpu.dot_dimension_numbers<[1], [0], [0], [1], [0, 0, 1, 1], [], []>} : vector<8x128xbf16>, vector<128x384xbf16>, vector<8x384xf32> -> vector<8x384xf32>
    %c0_60 = arith.constant 0 : index
    %c0_61 = arith.constant 0 : index
    %140 = vector.load %arg12[%c0_60, %c0_61] : memref<1x384xf32, #tpu.memory_space<vmem>>, vector<1x384xf32>
    %141 = vector.broadcast %140 : vector<1x384xf32> to vector<8x384xf32>
    %142 = arith.addf %139, %141 : vector<8x384xf32>
    %143 = vector.extract_strided_slice %136 {offsets = [0, 0], sizes = [8, 128], strides = [1, 1]} : vector<8x384xf32> to vector<8x128xf32>
    %144 = vector.extract_strided_slice %142 {offsets = [0, 0], sizes = [8, 128], strides = [1, 1]} : vector<8x384xf32> to vector<8x128xf32>
    %145 = arith.addf %143, %144 : vector<8x128xf32>
    %146 = arith.negf %145 : vector<8x128xf32>
    %147 = math.exp %146 : vector<8x128xf32>
    %cst_62 = arith.constant 1.000000e+00 : f32
    %148 = vector.broadcast %cst_62 : f32 to vector<8x128xf32>
    %149 = arith.addf %148, %147 : vector<8x128xf32>
    %150 = arith.divf %148, %149 : vector<8x128xf32>
    %151 = vector.extract_strided_slice %136 {offsets = [0, 128], sizes = [8, 128], strides = [1, 1]} : vector<8x384xf32> to vector<8x128xf32>
    %152 = vector.extract_strided_slice %142 {offsets = [0, 128], sizes = [8, 128], strides = [1, 1]} : vector<8x384xf32> to vector<8x128xf32>
    %153 = arith.addf %151, %152 : vector<8x128xf32>
    %154 = arith.negf %153 : vector<8x128xf32>
    %155 = math.exp %154 : vector<8x128xf32>
    %cst_63 = arith.constant 1.000000e+00 : f32
    %156 = vector.broadcast %cst_63 : f32 to vector<8x128xf32>
    %157 = arith.addf %156, %155 : vector<8x128xf32>
    %158 = arith.divf %156, %157 : vector<8x128xf32>
    %159 = vector.extract_strided_slice %136 {offsets = [0, 256], sizes = [8, 128], strides = [1, 1]} : vector<8x384xf32> to vector<8x128xf32>
    %160 = vector.extract_strided_slice %142 {offsets = [0, 256], sizes = [8, 128], strides = [1, 1]} : vector<8x384xf32> to vector<8x128xf32>
    %161 = arith.mulf %150, %160 : vector<8x128xf32>
    %162 = arith.addf %159, %161 : vector<8x128xf32>
    %163 = math.tanh %162 : vector<8x128xf32>
    %cst_64 = arith.constant 1.000000e+00 : f32
    %164 = vector.broadcast %cst_64 : f32 to vector<8x128xf32>
    %165 = arith.subf %164, %158 : vector<8x128xf32>
    %166 = arith.mulf %165, %163 : vector<8x128xf32>
    %167 = arith.mulf %158, %92 : vector<8x128xf32>
    %168 = arith.addf %166, %167 : vector<8x128xf32>
    %169 = arith.index_cast %95 : i32 to index
    %c0_65 = arith.constant 0 : index
    %170 = vector.load %arg19[%169, %c0_65] : memref<64x128xf32, #tpu.memory_space<vmem>>, vector<8x128xf32>
    tpu.vector_store %arg19[%169, %c0_65], %168 {strides = array<i32>} : memref<64x128xf32, #tpu.memory_space<vmem>>, vector<8x128xf32>,
    %c2_i32 = arith.constant 2 : i32
    %c8_i32_66 = arith.constant 8 : i32
    %171 = arith.muli %c2_i32, %c8_i32_66 : i32
    %172 = arith.index_cast %171 : i32 to index
    %c0_67 = arith.constant 0 : index
    %173 = vector.load %arg18[%172, %c0_67] : memref<64x384xf32, #tpu.memory_space<vmem>>, vector<8x384xf32>
    %174 = arith.addf %173, %13 : vector<8x384xf32>
    %175 = arith.truncf %130 : vector<8x128xf32> to vector<8x128xbf16>
    %c0_68 = arith.constant 0 : index
    %c0_69 = arith.constant 0 : index
    %176 = vector.load %arg7[%c0_68, %c0_69] : memref<128x384xbf16, #tpu.memory_space<vmem>>, vector<128x384xbf16>
    %cst_70 = arith.constant dense<0.000000e+00> : vector<8x384xf32>
    %177 = tpu.matmul %175, %176, %cst_70 {dimension_numbers = #tpu.dot_dimension_numbers<[1], [0], [0], [1], [0, 0, 1, 1], [], []>} : vector<8x128xbf16>, vector<128x384xbf16>, vector<8x384xf32> -> vector<8x384xf32>
    %c0_71 = arith.constant 0 : index
    %c0_72 = arith.constant 0 : index
    %178 = vector.load %arg8[%c0_71, %c0_72] : memref<1x384xf32, #tpu.memory_space<vmem>>, vector<1x384xf32>
    %179 = vector.broadcast %178 : vector<1x384xf32> to vector<8x384xf32>
    %180 = arith.addf %177, %179 : vector<8x384xf32>
    %181 = vector.extract_strided_slice %174 {offsets = [0, 0], sizes = [8, 128], strides = [1, 1]} : vector<8x384xf32> to vector<8x128xf32>
    %182 = vector.extract_strided_slice %180 {offsets = [0, 0], sizes = [8, 128], strides = [1, 1]} : vector<8x384xf32> to vector<8x128xf32>
    %183 = arith.addf %181, %182 : vector<8x128xf32>
    %184 = arith.negf %183 : vector<8x128xf32>
    %185 = math.exp %184 : vector<8x128xf32>
    %cst_73 = arith.constant 1.000000e+00 : f32
    %186 = vector.broadcast %cst_73 : f32 to vector<8x128xf32>
    %187 = arith.addf %186, %185 : vector<8x128xf32>
    %188 = arith.divf %186, %187 : vector<8x128xf32>
    %189 = vector.extract_strided_slice %174 {offsets = [0, 128], sizes = [8, 128], strides = [1, 1]} : vector<8x384xf32> to vector<8x128xf32>
    %190 = vector.extract_strided_slice %180 {offsets = [0, 128], sizes = [8, 128], strides = [1, 1]} : vector<8x384xf32> to vector<8x128xf32>
    %191 = arith.addf %189, %190 : vector<8x128xf32>
    %192 = arith.negf %191 : vector<8x128xf32>
    %193 = math.exp %192 : vector<8x128xf32>
    %cst_74 = arith.constant 1.000000e+00 : f32
    %194 = vector.broadcast %cst_74 : f32 to vector<8x128xf32>
    %195 = arith.addf %194, %193 : vector<8x128xf32>
    %196 = arith.divf %194, %195 : vector<8x128xf32>
    %197 = vector.extract_strided_slice %174 {offsets = [0, 256], sizes = [8, 128], strides = [1, 1]} : vector<8x384xf32> to vector<8x128xf32>
    %198 = vector.extract_strided_slice %180 {offsets = [0, 256], sizes = [8, 128], strides = [1, 1]} : vector<8x384xf32> to vector<8x128xf32>
    %199 = arith.mulf %188, %198 : vector<8x128xf32>
    %200 = arith.addf %197, %199 : vector<8x128xf32>
    %201 = math.tanh %200 : vector<8x128xf32>
    %cst_75 = arith.constant 1.000000e+00 : f32
    %202 = vector.broadcast %cst_75 : f32 to vector<8x128xf32>
    %203 = arith.subf %202, %196 : vector<8x128xf32>
    %204 = arith.mulf %203, %201 : vector<8x128xf32>
    %205 = arith.mulf %196, %130 : vector<8x128xf32>
    %206 = arith.addf %204, %205 : vector<8x128xf32>
    %207 = arith.truncf %206 : vector<8x128xf32> to vector<8x128xbf16>
    %c0_76 = arith.constant 0 : index
    %c0_77 = arith.constant 0 : index
    %208 = vector.load %arg9[%c0_76, %c0_77] : memref<128x384xbf16, #tpu.memory_space<vmem>>, vector<128x384xbf16>
    %cst_78 = arith.constant dense<0.000000e+00> : vector<8x384xf32>
    %209 = tpu.matmul %207, %208, %cst_78 {dimension_numbers = #tpu.dot_dimension_numbers<[1], [0], [0], [1], [0, 0, 1, 1], [], []>} : vector<8x128xbf16>, vector<128x384xbf16>, vector<8x384xf32> -> vector<8x384xf32>
    %c0_79 = arith.constant 0 : index
    %c0_80 = arith.constant 0 : index
    %210 = vector.load %arg10[%c0_79, %c0_80] : memref<1x384xf32, #tpu.memory_space<vmem>>, vector<1x384xf32>
    %211 = vector.broadcast %210 : vector<1x384xf32> to vector<8x384xf32>
    %212 = arith.addf %209, %211 : vector<8x384xf32>
    %213 = arith.truncf %168 : vector<8x128xf32> to vector<8x128xbf16>
    %c0_81 = arith.constant 0 : index
    %c0_82 = arith.constant 0 : index
    %214 = vector.load %arg11[%c0_81, %c0_82] : memref<128x384xbf16, #tpu.memory_space<vmem>>, vector<128x384xbf16>
    %cst_83 = arith.constant dense<0.000000e+00> : vector<8x384xf32>
    %215 = tpu.matmul %213, %214, %cst_83 {dimension_numbers = #tpu.dot_dimension_numbers<[1], [0], [0], [1], [0, 0, 1, 1], [], []>} : vector<8x128xbf16>, vector<128x384xbf16>, vector<8x384xf32> -> vector<8x384xf32>
    %c0_84 = arith.constant 0 : index
    %c0_85 = arith.constant 0 : index
    %216 = vector.load %arg12[%c0_84, %c0_85] : memref<1x384xf32, #tpu.memory_space<vmem>>, vector<1x384xf32>
    %217 = vector.broadcast %216 : vector<1x384xf32> to vector<8x384xf32>
    %218 = arith.addf %215, %217 : vector<8x384xf32>
    %219 = vector.extract_strided_slice %212 {offsets = [0, 0], sizes = [8, 128], strides = [1, 1]} : vector<8x384xf32> to vector<8x128xf32>
    %220 = vector.extract_strided_slice %218 {offsets = [0, 0], sizes = [8, 128], strides = [1, 1]} : vector<8x384xf32> to vector<8x128xf32>
    %221 = arith.addf %219, %220 : vector<8x128xf32>
    %222 = arith.negf %221 : vector<8x128xf32>
    %223 = math.exp %222 : vector<8x128xf32>
    %cst_86 = arith.constant 1.000000e+00 : f32
    %224 = vector.broadcast %cst_86 : f32 to vector<8x128xf32>
    %225 = arith.addf %224, %223 : vector<8x128xf32>
    %226 = arith.divf %224, %225 : vector<8x128xf32>
    %227 = vector.extract_strided_slice %212 {offsets = [0, 128], sizes = [8, 128], strides = [1, 1]} : vector<8x384xf32> to vector<8x128xf32>
    %228 = vector.extract_strided_slice %218 {offsets = [0, 128], sizes = [8, 128], strides = [1, 1]} : vector<8x384xf32> to vector<8x128xf32>
    %229 = arith.addf %227, %228 : vector<8x128xf32>
    %230 = arith.negf %229 : vector<8x128xf32>
    %231 = math.exp %230 : vector<8x128xf32>
    %cst_87 = arith.constant 1.000000e+00 : f32
    %232 = vector.broadcast %cst_87 : f32 to vector<8x128xf32>
    %233 = arith.addf %232, %231 : vector<8x128xf32>
    %234 = arith.divf %232, %233 : vector<8x128xf32>
    %235 = vector.extract_strided_slice %212 {offsets = [0, 256], sizes = [8, 128], strides = [1, 1]} : vector<8x384xf32> to vector<8x128xf32>
    %236 = vector.extract_strided_slice %218 {offsets = [0, 256], sizes = [8, 128], strides = [1, 1]} : vector<8x384xf32> to vector<8x128xf32>
    %237 = arith.mulf %226, %236 : vector<8x128xf32>
    %238 = arith.addf %235, %237 : vector<8x128xf32>
    %239 = math.tanh %238 : vector<8x128xf32>
    %cst_88 = arith.constant 1.000000e+00 : f32
    %240 = vector.broadcast %cst_88 : f32 to vector<8x128xf32>
    %241 = arith.subf %240, %234 : vector<8x128xf32>
    %242 = arith.mulf %241, %239 : vector<8x128xf32>
    %243 = arith.mulf %234, %168 : vector<8x128xf32>
    %244 = arith.addf %242, %243 : vector<8x128xf32>
    %245 = arith.index_cast %171 : i32 to index
    %c0_89 = arith.constant 0 : index
    %246 = vector.load %arg19[%245, %c0_89] : memref<64x128xf32, #tpu.memory_space<vmem>>, vector<8x128xf32>
    tpu.vector_store %arg19[%245, %c0_89], %244 {strides = array<i32>} : memref<64x128xf32, #tpu.memory_space<vmem>>, vector<8x128xf32>,
    %c3_i32 = arith.constant 3 : i32
    %c8_i32_90 = arith.constant 8 : i32
    %247 = arith.muli %c3_i32, %c8_i32_90 : i32
    %248 = arith.index_cast %247 : i32 to index
    %c0_91 = arith.constant 0 : index
    %249 = vector.load %arg18[%248, %c0_91] : memref<64x384xf32, #tpu.memory_space<vmem>>, vector<8x384xf32>
    %250 = arith.addf %249, %13 : vector<8x384xf32>
    %251 = arith.truncf %206 : vector<8x128xf32> to vector<8x128xbf16>
    %c0_92 = arith.constant 0 : index
    %c0_93 = arith.constant 0 : index
    %252 = vector.load %arg7[%c0_92, %c0_93] : memref<128x384xbf16, #tpu.memory_space<vmem>>, vector<128x384xbf16>
    %cst_94 = arith.constant dense<0.000000e+00> : vector<8x384xf32>
    %253 = tpu.matmul %251, %252, %cst_94 {dimension_numbers = #tpu.dot_dimension_numbers<[1], [0], [0], [1], [0, 0, 1, 1], [], []>} : vector<8x128xbf16>, vector<128x384xbf16>, vector<8x384xf32> -> vector<8x384xf32>
    %c0_95 = arith.constant 0 : index
    %c0_96 = arith.constant 0 : index
    %254 = vector.load %arg8[%c0_95, %c0_96] : memref<1x384xf32, #tpu.memory_space<vmem>>, vector<1x384xf32>
    %255 = vector.broadcast %254 : vector<1x384xf32> to vector<8x384xf32>
    %256 = arith.addf %253, %255 : vector<8x384xf32>
    %257 = vector.extract_strided_slice %250 {offsets = [0, 0], sizes = [8, 128], strides = [1, 1]} : vector<8x384xf32> to vector<8x128xf32>
    %258 = vector.extract_strided_slice %256 {offsets = [0, 0], sizes = [8, 128], strides = [1, 1]} : vector<8x384xf32> to vector<8x128xf32>
    %259 = arith.addf %257, %258 : vector<8x128xf32>
    %260 = arith.negf %259 : vector<8x128xf32>
    %261 = math.exp %260 : vector<8x128xf32>
    %cst_97 = arith.constant 1.000000e+00 : f32
    %262 = vector.broadcast %cst_97 : f32 to vector<8x128xf32>
    %263 = arith.addf %262, %261 : vector<8x128xf32>
    %264 = arith.divf %262, %263 : vector<8x128xf32>
    %265 = vector.extract_strided_slice %250 {offsets = [0, 128], sizes = [8, 128], strides = [1, 1]} : vector<8x384xf32> to vector<8x128xf32>
    %266 = vector.extract_strided_slice %256 {offsets = [0, 128], sizes = [8, 128], strides = [1, 1]} : vector<8x384xf32> to vector<8x128xf32>
    %267 = arith.addf %265, %266 : vector<8x128xf32>
    %268 = arith.negf %267 : vector<8x128xf32>
    %269 = math.exp %268 : vector<8x128xf32>
    %cst_98 = arith.constant 1.000000e+00 : f32
    %270 = vector.broadcast %cst_98 : f32 to vector<8x128xf32>
    %271 = arith.addf %270, %269 : vector<8x128xf32>
    %272 = arith.divf %270, %271 : vector<8x128xf32>
    %273 = vector.extract_strided_slice %250 {offsets = [0, 256], sizes = [8, 128], strides = [1, 1]} : vector<8x384xf32> to vector<8x128xf32>
    %274 = vector.extract_strided_slice %256 {offsets = [0, 256], sizes = [8, 128], strides = [1, 1]} : vector<8x384xf32> to vector<8x128xf32>
    %275 = arith.mulf %264, %274 : vector<8x128xf32>
    %276 = arith.addf %273, %275 : vector<8x128xf32>
    %277 = math.tanh %276 : vector<8x128xf32>
    %cst_99 = arith.constant 1.000000e+00 : f32
    %278 = vector.broadcast %cst_99 : f32 to vector<8x128xf32>
    %279 = arith.subf %278, %272 : vector<8x128xf32>
    %280 = arith.mulf %279, %277 : vector<8x128xf32>
    %281 = arith.mulf %272, %206 : vector<8x128xf32>
    %282 = arith.addf %280, %281 : vector<8x128xf32>
    %283 = arith.truncf %282 : vector<8x128xf32> to vector<8x128xbf16>
    %c0_100 = arith.constant 0 : index
    %c0_101 = arith.constant 0 : index
    %284 = vector.load %arg9[%c0_100, %c0_101] : memref<128x384xbf16, #tpu.memory_space<vmem>>, vector<128x384xbf16>
    %cst_102 = arith.constant dense<0.000000e+00> : vector<8x384xf32>
    %285 = tpu.matmul %283, %284, %cst_102 {dimension_numbers = #tpu.dot_dimension_numbers<[1], [0], [0], [1], [0, 0, 1, 1], [], []>} : vector<8x128xbf16>, vector<128x384xbf16>, vector<8x384xf32> -> vector<8x384xf32>
    %c0_103 = arith.constant 0 : index
    %c0_104 = arith.constant 0 : index
    %286 = vector.load %arg10[%c0_103, %c0_104] : memref<1x384xf32, #tpu.memory_space<vmem>>, vector<1x384xf32>
    %287 = vector.broadcast %286 : vector<1x384xf32> to vector<8x384xf32>
    %288 = arith.addf %285, %287 : vector<8x384xf32>
    %289 = arith.truncf %244 : vector<8x128xf32> to vector<8x128xbf16>
    %c0_105 = arith.constant 0 : index
    %c0_106 = arith.constant 0 : index
    %290 = vector.load %arg11[%c0_105, %c0_106] : memref<128x384xbf16, #tpu.memory_space<vmem>>, vector<128x384xbf16>
    %cst_107 = arith.constant dense<0.000000e+00> : vector<8x384xf32>
    %291 = tpu.matmul %289, %290, %cst_107 {dimension_numbers = #tpu.dot_dimension_numbers<[1], [0], [0], [1], [0, 0, 1, 1], [], []>} : vector<8x128xbf16>, vector<128x384xbf16>, vector<8x384xf32> -> vector<8x384xf32>
    %c0_108 = arith.constant 0 : index
    %c0_109 = arith.constant 0 : index
    %292 = vector.load %arg12[%c0_108, %c0_109] : memref<1x384xf32, #tpu.memory_space<vmem>>, vector<1x384xf32>
    %293 = vector.broadcast %292 : vector<1x384xf32> to vector<8x384xf32>
    %294 = arith.addf %291, %293 : vector<8x384xf32>
    %295 = vector.extract_strided_slice %288 {offsets = [0, 0], sizes = [8, 128], strides = [1, 1]} : vector<8x384xf32> to vector<8x128xf32>
    %296 = vector.extract_strided_slice %294 {offsets = [0, 0], sizes = [8, 128], strides = [1, 1]} : vector<8x384xf32> to vector<8x128xf32>
    %297 = arith.addf %295, %296 : vector<8x128xf32>
    %298 = arith.negf %297 : vector<8x128xf32>
    %299 = math.exp %298 : vector<8x128xf32>
    %cst_110 = arith.constant 1.000000e+00 : f32
    %300 = vector.broadcast %cst_110 : f32 to vector<8x128xf32>
    %301 = arith.addf %300, %299 : vector<8x128xf32>
    %302 = arith.divf %300, %301 : vector<8x128xf32>
    %303 = vector.extract_strided_slice %288 {offsets = [0, 128], sizes = [8, 128], strides = [1, 1]} : vector<8x384xf32> to vector<8x128xf32>
    %304 = vector.extract_strided_slice %294 {offsets = [0, 128], sizes = [8, 128], strides = [1, 1]} : vector<8x384xf32> to vector<8x128xf32>
    %305 = arith.addf %303, %304 : vector<8x128xf32>
    %306 = arith.negf %305 : vector<8x128xf32>
    %307 = math.exp %306 : vector<8x128xf32>
    %cst_111 = arith.constant 1.000000e+00 : f32
    %308 = vector.broadcast %cst_111 : f32 to vector<8x128xf32>
    %309 = arith.addf %308, %307 : vector<8x128xf32>
    %310 = arith.divf %308, %309 : vector<8x128xf32>
    %311 = vector.extract_strided_slice %288 {offsets = [0, 256], sizes = [8, 128], strides = [1, 1]} : vector<8x384xf32> to vector<8x128xf32>
    %312 = vector.extract_strided_slice %294 {offsets = [0, 256], sizes = [8, 128], strides = [1, 1]} : vector<8x384xf32> to vector<8x128xf32>
    %313 = arith.mulf %302, %312 : vector<8x128xf32>
    %314 = arith.addf %311, %313 : vector<8x128xf32>
    %315 = math.tanh %314 : vector<8x128xf32>
    %cst_112 = arith.constant 1.000000e+00 : f32
    %316 = vector.broadcast %cst_112 : f32 to vector<8x128xf32>
    %317 = arith.subf %316, %310 : vector<8x128xf32>
    %318 = arith.mulf %317, %315 : vector<8x128xf32>
    %319 = arith.mulf %310, %244 : vector<8x128xf32>
    %320 = arith.addf %318, %319 : vector<8x128xf32>
    %321 = arith.index_cast %247 : i32 to index
    %c0_113 = arith.constant 0 : index
    %322 = vector.load %arg19[%321, %c0_113] : memref<64x128xf32, #tpu.memory_space<vmem>>, vector<8x128xf32>
    tpu.vector_store %arg19[%321, %c0_113], %320 {strides = array<i32>} : memref<64x128xf32, #tpu.memory_space<vmem>>, vector<8x128xf32>,
    %c4_i32 = arith.constant 4 : i32
    %c8_i32_114 = arith.constant 8 : i32
    %323 = arith.muli %c4_i32, %c8_i32_114 : i32
    %324 = arith.index_cast %323 : i32 to index
    %c0_115 = arith.constant 0 : index
    %325 = vector.load %arg18[%324, %c0_115] : memref<64x384xf32, #tpu.memory_space<vmem>>, vector<8x384xf32>
    %326 = arith.addf %325, %13 : vector<8x384xf32>
    %327 = arith.truncf %282 : vector<8x128xf32> to vector<8x128xbf16>
    %c0_116 = arith.constant 0 : index
    %c0_117 = arith.constant 0 : index
    %328 = vector.load %arg7[%c0_116, %c0_117] : memref<128x384xbf16, #tpu.memory_space<vmem>>, vector<128x384xbf16>
    %cst_118 = arith.constant dense<0.000000e+00> : vector<8x384xf32>
    %329 = tpu.matmul %327, %328, %cst_118 {dimension_numbers = #tpu.dot_dimension_numbers<[1], [0], [0], [1], [0, 0, 1, 1], [], []>} : vector<8x128xbf16>, vector<128x384xbf16>, vector<8x384xf32> -> vector<8x384xf32>
    %c0_119 = arith.constant 0 : index
    %c0_120 = arith.constant 0 : index
    %330 = vector.load %arg8[%c0_119, %c0_120] : memref<1x384xf32, #tpu.memory_space<vmem>>, vector<1x384xf32>
    %331 = vector.broadcast %330 : vector<1x384xf32> to vector<8x384xf32>
    %332 = arith.addf %329, %331 : vector<8x384xf32>
    %333 = vector.extract_strided_slice %326 {offsets = [0, 0], sizes = [8, 128], strides = [1, 1]} : vector<8x384xf32> to vector<8x128xf32>
    %334 = vector.extract_strided_slice %332 {offsets = [0, 0], sizes = [8, 128], strides = [1, 1]} : vector<8x384xf32> to vector<8x128xf32>
    %335 = arith.addf %333, %334 : vector<8x128xf32>
    %336 = arith.negf %335 : vector<8x128xf32>
    %337 = math.exp %336 : vector<8x128xf32>
    %cst_121 = arith.constant 1.000000e+00 : f32
    %338 = vector.broadcast %cst_121 : f32 to vector<8x128xf32>
    %339 = arith.addf %338, %337 : vector<8x128xf32>
    %340 = arith.divf %338, %339 : vector<8x128xf32>
    %341 = vector.extract_strided_slice %326 {offsets = [0, 128], sizes = [8, 128], strides = [1, 1]} : vector<8x384xf32> to vector<8x128xf32>
    %342 = vector.extract_strided_slice %332 {offsets = [0, 128], sizes = [8, 128], strides = [1, 1]} : vector<8x384xf32> to vector<8x128xf32>
    %343 = arith.addf %341, %342 : vector<8x128xf32>
    %344 = arith.negf %343 : vector<8x128xf32>
    %345 = math.exp %344 : vector<8x128xf32>
    %cst_122 = arith.constant 1.000000e+00 : f32
    %346 = vector.broadcast %cst_122 : f32 to vector<8x128xf32>
    %347 = arith.addf %346, %345 : vector<8x128xf32>
    %348 = arith.divf %346, %347 : vector<8x128xf32>
    %349 = vector.extract_strided_slice %326 {offsets = [0, 256], sizes = [8, 128], strides = [1, 1]} : vector<8x384xf32> to vector<8x128xf32>
    %350 = vector.extract_strided_slice %332 {offsets = [0, 256], sizes = [8, 128], strides = [1, 1]} : vector<8x384xf32> to vector<8x128xf32>
    %351 = arith.mulf %340, %350 : vector<8x128xf32>
    %352 = arith.addf %349, %351 : vector<8x128xf32>
    %353 = math.tanh %352 : vector<8x128xf32>
    %cst_123 = arith.constant 1.000000e+00 : f32
    %354 = vector.broadcast %cst_123 : f32 to vector<8x128xf32>
    %355 = arith.subf %354, %348 : vector<8x128xf32>
    %356 = arith.mulf %355, %353 : vector<8x128xf32>
    %357 = arith.mulf %348, %282 : vector<8x128xf32>
    %358 = arith.addf %356, %357 : vector<8x128xf32>
    %359 = arith.truncf %358 : vector<8x128xf32> to vector<8x128xbf16>
    %c0_124 = arith.constant 0 : index
    %c0_125 = arith.constant 0 : index
    %360 = vector.load %arg9[%c0_124, %c0_125] : memref<128x384xbf16, #tpu.memory_space<vmem>>, vector<128x384xbf16>
    %cst_126 = arith.constant dense<0.000000e+00> : vector<8x384xf32>
    %361 = tpu.matmul %359, %360, %cst_126 {dimension_numbers = #tpu.dot_dimension_numbers<[1], [0], [0], [1], [0, 0, 1, 1], [], []>} : vector<8x128xbf16>, vector<128x384xbf16>, vector<8x384xf32> -> vector<8x384xf32>
    %c0_127 = arith.constant 0 : index
    %c0_128 = arith.constant 0 : index
    %362 = vector.load %arg10[%c0_127, %c0_128] : memref<1x384xf32, #tpu.memory_space<vmem>>, vector<1x384xf32>
    %363 = vector.broadcast %362 : vector<1x384xf32> to vector<8x384xf32>
    %364 = arith.addf %361, %363 : vector<8x384xf32>
    %365 = arith.truncf %320 : vector<8x128xf32> to vector<8x128xbf16>
    %c0_129 = arith.constant 0 : index
    %c0_130 = arith.constant 0 : index
    %366 = vector.load %arg11[%c0_129, %c0_130] : memref<128x384xbf16, #tpu.memory_space<vmem>>, vector<128x384xbf16>
    %cst_131 = arith.constant dense<0.000000e+00> : vector<8x384xf32>
    %367 = tpu.matmul %365, %366, %cst_131 {dimension_numbers = #tpu.dot_dimension_numbers<[1], [0], [0], [1], [0, 0, 1, 1], [], []>} : vector<8x128xbf16>, vector<128x384xbf16>, vector<8x384xf32> -> vector<8x384xf32>
    %c0_132 = arith.constant 0 : index
    %c0_133 = arith.constant 0 : index
    %368 = vector.load %arg12[%c0_132, %c0_133] : memref<1x384xf32, #tpu.memory_space<vmem>>, vector<1x384xf32>
    %369 = vector.broadcast %368 : vector<1x384xf32> to vector<8x384xf32>
    %370 = arith.addf %367, %369 : vector<8x384xf32>
    %371 = vector.extract_strided_slice %364 {offsets = [0, 0], sizes = [8, 128], strides = [1, 1]} : vector<8x384xf32> to vector<8x128xf32>
    %372 = vector.extract_strided_slice %370 {offsets = [0, 0], sizes = [8, 128], strides = [1, 1]} : vector<8x384xf32> to vector<8x128xf32>
    %373 = arith.addf %371, %372 : vector<8x128xf32>
    %374 = arith.negf %373 : vector<8x128xf32>
    %375 = math.exp %374 : vector<8x128xf32>
    %cst_134 = arith.constant 1.000000e+00 : f32
    %376 = vector.broadcast %cst_134 : f32 to vector<8x128xf32>
    %377 = arith.addf %376, %375 : vector<8x128xf32>
    %378 = arith.divf %376, %377 : vector<8x128xf32>
    %379 = vector.extract_strided_slice %364 {offsets = [0, 128], sizes = [8, 128], strides = [1, 1]} : vector<8x384xf32> to vector<8x128xf32>
    %380 = vector.extract_strided_slice %370 {offsets = [0, 128], sizes = [8, 128], strides = [1, 1]} : vector<8x384xf32> to vector<8x128xf32>
    %381 = arith.addf %379, %380 : vector<8x128xf32>
    %382 = arith.negf %381 : vector<8x128xf32>
    %383 = math.exp %382 : vector<8x128xf32>
    %cst_135 = arith.constant 1.000000e+00 : f32
    %384 = vector.broadcast %cst_135 : f32 to vector<8x128xf32>
    %385 = arith.addf %384, %383 : vector<8x128xf32>
    %386 = arith.divf %384, %385 : vector<8x128xf32>
    %387 = vector.extract_strided_slice %364 {offsets = [0, 256], sizes = [8, 128], strides = [1, 1]} : vector<8x384xf32> to vector<8x128xf32>
    %388 = vector.extract_strided_slice %370 {offsets = [0, 256], sizes = [8, 128], strides = [1, 1]} : vector<8x384xf32> to vector<8x128xf32>
    %389 = arith.mulf %378, %388 : vector<8x128xf32>
    %390 = arith.addf %387, %389 : vector<8x128xf32>
    %391 = math.tanh %390 : vector<8x128xf32>
    %cst_136 = arith.constant 1.000000e+00 : f32
    %392 = vector.broadcast %cst_136 : f32 to vector<8x128xf32>
    %393 = arith.subf %392, %386 : vector<8x128xf32>
    %394 = arith.mulf %393, %391 : vector<8x128xf32>
    %395 = arith.mulf %386, %320 : vector<8x128xf32>
    %396 = arith.addf %394, %395 : vector<8x128xf32>
    %397 = arith.index_cast %323 : i32 to index
    %c0_137 = arith.constant 0 : index
    %398 = vector.load %arg19[%397, %c0_137] : memref<64x128xf32, #tpu.memory_space<vmem>>, vector<8x128xf32>
    tpu.vector_store %arg19[%397, %c0_137], %396 {strides = array<i32>} : memref<64x128xf32, #tpu.memory_space<vmem>>, vector<8x128xf32>,
    %c5_i32 = arith.constant 5 : i32
    %c8_i32_138 = arith.constant 8 : i32
    %399 = arith.muli %c5_i32, %c8_i32_138 : i32
    %400 = arith.index_cast %399 : i32 to index
    %c0_139 = arith.constant 0 : index
    %401 = vector.load %arg18[%400, %c0_139] : memref<64x384xf32, #tpu.memory_space<vmem>>, vector<8x384xf32>
    %402 = arith.addf %401, %13 : vector<8x384xf32>
    %403 = arith.truncf %358 : vector<8x128xf32> to vector<8x128xbf16>
    %c0_140 = arith.constant 0 : index
    %c0_141 = arith.constant 0 : index
    %404 = vector.load %arg7[%c0_140, %c0_141] : memref<128x384xbf16, #tpu.memory_space<vmem>>, vector<128x384xbf16>
    %cst_142 = arith.constant dense<0.000000e+00> : vector<8x384xf32>
    %405 = tpu.matmul %403, %404, %cst_142 {dimension_numbers = #tpu.dot_dimension_numbers<[1], [0], [0], [1], [0, 0, 1, 1], [], []>} : vector<8x128xbf16>, vector<128x384xbf16>, vector<8x384xf32> -> vector<8x384xf32>
    %c0_143 = arith.constant 0 : index
    %c0_144 = arith.constant 0 : index
    %406 = vector.load %arg8[%c0_143, %c0_144] : memref<1x384xf32, #tpu.memory_space<vmem>>, vector<1x384xf32>
    %407 = vector.broadcast %406 : vector<1x384xf32> to vector<8x384xf32>
    %408 = arith.addf %405, %407 : vector<8x384xf32>
    %409 = vector.extract_strided_slice %402 {offsets = [0, 0], sizes = [8, 128], strides = [1, 1]} : vector<8x384xf32> to vector<8x128xf32>
    %410 = vector.extract_strided_slice %408 {offsets = [0, 0], sizes = [8, 128], strides = [1, 1]} : vector<8x384xf32> to vector<8x128xf32>
    %411 = arith.addf %409, %410 : vector<8x128xf32>
    %412 = arith.negf %411 : vector<8x128xf32>
    %413 = math.exp %412 : vector<8x128xf32>
    %cst_145 = arith.constant 1.000000e+00 : f32
    %414 = vector.broadcast %cst_145 : f32 to vector<8x128xf32>
    %415 = arith.addf %414, %413 : vector<8x128xf32>
    %416 = arith.divf %414, %415 : vector<8x128xf32>
    %417 = vector.extract_strided_slice %402 {offsets = [0, 128], sizes = [8, 128], strides = [1, 1]} : vector<8x384xf32> to vector<8x128xf32>
    %418 = vector.extract_strided_slice %408 {offsets = [0, 128], sizes = [8, 128], strides = [1, 1]} : vector<8x384xf32> to vector<8x128xf32>
    %419 = arith.addf %417, %418 : vector<8x128xf32>
    %420 = arith.negf %419 : vector<8x128xf32>
    %421 = math.exp %420 : vector<8x128xf32>
    %cst_146 = arith.constant 1.000000e+00 : f32
    %422 = vector.broadcast %cst_146 : f32 to vector<8x128xf32>
    %423 = arith.addf %422, %421 : vector<8x128xf32>
    %424 = arith.divf %422, %423 : vector<8x128xf32>
    %425 = vector.extract_strided_slice %402 {offsets = [0, 256], sizes = [8, 128], strides = [1, 1]} : vector<8x384xf32> to vector<8x128xf32>
    %426 = vector.extract_strided_slice %408 {offsets = [0, 256], sizes = [8, 128], strides = [1, 1]} : vector<8x384xf32> to vector<8x128xf32>
    %427 = arith.mulf %416, %426 : vector<8x128xf32>
    %428 = arith.addf %425, %427 : vector<8x128xf32>
    %429 = math.tanh %428 : vector<8x128xf32>
    %cst_147 = arith.constant 1.000000e+00 : f32
    %430 = vector.broadcast %cst_147 : f32 to vector<8x128xf32>
    %431 = arith.subf %430, %424 : vector<8x128xf32>
    %432 = arith.mulf %431, %429 : vector<8x128xf32>
    %433 = arith.mulf %424, %358 : vector<8x128xf32>
    %434 = arith.addf %432, %433 : vector<8x128xf32>
    %435 = arith.truncf %434 : vector<8x128xf32> to vector<8x128xbf16>
    %c0_148 = arith.constant 0 : index
    %c0_149 = arith.constant 0 : index
    %436 = vector.load %arg9[%c0_148, %c0_149] : memref<128x384xbf16, #tpu.memory_space<vmem>>, vector<128x384xbf16>
    %cst_150 = arith.constant dense<0.000000e+00> : vector<8x384xf32>
    %437 = tpu.matmul %435, %436, %cst_150 {dimension_numbers = #tpu.dot_dimension_numbers<[1], [0], [0], [1], [0, 0, 1, 1], [], []>} : vector<8x128xbf16>, vector<128x384xbf16>, vector<8x384xf32> -> vector<8x384xf32>
    %c0_151 = arith.constant 0 : index
    %c0_152 = arith.constant 0 : index
    %438 = vector.load %arg10[%c0_151, %c0_152] : memref<1x384xf32, #tpu.memory_space<vmem>>, vector<1x384xf32>
    %439 = vector.broadcast %438 : vector<1x384xf32> to vector<8x384xf32>
    %440 = arith.addf %437, %439 : vector<8x384xf32>
    %441 = arith.truncf %396 : vector<8x128xf32> to vector<8x128xbf16>
    %c0_153 = arith.constant 0 : index
    %c0_154 = arith.constant 0 : index
    %442 = vector.load %arg11[%c0_153, %c0_154] : memref<128x384xbf16, #tpu.memory_space<vmem>>, vector<128x384xbf16>
    %cst_155 = arith.constant dense<0.000000e+00> : vector<8x384xf32>
    %443 = tpu.matmul %441, %442, %cst_155 {dimension_numbers = #tpu.dot_dimension_numbers<[1], [0], [0], [1], [0, 0, 1, 1], [], []>} : vector<8x128xbf16>, vector<128x384xbf16>, vector<8x384xf32> -> vector<8x384xf32>
    %c0_156 = arith.constant 0 : index
    %c0_157 = arith.constant 0 : index
    %444 = vector.load %arg12[%c0_156, %c0_157] : memref<1x384xf32, #tpu.memory_space<vmem>>, vector<1x384xf32>
    %445 = vector.broadcast %444 : vector<1x384xf32> to vector<8x384xf32>
    %446 = arith.addf %443, %445 : vector<8x384xf32>
    %447 = vector.extract_strided_slice %440 {offsets = [0, 0], sizes = [8, 128], strides = [1, 1]} : vector<8x384xf32> to vector<8x128xf32>
    %448 = vector.extract_strided_slice %446 {offsets = [0, 0], sizes = [8, 128], strides = [1, 1]} : vector<8x384xf32> to vector<8x128xf32>
    %449 = arith.addf %447, %448 : vector<8x128xf32>
    %450 = arith.negf %449 : vector<8x128xf32>
    %451 = math.exp %450 : vector<8x128xf32>
    %cst_158 = arith.constant 1.000000e+00 : f32
    %452 = vector.broadcast %cst_158 : f32 to vector<8x128xf32>
    %453 = arith.addf %452, %451 : vector<8x128xf32>
    %454 = arith.divf %452, %453 : vector<8x128xf32>
    %455 = vector.extract_strided_slice %440 {offsets = [0, 128], sizes = [8, 128], strides = [1, 1]} : vector<8x384xf32> to vector<8x128xf32>
    %456 = vector.extract_strided_slice %446 {offsets = [0, 128], sizes = [8, 128], strides = [1, 1]} : vector<8x384xf32> to vector<8x128xf32>
    %457 = arith.addf %455, %456 : vector<8x128xf32>
    %458 = arith.negf %457 : vector<8x128xf32>
    %459 = math.exp %458 : vector<8x128xf32>
    %cst_159 = arith.constant 1.000000e+00 : f32
    %460 = vector.broadcast %cst_159 : f32 to vector<8x128xf32>
    %461 = arith.addf %460, %459 : vector<8x128xf32>
    %462 = arith.divf %460, %461 : vector<8x128xf32>
    %463 = vector.extract_strided_slice %440 {offsets = [0, 256], sizes = [8, 128], strides = [1, 1]} : vector<8x384xf32> to vector<8x128xf32>
    %464 = vector.extract_strided_slice %446 {offsets = [0, 256], sizes = [8, 128], strides = [1, 1]} : vector<8x384xf32> to vector<8x128xf32>
    %465 = arith.mulf %454, %464 : vector<8x128xf32>
    %466 = arith.addf %463, %465 : vector<8x128xf32>
    %467 = math.tanh %466 : vector<8x128xf32>
    %cst_160 = arith.constant 1.000000e+00 : f32
    %468 = vector.broadcast %cst_160 : f32 to vector<8x128xf32>
    %469 = arith.subf %468, %462 : vector<8x128xf32>
    %470 = arith.mulf %469, %467 : vector<8x128xf32>
    %471 = arith.mulf %462, %396 : vector<8x128xf32>
    %472 = arith.addf %470, %471 : vector<8x128xf32>
    %473 = arith.index_cast %399 : i32 to index
    %c0_161 = arith.constant 0 : index
    %474 = vector.load %arg19[%473, %c0_161] : memref<64x128xf32, #tpu.memory_space<vmem>>, vector<8x128xf32>
    tpu.vector_store %arg19[%473, %c0_161], %472 {strides = array<i32>} : memref<64x128xf32, #tpu.memory_space<vmem>>, vector<8x128xf32>,
    %c6_i32 = arith.constant 6 : i32
    %c8_i32_162 = arith.constant 8 : i32
    %475 = arith.muli %c6_i32, %c8_i32_162 : i32
    %476 = arith.index_cast %475 : i32 to index
    %c0_163 = arith.constant 0 : index
    %477 = vector.load %arg18[%476, %c0_163] : memref<64x384xf32, #tpu.memory_space<vmem>>, vector<8x384xf32>
    %478 = arith.addf %477, %13 : vector<8x384xf32>
    %479 = arith.truncf %434 : vector<8x128xf32> to vector<8x128xbf16>
    %c0_164 = arith.constant 0 : index
    %c0_165 = arith.constant 0 : index
    %480 = vector.load %arg7[%c0_164, %c0_165] : memref<128x384xbf16, #tpu.memory_space<vmem>>, vector<128x384xbf16>
    %cst_166 = arith.constant dense<0.000000e+00> : vector<8x384xf32>
    %481 = tpu.matmul %479, %480, %cst_166 {dimension_numbers = #tpu.dot_dimension_numbers<[1], [0], [0], [1], [0, 0, 1, 1], [], []>} : vector<8x128xbf16>, vector<128x384xbf16>, vector<8x384xf32> -> vector<8x384xf32>
    %c0_167 = arith.constant 0 : index
    %c0_168 = arith.constant 0 : index
    %482 = vector.load %arg8[%c0_167, %c0_168] : memref<1x384xf32, #tpu.memory_space<vmem>>, vector<1x384xf32>
    %483 = vector.broadcast %482 : vector<1x384xf32> to vector<8x384xf32>
    %484 = arith.addf %481, %483 : vector<8x384xf32>
    %485 = vector.extract_strided_slice %478 {offsets = [0, 0], sizes = [8, 128], strides = [1, 1]} : vector<8x384xf32> to vector<8x128xf32>
    %486 = vector.extract_strided_slice %484 {offsets = [0, 0], sizes = [8, 128], strides = [1, 1]} : vector<8x384xf32> to vector<8x128xf32>
    %487 = arith.addf %485, %486 : vector<8x128xf32>
    %488 = arith.negf %487 : vector<8x128xf32>
    %489 = math.exp %488 : vector<8x128xf32>
    %cst_169 = arith.constant 1.000000e+00 : f32
    %490 = vector.broadcast %cst_169 : f32 to vector<8x128xf32>
    %491 = arith.addf %490, %489 : vector<8x128xf32>
    %492 = arith.divf %490, %491 : vector<8x128xf32>
    %493 = vector.extract_strided_slice %478 {offsets = [0, 128], sizes = [8, 128], strides = [1, 1]} : vector<8x384xf32> to vector<8x128xf32>
    %494 = vector.extract_strided_slice %484 {offsets = [0, 128], sizes = [8, 128], strides = [1, 1]} : vector<8x384xf32> to vector<8x128xf32>
    %495 = arith.addf %493, %494 : vector<8x128xf32>
    %496 = arith.negf %495 : vector<8x128xf32>
    %497 = math.exp %496 : vector<8x128xf32>
    %cst_170 = arith.constant 1.000000e+00 : f32
    %498 = vector.broadcast %cst_170 : f32 to vector<8x128xf32>
    %499 = arith.addf %498, %497 : vector<8x128xf32>
    %500 = arith.divf %498, %499 : vector<8x128xf32>
    %501 = vector.extract_strided_slice %478 {offsets = [0, 256], sizes = [8, 128], strides = [1, 1]} : vector<8x384xf32> to vector<8x128xf32>
    %502 = vector.extract_strided_slice %484 {offsets = [0, 256], sizes = [8, 128], strides = [1, 1]} : vector<8x384xf32> to vector<8x128xf32>
    %503 = arith.mulf %492, %502 : vector<8x128xf32>
    %504 = arith.addf %501, %503 : vector<8x128xf32>
    %505 = math.tanh %504 : vector<8x128xf32>
    %cst_171 = arith.constant 1.000000e+00 : f32
    %506 = vector.broadcast %cst_171 : f32 to vector<8x128xf32>
    %507 = arith.subf %506, %500 : vector<8x128xf32>
    %508 = arith.mulf %507, %505 : vector<8x128xf32>
    %509 = arith.mulf %500, %434 : vector<8x128xf32>
    %510 = arith.addf %508, %509 : vector<8x128xf32>
    %511 = arith.truncf %510 : vector<8x128xf32> to vector<8x128xbf16>
    %c0_172 = arith.constant 0 : index
    %c0_173 = arith.constant 0 : index
    %512 = vector.load %arg9[%c0_172, %c0_173] : memref<128x384xbf16, #tpu.memory_space<vmem>>, vector<128x384xbf16>
    %cst_174 = arith.constant dense<0.000000e+00> : vector<8x384xf32>
    %513 = tpu.matmul %511, %512, %cst_174 {dimension_numbers = #tpu.dot_dimension_numbers<[1], [0], [0], [1], [0, 0, 1, 1], [], []>} : vector<8x128xbf16>, vector<128x384xbf16>, vector<8x384xf32> -> vector<8x384xf32>
    %c0_175 = arith.constant 0 : index
    %c0_176 = arith.constant 0 : index
    %514 = vector.load %arg10[%c0_175, %c0_176] : memref<1x384xf32, #tpu.memory_space<vmem>>, vector<1x384xf32>
    %515 = vector.broadcast %514 : vector<1x384xf32> to vector<8x384xf32>
    %516 = arith.addf %513, %515 : vector<8x384xf32>
    %517 = arith.truncf %472 : vector<8x128xf32> to vector<8x128xbf16>
    %c0_177 = arith.constant 0 : index
    %c0_178 = arith.constant 0 : index
    %518 = vector.load %arg11[%c0_177, %c0_178] : memref<128x384xbf16, #tpu.memory_space<vmem>>, vector<128x384xbf16>
    %cst_179 = arith.constant dense<0.000000e+00> : vector<8x384xf32>
    %519 = tpu.matmul %517, %518, %cst_179 {dimension_numbers = #tpu.dot_dimension_numbers<[1], [0], [0], [1], [0, 0, 1, 1], [], []>} : vector<8x128xbf16>, vector<128x384xbf16>, vector<8x384xf32> -> vector<8x384xf32>
    %c0_180 = arith.constant 0 : index
    %c0_181 = arith.constant 0 : index
    %520 = vector.load %arg12[%c0_180, %c0_181] : memref<1x384xf32, #tpu.memory_space<vmem>>, vector<1x384xf32>
    %521 = vector.broadcast %520 : vector<1x384xf32> to vector<8x384xf32>
    %522 = arith.addf %519, %521 : vector<8x384xf32>
    %523 = vector.extract_strided_slice %516 {offsets = [0, 0], sizes = [8, 128], strides = [1, 1]} : vector<8x384xf32> to vector<8x128xf32>
    %524 = vector.extract_strided_slice %522 {offsets = [0, 0], sizes = [8, 128], strides = [1, 1]} : vector<8x384xf32> to vector<8x128xf32>
    %525 = arith.addf %523, %524 : vector<8x128xf32>
    %526 = arith.negf %525 : vector<8x128xf32>
    %527 = math.exp %526 : vector<8x128xf32>
    %cst_182 = arith.constant 1.000000e+00 : f32
    %528 = vector.broadcast %cst_182 : f32 to vector<8x128xf32>
    %529 = arith.addf %528, %527 : vector<8x128xf32>
    %530 = arith.divf %528, %529 : vector<8x128xf32>
    %531 = vector.extract_strided_slice %516 {offsets = [0, 128], sizes = [8, 128], strides = [1, 1]} : vector<8x384xf32> to vector<8x128xf32>
    %532 = vector.extract_strided_slice %522 {offsets = [0, 128], sizes = [8, 128], strides = [1, 1]} : vector<8x384xf32> to vector<8x128xf32>
    %533 = arith.addf %531, %532 : vector<8x128xf32>
    %534 = arith.negf %533 : vector<8x128xf32>
    %535 = math.exp %534 : vector<8x128xf32>
    %cst_183 = arith.constant 1.000000e+00 : f32
    %536 = vector.broadcast %cst_183 : f32 to vector<8x128xf32>
    %537 = arith.addf %536, %535 : vector<8x128xf32>
    %538 = arith.divf %536, %537 : vector<8x128xf32>
    %539 = vector.extract_strided_slice %516 {offsets = [0, 256], sizes = [8, 128], strides = [1, 1]} : vector<8x384xf32> to vector<8x128xf32>
    %540 = vector.extract_strided_slice %522 {offsets = [0, 256], sizes = [8, 128], strides = [1, 1]} : vector<8x384xf32> to vector<8x128xf32>
    %541 = arith.mulf %530, %540 : vector<8x128xf32>
    %542 = arith.addf %539, %541 : vector<8x128xf32>
    %543 = math.tanh %542 : vector<8x128xf32>
    %cst_184 = arith.constant 1.000000e+00 : f32
    %544 = vector.broadcast %cst_184 : f32 to vector<8x128xf32>
    %545 = arith.subf %544, %538 : vector<8x128xf32>
    %546 = arith.mulf %545, %543 : vector<8x128xf32>
    %547 = arith.mulf %538, %472 : vector<8x128xf32>
    %548 = arith.addf %546, %547 : vector<8x128xf32>
    %549 = arith.index_cast %475 : i32 to index
    %c0_185 = arith.constant 0 : index
    %550 = vector.load %arg19[%549, %c0_185] : memref<64x128xf32, #tpu.memory_space<vmem>>, vector<8x128xf32>
    tpu.vector_store %arg19[%549, %c0_185], %548 {strides = array<i32>} : memref<64x128xf32, #tpu.memory_space<vmem>>, vector<8x128xf32>,
    %c7_i32 = arith.constant 7 : i32
    %c8_i32_186 = arith.constant 8 : i32
    %551 = arith.muli %c7_i32, %c8_i32_186 : i32
    %552 = arith.index_cast %551 : i32 to index
    %c0_187 = arith.constant 0 : index
    %553 = vector.load %arg18[%552, %c0_187] : memref<64x384xf32, #tpu.memory_space<vmem>>, vector<8x384xf32>
    %554 = arith.addf %553, %13 : vector<8x384xf32>
    %555 = arith.truncf %510 : vector<8x128xf32> to vector<8x128xbf16>
    %c0_188 = arith.constant 0 : index
    %c0_189 = arith.constant 0 : index
    %556 = vector.load %arg7[%c0_188, %c0_189] : memref<128x384xbf16, #tpu.memory_space<vmem>>, vector<128x384xbf16>
    %cst_190 = arith.constant dense<0.000000e+00> : vector<8x384xf32>
    %557 = tpu.matmul %555, %556, %cst_190 {dimension_numbers = #tpu.dot_dimension_numbers<[1], [0], [0], [1], [0, 0, 1, 1], [], []>} : vector<8x128xbf16>, vector<128x384xbf16>, vector<8x384xf32> -> vector<8x384xf32>
    %c0_191 = arith.constant 0 : index
    %c0_192 = arith.constant 0 : index
    %558 = vector.load %arg8[%c0_191, %c0_192] : memref<1x384xf32, #tpu.memory_space<vmem>>, vector<1x384xf32>
    %559 = vector.broadcast %558 : vector<1x384xf32> to vector<8x384xf32>
    %560 = arith.addf %557, %559 : vector<8x384xf32>
    %561 = vector.extract_strided_slice %554 {offsets = [0, 0], sizes = [8, 128], strides = [1, 1]} : vector<8x384xf32> to vector<8x128xf32>
    %562 = vector.extract_strided_slice %560 {offsets = [0, 0], sizes = [8, 128], strides = [1, 1]} : vector<8x384xf32> to vector<8x128xf32>
    %563 = arith.addf %561, %562 : vector<8x128xf32>
    %564 = arith.negf %563 : vector<8x128xf32>
    %565 = math.exp %564 : vector<8x128xf32>
    %cst_193 = arith.constant 1.000000e+00 : f32
    %566 = vector.broadcast %cst_193 : f32 to vector<8x128xf32>
    %567 = arith.addf %566, %565 : vector<8x128xf32>
    %568 = arith.divf %566, %567 : vector<8x128xf32>
    %569 = vector.extract_strided_slice %554 {offsets = [0, 128], sizes = [8, 128], strides = [1, 1]} : vector<8x384xf32> to vector<8x128xf32>
    %570 = vector.extract_strided_slice %560 {offsets = [0, 128], sizes = [8, 128], strides = [1, 1]} : vector<8x384xf32> to vector<8x128xf32>
    %571 = arith.addf %569, %570 : vector<8x128xf32>
    %572 = arith.negf %571 : vector<8x128xf32>
    %573 = math.exp %572 : vector<8x128xf32>
    %cst_194 = arith.constant 1.000000e+00 : f32
    %574 = vector.broadcast %cst_194 : f32 to vector<8x128xf32>
    %575 = arith.addf %574, %573 : vector<8x128xf32>
    %576 = arith.divf %574, %575 : vector<8x128xf32>
    %577 = vector.extract_strided_slice %554 {offsets = [0, 256], sizes = [8, 128], strides = [1, 1]} : vector<8x384xf32> to vector<8x128xf32>
    %578 = vector.extract_strided_slice %560 {offsets = [0, 256], sizes = [8, 128], strides = [1, 1]} : vector<8x384xf32> to vector<8x128xf32>
    %579 = arith.mulf %568, %578 : vector<8x128xf32>
    %580 = arith.addf %577, %579 : vector<8x128xf32>
    %581 = math.tanh %580 : vector<8x128xf32>
    %cst_195 = arith.constant 1.000000e+00 : f32
    %582 = vector.broadcast %cst_195 : f32 to vector<8x128xf32>
    %583 = arith.subf %582, %576 : vector<8x128xf32>
    %584 = arith.mulf %583, %581 : vector<8x128xf32>
    %585 = arith.mulf %576, %510 : vector<8x128xf32>
    %586 = arith.addf %584, %585 : vector<8x128xf32>
    %587 = arith.truncf %586 : vector<8x128xf32> to vector<8x128xbf16>
    %c0_196 = arith.constant 0 : index
    %c0_197 = arith.constant 0 : index
    %588 = vector.load %arg9[%c0_196, %c0_197] : memref<128x384xbf16, #tpu.memory_space<vmem>>, vector<128x384xbf16>
    %cst_198 = arith.constant dense<0.000000e+00> : vector<8x384xf32>
    %589 = tpu.matmul %587, %588, %cst_198 {dimension_numbers = #tpu.dot_dimension_numbers<[1], [0], [0], [1], [0, 0, 1, 1], [], []>} : vector<8x128xbf16>, vector<128x384xbf16>, vector<8x384xf32> -> vector<8x384xf32>
    %c0_199 = arith.constant 0 : index
    %c0_200 = arith.constant 0 : index
    %590 = vector.load %arg10[%c0_199, %c0_200] : memref<1x384xf32, #tpu.memory_space<vmem>>, vector<1x384xf32>
    %591 = vector.broadcast %590 : vector<1x384xf32> to vector<8x384xf32>
    %592 = arith.addf %589, %591 : vector<8x384xf32>
    %593 = arith.truncf %548 : vector<8x128xf32> to vector<8x128xbf16>
    %c0_201 = arith.constant 0 : index
    %c0_202 = arith.constant 0 : index
    %594 = vector.load %arg11[%c0_201, %c0_202] : memref<128x384xbf16, #tpu.memory_space<vmem>>, vector<128x384xbf16>
    %cst_203 = arith.constant dense<0.000000e+00> : vector<8x384xf32>
    %595 = tpu.matmul %593, %594, %cst_203 {dimension_numbers = #tpu.dot_dimension_numbers<[1], [0], [0], [1], [0, 0, 1, 1], [], []>} : vector<8x128xbf16>, vector<128x384xbf16>, vector<8x384xf32> -> vector<8x384xf32>
    %c0_204 = arith.constant 0 : index
    %c0_205 = arith.constant 0 : index
    %596 = vector.load %arg12[%c0_204, %c0_205] : memref<1x384xf32, #tpu.memory_space<vmem>>, vector<1x384xf32>
    %597 = vector.broadcast %596 : vector<1x384xf32> to vector<8x384xf32>
    %598 = arith.addf %595, %597 : vector<8x384xf32>
    %599 = vector.extract_strided_slice %592 {offsets = [0, 0], sizes = [8, 128], strides = [1, 1]} : vector<8x384xf32> to vector<8x128xf32>
    %600 = vector.extract_strided_slice %598 {offsets = [0, 0], sizes = [8, 128], strides = [1, 1]} : vector<8x384xf32> to vector<8x128xf32>
    %601 = arith.addf %599, %600 : vector<8x128xf32>
    %602 = arith.negf %601 : vector<8x128xf32>
    %603 = math.exp %602 : vector<8x128xf32>
    %cst_206 = arith.constant 1.000000e+00 : f32
    %604 = vector.broadcast %cst_206 : f32 to vector<8x128xf32>
    %605 = arith.addf %604, %603 : vector<8x128xf32>
    %606 = arith.divf %604, %605 : vector<8x128xf32>
    %607 = vector.extract_strided_slice %592 {offsets = [0, 128], sizes = [8, 128], strides = [1, 1]} : vector<8x384xf32> to vector<8x128xf32>
    %608 = vector.extract_strided_slice %598 {offsets = [0, 128], sizes = [8, 128], strides = [1, 1]} : vector<8x384xf32> to vector<8x128xf32>
    %609 = arith.addf %607, %608 : vector<8x128xf32>
    %610 = arith.negf %609 : vector<8x128xf32>
    %611 = math.exp %610 : vector<8x128xf32>
    %cst_207 = arith.constant 1.000000e+00 : f32
    %612 = vector.broadcast %cst_207 : f32 to vector<8x128xf32>
    %613 = arith.addf %612, %611 : vector<8x128xf32>
    %614 = arith.divf %612, %613 : vector<8x128xf32>
    %615 = vector.extract_strided_slice %592 {offsets = [0, 256], sizes = [8, 128], strides = [1, 1]} : vector<8x384xf32> to vector<8x128xf32>
    %616 = vector.extract_strided_slice %598 {offsets = [0, 256], sizes = [8, 128], strides = [1, 1]} : vector<8x384xf32> to vector<8x128xf32>
    %617 = arith.mulf %606, %616 : vector<8x128xf32>
    %618 = arith.addf %615, %617 : vector<8x128xf32>
    %619 = math.tanh %618 : vector<8x128xf32>
    %cst_208 = arith.constant 1.000000e+00 : f32
    %620 = vector.broadcast %cst_208 : f32 to vector<8x128xf32>
    %621 = arith.subf %620, %614 : vector<8x128xf32>
    %622 = arith.mulf %621, %619 : vector<8x128xf32>
    %623 = arith.mulf %614, %548 : vector<8x128xf32>
    %624 = arith.addf %622, %623 : vector<8x128xf32>
    %625 = arith.index_cast %551 : i32 to index
    %c0_209 = arith.constant 0 : index
    %626 = vector.load %arg19[%625, %c0_209] : memref<64x128xf32, #tpu.memory_space<vmem>>, vector<8x128xf32>
    tpu.vector_store %arg19[%625, %c0_209], %624 {strides = array<i32>} : memref<64x128xf32, #tpu.memory_space<vmem>>, vector<8x128xf32>,
    %c8_i32_210 = arith.constant 8 : i32
    %c0_211 = arith.constant 0 : index
    %c0_212 = arith.constant 0 : index
    %627 = vector.load %arg19[%c0_211, %c0_212] : memref<64x128xf32, #tpu.memory_space<vmem>>, vector<64x128xf32>
    %628 = arith.truncf %627 : vector<64x128xf32> to vector<64x128xbf16>
    %c0_213 = arith.constant 0 : index
    %c0_214 = arith.constant 0 : index
    %629 = vector.load %arg13[%c0_213, %c0_214] : memref<128x128xbf16, #tpu.memory_space<vmem>>, vector<128x128xbf16>
    %cst_215 = arith.constant dense<0.000000e+00> : vector<64x128xf32>
    %630 = tpu.matmul %628, %629, %cst_215 {dimension_numbers = #tpu.dot_dimension_numbers<[1], [0], [0], [1], [0, 0, 1, 1], [], []>} : vector<64x128xbf16>, vector<128x128xbf16>, vector<64x128xf32> -> vector<64x128xf32>
    %c0_216 = arith.constant 0 : index
    %c0_217 = arith.constant 0 : index
    %631 = vector.load %arg14[%c0_216, %c0_217] : memref<1x128xf32, #tpu.memory_space<vmem>>, vector<1x128xf32>
    %632 = vector.broadcast %631 : vector<1x128xf32> to vector<64x128xf32>
    %633 = arith.addf %630, %632 : vector<64x128xf32>
    %cst_218 = arith.constant 0.000000e+00 : f32
    %634 = vector.broadcast %cst_218 : f32 to vector<64x128xf32>
    %635 = arith.maximumf %633, %634 : vector<64x128xf32>
    %636 = arith.truncf %635 : vector<64x128xf32> to vector<64x128xbf16>
    %c0_219 = arith.constant 0 : index
    %c0_220 = arith.constant 0 : index
    %637 = vector.load %arg15[%c0_219, %c0_220] : memref<128x48xbf16, #tpu.memory_space<vmem>>, vector<128x48xbf16>
    %cst_221 = arith.constant dense<0.000000e+00> : vector<64x48xf32>
    %638 = tpu.matmul %636, %637, %cst_221 {dimension_numbers = #tpu.dot_dimension_numbers<[1], [0], [0], [1], [0, 0, 1, 1], [], []>} : vector<64x128xbf16>, vector<128x48xbf16>, vector<64x48xf32> -> vector<64x48xf32>
    %c0_222 = arith.constant 0 : index
    %c0_223 = arith.constant 0 : index
    %639 = vector.load %arg16[%c0_222, %c0_223] : memref<1x48xf32, #tpu.memory_space<vmem>>, vector<1x48xf32>
    %640 = vector.broadcast %639 : vector<1x48xf32> to vector<64x48xf32>
    %641 = arith.addf %638, %640 : vector<64x48xf32>
    %642 = vector.extract_strided_slice %641 {offsets = [0, 0], sizes = [64, 8], strides = [1, 1]} : vector<64x48xf32> to vector<64x8xf32>
    %cst_224 = arith.constant dense<0xFF800000> : vector<64xf32>
    %643 = vector.multi_reduction <maximumf>, %642, %cst_224 [1] : vector<64x8xf32> to vector<64xf32>
    %644 = vector.shape_cast %643 : vector<64xf32> to vector<64x1xf32>
    %645 = vector.broadcast %644 : vector<64x1xf32> to vector<64x8xf32>
    %646 = arith.subf %642, %645 : vector<64x8xf32>
    %647 = math.exp %646 : vector<64x8xf32>
    %cst_225 = arith.constant dense<0.000000e+00> : vector<64xf32>
    %648 = vector.multi_reduction <add>, %647, %cst_225 [1] : vector<64x8xf32> to vector<64xf32>
    %649 = vector.shape_cast %648 : vector<64xf32> to vector<64x1xf32>
    %650 = tpu.reciprocal %649 {approx = true} : vector<64x1xf32> -> vector<64x1xf32>
    %651 = vector.broadcast %650 : vector<64x1xf32> to vector<64x8xf32>
    %652 = arith.mulf %647, %651 : vector<64x8xf32>
    %c0_226 = arith.constant 0 : index
    %c0_227 = arith.constant 0 : index
    %653 = vector.load %arg17[%c0_226, %c0_227] : memref<64x48xf32, #tpu.memory_space<vmem>>, vector<64x8xf32>
    tpu.vector_store %arg17[%c0_226, %c0_227], %652 {strides = array<i32>} : memref<64x48xf32, #tpu.memory_space<vmem>>, vector<64x8xf32>,
    %654 = vector.extract_strided_slice %641 {offsets = [0, 8], sizes = [64, 16], strides = [1, 1]} : vector<64x48xf32> to vector<64x16xf32>
    %c0_228 = arith.constant 0 : index
    %c8 = arith.constant 8 : index
    %655 = vector.load %arg17[%c0_228, %c8] : memref<64x48xf32, #tpu.memory_space<vmem>>, vector<64x16xf32>
    tpu.vector_store %arg17[%c0_228, %c8], %654 {strides = array<i32>} : memref<64x48xf32, #tpu.memory_space<vmem>>, vector<64x16xf32>,
    %656 = vector.extract_strided_slice %641 {offsets = [0, 24], sizes = [64, 24], strides = [1, 1]} : vector<64x48xf32> to vector<64x24xf32>
    %cst_229 = arith.constant 0.000000e+00 : f32
    %657 = vector.broadcast %cst_229 : f32 to vector<64x24xf32>
    %658 = arith.maximumf %656, %657 : vector<64x24xf32>
    %659 = vector.broadcast %cst_229 : f32 to vector<64x24xf32>
    %660 = arith.subf %656, %659 : vector<64x24xf32>
    %661 = arith.cmpf one, %660, %660 : vector<64x24xf32>
    %662 = vector.broadcast %cst_229 : f32 to vector<64x24xf32>
    %663 = arith.addf %656, %662 : vector<64x24xf32>
    %664 = math.absf %660 : vector<64x24xf32>
    %cst_230 = arith.constant 0.000000e+00 : f32
    %665 = vector.broadcast %cst_230 : f32 to vector<64x24xf32>
    %666 = arith.subf %665, %664 : vector<64x24xf32>
    %667 = math.exp %666 : vector<64x24xf32>
    %668 = math.log1p %667 : vector<64x24xf32>
    %669 = arith.addf %658, %668 : vector<64x24xf32>
    %670 = arith.select %661, %663, %669 : vector<64x24xi1>, vector<64x24xf32>
    %cst_231 = arith.constant 2.22044605E-16 : f32
    %671 = vector.broadcast %cst_231 : f32 to vector<64x24xf32>
    %672 = arith.addf %670, %671 : vector<64x24xf32>
    %c0_232 = arith.constant 0 : index
    %c24 = arith.constant 24 : index
    %673 = vector.load %arg17[%c0_232, %c24] : memref<64x48xf32, #tpu.memory_space<vmem>>, vector<64x24xf32>
    tpu.vector_store %arg17[%c0_232, %c24], %672 {strides = array<i32>} : memref<64x48xf32, #tpu.memory_space<vmem>>, vector<64x24xf32>,
    return
  }
}

</mosaic_0001>

<llo_original>
// kernel: tpu_custom_call.1
$region0: #{tpu_custom_call.1}
  #allocation0 [shape = 'u32[]', space=smem, size = 0x4, offset = 0x4, fixed_abs, tag = 'smem constant byte address 0x4 - core index']
  #allocation1 [shape = 'u32[144,128]{1,0:T(1,128)}', space=vmem, size = 0x12000, scoped, tag = 'internal scratch']
  #allocation2 [shape = 'f32[64,384]{1,0:T(8,128)}', space=vmem, size = 0x18000, scoped, tag = 'scratch operand']
  #allocation3 [shape = 'f32[64,128]{1,0:T(8,128)}', space=vmem, size = 0x8000, scoped, tag = 'scratch operand']
  %s0 = inlined_call_operand.vmem [shape: bf16[64,2], index: 0, kind: input, shape index: {}]
  %s1 = inlined_call_operand.hbm [shape: bf16[8,16], index: 1, kind: input, shape index: {}]
  %s2 = inlined_call_operand.hbm [shape: bf16[16,32], index: 2, kind: input, shape index: {}]
  %s3 = inlined_call_operand.hbm [shape: f32[1,32], index: 3, kind: input, shape index: {}]
  %s4 = inlined_call_operand.vmem [shape: bf16[32,384], index: 4, kind: input, shape index: {}]
  %s5 = inlined_call_operand.vmem [shape: bf16[2,384], index: 5, kind: input, shape index: {}]
  %s6 = inlined_call_operand.vmem [shape: f32[1,384], index: 6, kind: input, shape index: {}]
  %s7 = inlined_call_operand.hbm [shape: bf16[128,384], index: 7, kind: input, shape index: {}]
  %s8 = inlined_call_operand.vmem [shape: f32[1,384], index: 8, kind: input, shape index: {}]
  %s9 = inlined_call_operand.hbm [shape: bf16[128,384], index: 9, kind: input, shape index: {}]
  %s10 = inlined_call_operand.vmem [shape: f32[1,384], index: 10, kind: input, shape index: {}]
  %s11 = inlined_call_operand.hbm [shape: bf16[128,384], index: 11, kind: input, shape index: {}]
  %s12 = inlined_call_operand.vmem [shape: f32[1,384], index: 12, kind: input, shape index: {}]
  %s13 = inlined_call_operand.vmem [shape: bf16[128,128], index: 13, kind: input, shape index: {}]
  %s14 = inlined_call_operand.vmem [shape: f32[1,128], index: 14, kind: input, shape index: {}]
  %s15 = inlined_call_operand.vmem [shape: bf16[128,48], index: 15, kind: input, shape index: {}]
  %s16 = inlined_call_operand.vmem [shape: f32[1,48], index: 16, kind: input, shape index: {}]
  %s17 = inlined_call_operand.vmem [shape: f32[64,48], index: 17, kind: output, shape index: {}]
  %s18 = sld [smem:[#allocation0]]
  $region102: #{tpu_custom_call.1} parent=0
    _
  %s20 = ssub.s32 1, %s18
  %s21 = scalar_select 0, %s20, %s18
  $region1: #{tpu_custom_call.1} parent=0
    #allocation4 [shape = 'u8[2048]{0}', space=vmem, size = 0x800, scoped, tag = 'input window, operand 1, single buffered']
    #allocation5 [shape = 's32[1]{0}', space=sflag, size = 0x4, scoped, tag = 'scoped memory for tpu_custom_call.1']
    #allocation6 [shape = 'u8[4096]{0}', space=vmem, size = 0x1000, scoped, tag = 'input window, operand 2, single buffered']
    #allocation7 [shape = 's32[1]{0}', space=sflag, size = 0x4, scoped, tag = 'scoped memory for tpu_custom_call.1']
    #allocation8 [shape = 'u8[512]{0}', space=vmem, size = 0x400, scoped, tag = 'input window, operand 3, single buffered']
    #allocation9 [shape = 'u8[98304]{0}', space=vmem, size = 0x18000, scoped, tag = 'input window, operand 7, single buffered']
    #allocation10 [shape = 's32[1]{0}', space=sflag, size = 0x4, scoped, tag = 'scoped memory for tpu_custom_call.1']
    #allocation11 [shape = 'u8[98304]{0}', space=vmem, size = 0x18000, scoped, tag = 'input window, operand 9, single buffered']
    #allocation12 [shape = 'u8[98304]{0}', space=vmem, size = 0x18000, scoped, tag = 'input window, operand 11, single buffered']
    #allocation13 [shape = 's32[1]{0}', space=sflag, size = 0x4, scoped, tag = 'scoped memory for tpu_custom_call.1']
    %22 = vsyncpa [#allocation5], 0
    %23 = vsyncpa [#allocation7], 0
    %24 = vsyncpa [#allocation10], 0
    %25 = vsyncpa [#allocation13], 0
    // Predicated region
    $region2: #{tpu_custom_call.1} parent=1 // pred_check
      _
    $region3: #{tpu_custom_call.1} parent=1 // pred_check_branch
      %27 = sbr.rel (0) target = $region5
    $region4: #{tpu_custom_call.1} parent=1 // pred_region
      _
    $region5: #{tpu_custom_call.1} parent=1 // pred_fallthru
      _
    // Predicated region
    $region6: #{tpu_custom_call.1} parent=1 // pred_check
      _
    $region7: #{tpu_custom_call.1} parent=1 // pred_check_branch
      %29 = sbr.rel (0) target = $region9
    $region8: #{tpu_custom_call.1} parent=1 // pred_region
      %s31 = ssub.s32 64, 64
      %32 = vsyncadd [#allocation5], %s31
      %s34 = sshll.u32 [#allocation4], 4
      %s35 = int_to_ptr.vmem [resolvable:$true] %s34
      %37 = dma.hbm_to_vmem [thread:$0]  %s1, 64, %s35, [#allocation5]
    $region9: #{tpu_custom_call.1} parent=1 // pred_fallthru
      _
    // Predicated region
    $region10: #{tpu_custom_call.1} parent=1 // pred_check
      _
    $region11: #{tpu_custom_call.1} parent=1 // pred_check_branch
      %39 = sbr.rel (0) target = $region13
    $region12: #{tpu_custom_call.1} parent=1 // pred_region
      %s41 = ssub.s32 128, 128
      %42 = vsyncadd [#allocation7], %s41
      %s43 = sshll.u32 [#allocation6], 4
      %s44 = int_to_ptr.vmem [resolvable:$true] %s43
      %49 = dma.hbm_to_vmem [thread:$0]  %s2, 128, %s44, [#allocation7], 64, 64, 4
    $region13: #{tpu_custom_call.1} parent=1 // pred_fallthru
      _
    // Predicated region
    $region14: #{tpu_custom_call.1} parent=1 // pred_check
      _
    $region15: #{tpu_custom_call.1} parent=1 // pred_check_branch
      %51 = sbr.rel (0) target = $region17
    $region16: #{tpu_custom_call.1} parent=1 // pred_region
      %s53 = ssub.s32 16, 16
      %54 = vsyncadd [#allocation7], %s53
      %s56 = sshll.u32 [#allocation8], 4
      %s57 = int_to_ptr.vmem [resolvable:$true] %s56
      %59 = dma.hbm_to_vmem [thread:$0]  %s3, 16, %s57, [#allocation7]
    $region17: #{tpu_custom_call.1} parent=1 // pred_fallthru
      _
    // Predicated region
    $region18: #{tpu_custom_call.1} parent=1 // pred_check
      _
    $region19: #{tpu_custom_call.1} parent=1 // pred_check_branch
      %61 = sbr.rel (0) target = $region21
    $region20: #{tpu_custom_call.1} parent=1 // pred_region
      _
    $region21: #{tpu_custom_call.1} parent=1 // pred_fallthru
      _
    // Predicated region
    $region22: #{tpu_custom_call.1} parent=1 // pred_check
      _
    $region23: #{tpu_custom_call.1} parent=1 // pred_check_branch
      %63 = sbr.rel (0) target = $region25
    $region24: #{tpu_custom_call.1} parent=1 // pred_region
      _
    $region25: #{tpu_custom_call.1} parent=1 // pred_fallthru
      _
    // Predicated region
    $region26: #{tpu_custom_call.1} parent=1 // pred_check
      _
    $region27: #{tpu_custom_call.1} parent=1 // pred_check_branch
      %65 = sbr.rel (0) target = $region29
    $region28: #{tpu_custom_call.1} parent=1 // pred_region
      _
    $region29: #{tpu_custom_call.1} parent=1 // pred_fallthru
      _
    // Predicated region
    $region30: #{tpu_custom_call.1} parent=1 // pred_check
      _
    $region31: #{tpu_custom_call.1} parent=1 // pred_check_branch
      %67 = sbr.rel (0) target = $region33
    $region32: #{tpu_custom_call.1} parent=1 // pred_region
      %s69 = ssub.s32 3072, 3072
      %70 = vsyncadd [#allocation10], %s69
      %s71 = sshll.u32 [#allocation9], 4
      %s72 = int_to_ptr.vmem [resolvable:$true] %s71
      %77 = dma.hbm_to_vmem [thread:$0]  %s7, 3072, %s72, [#allocation10], 192, 192, 12
    $region33: #{tpu_custom_call.1} parent=1 // pred_fallthru
      _
    // Predicated region
    $region34: #{tpu_custom_call.1} parent=1 // pred_check
      _
    $region35: #{tpu_custom_call.1} parent=1 // pred_check_branch
      %79 = sbr.rel (0) target = $region37
    $region36: #{tpu_custom_call.1} parent=1 // pred_region
      _
    $region37: #{tpu_custom_call.1} parent=1 // pred_fallthru
      _
    // Predicated region
    $region38: #{tpu_custom_call.1} parent=1 // pred_check
      _
    $region39: #{tpu_custom_call.1} parent=1 // pred_check_branch
      %81 = sbr.rel (0) target = $region41
    $region40: #{tpu_custom_call.1} parent=1 // pred_region
      %s83 = ssub.s32 3072, 3072
      %84 = vsyncadd [#allocation10], %s83
      %s85 = sshll.u32 [#allocation11], 4
      %s86 = int_to_ptr.vmem [resolvable:$true] %s85
      %91 = dma.hbm_to_vmem [thread:$0]  %s9, 3072, %s86, [#allocation10], 192, 192, 12
    $region41: #{tpu_custom_call.1} parent=1 // pred_fallthru
      _
    // Predicated region
    $region42: #{tpu_custom_call.1} parent=1 // pred_check
      _
    $region43: #{tpu_custom_call.1} parent=1 // pred_check_branch
      %93 = sbr.rel (0) target = $region45
    $region44: #{tpu_custom_call.1} parent=1 // pred_region
      _
    $region45: #{tpu_custom_call.1} parent=1 // pred_fallthru
      _
    // Predicated region
    $region46: #{tpu_custom_call.1} parent=1 // pred_check
      _
    $region47: #{tpu_custom_call.1} parent=1 // pred_check_branch
      %95 = sbr.rel (0) target = $region49
    $region48: #{tpu_custom_call.1} parent=1 // pred_region
      %s97 = ssub.s32 3072, 3072
      %98 = vsyncadd [#allocation13], %s97
      %s99 = sshll.u32 [#allocation12], 4
      %s100 = int_to_ptr.vmem [resolvable:$true] %s99
      %105 = dma.hbm_to_vmem [thread:$0]  %s11, 3072, %s100, [#allocation13], 192, 192, 12
    $region49: #{tpu_custom_call.1} parent=1 // pred_fallthru
      _
    // Predicated region
    $region50: #{tpu_custom_call.1} parent=1 // pred_check
      _
    $region51: #{tpu_custom_call.1} parent=1 // pred_check_branch
      %107 = sbr.rel (0) target = $region53
    $region52: #{tpu_custom_call.1} parent=1 // pred_region
      _
    $region53: #{tpu_custom_call.1} parent=1 // pred_fallthru
      _
    // Predicated region
    $region54: #{tpu_custom_call.1} parent=1 // pred_check
      _
    $region55: #{tpu_custom_call.1} parent=1 // pred_check_branch
      %109 = sbr.rel (0) target = $region57
    $region56: #{tpu_custom_call.1} parent=1 // pred_region
      _
    $region57: #{tpu_custom_call.1} parent=1 // pred_fallthru
      _
    // Predicated region
    $region58: #{tpu_custom_call.1} parent=1 // pred_check
      _
    $region59: #{tpu_custom_call.1} parent=1 // pred_check_branch
      %111 = sbr.rel (0) target = $region61
    $region60: #{tpu_custom_call.1} parent=1 // pred_region
      _
    $region61: #{tpu_custom_call.1} parent=1 // pred_fallthru
      _
    // Predicated region
    $region62: #{tpu_custom_call.1} parent=1 // pred_check
      _
    $region63: #{tpu_custom_call.1} parent=1 // pred_check_branch
      %113 = sbr.rel (0) target = $region65
    $region64: #{tpu_custom_call.1} parent=1 // pred_region
      _
    $region65: #{tpu_custom_call.1} parent=1 // pred_fallthru
      _
    // Predicated region
    $region66: #{tpu_custom_call.1} parent=1 // pred_check
      _
    $region67: #{tpu_custom_call.1} parent=1 // pred_check_branch
      %115 = sbr.rel (0) target = $region69
    $region68: #{tpu_custom_call.1} parent=1 // pred_region
      _
    $region69: #{tpu_custom_call.1} parent=1 // pred_fallthru
      _
    // Predicated region
    $region70: #{tpu_custom_call.1} parent=1 // pred_check
      _
    $region71: #{tpu_custom_call.1} parent=1 // pred_check_branch
      %117 = sbr.rel (0) target = $region73
    $region72: #{tpu_custom_call.1} parent=1 // pred_region
      %118 = dma.done [#allocation5], 64
    $region73: #{tpu_custom_call.1} parent=1 // pred_fallthru
      _
    // Predicated region
    $region74: #{tpu_custom_call.1} parent=1 // pred_check
      _
    $region75: #{tpu_custom_call.1} parent=1 // pred_check_branch
      %120 = sbr.rel (0) target = $region77
    $region76: #{tpu_custom_call.1} parent=1 // pred_region
      %121 = dma.done [#allocation7], 128
    $region77: #{tpu_custom_call.1} parent=1 // pred_fallthru
      _
    // Predicated region
    $region78: #{tpu_custom_call.1} parent=1 // pred_check
      _
    $region79: #{tpu_custom_call.1} parent=1 // pred_check_branch
      %123 = sbr.rel (0) target = $region81
    $region80: #{tpu_custom_call.1} parent=1 // pred_region
      %124 = dma.done [#allocation7], 16
    $region81: #{tpu_custom_call.1} parent=1 // pred_fallthru
      _
    // Predicated region
    $region82: #{tpu_custom_call.1} parent=1 // pred_check
      _
    $region83: #{tpu_custom_call.1} parent=1 // pred_check_branch
      %126 = sbr.rel (0) target = $region85
    $region84: #{tpu_custom_call.1} parent=1 // pred_region
      %127 = dma.done [#allocation10], 3072
    $region85: #{tpu_custom_call.1} parent=1 // pred_fallthru
      _
    // Predicated region
    $region86: #{tpu_custom_call.1} parent=1 // pred_check
      _
    $region87: #{tpu_custom_call.1} parent=1 // pred_check_branch
      %129 = sbr.rel (0) target = $region89
    $region88: #{tpu_custom_call.1} parent=1 // pred_region
      %130 = dma.done [#allocation10], 3072
    $region89: #{tpu_custom_call.1} parent=1 // pred_fallthru
      _
    // Predicated region
    $region90: #{tpu_custom_call.1} parent=1 // pred_check
      _
    $region91: #{tpu_custom_call.1} parent=1 // pred_check_branch
      %132 = sbr.rel (0) target = $region93
    $region92: #{tpu_custom_call.1} parent=1 // pred_region
      %133 = dma.done [#allocation13], 3072
    $region93: #{tpu_custom_call.1} parent=1 // pred_fallthru
      _
    %v135 = vld [vmem:[#allocation4] sm:$0xf]
    %v136 = vld [vmem:[#allocation6] sm:$0xf]
    %v137 = vld [vmem:[#allocation6 + $0x4] sm:$0xf]
    %v138 = vld [vmem:[#allocation8] sm:$0x1]
    %v140 = vlaneseq
    %v141 = vshrl.u32 %v140, 7
    %v142 = vsub.s32 0, %v141
    %v143 = vrot.slane %v138, %v142
    %v147 = vunpack.c.l.b16 %v136
    %v148 = vunpack.c.l.b16 %v137
    %v149 = vpack.c.b16 %v148, %v147
    %vm151 = vcmask 130048
    %v153 = vsel %vm151, %v135, 0
    %155 = vmatprep.subr.bf16.mxu0 0
    %156 = vmatpush1.bf16.msra.mxu0 %v149
    %157 = vmatprep.subr.bf16.mxu0 0
    %158 = vmatpush1.bf16.msra.mxu0 0
    %159 = vmatprep.subr.bf16.mxu0 0
    %160 = vmatpush1.bf16.msra.mxu0 0
    %161 = vmatprep.subr.bf16.mxu0 0
    %162 = vmatpush1.bf16.msra.mxu0 0
    %163 = vmatprep.subr.bf16.mxu0 0
    %164 = vmatpush1.bf16.msra.mxu0 0
    %165 = vmatprep.subr.bf16.mxu0 0
    %166 = vmatpush1.bf16.msra.mxu0 0
    %167 = vmatprep.subr.bf16.mxu0 0
    %168 = vmatpush1.bf16.msra.mxu0 0
    %169 = vmatprep.subr.bf16.mxu0 0
    %170 = vmatpush1.bf16.msra.mxu0 0
    %171 = vmatprep.subr.bf16.mxu0 0
    %172 = vmatpush1.bf16.msra.mxu0 0
    %173 = vmatprep.subr.bf16.mxu0 0
    %174 = vmatpush1.bf16.msra.mxu0 0
    %175 = vmatprep.subr.bf16.mxu0 0
    %176 = vmatpush1.bf16.msra.mxu0 0
    %177 = vmatprep.subr.bf16.mxu0 0
    %178 = vmatpush1.bf16.msra.mxu0 0
    %179 = vmatprep.subr.bf16.mxu0 0
    %180 = vmatpush1.bf16.msra.mxu0 0
    %181 = vmatprep.subr.bf16.mxu0 0
    %182 = vmatpush1.bf16.msra.mxu0 0
    %183 = vmatprep.subr.bf16.mxu0 0
    %184 = vmatpush1.bf16.msra.mxu0 0
    %185 = vmatprep.subr.bf16.mxu0 0
    %186 = vmatpush1.bf16.msra.mxu0 0
    %187 = vmatprep.mubr.bf16.mxu0 0
    %188 = vmatmul.mubr.bf16.gmra.mrb[0].mxu0 %v153
    %v189 = vpop.f32.mrb[0].mxu0
    %v190 = vadd.f32 %v143, %v189
    %v191 = vpop.f32.mrb[0].mxu0
    %v192 = vpop.f32.mrb[0].mxu0
    %v193 = vpop.f32.mrb[0].mxu0
    %194 = vdwg.mxu0
    %v195 = vmax.f32 %v190, 0.0
    %v196 = vpack.c.bf16 %v195, %v195
    %v197 = vld [vmem:[%s4] sm:$0xff]
    %v198 = vld [vmem:[%s4 + $0x8] sm:$0xf]
    %v199 = vld [vmem:[%s4 + $0xc] sm:$0xff]
    %v200 = vld [vmem:[%s4 + $0x14] sm:$0xf]
    %v201 = vld [vmem:[%s4 + $0x18] sm:$0xff]
    %v202 = vld [vmem:[%s4 + $0x20] sm:$0xf]
    %v203 = vld [vmem:[%s4 + $0x24] sm:$0xff]
    %v204 = vld [vmem:[%s4 + $0x2c] sm:$0xf]
    %v205 = vld [vmem:[%s6] sm:$0x7]
    %v207 = vlaneseq
    %v208 = vshrl.u32 %v207, 7
    %v209 = vsub.s32 0, %v208
    %v210 = vrot.slane %v205, %v209
    %v211 = vlaneseq
    %v212 = vshrl.u32 %v211, 7
    %v213 = vsub.s32 1, %v212
    %v214 = vrot.slane %v205, %v213
    %v215 = vlaneseq
    %v216 = vshrl.u32 %v215, 7
    %v217 = vsub.s32 2, %v216
    %v218 = vrot.slane %v205, %v217
    %v230 = vunpack.c.l.b16 %v197
    %v231 = vunpack.c.h.b16 %v197
    %v232 = vunpack.c.l.b16 %v198
    %v233 = vunpack.c.l.b16 %v199
    %v234 = vunpack.c.h.b16 %v199
    %v235 = vunpack.c.l.b16 %v200
    %v236 = vunpack.c.l.b16 %v201
    %v237 = vunpack.c.h.b16 %v201
    %v238 = vunpack.c.l.b16 %v202
    %v239 = vunpack.c.l.b16 %v203
    %v240 = vunpack.c.h.b16 %v203
    %v241 = vunpack.c.l.b16 %v204
    %v242 = vpack.c.b16 %v233, %v230
    %v243 = vpack.c.b16 %v234, %v231
    %v244 = vpack.c.b16 %v235, %v232
    %v245 = vpack.c.b16 %v239, %v236
    %v246 = vpack.c.b16 %v240, %v237
    %v247 = vpack.c.b16 %v241, %v238
    %vm254 = vcmask 261120
    %v256 = vsel %vm254, %v196, 0
    %258 = vmatprep.subr.bf16.mxu0 %v243
    %259 = vmatpush1.bf16.msra.mxu0 %v242
    %260 = vmatprep.subr.bf16.mxu0 %v246
    %261 = vmatpush1.bf16.msra.mxu0 %v245
    %262 = vmatprep.subr.bf16.mxu0 0
    %263 = vmatpush1.bf16.msra.mxu0 0
    %264 = vmatprep.subr.bf16.mxu0 0
    %265 = vmatpush1.bf16.msra.mxu0 0
    %266 = vmatprep.subr.bf16.mxu0 0
    %267 = vmatpush1.bf16.msra.mxu0 0
    %268 = vmatprep.subr.bf16.mxu0 0
    %269 = vmatpush1.bf16.msra.mxu0 0
    %270 = vmatprep.subr.bf16.mxu0 0
    %271 = vmatpush1.bf16.msra.mxu0 0
    %272 = vmatprep.subr.bf16.mxu0 0
    %273 = vmatpush1.bf16.msra.mxu0 0
    %274 = vmatprep.subr.bf16.mxu0 0
    %275 = vmatpush1.bf16.msra.mxu0 0
    %276 = vmatprep.subr.bf16.mxu0 0
    %277 = vmatpush1.bf16.msra.mxu0 0
    %278 = vmatprep.subr.bf16.mxu0 0
    %279 = vmatpush1.bf16.msra.mxu0 0
    %280 = vmatprep.subr.bf16.mxu0 0
    %281 = vmatpush1.bf16.msra.mxu0 0
    %282 = vmatprep.subr.bf16.mxu0 0
    %283 = vmatpush1.bf16.msra.mxu0 0
    %284 = vmatprep.subr.bf16.mxu0 0
    %285 = vmatpush1.bf16.msra.mxu0 0
    %286 = vmatprep.subr.bf16.mxu0 0
    %287 = vmatpush1.bf16.msra.mxu0 0
    %288 = vmatprep.subr.bf16.mxu0 0
    %289 = vmatpush1.bf16.msra.mxu0 0
    %290 = vmatprep.mubr.bf16.mxu0 0
    %291 = vmatmul.mubr.bf16.gmra.mrb[0].mxu0 %v256
    %v292 = vpop.f32.mrb[0].mxu0
    %v293 = vadd.f32 %v210, %v292
    %v294 = vpop.f32.mrb[0].mxu0
    %v295 = vadd.f32 %v214, %v294
    %v296 = vpop.f32.mrb[0].mxu0
    %v297 = vpop.f32.mrb[0].mxu0
    %298 = vdwg.mxu0
    %299 = vmatprep.subr.bf16.mxu0 0
    %300 = vmatpush1.bf16.msra.mxu0 %v244
    %301 = vmatprep.subr.bf16.mxu0 0
    %302 = vmatpush1.bf16.msra.mxu0 %v247
    %303 = vmatprep.subr.bf16.mxu0 0
    %304 = vmatpush1.bf16.msra.mxu0 0
    %305 = vmatprep.subr.bf16.mxu0 0
    %306 = vmatpush1.bf16.msra.mxu0 0
    %307 = vmatprep.subr.bf16.mxu0 0
    %308 = vmatpush1.bf16.msra.mxu0 0
    %309 = vmatprep.subr.bf16.mxu0 0
    %310 = vmatpush1.bf16.msra.mxu0 0
    %311 = vmatprep.subr.bf16.mxu0 0
    %312 = vmatpush1.bf16.msra.mxu0 0
    %313 = vmatprep.subr.bf16.mxu0 0
    %314 = vmatpush1.bf16.msra.mxu0 0
    %315 = vmatprep.subr.bf16.mxu0 0
    %316 = vmatpush1.bf16.msra.mxu0 0
    %317 = vmatprep.subr.bf16.mxu0 0
    %318 = vmatpush1.bf16.msra.mxu0 0
    %319 = vmatprep.subr.bf16.mxu0 0
    %320 = vmatpush1.bf16.msra.mxu0 0
    %321 = vmatprep.subr.bf16.mxu0 0
    %322 = vmatpush1.bf16.msra.mxu0 0
    %323 = vmatprep.subr.bf16.mxu0 0
    %324 = vmatpush1.bf16.msra.mxu0 0
    %325 = vmatprep.subr.bf16.mxu0 0
    %326 = vmatpush1.bf16.msra.mxu0 0
    %327 = vmatprep.subr.bf16.mxu0 0
    %328 = vmatpush1.bf16.msra.mxu0 0
    %329 = vmatprep.subr.bf16.mxu0 0
    %330 = vmatpush1.bf16.msra.mxu0 0
    %331 = vmatprep.mubr.bf16.mxu0 0
    %332 = vmatmul.mubr.bf16.gmra.mrb[0].mxu0 %v256
    %v333 = vpop.f32.mrb[0].mxu0
    %v334 = vadd.f32 %v218, %v333
    %v335 = vpop.f32.mrb[0].mxu0
    %v336 = vpop.f32.mrb[0].mxu0
    %v337 = vpop.f32.mrb[0].mxu0
    %338 = vdwg.mxu0
    %v339 = vld [vmem:[%s0] sm:$0xf]
    %v340 = vld [vmem:[%s0 + $0x4] sm:$0xf]
    %v341 = vld [vmem:[%s0 + $0x8] sm:$0xf]
    %v342 = vld [vmem:[%s0 + $0xc] sm:$0xf]
    %v343 = vld [vmem:[%s0 + $0x10] sm:$0xf]
    %v344 = vld [vmem:[%s0 + $0x14] sm:$0xf]
    %v345 = vld [vmem:[%s0 + $0x18] sm:$0xf]
    %v346 = vld [vmem:[%s0 + $0x1c] sm:$0xf]
    %v347 = vld [vmem:[%s5] sm:$0x7]
    %v356 = vunpack.c.l.b16 %v339
    %v357 = vunpack.c.l.b16 %v340
    %v358 = vunpack.c.l.b16 %v341
    %v359 = vunpack.c.l.b16 %v342
    %v360 = vunpack.c.l.b16 %v343
    %v361 = vunpack.c.l.b16 %v344
    %v362 = vunpack.c.l.b16 %v345
    %v363 = vunpack.c.l.b16 %v346
    %v364 = vpack.c.b16 %v357, %v356
    %v365 = vpack.c.b16 %v359, %v358
    %v366 = vpack.c.b16 %v361, %v360
    %v367 = vpack.c.b16 %v363, %v362
    %v370 = vunpack.c.l.s4 1966171168
    %v371 = vunpack.c.0.s8 %v370
    %v372 = vlaneseq
    %v373 = vshrl.u32 %v372, 7
    %v374 = vsub.s32 %v371, %v373
    %v375 = vrot.slane %v347, %v374
    %v376 = vcombine.high %v375, %v375
    %v378 = vunpack.c.l.s4 1966171168
    %v379 = vunpack.c.0.s8 %v378
    %v380 = vlaneseq
    %v381 = vshrl.u32 %v380, 7
    %v382 = vsub.s32 %v379, %v381
    %v383 = vrot.slane %v375, %v382
    %v385 = vunpack.c.l.s4 1966171168
    %v386 = vunpack.c.0.s8 %v385
    %v387 = vlaneseq
    %v388 = vshrl.u32 %v387, 7
    %v389 = vsub.s32 %v386, %v388
    %v390 = vrot.slane %v376, %v389
    %v391 = vcombine.high %v383, %v383
    %vm392 = vcmask 15360
    %v394 = vsel %vm392, %v364, 0
    %v397 = vsel %vm392, %v365, 0
    %v400 = vsel %vm392, %v366, 0
    %v403 = vsel %vm392, %v367, 0
    %vm405 = vcmask 1040384
    %v407 = vsel %vm405, %v383, 0
    %v410 = vsel %vm405, %v390, 0
    %v413 = vsel %vm405, %v391, 0
    %415 = vmatprep.subr.bf16.mxu0 %v410
    %416 = vmatpush1.bf16.msra.mxu0 %v407
    %417 = vmatprep.subr.bf16.mxu0 0
    %418 = vmatpush1.bf16.msra.mxu0 0
    %419 = vmatprep.subr.bf16.mxu0 0
    %420 = vmatpush1.bf16.msra.mxu0 0
    %421 = vmatprep.subr.bf16.mxu0 0
    %422 = vmatpush1.bf16.msra.mxu0 0
    %423 = vmatprep.subr.bf16.mxu0 0
    %424 = vmatpush1.bf16.msra.mxu0 0
    %425 = vmatprep.subr.bf16.mxu0 0
    %426 = vmatpush1.bf16.msra.mxu0 0
    %427 = vmatprep.subr.bf16.mxu0 0
    %428 = vmatpush1.bf16.msra.mxu0 0
    %429 = vmatprep.subr.bf16.mxu0 0
    %430 = vmatpush1.bf16.msra.mxu0 0
    %431 = vmatprep.subr.bf16.mxu0 0
    %432 = vmatpush1.bf16.msra.mxu0 0
    %433 = vmatprep.subr.bf16.mxu0 0
    %434 = vmatpush1.bf16.msra.mxu0 0
    %435 = vmatprep.subr.bf16.mxu0 0
    %436 = vmatpush1.bf16.msra.mxu0 0
    %437 = vmatprep.subr.bf16.mxu0 0
    %438 = vmatpush1.bf16.msra.mxu0 0
    %439 = vmatprep.subr.bf16.mxu0 0
    %440 = vmatpush1.bf16.msra.mxu0 0
    %441 = vmatprep.subr.bf16.mxu0 0
    %442 = vmatpush1.bf16.msra.mxu0 0
    %443 = vmatprep.subr.bf16.mxu0 0
    %444 = vmatpush1.bf16.msra.mxu0 0
    %445 = vmatprep.subr.bf16.mxu0 0
    %446 = vmatpush1.bf16.msra.mxu0 0
    %447 = vmatprep.mubr.bf16.mxu0 0
    %448 = vmatmul.mubr.bf16.gmra.mrb[0].mxu0 %v394
    %v449 = vpop.f32.mrb[0].mxu0
    %v450 = vadd.f32 0.0, %v449
    %v451 = vpop.f32.mrb[0].mxu0
    %v452 = vadd.f32 0.0, %v451
    %v453 = vpop.f32.mrb[0].mxu0
    %v454 = vadd.f32 0.0, %v453
    %v455 = vpop.f32.mrb[0].mxu0
    %v456 = vadd.f32 0.0, %v455
    %457 = vmatprep.mubr.bf16.mxu0 0
    %458 = vmatmul.mubr.bf16.gmra.mrb[0].mxu0 %v397
    %v459 = vpop.f32.mrb[0].mxu0
    %v460 = vadd.f32 0.0, %v459
    %v461 = vpop.f32.mrb[0].mxu0
    %v462 = vadd.f32 0.0, %v461
    %v463 = vpop.f32.mrb[0].mxu0
    %v464 = vadd.f32 0.0, %v463
    %v465 = vpop.f32.mrb[0].mxu0
    %v466 = vadd.f32 0.0, %v465
    %467 = vmatprep.mubr.bf16.mxu0 0
    %468 = vmatmul.mubr.bf16.gmra.mrb[0].mxu0 %v400
    %v469 = vpop.f32.mrb[0].mxu0
    %v470 = vadd.f32 0.0, %v469
    %v471 = vpop.f32.mrb[0].mxu0
    %v472 = vadd.f32 0.0, %v471
    %v473 = vpop.f32.mrb[0].mxu0
    %v474 = vadd.f32 0.0, %v473
    %v475 = vpop.f32.mrb[0].mxu0
    %v476 = vadd.f32 0.0, %v475
    %477 = vmatprep.mubr.bf16.mxu0 0
    %478 = vmatmul.mubr.bf16.gmra.mrb[0].mxu0 %v403
    %v479 = vpop.f32.mrb[0].mxu0
    %v480 = vadd.f32 0.0, %v479
    %v481 = vpop.f32.mrb[0].mxu0
    %v482 = vadd.f32 0.0, %v481
    %v483 = vpop.f32.mrb[0].mxu0
    %v484 = vadd.f32 0.0, %v483
    %v485 = vpop.f32.mrb[0].mxu0
    %v486 = vadd.f32 0.0, %v485
    %487 = vdwg.mxu0
    %488 = vmatprep.subr.bf16.mxu0 0
    %489 = vmatpush1.bf16.msra.mxu0 %v413
    %490 = vmatprep.subr.bf16.mxu0 0
    %491 = vmatpush1.bf16.msra.mxu0 0
    %492 = vmatprep.subr.bf16.mxu0 0
    %493 = vmatpush1.bf16.msra.mxu0 0
    %494 = vmatprep.subr.bf16.mxu0 0
    %495 = vmatpush1.bf16.msra.mxu0 0
    %496 = vmatprep.subr.bf16.mxu0 0
    %497 = vmatpush1.bf16.msra.mxu0 0
    %498 = vmatprep.subr.bf16.mxu0 0
    %499 = vmatpush1.bf16.msra.mxu0 0
    %500 = vmatprep.subr.bf16.mxu0 0
    %501 = vmatpush1.bf16.msra.mxu0 0
    %502 = vmatprep.subr.bf16.mxu0 0
    %503 = vmatpush1.bf16.msra.mxu0 0
    %504 = vmatprep.subr.bf16.mxu0 0
    %505 = vmatpush1.bf16.msra.mxu0 0
    %506 = vmatprep.subr.bf16.mxu0 0
    %507 = vmatpush1.bf16.msra.mxu0 0
    %508 = vmatprep.subr.bf16.mxu0 0
    %509 = vmatpush1.bf16.msra.mxu0 0
    %510 = vmatprep.subr.bf16.mxu0 0
    %511 = vmatpush1.bf16.msra.mxu0 0
    %512 = vmatprep.subr.bf16.mxu0 0
    %513 = vmatpush1.bf16.msra.mxu0 0
    %514 = vmatprep.subr.bf16.mxu0 0
    %515 = vmatpush1.bf16.msra.mxu0 0
    %516 = vmatprep.subr.bf16.mxu0 0
    %517 = vmatpush1.bf16.msra.mxu0 0
    %518 = vmatprep.subr.bf16.mxu0 0
    %519 = vmatpush1.bf16.msra.mxu0 0
    %520 = vmatprep.mubr.bf16.mxu0 0
    %521 = vmatmul.mubr.bf16.gmra.mrb[0].mxu0 %v394
    %v522 = vpop.f32.mrb[0].mxu0
    %v523 = vadd.f32 0.0, %v522
    %v524 = vpop.f32.mrb[0].mxu0
    %v525 = vpop.f32.mrb[0].mxu0
    %v526 = vadd.f32 0.0, %v525
    %v527 = vpop.f32.mrb[0].mxu0
    %528 = vmatprep.mubr.bf16.mxu0 0
    %529 = vmatmul.mubr.bf16.gmra.mrb[0].mxu0 %v397
    %v530 = vpop.f32.mrb[0].mxu0
    %v531 = vadd.f32 0.0, %v530
    %v532 = vpop.f32.mrb[0].mxu0
    %v533 = vpop.f32.mrb[0].mxu0
    %v534 = vadd.f32 0.0, %v533
    %v535 = vpop.f32.mrb[0].mxu0
    %536 = vmatprep.mubr.bf16.mxu0 0
    %537 = vmatmul.mubr.bf16.gmra.mrb[0].mxu0 %v400
    %v538 = vpop.f32.mrb[0].mxu0
    %v539 = vadd.f32 0.0, %v538
    %v540 = vpop.f32.mrb[0].mxu0
    %v541 = vpop.f32.mrb[0].mxu0
    %v542 = vadd.f32 0.0, %v541
    %v543 = vpop.f32.mrb[0].mxu0
    %544 = vmatprep.mubr.bf16.mxu0 0
    %545 = vmatmul.mubr.bf16.gmra.mrb[0].mxu0 %v403
    %v546 = vpop.f32.mrb[0].mxu0
    %v547 = vadd.f32 0.0, %v546
    %v548 = vpop.f32.mrb[0].mxu0
    %v549 = vpop.f32.mrb[0].mxu0
    %v550 = vadd.f32 0.0, %v549
    %v551 = vpop.f32.mrb[0].mxu0
    %552 = vdwg.mxu0
    %553 = vst [vmem:[#allocation2] sm:$0xff] %v450
    %554 = vst [vmem:[#allocation2 + $0x8] sm:$0xff] %v452
    %555 = vst [vmem:[#allocation2 + $0x10] sm:$0xff] %v523
    %556 = vst [vmem:[#allocation2 + $0x18] sm:$0xff] %v454
    %557 = vst [vmem:[#allocation2 + $0x20] sm:$0xff] %v456
    %558 = vst [vmem:[#allocation2 + $0x28] sm:$0xff] %v526
    %559 = vst [vmem:[#allocation2 + $0x30] sm:$0xff] %v460
    %560 = vst [vmem:[#allocation2 + $0x38] sm:$0xff] %v462
    %561 = vst [vmem:[#allocation2 + $0x40] sm:$0xff] %v531
    %562 = vst [vmem:[#allocation2 + $0x48] sm:$0xff] %v464
    %563 = vst [vmem:[#allocation2 + $0x50] sm:$0xff] %v466
    %564 = vst [vmem:[#allocation2 + $0x58] sm:$0xff] %v534
    %565 = vst [vmem:[#allocation2 + $0x60] sm:$0xff] %v470
    %566 = vst [vmem:[#allocation2 + $0x68] sm:$0xff] %v472
    %567 = vst [vmem:[#allocation2 + $0x70] sm:$0xff] %v539
    %568 = vst [vmem:[#allocation2 + $0x78] sm:$0xff] %v474
    %569 = vst [vmem:[#allocation2 + $0x80] sm:$0xff] %v476
    %570 = vst [vmem:[#allocation2 + $0x88] sm:$0xff] %v542
    %571 = vst [vmem:[#allocation2 + $0x90] sm:$0xff] %v480
    %572 = vst [vmem:[#allocation2 + $0x98] sm:$0xff] %v482
    %573 = vst [vmem:[#allocation2 + $0xa0] sm:$0xff] %v547
    %574 = vst [vmem:[#allocation2 + $0xa8] sm:$0xff] %v484
    %575 = vst [vmem:[#allocation2 + $0xb0] sm:$0xff] %v486
    %576 = vst [vmem:[#allocation2 + $0xb8] sm:$0xff] %v550
    %v577 = vld [vmem:[#allocation2] sm:$0xff]
    %v578 = vld [vmem:[#allocation2 + $0x8] sm:$0xff]
    %v579 = vld [vmem:[#allocation2 + $0x10] sm:$0xff]
    %v580 = vadd.f32 %v577, %v293
    %v581 = vadd.f32 %v578, %v295
    %v582 = vadd.f32 %v579, %v334
    %v583 = vld [vmem:[#allocation9] sm:$0xff]
    %v584 = vld [vmem:[#allocation9 + $0x8] sm:$0xf]
    %v585 = vld [vmem:[#allocation9 + $0xc] sm:$0xff]
    %v586 = vld [vmem:[#allocation9 + $0x14] sm:$0xf]
    %v587 = vld [vmem:[#allocation9 + $0x18] sm:$0xff]
    %v588 = vld [vmem:[#allocation9 + $0x20] sm:$0xf]
    %v589 = vld [vmem:[#allocation9 + $0x24] sm:$0xff]
    %v590 = vld [vmem:[#allocation9 + $0x2c] sm:$0xf]
    %v591 = vld [vmem:[#allocation9 + $0x30] sm:$0xff]
    %v592 = vld [vmem:[#allocation9 + $0x38] sm:$0xf]
    %v593 = vld [vmem:[#allocation9 + $0x3c] sm:$0xff]
    %v594 = vld [vmem:[#allocation9 + $0x44] sm:$0xf]
    %v595 = vld [vmem:[#allocation9 + $0x48] sm:$0xff]
    %v596 = vld [vmem:[#allocation9 + $0x50] sm:$0xf]
    %v597 = vld [vmem:[#allocation9 + $0x54] sm:$0xff]
    %v598 = vld [vmem:[#allocation9 + $0x5c] sm:$0xf]
    %v599 = vld [vmem:[#allocation9 + $0x60] sm:$0xff]
    %v600 = vld [vmem:[#allocation9 + $0x68] sm:$0xf]
    %v601 = vld [vmem:[#allocation9 + $0x6c] sm:$0xff]
    %v602 = vld [vmem:[#allocation9 + $0x74] sm:$0xf]
    %v603 = vld [vmem:[#allocation9 + $0x78] sm:$0xff]
    %v604 = vld [vmem:[#allocation9 + $0x80] sm:$0xf]
    %v605 = vld [vmem:[#allocation9 + $0x84] sm:$0xff]
    %v606 = vld [vmem:[#allocation9 + $0x8c] sm:$0xf]
    %v607 = vld [vmem:[#allocation9 + $0x90] sm:$0xff]
    %v608 = vld [vmem:[#allocation9 + $0x98] sm:$0xf]
    %v609 = vld [vmem:[#allocation9 + $0x9c] sm:$0xff]
    %v610 = vld [vmem:[#allocation9 + $0xa4] sm:$0xf]
    %v611 = vld [vmem:[#allocation9 + $0xa8] sm:$0xff]
    %v612 = vld [vmem:[#allocation9 + $0xb0] sm:$0xf]
    %v613 = vld [vmem:[#allocation9 + $0xb4] sm:$0xff]
    %v614 = vld [vmem:[#allocation9 + $0xbc] sm:$0xf]
    %v615 = vld [vmem:[%s8] sm:$0x7]
    %v617 = vlaneseq
    %v618 = vshrl.u32 %v617, 7
    %v619 = vsub.s32 0, %v618
    %v620 = vrot.slane %v615, %v619
    %v621 = vlaneseq
    %v622 = vshrl.u32 %v621, 7
    %v623 = vsub.s32 1, %v622
    %v624 = vrot.slane %v615, %v623
    %v625 = vlaneseq
    %v626 = vshrl.u32 %v625, 7
    %v627 = vsub.s32 2, %v626
    %v628 = vrot.slane %v615, %v627
    %v664 = vunpack.c.l.b16 %v583
    %v665 = vunpack.c.h.b16 %v583
    %v666 = vunpack.c.l.b16 %v584
    %v667 = vunpack.c.l.b16 %v585
    %v668 = vunpack.c.h.b16 %v585
    %v669 = vunpack.c.l.b16 %v586
    %v670 = vunpack.c.l.b16 %v587
    %v671 = vunpack.c.h.b16 %v587
    %v672 = vunpack.c.l.b16 %v588
    %v673 = vunpack.c.l.b16 %v589
    %v674 = vunpack.c.h.b16 %v589
    %v675 = vunpack.c.l.b16 %v590
    %v676 = vunpack.c.l.b16 %v591
    %v677 = vunpack.c.h.b16 %v591
    %v678 = vunpack.c.l.b16 %v592
    %v679 = vunpack.c.l.b16 %v593
    %v680 = vunpack.c.h.b16 %v593
    %v681 = vunpack.c.l.b16 %v594
    %v682 = vunpack.c.l.b16 %v595
    %v683 = vunpack.c.h.b16 %v595
    %v684 = vunpack.c.l.b16 %v596
    %v685 = vunpack.c.l.b16 %v597
    %v686 = vunpack.c.h.b16 %v597
    %v687 = vunpack.c.l.b16 %v598
    %v688 = vunpack.c.l.b16 %v599
    %v689 = vunpack.c.h.b16 %v599
    %v690 = vunpack.c.l.b16 %v600
    %v691 = vunpack.c.l.b16 %v601
    %v692 = vunpack.c.h.b16 %v601
    %v693 = vunpack.c.l.b16 %v602
    %v694 = vunpack.c.l.b16 %v603
    %v695 = vunpack.c.h.b16 %v603
    %v696 = vunpack.c.l.b16 %v604
    %v697 = vunpack.c.l.b16 %v605
    %v698 = vunpack.c.h.b16 %v605
    %v699 = vunpack.c.l.b16 %v606
    %v700 = vunpack.c.l.b16 %v607
    %v701 = vunpack.c.h.b16 %v607
    %v702 = vunpack.c.l.b16 %v608
    %v703 = vunpack.c.l.b16 %v609
    %v704 = vunpack.c.h.b16 %v609
    %v705 = vunpack.c.l.b16 %v610
    %v706 = vunpack.c.l.b16 %v611
    %v707 = vunpack.c.h.b16 %v611
    %v708 = vunpack.c.l.b16 %v612
    %v709 = vunpack.c.l.b16 %v613
    %v710 = vunpack.c.h.b16 %v613
    %v711 = vunpack.c.l.b16 %v614
    %v712 = vpack.c.b16 %v667, %v664
    %v713 = vpack.c.b16 %v668, %v665
    %v714 = vpack.c.b16 %v669, %v666
    %v715 = vpack.c.b16 %v673, %v670
    %v716 = vpack.c.b16 %v674, %v671
    %v717 = vpack.c.b16 %v675, %v672
    %v718 = vpack.c.b16 %v679, %v676
    %v719 = vpack.c.b16 %v680, %v677
    %v720 = vpack.c.b16 %v681, %v678
    %v721 = vpack.c.b16 %v685, %v682
    %v722 = vpack.c.b16 %v686, %v683
    %v723 = vpack.c.b16 %v687, %v684
    %v724 = vpack.c.b16 %v691, %v688
    %v725 = vpack.c.b16 %v692, %v689
    %v726 = vpack.c.b16 %v693, %v690
    %v727 = vpack.c.b16 %v697, %v694
    %v728 = vpack.c.b16 %v698, %v695
    %v729 = vpack.c.b16 %v699, %v696
    %v730 = vpack.c.b16 %v703, %v700
    %v731 = vpack.c.b16 %v704, %v701
    %v732 = vpack.c.b16 %v705, %v702
    %v733 = vpack.c.b16 %v709, %v706
    %v734 = vpack.c.b16 %v710, %v707
    %v735 = vpack.c.b16 %v711, %v708
    %760 = vmatprep.subr.bf16.mxu0 %v713
    %761 = vmatpush1.bf16.msra.mxu0 %v712
    %762 = vmatprep.subr.bf16.mxu0 %v716
    %763 = vmatpush1.bf16.msra.mxu0 %v715
    %764 = vmatprep.subr.bf16.mxu0 %v719
    %765 = vmatpush1.bf16.msra.mxu0 %v718
    %766 = vmatprep.subr.bf16.mxu0 %v722
    %767 = vmatpush1.bf16.msra.mxu0 %v721
    %768 = vmatprep.subr.bf16.mxu0 %v725
    %769 = vmatpush1.bf16.msra.mxu0 %v724
    %770 = vmatprep.subr.bf16.mxu0 %v728
    %771 = vmatpush1.bf16.msra.mxu0 %v727
    %772 = vmatprep.subr.bf16.mxu0 %v731
    %773 = vmatpush1.bf16.msra.mxu0 %v730
    %774 = vmatprep.subr.bf16.mxu0 %v734
    %775 = vmatpush1.bf16.msra.mxu0 %v733
    %776 = vmatprep.subr.bf16.mxu0 0
    %777 = vmatpush1.bf16.msra.mxu0 0
    %778 = vmatprep.subr.bf16.mxu0 0
    %779 = vmatpush1.bf16.msra.mxu0 0
    %780 = vmatprep.subr.bf16.mxu0 0
    %781 = vmatpush1.bf16.msra.mxu0 0
    %782 = vmatprep.subr.bf16.mxu0 0
    %783 = vmatpush1.bf16.msra.mxu0 0
    %784 = vmatprep.subr.bf16.mxu0 0
    %785 = vmatpush1.bf16.msra.mxu0 0
    %786 = vmatprep.subr.bf16.mxu0 0
    %787 = vmatpush1.bf16.msra.mxu0 0
    %788 = vmatprep.subr.bf16.mxu0 0
    %789 = vmatpush1.bf16.msra.mxu0 0
    %790 = vmatprep.subr.bf16.mxu0 0
    %791 = vmatpush1.bf16.msra.mxu0 0
    %792 = vmatprep.mubr.bf16.mxu0 0
    %793 = vmatmul.mubr.bf16.gmra.mrb[0].mxu0 0
    %v794 = vpop.f32.mrb[0].mxu0
    %v795 = vadd.f32 %v620, %v794
    %v796 = vpop.f32.mrb[0].mxu0
    %v797 = vadd.f32 %v624, %v796
    %v798 = vpop.f32.mrb[0].mxu0
    %v799 = vpop.f32.mrb[0].mxu0
    %800 = vdwg.mxu0
    %801 = vmatprep.subr.bf16.mxu0 0
    %802 = vmatpush1.bf16.msra.mxu0 %v714
    %803 = vmatprep.subr.bf16.mxu0 0
    %804 = vmatpush1.bf16.msra.mxu0 %v717
    %805 = vmatprep.subr.bf16.mxu0 0
    %806 = vmatpush1.bf16.msra.mxu0 %v720
    %807 = vmatprep.subr.bf16.mxu0 0
    %808 = vmatpush1.bf16.msra.mxu0 %v723
    %809 = vmatprep.subr.bf16.mxu0 0
    %810 = vmatpush1.bf16.msra.mxu0 %v726
    %811 = vmatprep.subr.bf16.mxu0 0
    %812 = vmatpush1.bf16.msra.mxu0 %v729
    %813 = vmatprep.subr.bf16.mxu0 0
    %814 = vmatpush1.bf16.msra.mxu0 %v732
    %815 = vmatprep.subr.bf16.mxu0 0
    %816 = vmatpush1.bf16.msra.mxu0 %v735
    %817 = vmatprep.subr.bf16.mxu0 0
    %818 = vmatpush1.bf16.msra.mxu0 0
    %819 = vmatprep.subr.bf16.mxu0 0
    %820 = vmatpush1.bf16.msra.mxu0 0
    %821 = vmatprep.subr.bf16.mxu0 0
    %822 = vmatpush1.bf16.msra.mxu0 0
    %823 = vmatprep.subr.bf16.mxu0 0
    %824 = vmatpush1.bf16.msra.mxu0 0
    %825 = vmatprep.subr.bf16.mxu0 0
    %826 = vmatpush1.bf16.msra.mxu0 0
    %827 = vmatprep.subr.bf16.mxu0 0
    %828 = vmatpush1.bf16.msra.mxu0 0
    %829 = vmatprep.subr.bf16.mxu0 0
    %830 = vmatpush1.bf16.msra.mxu0 0
    %831 = vmatprep.subr.bf16.mxu0 0
    %832 = vmatpush1.bf16.msra.mxu0 0
    %833 = vmatprep.mubr.bf16.mxu0 0
    %834 = vmatmul.mubr.bf16.gmra.mrb[0].mxu0 0
    %v835 = vpop.f32.mrb[0].mxu0
    %v836 = vadd.f32 %v628, %v835
    %v837 = vpop.f32.mrb[0].mxu0
    %v838 = vpop.f32.mrb[0].mxu0
    %v839 = vpop.f32.mrb[0].mxu0
    %840 = vdwg.mxu0
    %v841 = vadd.f32 %v580, %v795
    %v842 = vxor.u32 %v841, 2147483648
    %v843 = vmul.f32 %v842, 1.442695
    %v844 = vpow.pop %v843
    %v845 = vadd.f32 %v844, 1.0
    %v846 = vrcp.pop %v845
    %v847 = vmul.f32 1.0, %v846
    %v848 = vadd.f32 %v581, %v797
    %v849 = vxor.u32 %v848, 2147483648
    %v850 = vmul.f32 %v849, 1.442695
    %v851 = vpow.pop %v850
    %v852 = vadd.f32 %v851, 1.0
    %v853 = vrcp.pop %v852
    %v854 = vmul.f32 1.0, %v853
    %v855 = vmul.f32 %v847, %v836
    %v856 = vadd.f32 %v582, %v855
    %v857 = vtanh.pop %v856
    %v858 = vsub.f32 1.0, %v854
    %v859 = vmul.f32 %v858, %v857
    %v860 = vmul.f32 %v854, 0.0
    %v861 = vadd.f32 %v859, %v860
    %v862 = vpack.c.bf16 %v861, %v861
    %v863 = vld [vmem:[#allocation11] sm:$0xff]
    %v864 = vld [vmem:[#allocation11 + $0x8] sm:$0xf]
    %v865 = vld [vmem:[#allocation11 + $0xc] sm:$0xff]
    %v866 = vld [vmem:[#allocation11 + $0x14] sm:$0xf]
    %v867 = vld [vmem:[#allocation11 + $0x18] sm:$0xff]
    %v868 = vld [vmem:[#allocation11 + $0x20] sm:$0xf]
    %v869 = vld [vmem:[#allocation11 + $0x24] sm:$0xff]
    %v870 = vld [vmem:[#allocation11 + $0x2c] sm:$0xf]
    %v871 = vld [vmem:[#allocation11 + $0x30] sm:$0xff]
    %v872 = vld [vmem:[#allocation11 + $0x38] sm:$0xf]
    %v873 = vld [vmem:[#allocation11 + $0x3c] sm:$0xff]
    %v874 = vld [vmem:[#allocation11 + $0x44] sm:$0xf]
    %v875 = vld [vmem:[#allocation11 + $0x48] sm:$0xff]
    %v876 = vld [vmem:[#allocation11 + $0x50] sm:$0xf]
    %v877 = vld [vmem:[#allocation11 + $0x54] sm:$0xff]
    %v878 = vld [vmem:[#allocation11 + $0x5c] sm:$0xf]
    %v879 = vld [vmem:[#allocation11 + $0x60] sm:$0xff]
    %v880 = vld [vmem:[#allocation11 + $0x68] sm:$0xf]
    %v881 = vld [vmem:[#allocation11 + $0x6c] sm:$0xff]
    %v882 = vld [vmem:[#allocation11 + $0x74] sm:$0xf]
    %v883 = vld [vmem:[#allocation11 + $0x78] sm:$0xff]
    %v884 = vld [vmem:[#allocation11 + $0x80] sm:$0xf]
    %v885 = vld [vmem:[#allocation11 + $0x84] sm:$0xff]
    %v886 = vld [vmem:[#allocation11 + $0x8c] sm:$0xf]
    %v887 = vld [vmem:[#allocation11 + $0x90] sm:$0xff]
    %v888 = vld [vmem:[#allocation11 + $0x98] sm:$0xf]
    %v889 = vld [vmem:[#allocation11 + $0x9c] sm:$0xff]
    %v890 = vld [vmem:[#allocation11 + $0xa4] sm:$0xf]
    %v891 = vld [vmem:[#allocation11 + $0xa8] sm:$0xff]
    %v892 = vld [vmem:[#allocation11 + $0xb0] sm:$0xf]
    %v893 = vld [vmem:[#allocation11 + $0xb4] sm:$0xff]
    %v894 = vld [vmem:[#allocation11 + $0xbc] sm:$0xf]
    %v895 = vld [vmem:[%s10] sm:$0x7]
    %v897 = vlaneseq
    %v898 = vshrl.u32 %v897, 7
    %v899 = vsub.s32 0, %v898
    %v900 = vrot.slane %v895, %v899
    %v901 = vlaneseq
    %v902 = vshrl.u32 %v901, 7
    %v903 = vsub.s32 1, %v902
    %v904 = vrot.slane %v895, %v903
    %v905 = vlaneseq
    %v906 = vshrl.u32 %v905, 7
    %v907 = vsub.s32 2, %v906
    %v908 = vrot.slane %v895, %v907
    %v944 = vunpack.c.l.b16 %v863
    %v945 = vunpack.c.h.b16 %v863
    %v946 = vunpack.c.l.b16 %v864
    %v947 = vunpack.c.l.b16 %v865
    %v948 = vunpack.c.h.b16 %v865
    %v949 = vunpack.c.l.b16 %v866
    %v950 = vunpack.c.l.b16 %v867
    %v951 = vunpack.c.h.b16 %v867
    %v952 = vunpack.c.l.b16 %v868
    %v953 = vunpack.c.l.b16 %v869
    %v954 = vunpack.c.h.b16 %v869
    %v955 = vunpack.c.l.b16 %v870
    %v956 = vunpack.c.l.b16 %v871
    %v957 = vunpack.c.h.b16 %v871
    %v958 = vunpack.c.l.b16 %v872
    %v959 = vunpack.c.l.b16 %v873
    %v960 = vunpack.c.h.b16 %v873
    %v961 = vunpack.c.l.b16 %v874
    %v962 = vunpack.c.l.b16 %v875
    %v963 = vunpack.c.h.b16 %v875
    %v964 = vunpack.c.l.b16 %v876
    %v965 = vunpack.c.l.b16 %v877
    %v966 = vunpack.c.h.b16 %v877
    %v967 = vunpack.c.l.b16 %v878
    %v968 = vunpack.c.l.b16 %v879
    %v969 = vunpack.c.h.b16 %v879
    %v970 = vunpack.c.l.b16 %v880
    %v971 = vunpack.c.l.b16 %v881
    %v972 = vunpack.c.h.b16 %v881
    %v973 = vunpack.c.l.b16 %v882
    %v974 = vunpack.c.l.b16 %v883
    %v975 = vunpack.c.h.b16 %v883
    %v976 = vunpack.c.l.b16 %v884
    %v977 = vunpack.c.l.b16 %v885
    %v978 = vunpack.c.h.b16 %v885
    %v979 = vunpack.c.l.b16 %v886
    %v980 = vunpack.c.l.b16 %v887
    %v981 = vunpack.c.h.b16 %v887
    %v982 = vunpack.c.l.b16 %v888
    %v983 = vunpack.c.l.b16 %v889
    %v984 = vunpack.c.h.b16 %v889
    %v985 = vunpack.c.l.b16 %v890
    %v986 = vunpack.c.l.b16 %v891
    %v987 = vunpack.c.h.b16 %v891
    %v988 = vunpack.c.l.b16 %v892
    %v989 = vunpack.c.l.b16 %v893
    %v990 = vunpack.c.h.b16 %v893
    %v991 = vunpack.c.l.b16 %v894
    %v992 = vpack.c.b16 %v947, %v944
    %v993 = vpack.c.b16 %v948, %v945
    %v994 = vpack.c.b16 %v949, %v946
    %v995 = vpack.c.b16 %v953, %v950
    %v996 = vpack.c.b16 %v954, %v951
    %v997 = vpack.c.b16 %v955, %v952
    %v998 = vpack.c.b16 %v959, %v956
    %v999 = vpack.c.b16 %v960, %v957
    %v1000 = vpack.c.b16 %v961, %v958
    %v1001 = vpack.c.b16 %v965, %v962
    %v1002 = vpack.c.b16 %v966, %v963
    %v1003 = vpack.c.b16 %v967, %v964
    %v1004 = vpack.c.b16 %v971, %v968
    %v1005 = vpack.c.b16 %v972, %v969
    %v1006 = vpack.c.b16 %v973, %v970
    %v1007 = vpack.c.b16 %v977, %v974
    %v1008 = vpack.c.b16 %v978, %v975
    %v1009 = vpack.c.b16 %v979, %v976
    %v1010 = vpack.c.b16 %v983, %v980
    %v1011 = vpack.c.b16 %v984, %v981
    %v1012 = vpack.c.b16 %v985, %v982
    %v1013 = vpack.c.b16 %v989, %v986
    %v1014 = vpack.c.b16 %v990, %v987
    %v1015 = vpack.c.b16 %v991, %v988
    %1040 = vmatprep.subr.bf16.mxu0 %v993
    %1041 = vmatpush1.bf16.msra.mxu0 %v992
    %1042 = vmatprep.subr.bf16.mxu0 %v996
    %1043 = vmatpush1.bf16.msra.mxu0 %v995
    %1044 = vmatprep.subr.bf16.mxu0 %v999
    %1045 = vmatpush1.bf16.msra.mxu0 %v998
    %1046 = vmatprep.subr.bf16.mxu0 %v1002
    %1047 = vmatpush1.bf16.msra.mxu0 %v1001
    %1048 = vmatprep.subr.bf16.mxu0 %v1005
    %1049 = vmatpush1.bf16.msra.mxu0 %v1004
    %1050 = vmatprep.subr.bf16.mxu0 %v1008
    %1051 = vmatpush1.bf16.msra.mxu0 %v1007
    %1052 = vmatprep.subr.bf16.mxu0 %v1011
    %1053 = vmatpush1.bf16.msra.mxu0 %v1010
    %1054 = vmatprep.subr.bf16.mxu0 %v1014
    %1055 = vmatpush1.bf16.msra.mxu0 %v1013
    %1056 = vmatprep.subr.bf16.mxu0 0
    %1057 = vmatpush1.bf16.msra.mxu0 0
    %1058 = vmatprep.subr.bf16.mxu0 0
    %1059 = vmatpush1.bf16.msra.mxu0 0
    %1060 = vmatprep.subr.bf16.mxu0 0
    %1061 = vmatpush1.bf16.msra.mxu0 0
    %1062 = vmatprep.subr.bf16.mxu0 0
    %1063 = vmatpush1.bf16.msra.mxu0 0
    %1064 = vmatprep.subr.bf16.mxu0 0
    %1065 = vmatpush1.bf16.msra.mxu0 0
    %1066 = vmatprep.subr.bf16.mxu0 0
    %1067 = vmatpush1.bf16.msra.mxu0 0
    %1068 = vmatprep.subr.bf16.mxu0 0
    %1069 = vmatpush1.bf16.msra.mxu0 0
    %1070 = vmatprep.subr.bf16.mxu0 0
    %1071 = vmatpush1.bf16.msra.mxu0 0
    %1072 = vmatprep.mubr.bf16.mxu0 0
    %1073 = vmatmul.mubr.bf16.gmra.mrb[0].mxu0 %v862
    %v1074 = vpop.f32.mrb[0].mxu0
    %v1075 = vadd.f32 %v900, %v1074
    %v1076 = vpop.f32.mrb[0].mxu0
    %v1077 = vadd.f32 %v904, %v1076
    %v1078 = vpop.f32.mrb[0].mxu0
    %v1079 = vpop.f32.mrb[0].mxu0
    %1080 = vdwg.mxu0
    %1081 = vmatprep.subr.bf16.mxu0 0
    %1082 = vmatpush1.bf16.msra.mxu0 %v994
    %1083 = vmatprep.subr.bf16.mxu0 0
    %1084 = vmatpush1.bf16.msra.mxu0 %v997
    %1085 = vmatprep.subr.bf16.mxu0 0
    %1086 = vmatpush1.bf16.msra.mxu0 %v1000
    %1087 = vmatprep.subr.bf16.mxu0 0
    %1088 = vmatpush1.bf16.msra.mxu0 %v1003
    %1089 = vmatprep.subr.bf16.mxu0 0
    %1090 = vmatpush1.bf16.msra.mxu0 %v1006
    %1091 = vmatprep.subr.bf16.mxu0 0
    %1092 = vmatpush1.bf16.msra.mxu0 %v1009
    %1093 = vmatprep.subr.bf16.mxu0 0
    %1094 = vmatpush1.bf16.msra.mxu0 %v1012
    %1095 = vmatprep.subr.bf16.mxu0 0
    %1096 = vmatpush1.bf16.msra.mxu0 %v1015
    %1097 = vmatprep.subr.bf16.mxu0 0
    %1098 = vmatpush1.bf16.msra.mxu0 0
    %1099 = vmatprep.subr.bf16.mxu0 0
    %1100 = vmatpush1.bf16.msra.mxu0 0
    %1101 = vmatprep.subr.bf16.mxu0 0
    %1102 = vmatpush1.bf16.msra.mxu0 0
    %1103 = vmatprep.subr.bf16.mxu0 0
    %1104 = vmatpush1.bf16.msra.mxu0 0
    %1105 = vmatprep.subr.bf16.mxu0 0
    %1106 = vmatpush1.bf16.msra.mxu0 0
    %1107 = vmatprep.subr.bf16.mxu0 0
    %1108 = vmatpush1.bf16.msra.mxu0 0
    %1109 = vmatprep.subr.bf16.mxu0 0
    %1110 = vmatpush1.bf16.msra.mxu0 0
    %1111 = vmatprep.subr.bf16.mxu0 0
    %1112 = vmatpush1.bf16.msra.mxu0 0
    %1113 = vmatprep.mubr.bf16.mxu0 0
    %1114 = vmatmul.mubr.bf16.gmra.mrb[0].mxu0 %v862
    %v1115 = vpop.f32.mrb[0].mxu0
    %v1116 = vadd.f32 %v908, %v1115
    %v1117 = vpop.f32.mrb[0].mxu0
    %v1118 = vpop.f32.mrb[0].mxu0
    %v1119 = vpop.f32.mrb[0].mxu0
    %1120 = vdwg.mxu0
    %v1121 = vld [vmem:[#allocation12] sm:$0xff]
    %v1122 = vld [vmem:[#allocation12 + $0x8] sm:$0xf]
    %v1123 = vld [vmem:[#allocation12 + $0xc] sm:$0xff]
    %v1124 = vld [vmem:[#allocation12 + $0x14] sm:$0xf]
    %v1125 = vld [vmem:[#allocation12 + $0x18] sm:$0xff]
    %v1126 = vld [vmem:[#allocation12 + $0x20] sm:$0xf]
    %v1127 = vld [vmem:[#allocation12 + $0x24] sm:$0xff]
    %v1128 = vld [vmem:[#allocation12 + $0x2c] sm:$0xf]
    %v1129 = vld [vmem:[#allocation12 + $0x30] sm:$0xff]
    %v1130 = vld [vmem:[#allocation12 + $0x38] sm:$0xf]
    %v1131 = vld [vmem:[#allocation12 + $0x3c] sm:$0xff]
    %v1132 = vld [vmem:[#allocation12 + $0x44] sm:$0xf]
    %v1133 = vld [vmem:[#allocation12 + $0x48] sm:$0xff]
    %v1134 = vld [vmem:[#allocation12 + $0x50] sm:$0xf]
    %v1135 = vld [vmem:[#allocation12 + $0x54] sm:$0xff]
    %v1136 = vld [vmem:[#allocation12 + $0x5c] sm:$0xf]
    %v1137 = vld [vmem:[#allocation12 + $0x60] sm:$0xff]
    %v1138 = vld [vmem:[#allocation12 + $0x68] sm:$0xf]
    %v1139 = vld [vmem:[#allocation12 + $0x6c] sm:$0xff]
    %v1140 = vld [vmem:[#allocation12 + $0x74] sm:$0xf]
    %v1141 = vld [vmem:[#allocation12 + $0x78] sm:$0xff]
    %v1142 = vld [vmem:[#allocation12 + $0x80] sm:$0xf]
    %v1143 = vld [vmem:[#allocation12 + $0x84] sm:$0xff]
    %v1144 = vld [vmem:[#allocation12 + $0x8c] sm:$0xf]
    %v1145 = vld [vmem:[#allocation12 + $0x90] sm:$0xff]
    %v1146 = vld [vmem:[#allocation12 + $0x98] sm:$0xf]
    %v1147 = vld [vmem:[#allocation12 + $0x9c] sm:$0xff]
    %v1148 = vld [vmem:[#allocation12 + $0xa4] sm:$0xf]
    %v1149 = vld [vmem:[#allocation12 + $0xa8] sm:$0xff]
    %v1150 = vld [vmem:[#allocation12 + $0xb0] sm:$0xf]
    %v1151 = vld [vmem:[#allocation12 + $0xb4] sm:$0xff]
    %v1152 = vld [vmem:[#allocation12 + $0xbc] sm:$0xf]
    %v1153 = vld [vmem:[%s12] sm:$0x7]
    %v1155 = vlaneseq
    %v1156 = vshrl.u32 %v1155, 7
    %v1157 = vsub.s32 0, %v1156
    %v1158 = vrot.slane %v1153, %v1157
    %v1159 = vlaneseq
    %v1160 = vshrl.u32 %v1159, 7
    %v1161 = vsub.s32 1, %v1160
    %v1162 = vrot.slane %v1153, %v1161
    %v1163 = vlaneseq
    %v1164 = vshrl.u32 %v1163, 7
    %v1165 = vsub.s32 2, %v1164
    %v1166 = vrot.slane %v1153, %v1165
    %v1202 = vunpack.c.l.b16 %v1121
    %v1203 = vunpack.c.h.b16 %v1121
    %v1204 = vunpack.c.l.b16 %v1122
    %v1205 = vunpack.c.l.b16 %v1123
    %v1206 = vunpack.c.h.b16 %v1123
    %v1207 = vunpack.c.l.b16 %v1124
    %v1208 = vunpack.c.l.b16 %v1125
    %v1209 = vunpack.c.h.b16 %v1125
    %v1210 = vunpack.c.l.b16 %v1126
    %v1211 = vunpack.c.l.b16 %v1127
    %v1212 = vunpack.c.h.b16 %v1127
    %v1213 = vunpack.c.l.b16 %v1128
    %v1214 = vunpack.c.l.b16 %v1129
    %v1215 = vunpack.c.h.b16 %v1129
    %v1216 = vunpack.c.l.b16 %v1130
    %v1217 = vunpack.c.l.b16 %v1131
    %v1218 = vunpack.c.h.b16 %v1131
    %v1219 = vunpack.c.l.b16 %v1132
    %v1220 = vunpack.c.l.b16 %v1133
    %v1221 = vunpack.c.h.b16 %v1133
    %v1222 = vunpack.c.l.b16 %v1134
    %v1223 = vunpack.c.l.b16 %v1135
    %v1224 = vunpack.c.h.b16 %v1135
    %v1225 = vunpack.c.l.b16 %v1136
    %v1226 = vunpack.c.l.b16 %v1137
    %v1227 = vunpack.c.h.b16 %v1137
    %v1228 = vunpack.c.l.b16 %v1138
    %v1229 = vunpack.c.l.b16 %v1139
    %v1230 = vunpack.c.h.b16 %v1139
    %v1231 = vunpack.c.l.b16 %v1140
    %v1232 = vunpack.c.l.b16 %v1141
    %v1233 = vunpack.c.h.b16 %v1141
    %v1234 = vunpack.c.l.b16 %v1142
    %v1235 = vunpack.c.l.b16 %v1143
    %v1236 = vunpack.c.h.b16 %v1143
    %v1237 = vunpack.c.l.b16 %v1144
    %v1238 = vunpack.c.l.b16 %v1145
    %v1239 = vunpack.c.h.b16 %v1145
    %v1240 = vunpack.c.l.b16 %v1146
    %v1241 = vunpack.c.l.b16 %v1147
    %v1242 = vunpack.c.h.b16 %v1147
    %v1243 = vunpack.c.l.b16 %v1148
    %v1244 = vunpack.c.l.b16 %v1149
    %v1245 = vunpack.c.h.b16 %v1149
    %v1246 = vunpack.c.l.b16 %v1150
    %v1247 = vunpack.c.l.b16 %v1151
    %v1248 = vunpack.c.h.b16 %v1151
    %v1249 = vunpack.c.l.b16 %v1152
    %v1250 = vpack.c.b16 %v1205, %v1202
    %v1251 = vpack.c.b16 %v1206, %v1203
    %v1252 = vpack.c.b16 %v1207, %v1204
    %v1253 = vpack.c.b16 %v1211, %v1208
    %v1254 = vpack.c.b16 %v1212, %v1209
    %v1255 = vpack.c.b16 %v1213, %v1210
    %v1256 = vpack.c.b16 %v1217, %v1214
    %v1257 = vpack.c.b16 %v1218, %v1215
    %v1258 = vpack.c.b16 %v1219, %v1216
    %v1259 = vpack.c.b16 %v1223, %v1220
    %v1260 = vpack.c.b16 %v1224, %v1221
    %v1261 = vpack.c.b16 %v1225, %v1222
    %v1262 = vpack.c.b16 %v1229, %v1226
    %v1263 = vpack.c.b16 %v1230, %v1227
    %v1264 = vpack.c.b16 %v1231, %v1228
    %v1265 = vpack.c.b16 %v1235, %v1232
    %v1266 = vpack.c.b16 %v1236, %v1233
    %v1267 = vpack.c.b16 %v1237, %v1234
    %v1268 = vpack.c.b16 %v1241, %v1238
    %v1269 = vpack.c.b16 %v1242, %v1239
    %v1270 = vpack.c.b16 %v1243, %v1240
    %v1271 = vpack.c.b16 %v1247, %v1244
    %v1272 = vpack.c.b16 %v1248, %v1245
    %v1273 = vpack.c.b16 %v1249, %v1246
    %1298 = vmatprep.subr.bf16.mxu0 %v1251
    %1299 = vmatpush1.bf16.msra.mxu0 %v1250
    %1300 = vmatprep.subr.bf16.mxu0 %v1254
    %1301 = vmatpush1.bf16.msra.mxu0 %v1253
    %1302 = vmatprep.subr.bf16.mxu0 %v1257
    %1303 = vmatpush1.bf16.msra.mxu0 %v1256
    %1304 = vmatprep.subr.bf16.mxu0 %v1260
    %1305 = vmatpush1.bf16.msra.mxu0 %v1259
    %1306 = vmatprep.subr.bf16.mxu0 %v1263
    %1307 = vmatpush1.bf16.msra.mxu0 %v1262
    %1308 = vmatprep.subr.bf16.mxu0 %v1266
    %1309 = vmatpush1.bf16.msra.mxu0 %v1265
    %1310 = vmatprep.subr.bf16.mxu0 %v1269
    %1311 = vmatpush1.bf16.msra.mxu0 %v1268
    %1312 = vmatprep.subr.bf16.mxu0 %v1272
    %1313 = vmatpush1.bf16.msra.mxu0 %v1271
    %1314 = vmatprep.subr.bf16.mxu0 0
    %1315 = vmatpush1.bf16.msra.mxu0 0
    %1316 = vmatprep.subr.bf16.mxu0 0
    %1317 = vmatpush1.bf16.msra.mxu0 0
    %1318 = vmatprep.subr.bf16.mxu0 0
    %1319 = vmatpush1.bf16.msra.mxu0 0
    %1320 = vmatprep.subr.bf16.mxu0 0
    %1321 = vmatpush1.bf16.msra.mxu0 0
    %1322 = vmatprep.subr.bf16.mxu0 0
    %1323 = vmatpush1.bf16.msra.mxu0 0
    %1324 = vmatprep.subr.bf16.mxu0 0
    %1325 = vmatpush1.bf16.msra.mxu0 0
    %1326 = vmatprep.subr.bf16.mxu0 0
    %1327 = vmatpush1.bf16.msra.mxu0 0
    %1328 = vmatprep.subr.bf16.mxu0 0
    %1329 = vmatpush1.bf16.msra.mxu0 0
    %1330 = vmatprep.mubr.bf16.mxu0 0
    %1331 = vmatmul.mubr.bf16.gmra.mrb[0].mxu0 0
    %v1332 = vpop.f32.mrb[0].mxu0
    %v1333 = vadd.f32 %v1158, %v1332
    %v1334 = vpop.f32.mrb[0].mxu0
    %v1335 = vadd.f32 %v1162, %v1334
    %v1336 = vpop.f32.mrb[0].mxu0
    %v1337 = vpop.f32.mrb[0].mxu0
    %1338 = vdwg.mxu0
    %1339 = vmatprep.subr.bf16.mxu0 0
    %1340 = vmatpush1.bf16.msra.mxu0 %v1252
    %1341 = vmatprep.subr.bf16.mxu0 0
    %1342 = vmatpush1.bf16.msra.mxu0 %v1255
    %1343 = vmatprep.subr.bf16.mxu0 0
    %1344 = vmatpush1.bf16.msra.mxu0 %v1258
    %1345 = vmatprep.subr.bf16.mxu0 0
    %1346 = vmatpush1.bf16.msra.mxu0 %v1261
    %1347 = vmatprep.subr.bf16.mxu0 0
    %1348 = vmatpush1.bf16.msra.mxu0 %v1264
    %1349 = vmatprep.subr.bf16.mxu0 0
    %1350 = vmatpush1.bf16.msra.mxu0 %v1267
    %1351 = vmatprep.subr.bf16.mxu0 0
    %1352 = vmatpush1.bf16.msra.mxu0 %v1270
    %1353 = vmatprep.subr.bf16.mxu0 0
    %1354 = vmatpush1.bf16.msra.mxu0 %v1273
    %1355 = vmatprep.subr.bf16.mxu0 0
    %1356 = vmatpush1.bf16.msra.mxu0 0
    %1357 = vmatprep.subr.bf16.mxu0 0
    %1358 = vmatpush1.bf16.msra.mxu0 0
    %1359 = vmatprep.subr.bf16.mxu0 0
    %1360 = vmatpush1.bf16.msra.mxu0 0
    %1361 = vmatprep.subr.bf16.mxu0 0
    %1362 = vmatpush1.bf16.msra.mxu0 0
    %1363 = vmatprep.subr.bf16.mxu0 0
    %1364 = vmatpush1.bf16.msra.mxu0 0
    %1365 = vmatprep.subr.bf16.mxu0 0
    %1366 = vmatpush1.bf16.msra.mxu0 0
    %1367 = vmatprep.subr.bf16.mxu0 0
    %1368 = vmatpush1.bf16.msra.mxu0 0
    %1369 = vmatprep.subr.bf16.mxu0 0
    %1370 = vmatpush1.bf16.msra.mxu0 0
    %1371 = vmatprep.mubr.bf16.mxu0 0
    %1372 = vmatmul.mubr.bf16.gmra.mrb[0].mxu0 0
    %v1373 = vpop.f32.mrb[0].mxu0
    %v1374 = vadd.f32 %v1166, %v1373
    %v1375 = vpop.f32.mrb[0].mxu0
    %v1376 = vpop.f32.mrb[0].mxu0
    %v1377 = vpop.f32.mrb[0].mxu0
    %1378 = vdwg.mxu0
    %v1379 = vadd.f32 %v1075, %v1333
    %v1380 = vxor.u32 %v1379, 2147483648
    %v1381 = vmul.f32 %v1380, 1.442695
    %v1382 = vpow.pop %v1381
    %v1383 = vadd.f32 %v1382, 1.0
    %v1384 = vrcp.pop %v1383
    %v1385 = vmul.f32 1.0, %v1384
    %v1386 = vadd.f32 %v1077, %v1335
    %v1387 = vxor.u32 %v1386, 2147483648
    %v1388 = vmul.f32 %v1387, 1.442695
    %v1389 = vpow.pop %v1388
    %v1390 = vadd.f32 %v1389, 1.0
    %v1391 = vrcp.pop %v1390
    %v1392 = vmul.f32 1.0, %v1391
    %v1393 = vmul.f32 %v1385, %v1374
    %v1394 = vadd.f32 %v1116, %v1393
    %v1395 = vtanh.pop %v1394
    %v1396 = vsub.f32 1.0, %v1392
    %v1397 = vmul.f32 %v1396, %v1395
    %v1398 = vmul.f32 %v1392, 0.0
    %v1399 = vadd.f32 %v1397, %v1398
    %1400 = vst [vmem:[#allocation3] sm:$0xff] %v1399
    %v1401 = vld [vmem:[#allocation2 + $0x18] sm:$0xff]
    %v1402 = vld [vmem:[#allocation2 + $0x20] sm:$0xff]
    %v1403 = vld [vmem:[#allocation2 + $0x28] sm:$0xff]
    %v1404 = vadd.f32 %v1401, %v293
    %v1405 = vadd.f32 %v1402, %v295
    %v1406 = vadd.f32 %v1403, %v334
    %v1407 = vld [vmem:[#allocation9] sm:$0xff]
    %v1408 = vld [vmem:[#allocation9 + $0x8] sm:$0xf]
    %v1409 = vld [vmem:[#allocation9 + $0xc] sm:$0xff]
    %v1410 = vld [vmem:[#allocation9 + $0x14] sm:$0xf]
    %v1411 = vld [vmem:[#allocation9 + $0x18] sm:$0xff]
    %v1412 = vld [vmem:[#allocation9 + $0x20] sm:$0xf]
    %v1413 = vld [vmem:[#allocation9 + $0x24] sm:$0xff]
    %v1414 = vld [vmem:[#allocation9 + $0x2c] sm:$0xf]
    %v1415 = vld [vmem:[#allocation9 + $0x30] sm:$0xff]
    %v1416 = vld [vmem:[#allocation9 + $0x38] sm:$0xf]
    %v1417 = vld [vmem:[#allocation9 + $0x3c] sm:$0xff]
    %v1418 = vld [vmem:[#allocation9 + $0x44] sm:$0xf]
    %v1419 = vld [vmem:[#allocation9 + $0x48] sm:$0xff]
    %v1420 = vld [vmem:[#allocation9 + $0x50] sm:$0xf]
    %v1421 = vld [vmem:[#allocation9 + $0x54] sm:$0xff]
    %v1422 = vld [vmem:[#allocation9 + $0x5c] sm:$0xf]
    %v1423 = vld [vmem:[#allocation9 + $0x60] sm:$0xff]
    %v1424 = vld [vmem:[#allocation9 + $0x68] sm:$0xf]
    %v1425 = vld [vmem:[#allocation9 + $0x6c] sm:$0xff]
    %v1426 = vld [vmem:[#allocation9 + $0x74] sm:$0xf]
    %v1427 = vld [vmem:[#allocation9 + $0x78] sm:$0xff]
    %v1428 = vld [vmem:[#allocation9 + $0x80] sm:$0xf]
    %v1429 = vld [vmem:[#allocation9 + $0x84] sm:$0xff]
    %v1430 = vld [vmem:[#allocation9 + $0x8c] sm:$0xf]
    %v1431 = vld [vmem:[#allocation9 + $0x90] sm:$0xff]
    %v1432 = vld [vmem:[#allocation9 + $0x98] sm:$0xf]
    %v1433 = vld [vmem:[#allocation9 + $0x9c] sm:$0xff]
    %v1434 = vld [vmem:[#allocation9 + $0xa4] sm:$0xf]
    %v1435 = vld [vmem:[#allocation9 + $0xa8] sm:$0xff]
    %v1436 = vld [vmem:[#allocation9 + $0xb0] sm:$0xf]
    %v1437 = vld [vmem:[#allocation9 + $0xb4] sm:$0xff]
    %v1438 = vld [vmem:[#allocation9 + $0xbc] sm:$0xf]
    %v1439 = vld [vmem:[%s8] sm:$0x7]
    %v1441 = vlaneseq
    %v1442 = vshrl.u32 %v1441, 7
    %v1443 = vsub.s32 0, %v1442
    %v1444 = vrot.slane %v1439, %v1443
    %v1445 = vlaneseq
    %v1446 = vshrl.u32 %v1445, 7
    %v1447 = vsub.s32 1, %v1446
    %v1448 = vrot.slane %v1439, %v1447
    %v1449 = vlaneseq
    %v1450 = vshrl.u32 %v1449, 7
    %v1451 = vsub.s32 2, %v1450
    %v1452 = vrot.slane %v1439, %v1451
    %v1488 = vunpack.c.l.b16 %v1407
    %v1489 = vunpack.c.h.b16 %v1407
    %v1490 = vunpack.c.l.b16 %v1408
    %v1491 = vunpack.c.l.b16 %v1409
    %v1492 = vunpack.c.h.b16 %v1409
    %v1493 = vunpack.c.l.b16 %v1410
    %v1494 = vunpack.c.l.b16 %v1411
    %v1495 = vunpack.c.h.b16 %v1411
    %v1496 = vunpack.c.l.b16 %v1412
    %v1497 = vunpack.c.l.b16 %v1413
    %v1498 = vunpack.c.h.b16 %v1413
    %v1499 = vunpack.c.l.b16 %v1414
    %v1500 = vunpack.c.l.b16 %v1415
    %v1501 = vunpack.c.h.b16 %v1415
    %v1502 = vunpack.c.l.b16 %v1416
    %v1503 = vunpack.c.l.b16 %v1417
    %v1504 = vunpack.c.h.b16 %v1417
    %v1505 = vunpack.c.l.b16 %v1418
    %v1506 = vunpack.c.l.b16 %v1419
    %v1507 = vunpack.c.h.b16 %v1419
    %v1508 = vunpack.c.l.b16 %v1420
    %v1509 = vunpack.c.l.b16 %v1421
    %v1510 = vunpack.c.h.b16 %v1421
    %v1511 = vunpack.c.l.b16 %v1422
    %v1512 = vunpack.c.l.b16 %v1423
    %v1513 = vunpack.c.h.b16 %v1423
    %v1514 = vunpack.c.l.b16 %v1424
    %v1515 = vunpack.c.l.b16 %v1425
    %v1516 = vunpack.c.h.b16 %v1425
    %v1517 = vunpack.c.l.b16 %v1426
    %v1518 = vunpack.c.l.b16 %v1427
    %v1519 = vunpack.c.h.b16 %v1427
    %v1520 = vunpack.c.l.b16 %v1428
    %v1521 = vunpack.c.l.b16 %v1429
    %v1522 = vunpack.c.h.b16 %v1429
    %v1523 = vunpack.c.l.b16 %v1430
    %v1524 = vunpack.c.l.b16 %v1431
    %v1525 = vunpack.c.h.b16 %v1431
    %v1526 = vunpack.c.l.b16 %v1432
    %v1527 = vunpack.c.l.b16 %v1433
    %v1528 = vunpack.c.h.b16 %v1433
    %v1529 = vunpack.c.l.b16 %v1434
    %v1530 = vunpack.c.l.b16 %v1435
    %v1531 = vunpack.c.h.b16 %v1435
    %v1532 = vunpack.c.l.b16 %v1436
    %v1533 = vunpack.c.l.b16 %v1437
    %v1534 = vunpack.c.h.b16 %v1437
    %v1535 = vunpack.c.l.b16 %v1438
    %v1536 = vpack.c.b16 %v1491, %v1488
    %v1537 = vpack.c.b16 %v1492, %v1489
    %v1538 = vpack.c.b16 %v1493, %v1490
    %v1539 = vpack.c.b16 %v1497, %v1494
    %v1540 = vpack.c.b16 %v1498, %v1495
    %v1541 = vpack.c.b16 %v1499, %v1496
    %v1542 = vpack.c.b16 %v1503, %v1500
    %v1543 = vpack.c.b16 %v1504, %v1501
    %v1544 = vpack.c.b16 %v1505, %v1502
    %v1545 = vpack.c.b16 %v1509, %v1506
    %v1546 = vpack.c.b16 %v1510, %v1507
    %v1547 = vpack.c.b16 %v1511, %v1508
    %v1548 = vpack.c.b16 %v1515, %v1512
    %v1549 = vpack.c.b16 %v1516, %v1513
    %v1550 = vpack.c.b16 %v1517, %v1514
    %v1551 = vpack.c.b16 %v1521, %v1518
    %v1552 = vpack.c.b16 %v1522, %v1519
    %v1553 = vpack.c.b16 %v1523, %v1520
    %v1554 = vpack.c.b16 %v1527, %v1524
    %v1555 = vpack.c.b16 %v1528, %v1525
    %v1556 = vpack.c.b16 %v1529, %v1526
    %v1557 = vpack.c.b16 %v1533, %v1530
    %v1558 = vpack.c.b16 %v1534, %v1531
    %v1559 = vpack.c.b16 %v1535, %v1532
    %1584 = vmatprep.subr.bf16.mxu0 %v1537
    %1585 = vmatpush1.bf16.msra.mxu0 %v1536
    %1586 = vmatprep.subr.bf16.mxu0 %v1540
    %1587 = vmatpush1.bf16.msra.mxu0 %v1539
    %1588 = vmatprep.subr.bf16.mxu0 %v1543
    %1589 = vmatpush1.bf16.msra.mxu0 %v1542
    %1590 = vmatprep.subr.bf16.mxu0 %v1546
    %1591 = vmatpush1.bf16.msra.mxu0 %v1545
    %1592 = vmatprep.subr.bf16.mxu0 %v1549
    %1593 = vmatpush1.bf16.msra.mxu0 %v1548
    %1594 = vmatprep.subr.bf16.mxu0 %v1552
    %1595 = vmatpush1.bf16.msra.mxu0 %v1551
    %1596 = vmatprep.subr.bf16.mxu0 %v1555
    %1597 = vmatpush1.bf16.msra.mxu0 %v1554
    %1598 = vmatprep.subr.bf16.mxu0 %v1558
    %1599 = vmatpush1.bf16.msra.mxu0 %v1557
    %1600 = vmatprep.subr.bf16.mxu0 0
    %1601 = vmatpush1.bf16.msra.mxu0 0
    %1602 = vmatprep.subr.bf16.mxu0 0
    %1603 = vmatpush1.bf16.msra.mxu0 0
    %1604 = vmatprep.subr.bf16.mxu0 0
    %1605 = vmatpush1.bf16.msra.mxu0 0
    %1606 = vmatprep.subr.bf16.mxu0 0
    %1607 = vmatpush1.bf16.msra.mxu0 0
    %1608 = vmatprep.subr.bf16.mxu0 0
    %1609 = vmatpush1.bf16.msra.mxu0 0
    %1610 = vmatprep.subr.bf16.mxu0 0
    %1611 = vmatpush1.bf16.msra.mxu0 0
    %1612 = vmatprep.subr.bf16.mxu0 0
    %1613 = vmatpush1.bf16.msra.mxu0 0
    %1614 = vmatprep.subr.bf16.mxu0 0
    %1615 = vmatpush1.bf16.msra.mxu0 0
    %1616 = vmatprep.mubr.bf16.mxu0 0
    %1617 = vmatmul.mubr.bf16.gmra.mrb[0].mxu0 %v862
    %v1618 = vpop.f32.mrb[0].mxu0
    %v1619 = vadd.f32 %v1444, %v1618
    %v1620 = vpop.f32.mrb[0].mxu0
    %v1621 = vadd.f32 %v1448, %v1620
    %v1622 = vpop.f32.mrb[0].mxu0
    %v1623 = vpop.f32.mrb[0].mxu0
    %1624 = vdwg.mxu0
    %1625 = vmatprep.subr.bf16.mxu0 0
    %1626 = vmatpush1.bf16.msra.mxu0 %v1538
    %1627 = vmatprep.subr.bf16.mxu0 0
    %1628 = vmatpush1.bf16.msra.mxu0 %v1541
    %1629 = vmatprep.subr.bf16.mxu0 0
    %1630 = vmatpush1.bf16.msra.mxu0 %v1544
    %1631 = vmatprep.subr.bf16.mxu0 0
    %1632 = vmatpush1.bf16.msra.mxu0 %v1547
    %1633 = vmatprep.subr.bf16.mxu0 0
    %1634 = vmatpush1.bf16.msra.mxu0 %v1550
    %1635 = vmatprep.subr.bf16.mxu0 0
    %1636 = vmatpush1.bf16.msra.mxu0 %v1553
    %1637 = vmatprep.subr.bf16.mxu0 0
    %1638 = vmatpush1.bf16.msra.mxu0 %v1556
    %1639 = vmatprep.subr.bf16.mxu0 0
    %1640 = vmatpush1.bf16.msra.mxu0 %v1559
    %1641 = vmatprep.subr.bf16.mxu0 0
    %1642 = vmatpush1.bf16.msra.mxu0 0
    %1643 = vmatprep.subr.bf16.mxu0 0
    %1644 = vmatpush1.bf16.msra.mxu0 0
    %1645 = vmatprep.subr.bf16.mxu0 0
    %1646 = vmatpush1.bf16.msra.mxu0 0
    %1647 = vmatprep.subr.bf16.mxu0 0
    %1648 = vmatpush1.bf16.msra.mxu0 0
    %1649 = vmatprep.subr.bf16.mxu0 0
    %1650 = vmatpush1.bf16.msra.mxu0 0
    %1651 = vmatprep.subr.bf16.mxu0 0
    %1652 = vmatpush1.bf16.msra.mxu0 0
    %1653 = vmatprep.subr.bf16.mxu0 0
    %1654 = vmatpush1.bf16.msra.mxu0 0
    %1655 = vmatprep.subr.bf16.mxu0 0
    %1656 = vmatpush1.bf16.msra.mxu0 0
    %1657 = vmatprep.mubr.bf16.mxu0 0
    %1658 = vmatmul.mubr.bf16.gmra.mrb[0].mxu0 %v862
    %v1659 = vpop.f32.mrb[0].mxu0
    %v1660 = vadd.f32 %v1452, %v1659
    %v1661 = vpop.f32.mrb[0].mxu0
    %v1662 = vpop.f32.mrb[0].mxu0
    %v1663 = vpop.f32.mrb[0].mxu0
    %1664 = vdwg.mxu0
    %v1665 = vadd.f32 %v1404, %v1619
    %v1666 = vxor.u32 %v1665, 2147483648
    %v1667 = vmul.f32 %v1666, 1.442695
    %v1668 = vpow.pop %v1667
    %v1669 = vadd.f32 %v1668, 1.0
    %v1670 = vrcp.pop %v1669
    %v1671 = vmul.f32 1.0, %v1670
    %v1672 = vadd.f32 %v1405, %v1621
    %v1673 = vxor.u32 %v1672, 2147483648
    %v1674 = vmul.f32 %v1673, 1.442695
    %v1675 = vpow.pop %v1674
    %v1676 = vadd.f32 %v1675, 1.0
    %v1677 = vrcp.pop %v1676
    %v1678 = vmul.f32 1.0, %v1677
    %v1679 = vmul.f32 %v1671, %v1660
    %v1680 = vadd.f32 %v1406, %v1679
    %v1681 = vtanh.pop %v1680
    %v1682 = vsub.f32 1.0, %v1678
    %v1683 = vmul.f32 %v1682, %v1681
    %v1684 = vmul.f32 %v1678, %v861
    %v1685 = vadd.f32 %v1683, %v1684
    %v1686 = vpack.c.bf16 %v1685, %v1685
    %v1687 = vld [vmem:[#allocation11] sm:$0xff]
    %v1688 = vld [vmem:[#allocation11 + $0x8] sm:$0xf]
    %v1689 = vld [vmem:[#allocation11 + $0xc] sm:$0xff]
    %v1690 = vld [vmem:[#allocation11 + $0x14] sm:$0xf]
    %v1691 = vld [vmem:[#allocation11 + $0x18] sm:$0xff]
    %v1692 = vld [vmem:[#allocation11 + $0x20] sm:$0xf]
    %v1693 = vld [vmem:[#allocation11 + $0x24] sm:$0xff]
    %v1694 = vld [vmem:[#allocation11 + $0x2c] sm:$0xf]
    %v1695 = vld [vmem:[#allocation11 + $0x30] sm:$0xff]
    %v1696 = vld [vmem:[#allocation11 + $0x38] sm:$0xf]
    %v1697 = vld [vmem:[#allocation11 + $0x3c] sm:$0xff]
    %v1698 = vld [vmem:[#allocation11 + $0x44] sm:$0xf]
    %v1699 = vld [vmem:[#allocation11 + $0x48] sm:$0xff]
    %v1700 = vld [vmem:[#allocation11 + $0x50] sm:$0xf]
    %v1701 = vld [vmem:[#allocation11 + $0x54] sm:$0xff]
    %v1702 = vld [vmem:[#allocation11 + $0x5c] sm:$0xf]
    %v1703 = vld [vmem:[#allocation11 + $0x60] sm:$0xff]
    %v1704 = vld [vmem:[#allocation11 + $0x68] sm:$0xf]
    %v1705 = vld [vmem:[#allocation11 + $0x6c] sm:$0xff]
    %v1706 = vld [vmem:[#allocation11 + $0x74] sm:$0xf]
    %v1707 = vld [vmem:[#allocation11 + $0x78] sm:$0xff]
    %v1708 = vld [vmem:[#allocation11 + $0x80] sm:$0xf]
    %v1709 = vld [vmem:[#allocation11 + $0x84] sm:$0xff]
    %v1710 = vld [vmem:[#allocation11 + $0x8c] sm:$0xf]
    %v1711 = vld [vmem:[#allocation11 + $0x90] sm:$0xff]
    %v1712 = vld [vmem:[#allocation11 + $0x98] sm:$0xf]
    %v1713 = vld [vmem:[#allocation11 + $0x9c] sm:$0xff]
    %v1714 = vld [vmem:[#allocation11 + $0xa4] sm:$0xf]
    %v1715 = vld [vmem:[#allocation11 + $0xa8] sm:$0xff]
    %v1716 = vld [vmem:[#allocation11 + $0xb0] sm:$0xf]
    %v1717 = vld [vmem:[#allocation11 + $0xb4] sm:$0xff]
    %v1718 = vld [vmem:[#allocation11 + $0xbc] sm:$0xf]
    %v1719 = vld [vmem:[%s10] sm:$0x7]
    %v1721 = vlaneseq
    %v1722 = vshrl.u32 %v1721, 7
    %v1723 = vsub.s32 0, %v1722
    %v1724 = vrot.slane %v1719, %v1723
    %v1725 = vlaneseq
    %v1726 = vshrl.u32 %v1725, 7
    %v1727 = vsub.s32 1, %v1726
    %v1728 = vrot.slane %v1719, %v1727
    %v1729 = vlaneseq
    %v1730 = vshrl.u32 %v1729, 7
    %v1731 = vsub.s32 2, %v1730
    %v1732 = vrot.slane %v1719, %v1731
    %v1768 = vunpack.c.l.b16 %v1687
    %v1769 = vunpack.c.h.b16 %v1687
    %v1770 = vunpack.c.l.b16 %v1688
    %v1771 = vunpack.c.l.b16 %v1689
    %v1772 = vunpack.c.h.b16 %v1689
    %v1773 = vunpack.c.l.b16 %v1690
    %v1774 = vunpack.c.l.b16 %v1691
    %v1775 = vunpack.c.h.b16 %v1691
    %v1776 = vunpack.c.l.b16 %v1692
    %v1777 = vunpack.c.l.b16 %v1693
    %v1778 = vunpack.c.h.b16 %v1693
    %v1779 = vunpack.c.l.b16 %v1694
    %v1780 = vunpack.c.l.b16 %v1695
    %v1781 = vunpack.c.h.b16 %v1695
    %v1782 = vunpack.c.l.b16 %v1696
    %v1783 = vunpack.c.l.b16 %v1697
    %v1784 = vunpack.c.h.b16 %v1697
    %v1785 = vunpack.c.l.b16 %v1698
    %v1786 = vunpack.c.l.b16 %v1699
    %v1787 = vunpack.c.h.b16 %v1699
    %v1788 = vunpack.c.l.b16 %v1700
    %v1789 = vunpack.c.l.b16 %v1701
    %v1790 = vunpack.c.h.b16 %v1701
    %v1791 = vunpack.c.l.b16 %v1702
    %v1792 = vunpack.c.l.b16 %v1703
    %v1793 = vunpack.c.h.b16 %v1703
    %v1794 = vunpack.c.l.b16 %v1704
    %v1795 = vunpack.c.l.b16 %v1705
    %v1796 = vunpack.c.h.b16 %v1705
    %v1797 = vunpack.c.l.b16 %v1706
    %v1798 = vunpack.c.l.b16 %v1707
    %v1799 = vunpack.c.h.b16 %v1707
    %v1800 = vunpack.c.l.b16 %v1708
    %v1801 = vunpack.c.l.b16 %v1709
    %v1802 = vunpack.c.h.b16 %v1709
    %v1803 = vunpack.c.l.b16 %v1710
    %v1804 = vunpack.c.l.b16 %v1711
    %v1805 = vunpack.c.h.b16 %v1711
    %v1806 = vunpack.c.l.b16 %v1712
    %v1807 = vunpack.c.l.b16 %v1713
    %v1808 = vunpack.c.h.b16 %v1713
    %v1809 = vunpack.c.l.b16 %v1714
    %v1810 = vunpack.c.l.b16 %v1715
    %v1811 = vunpack.c.h.b16 %v1715
    %v1812 = vunpack.c.l.b16 %v1716
    %v1813 = vunpack.c.l.b16 %v1717
    %v1814 = vunpack.c.h.b16 %v1717
    %v1815 = vunpack.c.l.b16 %v1718
    %v1816 = vpack.c.b16 %v1771, %v1768
    %v1817 = vpack.c.b16 %v1772, %v1769
    %v1818 = vpack.c.b16 %v1773, %v1770
    %v1819 = vpack.c.b16 %v1777, %v1774
    %v1820 = vpack.c.b16 %v1778, %v1775
    %v1821 = vpack.c.b16 %v1779, %v1776
    %v1822 = vpack.c.b16 %v1783, %v1780
    %v1823 = vpack.c.b16 %v1784, %v1781
    %v1824 = vpack.c.b16 %v1785, %v1782
    %v1825 = vpack.c.b16 %v1789, %v1786
    %v1826 = vpack.c.b16 %v1790, %v1787
    %v1827 = vpack.c.b16 %v1791, %v1788
    %v1828 = vpack.c.b16 %v1795, %v1792
    %v1829 = vpack.c.b16 %v1796, %v1793
    %v1830 = vpack.c.b16 %v1797, %v1794
    %v1831 = vpack.c.b16 %v1801, %v1798
    %v1832 = vpack.c.b16 %v1802, %v1799
    %v1833 = vpack.c.b16 %v1803, %v1800
    %v1834 = vpack.c.b16 %v1807, %v1804
    %v1835 = vpack.c.b16 %v1808, %v1805
    %v1836 = vpack.c.b16 %v1809, %v1806
    %v1837 = vpack.c.b16 %v1813, %v1810
    %v1838 = vpack.c.b16 %v1814, %v1811
    %v1839 = vpack.c.b16 %v1815, %v1812
    %1864 = vmatprep.subr.bf16.mxu0 %v1817
    %1865 = vmatpush1.bf16.msra.mxu0 %v1816
    %1866 = vmatprep.subr.bf16.mxu0 %v1820
    %1867 = vmatpush1.bf16.msra.mxu0 %v1819
    %1868 = vmatprep.subr.bf16.mxu0 %v1823
    %1869 = vmatpush1.bf16.msra.mxu0 %v1822
    %1870 = vmatprep.subr.bf16.mxu0 %v1826
    %1871 = vmatpush1.bf16.msra.mxu0 %v1825
    %1872 = vmatprep.subr.bf16.mxu0 %v1829
    %1873 = vmatpush1.bf16.msra.mxu0 %v1828
    %1874 = vmatprep.subr.bf16.mxu0 %v1832
    %1875 = vmatpush1.bf16.msra.mxu0 %v1831
    %1876 = vmatprep.subr.bf16.mxu0 %v1835
    %1877 = vmatpush1.bf16.msra.mxu0 %v1834
    %1878 = vmatprep.subr.bf16.mxu0 %v1838
    %1879 = vmatpush1.bf16.msra.mxu0 %v1837
    %1880 = vmatprep.subr.bf16.mxu0 0
    %1881 = vmatpush1.bf16.msra.mxu0 0
    %1882 = vmatprep.subr.bf16.mxu0 0
    %1883 = vmatpush1.bf16.msra.mxu0 0
    %1884 = vmatprep.subr.bf16.mxu0 0
    %1885 = vmatpush1.bf16.msra.mxu0 0
    %1886 = vmatprep.subr.bf16.mxu0 0
    %1887 = vmatpush1.bf16.msra.mxu0 0
    %1888 = vmatprep.subr.bf16.mxu0 0
    %1889 = vmatpush1.bf16.msra.mxu0 0
    %1890 = vmatprep.subr.bf16.mxu0 0
    %1891 = vmatpush1.bf16.msra.mxu0 0
    %1892 = vmatprep.subr.bf16.mxu0 0
    %1893 = vmatpush1.bf16.msra.mxu0 0
    %1894 = vmatprep.subr.bf16.mxu0 0
    %1895 = vmatpush1.bf16.msra.mxu0 0
    %1896 = vmatprep.mubr.bf16.mxu0 0
    %1897 = vmatmul.mubr.bf16.gmra.mrb[0].mxu0 %v1686
    %v1898 = vpop.f32.mrb[0].mxu0
    %v1899 = vadd.f32 %v1724, %v1898
    %v1900 = vpop.f32.mrb[0].mxu0
    %v1901 = vadd.f32 %v1728, %v1900
    %v1902 = vpop.f32.mrb[0].mxu0
    %v1903 = vpop.f32.mrb[0].mxu0
    %1904 = vdwg.mxu0
    %1905 = vmatprep.subr.bf16.mxu0 0
    %1906 = vmatpush1.bf16.msra.mxu0 %v1818
    %1907 = vmatprep.subr.bf16.mxu0 0
    %1908 = vmatpush1.bf16.msra.mxu0 %v1821
    %1909 = vmatprep.subr.bf16.mxu0 0
    %1910 = vmatpush1.bf16.msra.mxu0 %v1824
    %1911 = vmatprep.subr.bf16.mxu0 0
    %1912 = vmatpush1.bf16.msra.mxu0 %v1827
    %1913 = vmatprep.subr.bf16.mxu0 0
    %1914 = vmatpush1.bf16.msra.mxu0 %v1830
    %1915 = vmatprep.subr.bf16.mxu0 0
    %1916 = vmatpush1.bf16.msra.mxu0 %v1833
    %1917 = vmatprep.subr.bf16.mxu0 0
    %1918 = vmatpush1.bf16.msra.mxu0 %v1836
    %1919 = vmatprep.subr.bf16.mxu0 0
    %1920 = vmatpush1.bf16.msra.mxu0 %v1839
    %1921 = vmatprep.subr.bf16.mxu0 0
    %1922 = vmatpush1.bf16.msra.mxu0 0
    %1923 = vmatprep.subr.bf16.mxu0 0
    %1924 = vmatpush1.bf16.msra.mxu0 0
    %1925 = vmatprep.subr.bf16.mxu0 0
    %1926 = vmatpush1.bf16.msra.mxu0 0
    %1927 = vmatprep.subr.bf16.mxu0 0
    %1928 = vmatpush1.bf16.msra.mxu0 0
    %1929 = vmatprep.subr.bf16.mxu0 0
    %1930 = vmatpush1.bf16.msra.mxu0 0
    %1931 = vmatprep.subr.bf16.mxu0 0
    %1932 = vmatpush1.bf16.msra.mxu0 0
    %1933 = vmatprep.subr.bf16.mxu0 0
    %1934 = vmatpush1.bf16.msra.mxu0 0
    %1935 = vmatprep.subr.bf16.mxu0 0
    %1936 = vmatpush1.bf16.msra.mxu0 0
    %1937 = vmatprep.mubr.bf16.mxu0 0
    %1938 = vmatmul.mubr.bf16.gmra.mrb[0].mxu0 %v1686
    %v1939 = vpop.f32.mrb[0].mxu0
    %v1940 = vadd.f32 %v1732, %v1939
    %v1941 = vpop.f32.mrb[0].mxu0
    %v1942 = vpop.f32.mrb[0].mxu0
    %v1943 = vpop.f32.mrb[0].mxu0
    %1944 = vdwg.mxu0
    %v1945 = vpack.c.bf16 %v1399, %v1399
    %v1946 = vld [vmem:[#allocation12] sm:$0xff]
    %v1947 = vld [vmem:[#allocation12 + $0x8] sm:$0xf]
    %v1948 = vld [vmem:[#allocation12 + $0xc] sm:$0xff]
    %v1949 = vld [vmem:[#allocation12 + $0x14] sm:$0xf]
    %v1950 = vld [vmem:[#allocation12 + $0x18] sm:$0xff]
    %v1951 = vld [vmem:[#allocation12 + $0x20] sm:$0xf]
    %v1952 = vld [vmem:[#allocation12 + $0x24] sm:$0xff]
    %v1953 = vld [vmem:[#allocation12 + $0x2c] sm:$0xf]
    %v1954 = vld [vmem:[#allocation12 + $0x30] sm:$0xff]
    %v1955 = vld [vmem:[#allocation12 + $0x38] sm:$0xf]
    %v1956 = vld [vmem:[#allocation12 + $0x3c] sm:$0xff]
    %v1957 = vld [vmem:[#allocation12 + $0x44] sm:$0xf]
    %v1958 = vld [vmem:[#allocation12 + $0x48] sm:$0xff]
    %v1959 = vld [vmem:[#allocation12 + $0x50] sm:$0xf]
    %v1960 = vld [vmem:[#allocation12 + $0x54] sm:$0xff]
    %v1961 = vld [vmem:[#allocation12 + $0x5c] sm:$0xf]
    %v1962 = vld [vmem:[#allocation12 + $0x60] sm:$0xff]
    %v1963 = vld [vmem:[#allocation12 + $0x68] sm:$0xf]
    %v1964 = vld [vmem:[#allocation12 + $0x6c] sm:$0xff]
    %v1965 = vld [vmem:[#allocation12 + $0x74] sm:$0xf]
    %v1966 = vld [vmem:[#allocation12 + $0x78] sm:$0xff]
    %v1967 = vld [vmem:[#allocation12 + $0x80] sm:$0xf]
    %v1968 = vld [vmem:[#allocation12 + $0x84] sm:$0xff]
    %v1969 = vld [vmem:[#allocation12 + $0x8c] sm:$0xf]
    %v1970 = vld [vmem:[#allocation12 + $0x90] sm:$0xff]
    %v1971 = vld [vmem:[#allocation12 + $0x98] sm:$0xf]
    %v1972 = vld [vmem:[#allocation12 + $0x9c] sm:$0xff]
    %v1973 = vld [vmem:[#allocation12 + $0xa4] sm:$0xf]
    %v1974 = vld [vmem:[#allocation12 + $0xa8] sm:$0xff]
    %v1975 = vld [vmem:[#allocation12 + $0xb0] sm:$0xf]
    %v1976 = vld [vmem:[#allocation12 + $0xb4] sm:$0xff]
    %v1977 = vld [vmem:[#allocation12 + $0xbc] sm:$0xf]
    %v1978 = vld [vmem:[%s12] sm:$0x7]
    %v1980 = vlaneseq
    %v1981 = vshrl.u32 %v1980, 7
    %v1982 = vsub.s32 0, %v1981
    %v1983 = vrot.slane %v1978, %v1982
    %v1984 = vlaneseq
    %v1985 = vshrl.u32 %v1984, 7
    %v1986 = vsub.s32 1, %v1985
    %v1987 = vrot.slane %v1978, %v1986
    %v1988 = vlaneseq
    %v1989 = vshrl.u32 %v1988, 7
    %v1990 = vsub.s32 2, %v1989
    %v1991 = vrot.slane %v1978, %v1990
    %v2027 = vunpack.c.l.b16 %v1946
    %v2028 = vunpack.c.h.b16 %v1946
    %v2029 = vunpack.c.l.b16 %v1947
    %v2030 = vunpack.c.l.b16 %v1948
    %v2031 = vunpack.c.h.b16 %v1948
    %v2032 = vunpack.c.l.b16 %v1949
    %v2033 = vunpack.c.l.b16 %v1950
    %v2034 = vunpack.c.h.b16 %v1950
    %v2035 = vunpack.c.l.b16 %v1951
    %v2036 = vunpack.c.l.b16 %v1952
    %v2037 = vunpack.c.h.b16 %v1952
    %v2038 = vunpack.c.l.b16 %v1953
    %v2039 = vunpack.c.l.b16 %v1954
    %v2040 = vunpack.c.h.b16 %v1954
    %v2041 = vunpack.c.l.b16 %v1955
    %v2042 = vunpack.c.l.b16 %v1956
    %v2043 = vunpack.c.h.b16 %v1956
    %v2044 = vunpack.c.l.b16 %v1957
    %v2045 = vunpack.c.l.b16 %v1958
    %v2046 = vunpack.c.h.b16 %v1958
    %v2047 = vunpack.c.l.b16 %v1959
    %v2048 = vunpack.c.l.b16 %v1960
    %v2049 = vunpack.c.h.b16 %v1960
    %v2050 = vunpack.c.l.b16 %v1961
    %v2051 = vunpack.c.l.b16 %v1962
    %v2052 = vunpack.c.h.b16 %v1962
    %v2053 = vunpack.c.l.b16 %v1963
    %v2054 = vunpack.c.l.b16 %v1964
    %v2055 = vunpack.c.h.b16 %v1964
    %v2056 = vunpack.c.l.b16 %v1965
    %v2057 = vunpack.c.l.b16 %v1966
    %v2058 = vunpack.c.h.b16 %v1966
    %v2059 = vunpack.c.l.b16 %v1967
    %v2060 = vunpack.c.l.b16 %v1968
    %v2061 = vunpack.c.h.b16 %v1968
    %v2062 = vunpack.c.l.b16 %v1969
    %v2063 = vunpack.c.l.b16 %v1970
    %v2064 = vunpack.c.h.b16 %v1970
    %v2065 = vunpack.c.l.b16 %v1971
    %v2066 = vunpack.c.l.b16 %v1972
    %v2067 = vunpack.c.h.b16 %v1972
    %v2068 = vunpack.c.l.b16 %v1973
    %v2069 = vunpack.c.l.b16 %v1974
    %v2070 = vunpack.c.h.b16 %v1974
    %v2071 = vunpack.c.l.b16 %v1975
    %v2072 = vunpack.c.l.b16 %v1976
    %v2073 = vunpack.c.h.b16 %v1976
    %v2074 = vunpack.c.l.b16 %v1977
    %v2075 = vpack.c.b16 %v2030, %v2027
    %v2076 = vpack.c.b16 %v2031, %v2028
    %v2077 = vpack.c.b16 %v2032, %v2029
    %v2078 = vpack.c.b16 %v2036, %v2033
    %v2079 = vpack.c.b16 %v2037, %v2034
    %v2080 = vpack.c.b16 %v2038, %v2035
    %v2081 = vpack.c.b16 %v2042, %v2039
    %v2082 = vpack.c.b16 %v2043, %v2040
    %v2083 = vpack.c.b16 %v2044, %v2041
    %v2084 = vpack.c.b16 %v2048, %v2045
    %v2085 = vpack.c.b16 %v2049, %v2046
    %v2086 = vpack.c.b16 %v2050, %v2047
    %v2087 = vpack.c.b16 %v2054, %v2051
    %v2088 = vpack.c.b16 %v2055, %v2052
    %v2089 = vpack.c.b16 %v2056, %v2053
    %v2090 = vpack.c.b16 %v2060, %v2057
    %v2091 = vpack.c.b16 %v2061, %v2058
    %v2092 = vpack.c.b16 %v2062, %v2059
    %v2093 = vpack.c.b16 %v2066, %v2063
    %v2094 = vpack.c.b16 %v2067, %v2064
    %v2095 = vpack.c.b16 %v2068, %v2065
    %v2096 = vpack.c.b16 %v2072, %v2069
    %v2097 = vpack.c.b16 %v2073, %v2070
    %v2098 = vpack.c.b16 %v2074, %v2071
    %2123 = vmatprep.subr.bf16.mxu0 %v2076
    %2124 = vmatpush1.bf16.msra.mxu0 %v2075
    %2125 = vmatprep.subr.bf16.mxu0 %v2079
    %2126 = vmatpush1.bf16.msra.mxu0 %v2078
    %2127 = vmatprep.subr.bf16.mxu0 %v2082
    %2128 = vmatpush1.bf16.msra.mxu0 %v2081
    %2129 = vmatprep.subr.bf16.mxu0 %v2085
    %2130 = vmatpush1.bf16.msra.mxu0 %v2084
    %2131 = vmatprep.subr.bf16.mxu0 %v2088
    %2132 = vmatpush1.bf16.msra.mxu0 %v2087
    %2133 = vmatprep.subr.bf16.mxu0 %v2091
    %2134 = vmatpush1.bf16.msra.mxu0 %v2090
    %2135 = vmatprep.subr.bf16.mxu0 %v2094
    %2136 = vmatpush1.bf16.msra.mxu0 %v2093
    %2137 = vmatprep.subr.bf16.mxu0 %v2097
    %2138 = vmatpush1.bf16.msra.mxu0 %v2096
    %2139 = vmatprep.subr.bf16.mxu0 0
    %2140 = vmatpush1.bf16.msra.mxu0 0
    %2141 = vmatprep.subr.bf16.mxu0 0
    %2142 = vmatpush1.bf16.msra.mxu0 0
    %2143 = vmatprep.subr.bf16.mxu0 0
    %2144 = vmatpush1.bf16.msra.mxu0 0
    %2145 = vmatprep.subr.bf16.mxu0 0
    %2146 = vmatpush1.bf16.msra.mxu0 0
    %2147 = vmatprep.subr.bf16.mxu0 0
    %2148 = vmatpush1.bf16.msra.mxu0 0
    %2149 = vmatprep.subr.bf16.mxu0 0
    %2150 = vmatpush1.bf16.msra.mxu0 0
    %2151 = vmatprep.subr.bf16.mxu0 0
    %2152 = vmatpush1.bf16.msra.mxu0 0
    %2153 = vmatprep.subr.bf16.mxu0 0
    %2154 = vmatpush1.bf16.msra.mxu0 0
    %2155 = vmatprep.mubr.bf16.mxu0 0
    %2156 = vmatmul.mubr.bf16.gmra.mrb[0].mxu0 %v1945
    %v2157 = vpop.f32.mrb[0].mxu0
    %v2158 = vadd.f32 %v1983, %v2157
    %v2159 = vpop.f32.mrb[0].mxu0
    %v2160 = vadd.f32 %v1987, %v2159
    %v2161 = vpop.f32.mrb[0].mxu0
    %v2162 = vpop.f32.mrb[0].mxu0
    %2163 = vdwg.mxu0
    %2164 = vmatprep.subr.bf16.mxu0 0
    %2165 = vmatpush1.bf16.msra.mxu0 %v2077
    %2166 = vmatprep.subr.bf16.mxu0 0
    %2167 = vmatpush1.bf16.msra.mxu0 %v2080
    %2168 = vmatprep.subr.bf16.mxu0 0
    %2169 = vmatpush1.bf16.msra.mxu0 %v2083
    %2170 = vmatprep.subr.bf16.mxu0 0
    %2171 = vmatpush1.bf16.msra.mxu0 %v2086
    %2172 = vmatprep.subr.bf16.mxu0 0
    %2173 = vmatpush1.bf16.msra.mxu0 %v2089
    %2174 = vmatprep.subr.bf16.mxu0 0
    %2175 = vmatpush1.bf16.msra.mxu0 %v2092
    %2176 = vmatprep.subr.bf16.mxu0 0
    %2177 = vmatpush1.bf16.msra.mxu0 %v2095
    %2178 = vmatprep.subr.bf16.mxu0 0
    %2179 = vmatpush1.bf16.msra.mxu0 %v2098
    %2180 = vmatprep.subr.bf16.mxu0 0
    %2181 = vmatpush1.bf16.msra.mxu0 0
    %2182 = vmatprep.subr.bf16.mxu0 0
    %2183 = vmatpush1.bf16.msra.mxu0 0
    %2184 = vmatprep.subr.bf16.mxu0 0
    %2185 = vmatpush1.bf16.msra.mxu0 0
    %2186 = vmatprep.subr.bf16.mxu0 0
    %2187 = vmatpush1.bf16.msra.mxu0 0
    %2188 = vmatprep.subr.bf16.mxu0 0
    %2189 = vmatpush1.bf16.msra.mxu0 0
    %2190 = vmatprep.subr.bf16.mxu0 0
    %2191 = vmatpush1.bf16.msra.mxu0 0
    %2192 = vmatprep.subr.bf16.mxu0 0
    %2193 = vmatpush1.bf16.msra.mxu0 0
    %2194 = vmatprep.subr.bf16.mxu0 0
    %2195 = vmatpush1.bf16.msra.mxu0 0
    %2196 = vmatprep.mubr.bf16.mxu0 0
    %2197 = vmatmul.mubr.bf16.gmra.mrb[0].mxu0 %v1945
    %v2198 = vpop.f32.mrb[0].mxu0
    %v2199 = vadd.f32 %v1991, %v2198
    %v2200 = vpop.f32.mrb[0].mxu0
    %v2201 = vpop.f32.mrb[0].mxu0
    %v2202 = vpop.f32.mrb[0].mxu0
    %2203 = vdwg.mxu0
    %v2204 = vadd.f32 %v1899, %v2158
    %v2205 = vxor.u32 %v2204, 2147483648
    %v2206 = vmul.f32 %v2205, 1.442695
    %v2207 = vpow.pop %v2206
    %v2208 = vadd.f32 %v2207, 1.0
    %v2209 = vrcp.pop %v2208
    %v2210 = vmul.f32 1.0, %v2209
    %v2211 = vadd.f32 %v1901, %v2160
    %v2212 = vxor.u32 %v2211, 2147483648
    %v2213 = vmul.f32 %v2212, 1.442695
    %v2214 = vpow.pop %v2213
    %v2215 = vadd.f32 %v2214, 1.0
    %v2216 = vrcp.pop %v2215
    %v2217 = vmul.f32 1.0, %v2216
    %v2218 = vmul.f32 %v2210, %v2199
    %v2219 = vadd.f32 %v1940, %v2218
    %v2220 = vtanh.pop %v2219
    %v2221 = vsub.f32 1.0, %v2217
    %v2222 = vmul.f32 %v2221, %v2220
    %v2223 = vmul.f32 %v2217, %v1399
    %v2224 = vadd.f32 %v2222, %v2223
    %2225 = vst [vmem:[#allocation3 + $0x8] sm:$0xff] %v2224
    %v2226 = vld [vmem:[#allocation2 + $0x30] sm:$0xff]
    %v2227 = vld [vmem:[#allocation2 + $0x38] sm:$0xff]
    %v2228 = vld [vmem:[#allocation2 + $0x40] sm:$0xff]
    %v2229 = vadd.f32 %v2226, %v293
    %v2230 = vadd.f32 %v2227, %v295
    %v2231 = vadd.f32 %v2228, %v334
    %v2232 = vld [vmem:[#allocation9] sm:$0xff]
    %v2233 = vld [vmem:[#allocation9 + $0x8] sm:$0xf]
    %v2234 = vld [vmem:[#allocation9 + $0xc] sm:$0xff]
    %v2235 = vld [vmem:[#allocation9 + $0x14] sm:$0xf]
    %v2236 = vld [vmem:[#allocation9 + $0x18] sm:$0xff]
    %v2237 = vld [vmem:[#allocation9 + $0x20] sm:$0xf]
    %v2238 = vld [vmem:[#allocation9 + $0x24] sm:$0xff]
    %v2239 = vld [vmem:[#allocation9 + $0x2c] sm:$0xf]
    %v2240 = vld [vmem:[#allocation9 + $0x30] sm:$0xff]
    %v2241 = vld [vmem:[#allocation9 + $0x38] sm:$0xf]
    %v2242 = vld [vmem:[#allocation9 + $0x3c] sm:$0xff]
    %v2243 = vld [vmem:[#allocation9 + $0x44] sm:$0xf]
    %v2244 = vld [vmem:[#allocation9 + $0x48] sm:$0xff]
    %v2245 = vld [vmem:[#allocation9 + $0x50] sm:$0xf]
    %v2246 = vld [vmem:[#allocation9 + $0x54] sm:$0xff]
    %v2247 = vld [vmem:[#allocation9 + $0x5c] sm:$0xf]
    %v2248 = vld [vmem:[#allocation9 + $0x60] sm:$0xff]
    %v2249 = vld [vmem:[#allocation9 + $0x68] sm:$0xf]
    %v2250 = vld [vmem:[#allocation9 + $0x6c] sm:$0xff]
    %v2251 = vld [vmem:[#allocation9 + $0x74] sm:$0xf]
    %v2252 = vld [vmem:[#allocation9 + $0x78] sm:$0xff]
    %v2253 = vld [vmem:[#allocation9 + $0x80] sm:$0xf]
    %v2254 = vld [vmem:[#allocation9 + $0x84] sm:$0xff]
    %v2255 = vld [vmem:[#allocation9 + $0x8c] sm:$0xf]
    %v2256 = vld [vmem:[#allocation9 + $0x90] sm:$0xff]
    %v2257 = vld [vmem:[#allocation9 + $0x98] sm:$0xf]
    %v2258 = vld [vmem:[#allocation9 + $0x9c] sm:$0xff]
    %v2259 = vld [vmem:[#allocation9 + $0xa4] sm:$0xf]
    %v2260 = vld [vmem:[#allocation9 + $0xa8] sm:$0xff]
    %v2261 = vld [vmem:[#allocation9 + $0xb0] sm:$0xf]
    %v2262 = vld [vmem:[#allocation9 + $0xb4] sm:$0xff]
    %v2263 = vld [vmem:[#allocation9 + $0xbc] sm:$0xf]
    %v2264 = vld [vmem:[%s8] sm:$0x7]
    %v2266 = vlaneseq
    %v2267 = vshrl.u32 %v2266, 7
    %v2268 = vsub.s32 0, %v2267
    %v2269 = vrot.slane %v2264, %v2268
    %v2270 = vlaneseq
    %v2271 = vshrl.u32 %v2270, 7
    %v2272 = vsub.s32 1, %v2271
    %v2273 = vrot.slane %v2264, %v2272
    %v2274 = vlaneseq
    %v2275 = vshrl.u32 %v2274, 7
    %v2276 = vsub.s32 2, %v2275
    %v2277 = vrot.slane %v2264, %v2276
    %v2313 = vunpack.c.l.b16 %v2232
    %v2314 = vunpack.c.h.b16 %v2232
    %v2315 = vunpack.c.l.b16 %v2233
    %v2316 = vunpack.c.l.b16 %v2234
    %v2317 = vunpack.c.h.b16 %v2234
    %v2318 = vunpack.c.l.b16 %v2235
    %v2319 = vunpack.c.l.b16 %v2236
    %v2320 = vunpack.c.h.b16 %v2236
    %v2321 = vunpack.c.l.b16 %v2237
    %v2322 = vunpack.c.l.b16 %v2238
    %v2323 = vunpack.c.h.b16 %v2238
    %v2324 = vunpack.c.l.b16 %v2239
    %v2325 = vunpack.c.l.b16 %v2240
    %v2326 = vunpack.c.h.b16 %v2240
    %v2327 = vunpack.c.l.b16 %v2241
    %v2328 = vunpack.c.l.b16 %v2242
    %v2329 = vunpack.c.h.b16 %v2242
    %v2330 = vunpack.c.l.b16 %v2243
    %v2331 = vunpack.c.l.b16 %v2244
    %v2332 = vunpack.c.h.b16 %v2244
    %v2333 = vunpack.c.l.b16 %v2245
    %v2334 = vunpack.c.l.b16 %v2246
    %v2335 = vunpack.c.h.b16 %v2246
    %v2336 = vunpack.c.l.b16 %v2247
    %v2337 = vunpack.c.l.b16 %v2248
    %v2338 = vunpack.c.h.b16 %v2248
    %v2339 = vunpack.c.l.b16 %v2249
    %v2340 = vunpack.c.l.b16 %v2250
    %v2341 = vunpack.c.h.b16 %v2250
    %v2342 = vunpack.c.l.b16 %v2251
    %v2343 = vunpack.c.l.b16 %v2252
    %v2344 = vunpack.c.h.b16 %v2252
    %v2345 = vunpack.c.l.b16 %v2253
    %v2346 = vunpack.c.l.b16 %v2254
    %v2347 = vunpack.c.h.b16 %v2254
    %v2348 = vunpack.c.l.b16 %v2255
    %v2349 = vunpack.c.l.b16 %v2256
    %v2350 = vunpack.c.h.b16 %v2256
    %v2351 = vunpack.c.l.b16 %v2257
    %v2352 = vunpack.c.l.b16 %v2258
    %v2353 = vunpack.c.h.b16 %v2258
    %v2354 = vunpack.c.l.b16 %v2259
    %v2355 = vunpack.c.l.b16 %v2260
    %v2356 = vunpack.c.h.b16 %v2260
    %v2357 = vunpack.c.l.b16 %v2261
    %v2358 = vunpack.c.l.b16 %v2262
    %v2359 = vunpack.c.h.b16 %v2262
    %v2360 = vunpack.c.l.b16 %v2263
    %v2361 = vpack.c.b16 %v2316, %v2313
    %v2362 = vpack.c.b16 %v2317, %v2314
    %v2363 = vpack.c.b16 %v2318, %v2315
    %v2364 = vpack.c.b16 %v2322, %v2319
    %v2365 = vpack.c.b16 %v2323, %v2320
    %v2366 = vpack.c.b16 %v2324, %v2321
    %v2367 = vpack.c.b16 %v2328, %v2325
    %v2368 = vpack.c.b16 %v2329, %v2326
    %v2369 = vpack.c.b16 %v2330, %v2327
    %v2370 = vpack.c.b16 %v2334, %v2331
    %v2371 = vpack.c.b16 %v2335, %v2332
    %v2372 = vpack.c.b16 %v2336, %v2333
    %v2373 = vpack.c.b16 %v2340, %v2337
    %v2374 = vpack.c.b16 %v2341, %v2338
    %v2375 = vpack.c.b16 %v2342, %v2339
    %v2376 = vpack.c.b16 %v2346, %v2343
    %v2377 = vpack.c.b16 %v2347, %v2344
    %v2378 = vpack.c.b16 %v2348, %v2345
    %v2379 = vpack.c.b16 %v2352, %v2349
    %v2380 = vpack.c.b16 %v2353, %v2350
    %v2381 = vpack.c.b16 %v2354, %v2351
    %v2382 = vpack.c.b16 %v2358, %v2355
    %v2383 = vpack.c.b16 %v2359, %v2356
    %v2384 = vpack.c.b16 %v2360, %v2357
    %2409 = vmatprep.subr.bf16.mxu0 %v2362
    %2410 = vmatpush1.bf16.msra.mxu0 %v2361
    %2411 = vmatprep.subr.bf16.mxu0 %v2365
    %2412 = vmatpush1.bf16.msra.mxu0 %v2364
    %2413 = vmatprep.subr.bf16.mxu0 %v2368
    %2414 = vmatpush1.bf16.msra.mxu0 %v2367
    %2415 = vmatprep.subr.bf16.mxu0 %v2371
    %2416 = vmatpush1.bf16.msra.mxu0 %v2370
    %2417 = vmatprep.subr.bf16.mxu0 %v2374
    %2418 = vmatpush1.bf16.msra.mxu0 %v2373
    %2419 = vmatprep.subr.bf16.mxu0 %v2377
    %2420 = vmatpush1.bf16.msra.mxu0 %v2376
    %2421 = vmatprep.subr.bf16.mxu0 %v2380
    %2422 = vmatpush1.bf16.msra.mxu0 %v2379
    %2423 = vmatprep.subr.bf16.mxu0 %v2383
    %2424 = vmatpush1.bf16.msra.mxu0 %v2382
    %2425 = vmatprep.subr.bf16.mxu0 0
    %2426 = vmatpush1.bf16.msra.mxu0 0
    %2427 = vmatprep.subr.bf16.mxu0 0
    %2428 = vmatpush1.bf16.msra.mxu0 0
    %2429 = vmatprep.subr.bf16.mxu0 0
    %2430 = vmatpush1.bf16.msra.mxu0 0
    %2431 = vmatprep.subr.bf16.mxu0 0
    %2432 = vmatpush1.bf16.msra.mxu0 0
    %2433 = vmatprep.subr.bf16.mxu0 0
    %2434 = vmatpush1.bf16.msra.mxu0 0
    %2435 = vmatprep.subr.bf16.mxu0 0
    %2436 = vmatpush1.bf16.msra.mxu0 0
    %2437 = vmatprep.subr.bf16.mxu0 0
    %2438 = vmatpush1.bf16.msra.mxu0 0
    %2439 = vmatprep.subr.bf16.mxu0 0
    %2440 = vmatpush1.bf16.msra.mxu0 0
    %2441 = vmatprep.mubr.bf16.mxu0 0
    %2442 = vmatmul.mubr.bf16.gmra.mrb[0].mxu0 %v1686
    %v2443 = vpop.f32.mrb[0].mxu0
    %v2444 = vadd.f32 %v2269, %v2443
    %v2445 = vpop.f32.mrb[0].mxu0
    %v2446 = vadd.f32 %v2273, %v2445
    %v2447 = vpop.f32.mrb[0].mxu0
    %v2448 = vpop.f32.mrb[0].mxu0
    %2449 = vdwg.mxu0
    %2450 = vmatprep.subr.bf16.mxu0 0
    %2451 = vmatpush1.bf16.msra.mxu0 %v2363
    %2452 = vmatprep.subr.bf16.mxu0 0
    %2453 = vmatpush1.bf16.msra.mxu0 %v2366
    %2454 = vmatprep.subr.bf16.mxu0 0
    %2455 = vmatpush1.bf16.msra.mxu0 %v2369
    %2456 = vmatprep.subr.bf16.mxu0 0
    %2457 = vmatpush1.bf16.msra.mxu0 %v2372
    %2458 = vmatprep.subr.bf16.mxu0 0
    %2459 = vmatpush1.bf16.msra.mxu0 %v2375
    %2460 = vmatprep.subr.bf16.mxu0 0
    %2461 = vmatpush1.bf16.msra.mxu0 %v2378
    %2462 = vmatprep.subr.bf16.mxu0 0
    %2463 = vmatpush1.bf16.msra.mxu0 %v2381
    %2464 = vmatprep.subr.bf16.mxu0 0
    %2465 = vmatpush1.bf16.msra.mxu0 %v2384
    %2466 = vmatprep.subr.bf16.mxu0 0
    %2467 = vmatpush1.bf16.msra.mxu0 0
    %2468 = vmatprep.subr.bf16.mxu0 0
    %2469 = vmatpush1.bf16.msra.mxu0 0
    %2470 = vmatprep.subr.bf16.mxu0 0
    %2471 = vmatpush1.bf16.msra.mxu0 0
    %2472 = vmatprep.subr.bf16.mxu0 0
    %2473 = vmatpush1.bf16.msra.mxu0 0
    %2474 = vmatprep.subr.bf16.mxu0 0
    %2475 = vmatpush1.bf16.msra.mxu0 0
    %2476 = vmatprep.subr.bf16.mxu0 0
    %2477 = vmatpush1.bf16.msra.mxu0 0
    %2478 = vmatprep.subr.bf16.mxu0 0
    %2479 = vmatpush1.bf16.msra.mxu0 0
    %2480 = vmatprep.subr.bf16.mxu0 0
    %2481 = vmatpush1.bf16.msra.mxu0 0
    %2482 = vmatprep.mubr.bf16.mxu0 0
    %2483 = vmatmul.mubr.bf16.gmra.mrb[0].mxu0 %v1686
    %v2484 = vpop.f32.mrb[0].mxu0
    %v2485 = vadd.f32 %v2277, %v2484
    %v2486 = vpop.f32.mrb[0].mxu0
    %v2487 = vpop.f32.mrb[0].mxu0
    %v2488 = vpop.f32.mrb[0].mxu0
    %2489 = vdwg.mxu0
    %v2490 = vadd.f32 %v2229, %v2444
    %v2491 = vxor.u32 %v2490, 2147483648
    %v2492 = vmul.f32 %v2491, 1.442695
    %v2493 = vpow.pop %v2492
    %v2494 = vadd.f32 %v2493, 1.0
    %v2495 = vrcp.pop %v2494
    %v2496 = vmul.f32 1.0, %v2495
    %v2497 = vadd.f32 %v2230, %v2446
    %v2498 = vxor.u32 %v2497, 2147483648
    %v2499 = vmul.f32 %v2498, 1.442695
    %v2500 = vpow.pop %v2499
    %v2501 = vadd.f32 %v2500, 1.0
    %v2502 = vrcp.pop %v2501
    %v2503 = vmul.f32 1.0, %v2502
    %v2504 = vmul.f32 %v2496, %v2485
    %v2505 = vadd.f32 %v2231, %v2504
    %v2506 = vtanh.pop %v2505
    %v2507 = vsub.f32 1.0, %v2503
    %v2508 = vmul.f32 %v2507, %v2506
    %v2509 = vmul.f32 %v2503, %v1685
    %v2510 = vadd.f32 %v2508, %v2509
    %v2511 = vpack.c.bf16 %v2510, %v2510
    %v2512 = vld [vmem:[#allocation11] sm:$0xff]
    %v2513 = vld [vmem:[#allocation11 + $0x8] sm:$0xf]
    %v2514 = vld [vmem:[#allocation11 + $0xc] sm:$0xff]
    %v2515 = vld [vmem:[#allocation11 + $0x14] sm:$0xf]
    %v2516 = vld [vmem:[#allocation11 + $0x18] sm:$0xff]
    %v2517 = vld [vmem:[#allocation11 + $0x20] sm:$0xf]
    %v2518 = vld [vmem:[#allocation11 + $0x24] sm:$0xff]
    %v2519 = vld [vmem:[#allocation11 + $0x2c] sm:$0xf]
    %v2520 = vld [vmem:[#allocation11 + $0x30] sm:$0xff]
    %v2521 = vld [vmem:[#allocation11 + $0x38] sm:$0xf]
    %v2522 = vld [vmem:[#allocation11 + $0x3c] sm:$0xff]
    %v2523 = vld [vmem:[#allocation11 + $0x44] sm:$0xf]
    %v2524 = vld [vmem:[#allocation11 + $0x48] sm:$0xff]
    %v2525 = vld [vmem:[#allocation11 + $0x50] sm:$0xf]
    %v2526 = vld [vmem:[#allocation11 + $0x54] sm:$0xff]
    %v2527 = vld [vmem:[#allocation11 + $0x5c] sm:$0xf]
    %v2528 = vld [vmem:[#allocation11 + $0x60] sm:$0xff]
    %v2529 = vld [vmem:[#allocation11 + $0x68] sm:$0xf]
    %v2530 = vld [vmem:[#allocation11 + $0x6c] sm:$0xff]
    %v2531 = vld [vmem:[#allocation11 + $0x74] sm:$0xf]
    %v2532 = vld [vmem:[#allocation11 + $0x78] sm:$0xff]
    %v2533 = vld [vmem:[#allocation11 + $0x80] sm:$0xf]
    %v2534 = vld [vmem:[#allocation11 + $0x84] sm:$0xff]
    %v2535 = vld [vmem:[#allocation11 + $0x8c] sm:$0xf]
    %v2536 = vld [vmem:[#allocation11 + $0x90] sm:$0xff]
    %v2537 = vld [vmem:[#allocation11 + $0x98] sm:$0xf]
    %v2538 = vld [vmem:[#allocation11 + $0x9c] sm:$0xff]
    %v2539 = vld [vmem:[#allocation11 + $0xa4] sm:$0xf]
    %v2540 = vld [vmem:[#allocation11 + $0xa8] sm:$0xff]
    %v2541 = vld [vmem:[#allocation11 + $0xb0] sm:$0xf]
    %v2542 = vld [vmem:[#allocation11 + $0xb4] sm:$0xff]
    %v2543 = vld [vmem:[#allocation11 + $0xbc] sm:$0xf]
    %v2544 = vld [vmem:[%s10] sm:$0x7]
    %v2546 = vlaneseq
    %v2547 = vshrl.u32 %v2546, 7
    %v2548 = vsub.s32 0, %v2547
    %v2549 = vrot.slane %v2544, %v2548
    %v2550 = vlaneseq
    %v2551 = vshrl.u32 %v2550, 7
    %v2552 = vsub.s32 1, %v2551
    %v2553 = vrot.slane %v2544, %v2552
    %v2554 = vlaneseq
    %v2555 = vshrl.u32 %v2554, 7
    %v2556 = vsub.s32 2, %v2555
    %v2557 = vrot.slane %v2544, %v2556
    %v2593 = vunpack.c.l.b16 %v2512
    %v2594 = vunpack.c.h.b16 %v2512
    %v2595 = vunpack.c.l.b16 %v2513
    %v2596 = vunpack.c.l.b16 %v2514
    %v2597 = vunpack.c.h.b16 %v2514
    %v2598 = vunpack.c.l.b16 %v2515
    %v2599 = vunpack.c.l.b16 %v2516
    %v2600 = vunpack.c.h.b16 %v2516
    %v2601 = vunpack.c.l.b16 %v2517
    %v2602 = vunpack.c.l.b16 %v2518
    %v2603 = vunpack.c.h.b16 %v2518
    %v2604 = vunpack.c.l.b16 %v2519
    %v2605 = vunpack.c.l.b16 %v2520
    %v2606 = vunpack.c.h.b16 %v2520
    %v2607 = vunpack.c.l.b16 %v2521
    %v2608 = vunpack.c.l.b16 %v2522
    %v2609 = vunpack.c.h.b16 %v2522
    %v2610 = vunpack.c.l.b16 %v2523
    %v2611 = vunpack.c.l.b16 %v2524
    %v2612 = vunpack.c.h.b16 %v2524
    %v2613 = vunpack.c.l.b16 %v2525
    %v2614 = vunpack.c.l.b16 %v2526
    %v2615 = vunpack.c.h.b16 %v2526
    %v2616 = vunpack.c.l.b16 %v2527
    %v2617 = vunpack.c.l.b16 %v2528
    %v2618 = vunpack.c.h.b16 %v2528
    %v2619 = vunpack.c.l.b16 %v2529
    %v2620 = vunpack.c.l.b16 %v2530
    %v2621 = vunpack.c.h.b16 %v2530
    %v2622 = vunpack.c.l.b16 %v2531
    %v2623 = vunpack.c.l.b16 %v2532
    %v2624 = vunpack.c.h.b16 %v2532
    %v2625 = vunpack.c.l.b16 %v2533
    %v2626 = vunpack.c.l.b16 %v2534
    %v2627 = vunpack.c.h.b16 %v2534
    %v2628 = vunpack.c.l.b16 %v2535
    %v2629 = vunpack.c.l.b16 %v2536
    %v2630 = vunpack.c.h.b16 %v2536
    %v2631 = vunpack.c.l.b16 %v2537
    %v2632 = vunpack.c.l.b16 %v2538
    %v2633 = vunpack.c.h.b16 %v2538
    %v2634 = vunpack.c.l.b16 %v2539
    %v2635 = vunpack.c.l.b16 %v2540
    %v2636 = vunpack.c.h.b16 %v2540
    %v2637 = vunpack.c.l.b16 %v2541
    %v2638 = vunpack.c.l.b16 %v2542
    %v2639 = vunpack.c.h.b16 %v2542
    %v2640 = vunpack.c.l.b16 %v2543
    %v2641 = vpack.c.b16 %v2596, %v2593
    %v2642 = vpack.c.b16 %v2597, %v2594
    %v2643 = vpack.c.b16 %v2598, %v2595
    %v2644 = vpack.c.b16 %v2602, %v2599
    %v2645 = vpack.c.b16 %v2603, %v2600
    %v2646 = vpack.c.b16 %v2604, %v2601
    %v2647 = vpack.c.b16 %v2608, %v2605
    %v2648 = vpack.c.b16 %v2609, %v2606
    %v2649 = vpack.c.b16 %v2610, %v2607
    %v2650 = vpack.c.b16 %v2614, %v2611
    %v2651 = vpack.c.b16 %v2615, %v2612
    %v2652 = vpack.c.b16 %v2616, %v2613
    %v2653 = vpack.c.b16 %v2620, %v2617
    %v2654 = vpack.c.b16 %v2621, %v2618
    %v2655 = vpack.c.b16 %v2622, %v2619
    %v2656 = vpack.c.b16 %v2626, %v2623
    %v2657 = vpack.c.b16 %v2627, %v2624
    %v2658 = vpack.c.b16 %v2628, %v2625
    %v2659 = vpack.c.b16 %v2632, %v2629
    %v2660 = vpack.c.b16 %v2633, %v2630
    %v2661 = vpack.c.b16 %v2634, %v2631
    %v2662 = vpack.c.b16 %v2638, %v2635
    %v2663 = vpack.c.b16 %v2639, %v2636
    %v2664 = vpack.c.b16 %v2640, %v2637
    %2689 = vmatprep.subr.bf16.mxu0 %v2642
    %2690 = vmatpush1.bf16.msra.mxu0 %v2641
    %2691 = vmatprep.subr.bf16.mxu0 %v2645
    %2692 = vmatpush1.bf16.msra.mxu0 %v2644
    %2693 = vmatprep.subr.bf16.mxu0 %v2648
    %2694 = vmatpush1.bf16.msra.mxu0 %v2647
    %2695 = vmatprep.subr.bf16.mxu0 %v2651
    %2696 = vmatpush1.bf16.msra.mxu0 %v2650
    %2697 = vmatprep.subr.bf16.mxu0 %v2654
    %2698 = vmatpush1.bf16.msra.mxu0 %v2653
    %2699 = vmatprep.subr.bf16.mxu0 %v2657
    %2700 = vmatpush1.bf16.msra.mxu0 %v2656
    %2701 = vmatprep.subr.bf16.mxu0 %v2660
    %2702 = vmatpush1.bf16.msra.mxu0 %v2659
    %2703 = vmatprep.subr.bf16.mxu0 %v2663
    %2704 = vmatpush1.bf16.msra.mxu0 %v2662
    %2705 = vmatprep.subr.bf16.mxu0 0
    %2706 = vmatpush1.bf16.msra.mxu0 0
    %2707 = vmatprep.subr.bf16.mxu0 0
    %2708 = vmatpush1.bf16.msra.mxu0 0
    %2709 = vmatprep.subr.bf16.mxu0 0
    %2710 = vmatpush1.bf16.msra.mxu0 0
    %2711 = vmatprep.subr.bf16.mxu0 0
    %2712 = vmatpush1.bf16.msra.mxu0 0
    %2713 = vmatprep.subr.bf16.mxu0 0
    %2714 = vmatpush1.bf16.msra.mxu0 0
    %2715 = vmatprep.subr.bf16.mxu0 0
    %2716 = vmatpush1.bf16.msra.mxu0 0
    %2717 = vmatprep.subr.bf16.mxu0 0
    %2718 = vmatpush1.bf16.msra.mxu0 0
    %2719 = vmatprep.subr.bf16.mxu0 0
    %2720 = vmatpush1.bf16.msra.mxu0 0
    %2721 = vmatprep.mubr.bf16.mxu0 0
    %2722 = vmatmul.mubr.bf16.gmra.mrb[0].mxu0 %v2511
    %v2723 = vpop.f32.mrb[0].mxu0
    %v2724 = vadd.f32 %v2549, %v2723
    %v2725 = vpop.f32.mrb[0].mxu0
    %v2726 = vadd.f32 %v2553, %v2725
    %v2727 = vpop.f32.mrb[0].mxu0
    %v2728 = vpop.f32.mrb[0].mxu0
    %2729 = vdwg.mxu0
    %2730 = vmatprep.subr.bf16.mxu0 0
    %2731 = vmatpush1.bf16.msra.mxu0 %v2643
    %2732 = vmatprep.subr.bf16.mxu0 0
    %2733 = vmatpush1.bf16.msra.mxu0 %v2646
    %2734 = vmatprep.subr.bf16.mxu0 0
    %2735 = vmatpush1.bf16.msra.mxu0 %v2649
    %2736 = vmatprep.subr.bf16.mxu0 0
    %2737 = vmatpush1.bf16.msra.mxu0 %v2652
    %2738 = vmatprep.subr.bf16.mxu0 0
    %2739 = vmatpush1.bf16.msra.mxu0 %v2655
    %2740 = vmatprep.subr.bf16.mxu0 0
    %2741 = vmatpush1.bf16.msra.mxu0 %v2658
    %2742 = vmatprep.subr.bf16.mxu0 0
    %2743 = vmatpush1.bf16.msra.mxu0 %v2661
    %2744 = vmatprep.subr.bf16.mxu0 0
    %2745 = vmatpush1.bf16.msra.mxu0 %v2664
    %2746 = vmatprep.subr.bf16.mxu0 0
    %2747 = vmatpush1.bf16.msra.mxu0 0
    %2748 = vmatprep.subr.bf16.mxu0 0
    %2749 = vmatpush1.bf16.msra.mxu0 0
    %2750 = vmatprep.subr.bf16.mxu0 0
    %2751 = vmatpush1.bf16.msra.mxu0 0
    %2752 = vmatprep.subr.bf16.mxu0 0
    %2753 = vmatpush1.bf16.msra.mxu0 0
    %2754 = vmatprep.subr.bf16.mxu0 0
    %2755 = vmatpush1.bf16.msra.mxu0 0
    %2756 = vmatprep.subr.bf16.mxu0 0
    %2757 = vmatpush1.bf16.msra.mxu0 0
    %2758 = vmatprep.subr.bf16.mxu0 0
    %2759 = vmatpush1.bf16.msra.mxu0 0
    %2760 = vmatprep.subr.bf16.mxu0 0
    %2761 = vmatpush1.bf16.msra.mxu0 0
    %2762 = vmatprep.mubr.bf16.mxu0 0
    %2763 = vmatmul.mubr.bf16.gmra.mrb[0].mxu0 %v2511
    %v2764 = vpop.f32.mrb[0].mxu0
    %v2765 = vadd.f32 %v2557, %v2764
    %v2766 = vpop.f32.mrb[0].mxu0
    %v2767 = vpop.f32.mrb[0].mxu0
    %v2768 = vpop.f32.mrb[0].mxu0
    %2769 = vdwg.mxu0
    %v2770 = vpack.c.bf16 %v2224, %v2224
    %v2771 = vld [vmem:[#allocation12] sm:$0xff]
    %v2772 = vld [vmem:[#allocation12 + $0x8] sm:$0xf]
    %v2773 = vld [vmem:[#allocation12 + $0xc] sm:$0xff]
    %v2774 = vld [vmem:[#allocation12 + $0x14] sm:$0xf]
    %v2775 = vld [vmem:[#allocation12 + $0x18] sm:$0xff]
    %v2776 = vld [vmem:[#allocation12 + $0x20] sm:$0xf]
    %v2777 = vld [vmem:[#allocation12 + $0x24] sm:$0xff]
    %v2778 = vld [vmem:[#allocation12 + $0x2c] sm:$0xf]
    %v2779 = vld [vmem:[#allocation12 + $0x30] sm:$0xff]
    %v2780 = vld [vmem:[#allocation12 + $0x38] sm:$0xf]
    %v2781 = vld [vmem:[#allocation12 + $0x3c] sm:$0xff]
    %v2782 = vld [vmem:[#allocation12 + $0x44] sm:$0xf]
    %v2783 = vld [vmem:[#allocation12 + $0x48] sm:$0xff]
    %v2784 = vld [vmem:[#allocation12 + $0x50] sm:$0xf]
    %v2785 = vld [vmem:[#allocation12 + $0x54] sm:$0xff]
    %v2786 = vld [vmem:[#allocation12 + $0x5c] sm:$0xf]
    %v2787 = vld [vmem:[#allocation12 + $0x60] sm:$0xff]
    %v2788 = vld [vmem:[#allocation12 + $0x68] sm:$0xf]
    %v2789 = vld [vmem:[#allocation12 + $0x6c] sm:$0xff]
    %v2790 = vld [vmem:[#allocation12 + $0x74] sm:$0xf]
    %v2791 = vld [vmem:[#allocation12 + $0x78] sm:$0xff]
    %v2792 = vld [vmem:[#allocation12 + $0x80] sm:$0xf]
    %v2793 = vld [vmem:[#allocation12 + $0x84] sm:$0xff]
    %v2794 = vld [vmem:[#allocation12 + $0x8c] sm:$0xf]
    %v2795 = vld [vmem:[#allocation12 + $0x90] sm:$0xff]
    %v2796 = vld [vmem:[#allocation12 + $0x98] sm:$0xf]
    %v2797 = vld [vmem:[#allocation12 + $0x9c] sm:$0xff]
    %v2798 = vld [vmem:[#allocation12 + $0xa4] sm:$0xf]
    %v2799 = vld [vmem:[#allocation12 + $0xa8] sm:$0xff]
    %v2800 = vld [vmem:[#allocation12 + $0xb0] sm:$0xf]
    %v2801 = vld [vmem:[#allocation12 + $0xb4] sm:$0xff]
    %v2802 = vld [vmem:[#allocation12 + $0xbc] sm:$0xf]
    %v2803 = vld [vmem:[%s12] sm:$0x7]
    %v2805 = vlaneseq
    %v2806 = vshrl.u32 %v2805, 7
    %v2807 = vsub.s32 0, %v2806
    %v2808 = vrot.slane %v2803, %v2807
    %v2809 = vlaneseq
    %v2810 = vshrl.u32 %v2809, 7
    %v2811 = vsub.s32 1, %v2810
    %v2812 = vrot.slane %v2803, %v2811
    %v2813 = vlaneseq
    %v2814 = vshrl.u32 %v2813, 7
    %v2815 = vsub.s32 2, %v2814
    %v2816 = vrot.slane %v2803, %v2815
    %v2852 = vunpack.c.l.b16 %v2771
    %v2853 = vunpack.c.h.b16 %v2771
    %v2854 = vunpack.c.l.b16 %v2772
    %v2855 = vunpack.c.l.b16 %v2773
    %v2856 = vunpack.c.h.b16 %v2773
    %v2857 = vunpack.c.l.b16 %v2774
    %v2858 = vunpack.c.l.b16 %v2775
    %v2859 = vunpack.c.h.b16 %v2775
    %v2860 = vunpack.c.l.b16 %v2776
    %v2861 = vunpack.c.l.b16 %v2777
    %v2862 = vunpack.c.h.b16 %v2777
    %v2863 = vunpack.c.l.b16 %v2778
    %v2864 = vunpack.c.l.b16 %v2779
    %v2865 = vunpack.c.h.b16 %v2779
    %v2866 = vunpack.c.l.b16 %v2780
    %v2867 = vunpack.c.l.b16 %v2781
    %v2868 = vunpack.c.h.b16 %v2781
    %v2869 = vunpack.c.l.b16 %v2782
    %v2870 = vunpack.c.l.b16 %v2783
    %v2871 = vunpack.c.h.b16 %v2783
    %v2872 = vunpack.c.l.b16 %v2784
    %v2873 = vunpack.c.l.b16 %v2785
    %v2874 = vunpack.c.h.b16 %v2785
    %v2875 = vunpack.c.l.b16 %v2786
    %v2876 = vunpack.c.l.b16 %v2787
    %v2877 = vunpack.c.h.b16 %v2787
    %v2878 = vunpack.c.l.b16 %v2788
    %v2879 = vunpack.c.l.b16 %v2789
    %v2880 = vunpack.c.h.b16 %v2789
    %v2881 = vunpack.c.l.b16 %v2790
    %v2882 = vunpack.c.l.b16 %v2791
    %v2883 = vunpack.c.h.b16 %v2791
    %v2884 = vunpack.c.l.b16 %v2792
    %v2885 = vunpack.c.l.b16 %v2793
    %v2886 = vunpack.c.h.b16 %v2793
    %v2887 = vunpack.c.l.b16 %v2794
    %v2888 = vunpack.c.l.b16 %v2795
    %v2889 = vunpack.c.h.b16 %v2795
    %v2890 = vunpack.c.l.b16 %v2796
    %v2891 = vunpack.c.l.b16 %v2797
    %v2892 = vunpack.c.h.b16 %v2797
    %v2893 = vunpack.c.l.b16 %v2798
    %v2894 = vunpack.c.l.b16 %v2799
    %v2895 = vunpack.c.h.b16 %v2799
    %v2896 = vunpack.c.l.b16 %v2800
    %v2897 = vunpack.c.l.b16 %v2801
    %v2898 = vunpack.c.h.b16 %v2801
    %v2899 = vunpack.c.l.b16 %v2802
    %v2900 = vpack.c.b16 %v2855, %v2852
    %v2901 = vpack.c.b16 %v2856, %v2853
    %v2902 = vpack.c.b16 %v2857, %v2854
    %v2903 = vpack.c.b16 %v2861, %v2858
    %v2904 = vpack.c.b16 %v2862, %v2859
    %v2905 = vpack.c.b16 %v2863, %v2860
    %v2906 = vpack.c.b16 %v2867, %v2864
    %v2907 = vpack.c.b16 %v2868, %v2865
    %v2908 = vpack.c.b16 %v2869, %v2866
    %v2909 = vpack.c.b16 %v2873, %v2870
    %v2910 = vpack.c.b16 %v2874, %v2871
    %v2911 = vpack.c.b16 %v2875, %v2872
    %v2912 = vpack.c.b16 %v2879, %v2876
    %v2913 = vpack.c.b16 %v2880, %v2877
    %v2914 = vpack.c.b16 %v2881, %v2878
    %v2915 = vpack.c.b16 %v2885, %v2882
    %v2916 = vpack.c.b16 %v2886, %v2883
    %v2917 = vpack.c.b16 %v2887, %v2884
    %v2918 = vpack.c.b16 %v2891, %v2888
    %v2919 = vpack.c.b16 %v2892, %v2889
    %v2920 = vpack.c.b16 %v2893, %v2890
    %v2921 = vpack.c.b16 %v2897, %v2894
    %v2922 = vpack.c.b16 %v2898, %v2895
    %v2923 = vpack.c.b16 %v2899, %v2896
    %2948 = vmatprep.subr.bf16.mxu0 %v2901
    %2949 = vmatpush1.bf16.msra.mxu0 %v2900
    %2950 = vmatprep.subr.bf16.mxu0 %v2904
    %2951 = vmatpush1.bf16.msra.mxu0 %v2903
    %2952 = vmatprep.subr.bf16.mxu0 %v2907
    %2953 = vmatpush1.bf16.msra.mxu0 %v2906
    %2954 = vmatprep.subr.bf16.mxu0 %v2910
    %2955 = vmatpush1.bf16.msra.mxu0 %v2909
    %2956 = vmatprep.subr.bf16.mxu0 %v2913
    %2957 = vmatpush1.bf16.msra.mxu0 %v2912
    %2958 = vmatprep.subr.bf16.mxu0 %v2916
    %2959 = vmatpush1.bf16.msra.mxu0 %v2915
    %2960 = vmatprep.subr.bf16.mxu0 %v2919
    %2961 = vmatpush1.bf16.msra.mxu0 %v2918
    %2962 = vmatprep.subr.bf16.mxu0 %v2922
    %2963 = vmatpush1.bf16.msra.mxu0 %v2921
    %2964 = vmatprep.subr.bf16.mxu0 0
    %2965 = vmatpush1.bf16.msra.mxu0 0
    %2966 = vmatprep.subr.bf16.mxu0 0
    %2967 = vmatpush1.bf16.msra.mxu0 0
    %2968 = vmatprep.subr.bf16.mxu0 0
    %2969 = vmatpush1.bf16.msra.mxu0 0
    %2970 = vmatprep.subr.bf16.mxu0 0
    %2971 = vmatpush1.bf16.msra.mxu0 0
    %2972 = vmatprep.subr.bf16.mxu0 0
    %2973 = vmatpush1.bf16.msra.mxu0 0
    %2974 = vmatprep.subr.bf16.mxu0 0
    %2975 = vmatpush1.bf16.msra.mxu0 0
    %2976 = vmatprep.subr.bf16.mxu0 0
    %2977 = vmatpush1.bf16.msra.mxu0 0
    %2978 = vmatprep.subr.bf16.mxu0 0
    %2979 = vmatpush1.bf16.msra.mxu0 0
    %2980 = vmatprep.mubr.bf16.mxu0 0
    %2981 = vmatmul.mubr.bf16.gmra.mrb[0].mxu0 %v2770
    %v2982 = vpop.f32.mrb[0].mxu0
    %v2983 = vadd.f32 %v2808, %v2982
    %v2984 = vpop.f32.mrb[0].mxu0
    %v2985 = vadd.f32 %v2812, %v2984
    %v2986 = vpop.f32.mrb[0].mxu0
    %v2987 = vpop.f32.mrb[0].mxu0
    %2988 = vdwg.mxu0
    %2989 = vmatprep.subr.bf16.mxu0 0
    %2990 = vmatpush1.bf16.msra.mxu0 %v2902
    %2991 = vmatprep.subr.bf16.mxu0 0
    %2992 = vmatpush1.bf16.msra.mxu0 %v2905
    %2993 = vmatprep.subr.bf16.mxu0 0
    %2994 = vmatpush1.bf16.msra.mxu0 %v2908
    %2995 = vmatprep.subr.bf16.mxu0 0
    %2996 = vmatpush1.bf16.msra.mxu0 %v2911
    %2997 = vmatprep.subr.bf16.mxu0 0
    %2998 = vmatpush1.bf16.msra.mxu0 %v2914
    %2999 = vmatprep.subr.bf16.mxu0 0
    %3000 = vmatpush1.bf16.msra.mxu0 %v2917
    %3001 = vmatprep.subr.bf16.mxu0 0
    %3002 = vmatpush1.bf16.msra.mxu0 %v2920
    %3003 = vmatprep.subr.bf16.mxu0 0
    %3004 = vmatpush1.bf16.msra.mxu0 %v2923
    %3005 = vmatprep.subr.bf16.mxu0 0
    %3006 = vmatpush1.bf16.msra.mxu0 0
    %3007 = vmatprep.subr.bf16.mxu0 0
    %3008 = vmatpush1.bf16.msra.mxu0 0
    %3009 = vmatprep.subr.bf16.mxu0 0
    %3010 = vmatpush1.bf16.msra.mxu0 0
    %3011 = vmatprep.subr.bf16.mxu0 0
    %3012 = vmatpush1.bf16.msra.mxu0 0
    %3013 = vmatprep.subr.bf16.mxu0 0
    %3014 = vmatpush1.bf16.msra.mxu0 0
    %3015 = vmatprep.subr.bf16.mxu0 0
    %3016 = vmatpush1.bf16.msra.mxu0 0
    %3017 = vmatprep.subr.bf16.mxu0 0
    %3018 = vmatpush1.bf16.msra.mxu0 0
    %3019 = vmatprep.subr.bf16.mxu0 0
    %3020 = vmatpush1.bf16.msra.mxu0 0
    %3021 = vmatprep.mubr.bf16.mxu0 0
    %3022 = vmatmul.mubr.bf16.gmra.mrb[0].mxu0 %v2770
    %v3023 = vpop.f32.mrb[0].mxu0
    %v3024 = vadd.f32 %v2816, %v3023
    %v3025 = vpop.f32.mrb[0].mxu0
    %v3026 = vpop.f32.mrb[0].mxu0
    %v3027 = vpop.f32.mrb[0].mxu0
    %3028 = vdwg.mxu0
    %v3029 = vadd.f32 %v2724, %v2983
    %v3030 = vxor.u32 %v3029, 2147483648
    %v3031 = vmul.f32 %v3030, 1.442695
    %v3032 = vpow.pop %v3031
    %v3033 = vadd.f32 %v3032, 1.0
    %v3034 = vrcp.pop %v3033
    %v3035 = vmul.f32 1.0, %v3034
    %v3036 = vadd.f32 %v2726, %v2985
    %v3037 = vxor.u32 %v3036, 2147483648
    %v3038 = vmul.f32 %v3037, 1.442695
    %v3039 = vpow.pop %v3038
    %v3040 = vadd.f32 %v3039, 1.0
    %v3041 = vrcp.pop %v3040
    %v3042 = vmul.f32 1.0, %v3041
    %v3043 = vmul.f32 %v3035, %v3024
    %v3044 = vadd.f32 %v2765, %v3043
    %v3045 = vtanh.pop %v3044
    %v3046 = vsub.f32 1.0, %v3042
    %v3047 = vmul.f32 %v3046, %v3045
    %v3048 = vmul.f32 %v3042, %v2224
    %v3049 = vadd.f32 %v3047, %v3048
    %3050 = vst [vmem:[#allocation3 + $0x10] sm:$0xff] %v3049
    %v3051 = vld [vmem:[#allocation2 + $0x48] sm:$0xff]
    %v3052 = vld [vmem:[#allocation2 + $0x50] sm:$0xff]
    %v3053 = vld [vmem:[#allocation2 + $0x58] sm:$0xff]
    %v3054 = vadd.f32 %v3051, %v293
    %v3055 = vadd.f32 %v3052, %v295
    %v3056 = vadd.f32 %v3053, %v334
    %v3057 = vld [vmem:[#allocation9] sm:$0xff]
    %v3058 = vld [vmem:[#allocation9 + $0x8] sm:$0xf]
    %v3059 = vld [vmem:[#allocation9 + $0xc] sm:$0xff]
    %v3060 = vld [vmem:[#allocation9 + $0x14] sm:$0xf]
    %v3061 = vld [vmem:[#allocation9 + $0x18] sm:$0xff]
    %v3062 = vld [vmem:[#allocation9 + $0x20] sm:$0xf]
    %v3063 = vld [vmem:[#allocation9 + $0x24] sm:$0xff]
    %v3064 = vld [vmem:[#allocation9 + $0x2c] sm:$0xf]
    %v3065 = vld [vmem:[#allocation9 + $0x30] sm:$0xff]
    %v3066 = vld [vmem:[#allocation9 + $0x38] sm:$0xf]
    %v3067 = vld [vmem:[#allocation9 + $0x3c] sm:$0xff]
    %v3068 = vld [vmem:[#allocation9 + $0x44] sm:$0xf]
    %v3069 = vld [vmem:[#allocation9 + $0x48] sm:$0xff]
    %v3070 = vld [vmem:[#allocation9 + $0x50] sm:$0xf]
    %v3071 = vld [vmem:[#allocation9 + $0x54] sm:$0xff]
    %v3072 = vld [vmem:[#allocation9 + $0x5c] sm:$0xf]
    %v3073 = vld [vmem:[#allocation9 + $0x60] sm:$0xff]
    %v3074 = vld [vmem:[#allocation9 + $0x68] sm:$0xf]
    %v3075 = vld [vmem:[#allocation9 + $0x6c] sm:$0xff]
    %v3076 = vld [vmem:[#allocation9 + $0x74] sm:$0xf]
    %v3077 = vld [vmem:[#allocation9 + $0x78] sm:$0xff]
    %v3078 = vld [vmem:[#allocation9 + $0x80] sm:$0xf]
    %v3079 = vld [vmem:[#allocation9 + $0x84] sm:$0xff]
    %v3080 = vld [vmem:[#allocation9 + $0x8c] sm:$0xf]
    %v3081 = vld [vmem:[#allocation9 + $0x90] sm:$0xff]
    %v3082 = vld [vmem:[#allocation9 + $0x98] sm:$0xf]
    %v3083 = vld [vmem:[#allocation9 + $0x9c] sm:$0xff]
    %v3084 = vld [vmem:[#allocation9 + $0xa4] sm:$0xf]
    %v3085 = vld [vmem:[#allocation9 + $0xa8] sm:$0xff]
    %v3086 = vld [vmem:[#allocation9 + $0xb0] sm:$0xf]
    %v3087 = vld [vmem:[#allocation9 + $0xb4] sm:$0xff]
    %v3088 = vld [vmem:[#allocation9 + $0xbc] sm:$0xf]
    %v3089 = vld [vmem:[%s8] sm:$0x7]
    %v3091 = vlaneseq
    %v3092 = vshrl.u32 %v3091, 7
    %v3093 = vsub.s32 0, %v3092
    %v3094 = vrot.slane %v3089, %v3093
    %v3095 = vlaneseq
    %v3096 = vshrl.u32 %v3095, 7
    %v3097 = vsub.s32 1, %v3096
    %v3098 = vrot.slane %v3089, %v3097
    %v3099 = vlaneseq
    %v3100 = vshrl.u32 %v3099, 7
    %v3101 = vsub.s32 2, %v3100
    %v3102 = vrot.slane %v3089, %v3101
    %v3138 = vunpack.c.l.b16 %v3057
    %v3139 = vunpack.c.h.b16 %v3057
    %v3140 = vunpack.c.l.b16 %v3058
    %v3141 = vunpack.c.l.b16 %v3059
    %v3142 = vunpack.c.h.b16 %v3059
    %v3143 = vunpack.c.l.b16 %v3060
    %v3144 = vunpack.c.l.b16 %v3061
    %v3145 = vunpack.c.h.b16 %v3061
    %v3146 = vunpack.c.l.b16 %v3062
    %v3147 = vunpack.c.l.b16 %v3063
    %v3148 = vunpack.c.h.b16 %v3063
    %v3149 = vunpack.c.l.b16 %v3064
    %v3150 = vunpack.c.l.b16 %v3065
    %v3151 = vunpack.c.h.b16 %v3065
    %v3152 = vunpack.c.l.b16 %v3066
    %v3153 = vunpack.c.l.b16 %v3067
    %v3154 = vunpack.c.h.b16 %v3067
    %v3155 = vunpack.c.l.b16 %v3068
    %v3156 = vunpack.c.l.b16 %v3069
    %v3157 = vunpack.c.h.b16 %v3069
    %v3158 = vunpack.c.l.b16 %v3070
    %v3159 = vunpack.c.l.b16 %v3071
    %v3160 = vunpack.c.h.b16 %v3071
    %v3161 = vunpack.c.l.b16 %v3072
    %v3162 = vunpack.c.l.b16 %v3073
    %v3163 = vunpack.c.h.b16 %v3073
    %v3164 = vunpack.c.l.b16 %v3074
    %v3165 = vunpack.c.l.b16 %v3075
    %v3166 = vunpack.c.h.b16 %v3075
    %v3167 = vunpack.c.l.b16 %v3076
    %v3168 = vunpack.c.l.b16 %v3077
    %v3169 = vunpack.c.h.b16 %v3077
    %v3170 = vunpack.c.l.b16 %v3078
    %v3171 = vunpack.c.l.b16 %v3079
    %v3172 = vunpack.c.h.b16 %v3079
    %v3173 = vunpack.c.l.b16 %v3080
    %v3174 = vunpack.c.l.b16 %v3081
    %v3175 = vunpack.c.h.b16 %v3081
    %v3176 = vunpack.c.l.b16 %v3082
    %v3177 = vunpack.c.l.b16 %v3083
    %v3178 = vunpack.c.h.b16 %v3083
    %v3179 = vunpack.c.l.b16 %v3084
    %v3180 = vunpack.c.l.b16 %v3085
    %v3181 = vunpack.c.h.b16 %v3085
    %v3182 = vunpack.c.l.b16 %v3086
    %v3183 = vunpack.c.l.b16 %v3087
    %v3184 = vunpack.c.h.b16 %v3087
    %v3185 = vunpack.c.l.b16 %v3088
    %v3186 = vpack.c.b16 %v3141, %v3138
    %v3187 = vpack.c.b16 %v3142, %v3139
    %v3188 = vpack.c.b16 %v3143, %v3140
    %v3189 = vpack.c.b16 %v3147, %v3144
    %v3190 = vpack.c.b16 %v3148, %v3145
    %v3191 = vpack.c.b16 %v3149, %v3146
    %v3192 = vpack.c.b16 %v3153, %v3150
    %v3193 = vpack.c.b16 %v3154, %v3151
    %v3194 = vpack.c.b16 %v3155, %v3152
    %v3195 = vpack.c.b16 %v3159, %v3156
    %v3196 = vpack.c.b16 %v3160, %v3157
    %v3197 = vpack.c.b16 %v3161, %v3158
    %v3198 = vpack.c.b16 %v3165, %v3162
    %v3199 = vpack.c.b16 %v3166, %v3163
    %v3200 = vpack.c.b16 %v3167, %v3164
    %v3201 = vpack.c.b16 %v3171, %v3168
    %v3202 = vpack.c.b16 %v3172, %v3169
    %v3203 = vpack.c.b16 %v3173, %v3170
    %v3204 = vpack.c.b16 %v3177, %v3174
    %v3205 = vpack.c.b16 %v3178, %v3175
    %v3206 = vpack.c.b16 %v3179, %v3176
    %v3207 = vpack.c.b16 %v3183, %v3180
    %v3208 = vpack.c.b16 %v3184, %v3181
    %v3209 = vpack.c.b16 %v3185, %v3182
    %3234 = vmatprep.subr.bf16.mxu0 %v3187
    %3235 = vmatpush1.bf16.msra.mxu0 %v3186
    %3236 = vmatprep.subr.bf16.mxu0 %v3190
    %3237 = vmatpush1.bf16.msra.mxu0 %v3189
    %3238 = vmatprep.subr.bf16.mxu0 %v3193
    %3239 = vmatpush1.bf16.msra.mxu0 %v3192
    %3240 = vmatprep.subr.bf16.mxu0 %v3196
    %3241 = vmatpush1.bf16.msra.mxu0 %v3195
    %3242 = vmatprep.subr.bf16.mxu0 %v3199
    %3243 = vmatpush1.bf16.msra.mxu0 %v3198
    %3244 = vmatprep.subr.bf16.mxu0 %v3202
    %3245 = vmatpush1.bf16.msra.mxu0 %v3201
    %3246 = vmatprep.subr.bf16.mxu0 %v3205
    %3247 = vmatpush1.bf16.msra.mxu0 %v3204
    %3248 = vmatprep.subr.bf16.mxu0 %v3208
    %3249 = vmatpush1.bf16.msra.mxu0 %v3207
    %3250 = vmatprep.subr.bf16.mxu0 0
    %3251 = vmatpush1.bf16.msra.mxu0 0
    %3252 = vmatprep.subr.bf16.mxu0 0
    %3253 = vmatpush1.bf16.msra.mxu0 0
    %3254 = vmatprep.subr.bf16.mxu0 0
    %3255 = vmatpush1.bf16.msra.mxu0 0
    %3256 = vmatprep.subr.bf16.mxu0 0
    %3257 = vmatpush1.bf16.msra.mxu0 0
    %3258 = vmatprep.subr.bf16.mxu0 0
    %3259 = vmatpush1.bf16.msra.mxu0 0
    %3260 = vmatprep.subr.bf16.mxu0 0
    %3261 = vmatpush1.bf16.msra.mxu0 0
    %3262 = vmatprep.subr.bf16.mxu0 0
    %3263 = vmatpush1.bf16.msra.mxu0 0
    %3264 = vmatprep.subr.bf16.mxu0 0
    %3265 = vmatpush1.bf16.msra.mxu0 0
    %3266 = vmatprep.mubr.bf16.mxu0 0
    %3267 = vmatmul.mubr.bf16.gmra.mrb[0].mxu0 %v2511
    %v3268 = vpop.f32.mrb[0].mxu0
    %v3269 = vadd.f32 %v3094, %v3268
    %v3270 = vpop.f32.mrb[0].mxu0
    %v3271 = vadd.f32 %v3098, %v3270
    %v3272 = vpop.f32.mrb[0].mxu0
    %v3273 = vpop.f32.mrb[0].mxu0
    %3274 = vdwg.mxu0
    %3275 = vmatprep.subr.bf16.mxu0 0
    %3276 = vmatpush1.bf16.msra.mxu0 %v3188
    %3277 = vmatprep.subr.bf16.mxu0 0
    %3278 = vmatpush1.bf16.msra.mxu0 %v3191
    %3279 = vmatprep.subr.bf16.mxu0 0
    %3280 = vmatpush1.bf16.msra.mxu0 %v3194
    %3281 = vmatprep.subr.bf16.mxu0 0
    %3282 = vmatpush1.bf16.msra.mxu0 %v3197
    %3283 = vmatprep.subr.bf16.mxu0 0
    %3284 = vmatpush1.bf16.msra.mxu0 %v3200
    %3285 = vmatprep.subr.bf16.mxu0 0
    %3286 = vmatpush1.bf16.msra.mxu0 %v3203
    %3287 = vmatprep.subr.bf16.mxu0 0
    %3288 = vmatpush1.bf16.msra.mxu0 %v3206
    %3289 = vmatprep.subr.bf16.mxu0 0
    %3290 = vmatpush1.bf16.msra.mxu0 %v3209
    %3291 = vmatprep.subr.bf16.mxu0 0
    %3292 = vmatpush1.bf16.msra.mxu0 0
    %3293 = vmatprep.subr.bf16.mxu0 0
    %3294 = vmatpush1.bf16.msra.mxu0 0
    %3295 = vmatprep.subr.bf16.mxu0 0
    %3296 = vmatpush1.bf16.msra.mxu0 0
    %3297 = vmatprep.subr.bf16.mxu0 0
    %3298 = vmatpush1.bf16.msra.mxu0 0
    %3299 = vmatprep.subr.bf16.mxu0 0
    %3300 = vmatpush1.bf16.msra.mxu0 0
    %3301 = vmatprep.subr.bf16.mxu0 0
    %3302 = vmatpush1.bf16.msra.mxu0 0
    %3303 = vmatprep.subr.bf16.mxu0 0
    %3304 = vmatpush1.bf16.msra.mxu0 0
    %3305 = vmatprep.subr.bf16.mxu0 0
    %3306 = vmatpush1.bf16.msra.mxu0 0
    %3307 = vmatprep.mubr.bf16.mxu0 0
    %3308 = vmatmul.mubr.bf16.gmra.mrb[0].mxu0 %v2511
    %v3309 = vpop.f32.mrb[0].mxu0
    %v3310 = vadd.f32 %v3102, %v3309
    %v3311 = vpop.f32.mrb[0].mxu0
    %v3312 = vpop.f32.mrb[0].mxu0
    %v3313 = vpop.f32.mrb[0].mxu0
    %3314 = vdwg.mxu0
    %v3315 = vadd.f32 %v3054, %v3269
    %v3316 = vxor.u32 %v3315, 2147483648
    %v3317 = vmul.f32 %v3316, 1.442695
    %v3318 = vpow.pop %v3317
    %v3319 = vadd.f32 %v3318, 1.0
    %v3320 = vrcp.pop %v3319
    %v3321 = vmul.f32 1.0, %v3320
    %v3322 = vadd.f32 %v3055, %v3271
    %v3323 = vxor.u32 %v3322, 2147483648
    %v3324 = vmul.f32 %v3323, 1.442695
    %v3325 = vpow.pop %v3324
    %v3326 = vadd.f32 %v3325, 1.0
    %v3327 = vrcp.pop %v3326
    %v3328 = vmul.f32 1.0, %v3327
    %v3329 = vmul.f32 %v3321, %v3310
    %v3330 = vadd.f32 %v3056, %v3329
    %v3331 = vtanh.pop %v3330
    %v3332 = vsub.f32 1.0, %v3328
    %v3333 = vmul.f32 %v3332, %v3331
    %v3334 = vmul.f32 %v3328, %v2510
    %v3335 = vadd.f32 %v3333, %v3334
    %v3336 = vpack.c.bf16 %v3335, %v3335
    %v3337 = vld [vmem:[#allocation11] sm:$0xff]
    %v3338 = vld [vmem:[#allocation11 + $0x8] sm:$0xf]
    %v3339 = vld [vmem:[#allocation11 + $0xc] sm:$0xff]
    %v3340 = vld [vmem:[#allocation11 + $0x14] sm:$0xf]
    %v3341 = vld [vmem:[#allocation11 + $0x18] sm:$0xff]
    %v3342 = vld [vmem:[#allocation11 + $0x20] sm:$0xf]
    %v3343 = vld [vmem:[#allocation11 + $0x24] sm:$0xff]
    %v3344 = vld [vmem:[#allocation11 + $0x2c] sm:$0xf]
    %v3345 = vld [vmem:[#allocation11 + $0x30] sm:$0xff]
    %v3346 = vld [vmem:[#allocation11 + $0x38] sm:$0xf]
    %v3347 = vld [vmem:[#allocation11 + $0x3c] sm:$0xff]
    %v3348 = vld [vmem:[#allocation11 + $0x44] sm:$0xf]
    %v3349 = vld [vmem:[#allocation11 + $0x48] sm:$0xff]
    %v3350 = vld [vmem:[#allocation11 + $0x50] sm:$0xf]
    %v3351 = vld [vmem:[#allocation11 + $0x54] sm:$0xff]
    %v3352 = vld [vmem:[#allocation11 + $0x5c] sm:$0xf]
    %v3353 = vld [vmem:[#allocation11 + $0x60] sm:$0xff]
    %v3354 = vld [vmem:[#allocation11 + $0x68] sm:$0xf]
    %v3355 = vld [vmem:[#allocation11 + $0x6c] sm:$0xff]
    %v3356 = vld [vmem:[#allocation11 + $0x74] sm:$0xf]
    %v3357 = vld [vmem:[#allocation11 + $0x78] sm:$0xff]
    %v3358 = vld [vmem:[#allocation11 + $0x80] sm:$0xf]
    %v3359 = vld [vmem:[#allocation11 + $0x84] sm:$0xff]
    %v3360 = vld [vmem:[#allocation11 + $0x8c] sm:$0xf]
    %v3361 = vld [vmem:[#allocation11 + $0x90] sm:$0xff]
    %v3362 = vld [vmem:[#allocation11 + $0x98] sm:$0xf]
    %v3363 = vld [vmem:[#allocation11 + $0x9c] sm:$0xff]
    %v3364 = vld [vmem:[#allocation11 + $0xa4] sm:$0xf]
    %v3365 = vld [vmem:[#allocation11 + $0xa8] sm:$0xff]
    %v3366 = vld [vmem:[#allocation11 + $0xb0] sm:$0xf]
    %v3367 = vld [vmem:[#allocation11 + $0xb4] sm:$0xff]
    %v3368 = vld [vmem:[#allocation11 + $0xbc] sm:$0xf]
    %v3369 = vld [vmem:[%s10] sm:$0x7]
    %v3371 = vlaneseq
    %v3372 = vshrl.u32 %v3371, 7
    %v3373 = vsub.s32 0, %v3372
    %v3374 = vrot.slane %v3369, %v3373
    %v3375 = vlaneseq
    %v3376 = vshrl.u32 %v3375, 7
    %v3377 = vsub.s32 1, %v3376
    %v3378 = vrot.slane %v3369, %v3377
    %v3379 = vlaneseq
    %v3380 = vshrl.u32 %v3379, 7
    %v3381 = vsub.s32 2, %v3380
    %v3382 = vrot.slane %v3369, %v3381
    %v3418 = vunpack.c.l.b16 %v3337
    %v3419 = vunpack.c.h.b16 %v3337
    %v3420 = vunpack.c.l.b16 %v3338
    %v3421 = vunpack.c.l.b16 %v3339
    %v3422 = vunpack.c.h.b16 %v3339
    %v3423 = vunpack.c.l.b16 %v3340
    %v3424 = vunpack.c.l.b16 %v3341
    %v3425 = vunpack.c.h.b16 %v3341
    %v3426 = vunpack.c.l.b16 %v3342
    %v3427 = vunpack.c.l.b16 %v3343
    %v3428 = vunpack.c.h.b16 %v3343
    %v3429 = vunpack.c.l.b16 %v3344
    %v3430 = vunpack.c.l.b16 %v3345
    %v3431 = vunpack.c.h.b16 %v3345
    %v3432 = vunpack.c.l.b16 %v3346
    %v3433 = vunpack.c.l.b16 %v3347
    %v3434 = vunpack.c.h.b16 %v3347
    %v3435 = vunpack.c.l.b16 %v3348
    %v3436 = vunpack.c.l.b16 %v3349
    %v3437 = vunpack.c.h.b16 %v3349
    %v3438 = vunpack.c.l.b16 %v3350
    %v3439 = vunpack.c.l.b16 %v3351
    %v3440 = vunpack.c.h.b16 %v3351
    %v3441 = vunpack.c.l.b16 %v3352
    %v3442 = vunpack.c.l.b16 %v3353
    %v3443 = vunpack.c.h.b16 %v3353
    %v3444 = vunpack.c.l.b16 %v3354
    %v3445 = vunpack.c.l.b16 %v3355
    %v3446 = vunpack.c.h.b16 %v3355
    %v3447 = vunpack.c.l.b16 %v3356
    %v3448 = vunpack.c.l.b16 %v3357
    %v3449 = vunpack.c.h.b16 %v3357
    %v3450 = vunpack.c.l.b16 %v3358
    %v3451 = vunpack.c.l.b16 %v3359
    %v3452 = vunpack.c.h.b16 %v3359
    %v3453 = vunpack.c.l.b16 %v3360
    %v3454 = vunpack.c.l.b16 %v3361
    %v3455 = vunpack.c.h.b16 %v3361
    %v3456 = vunpack.c.l.b16 %v3362
    %v3457 = vunpack.c.l.b16 %v3363
    %v3458 = vunpack.c.h.b16 %v3363
    %v3459 = vunpack.c.l.b16 %v3364
    %v3460 = vunpack.c.l.b16 %v3365
    %v3461 = vunpack.c.h.b16 %v3365
    %v3462 = vunpack.c.l.b16 %v3366
    %v3463 = vunpack.c.l.b16 %v3367
    %v3464 = vunpack.c.h.b16 %v3367
    %v3465 = vunpack.c.l.b16 %v3368
    %v3466 = vpack.c.b16 %v3421, %v3418
    %v3467 = vpack.c.b16 %v3422, %v3419
    %v3468 = vpack.c.b16 %v3423, %v3420
    %v3469 = vpack.c.b16 %v3427, %v3424
    %v3470 = vpack.c.b16 %v3428, %v3425
    %v3471 = vpack.c.b16 %v3429, %v3426
    %v3472 = vpack.c.b16 %v3433, %v3430
    %v3473 = vpack.c.b16 %v3434, %v3431
    %v3474 = vpack.c.b16 %v3435, %v3432
    %v3475 = vpack.c.b16 %v3439, %v3436
    %v3476 = vpack.c.b16 %v3440, %v3437
    %v3477 = vpack.c.b16 %v3441, %v3438
    %v3478 = vpack.c.b16 %v3445, %v3442
    %v3479 = vpack.c.b16 %v3446, %v3443
    %v3480 = vpack.c.b16 %v3447, %v3444
    %v3481 = vpack.c.b16 %v3451, %v3448
    %v3482 = vpack.c.b16 %v3452, %v3449
    %v3483 = vpack.c.b16 %v3453, %v3450
    %v3484 = vpack.c.b16 %v3457, %v3454
    %v3485 = vpack.c.b16 %v3458, %v3455
    %v3486 = vpack.c.b16 %v3459, %v3456
    %v3487 = vpack.c.b16 %v3463, %v3460
    %v3488 = vpack.c.b16 %v3464, %v3461
    %v3489 = vpack.c.b16 %v3465, %v3462
    %3514 = vmatprep.subr.bf16.mxu0 %v3467
    %3515 = vmatpush1.bf16.msra.mxu0 %v3466
    %3516 = vmatprep.subr.bf16.mxu0 %v3470
    %3517 = vmatpush1.bf16.msra.mxu0 %v3469
    %3518 = vmatprep.subr.bf16.mxu0 %v3473
    %3519 = vmatpush1.bf16.msra.mxu0 %v3472
    %3520 = vmatprep.subr.bf16.mxu0 %v3476
    %3521 = vmatpush1.bf16.msra.mxu0 %v3475
    %3522 = vmatprep.subr.bf16.mxu0 %v3479
    %3523 = vmatpush1.bf16.msra.mxu0 %v3478
    %3524 = vmatprep.subr.bf16.mxu0 %v3482
    %3525 = vmatpush1.bf16.msra.mxu0 %v3481
    %3526 = vmatprep.subr.bf16.mxu0 %v3485
    %3527 = vmatpush1.bf16.msra.mxu0 %v3484
    %3528 = vmatprep.subr.bf16.mxu0 %v3488
    %3529 = vmatpush1.bf16.msra.mxu0 %v3487
    %3530 = vmatprep.subr.bf16.mxu0 0
    %3531 = vmatpush1.bf16.msra.mxu0 0
    %3532 = vmatprep.subr.bf16.mxu0 0
    %3533 = vmatpush1.bf16.msra.mxu0 0
    %3534 = vmatprep.subr.bf16.mxu0 0
    %3535 = vmatpush1.bf16.msra.mxu0 0
    %3536 = vmatprep.subr.bf16.mxu0 0
    %3537 = vmatpush1.bf16.msra.mxu0 0
    %3538 = vmatprep.subr.bf16.mxu0 0
    %3539 = vmatpush1.bf16.msra.mxu0 0
    %3540 = vmatprep.subr.bf16.mxu0 0
    %3541 = vmatpush1.bf16.msra.mxu0 0
    %3542 = vmatprep.subr.bf16.mxu0 0
    %3543 = vmatpush1.bf16.msra.mxu0 0
    %3544 = vmatprep.subr.bf16.mxu0 0
    %3545 = vmatpush1.bf16.msra.mxu0 0
    %3546 = vmatprep.mubr.bf16.mxu0 0
    %3547 = vmatmul.mubr.bf16.gmra.mrb[0].mxu0 %v3336
    %v3548 = vpop.f32.mrb[0].mxu0
    %v3549 = vadd.f32 %v3374, %v3548
    %v3550 = vpop.f32.mrb[0].mxu0
    %v3551 = vadd.f32 %v3378, %v3550
    %v3552 = vpop.f32.mrb[0].mxu0
    %v3553 = vpop.f32.mrb[0].mxu0
    %3554 = vdwg.mxu0
    %3555 = vmatprep.subr.bf16.mxu0 0
    %3556 = vmatpush1.bf16.msra.mxu0 %v3468
    %3557 = vmatprep.subr.bf16.mxu0 0
    %3558 = vmatpush1.bf16.msra.mxu0 %v3471
    %3559 = vmatprep.subr.bf16.mxu0 0
    %3560 = vmatpush1.bf16.msra.mxu0 %v3474
    %3561 = vmatprep.subr.bf16.mxu0 0
    %3562 = vmatpush1.bf16.msra.mxu0 %v3477
    %3563 = vmatprep.subr.bf16.mxu0 0
    %3564 = vmatpush1.bf16.msra.mxu0 %v3480
    %3565 = vmatprep.subr.bf16.mxu0 0
    %3566 = vmatpush1.bf16.msra.mxu0 %v3483
    %3567 = vmatprep.subr.bf16.mxu0 0
    %3568 = vmatpush1.bf16.msra.mxu0 %v3486
    %3569 = vmatprep.subr.bf16.mxu0 0
    %3570 = vmatpush1.bf16.msra.mxu0 %v3489
    %3571 = vmatprep.subr.bf16.mxu0 0
    %3572 = vmatpush1.bf16.msra.mxu0 0
    %3573 = vmatprep.subr.bf16.mxu0 0
    %3574 = vmatpush1.bf16.msra.mxu0 0
    %3575 = vmatprep.subr.bf16.mxu0 0
    %3576 = vmatpush1.bf16.msra.mxu0 0
    %3577 = vmatprep.subr.bf16.mxu0 0
    %3578 = vmatpush1.bf16.msra.mxu0 0
    %3579 = vmatprep.subr.bf16.mxu0 0
    %3580 = vmatpush1.bf16.msra.mxu0 0
    %3581 = vmatprep.subr.bf16.mxu0 0
    %3582 = vmatpush1.bf16.msra.mxu0 0
    %3583 = vmatprep.subr.bf16.mxu0 0
    %3584 = vmatpush1.bf16.msra.mxu0 0
    %3585 = vmatprep.subr.bf16.mxu0 0
    %3586 = vmatpush1.bf16.msra.mxu0 0
    %3587 = vmatprep.mubr.bf16.mxu0 0
    %3588 = vmatmul.mubr.bf16.gmra.mrb[0].mxu0 %v3336
    %v3589 = vpop.f32.mrb[0].mxu0
    %v3590 = vadd.f32 %v3382, %v3589
    %v3591 = vpop.f32.mrb[0].mxu0
    %v3592 = vpop.f32.mrb[0].mxu0
    %v3593 = vpop.f32.mrb[0].mxu0
    %3594 = vdwg.mxu0
    %v3595 = vpack.c.bf16 %v3049, %v3049
    %v3596 = vld [vmem:[#allocation12] sm:$0xff]
    %v3597 = vld [vmem:[#allocation12 + $0x8] sm:$0xf]
    %v3598 = vld [vmem:[#allocation12 + $0xc] sm:$0xff]
    %v3599 = vld [vmem:[#allocation12 + $0x14] sm:$0xf]
    %v3600 = vld [vmem:[#allocation12 + $0x18] sm:$0xff]
    %v3601 = vld [vmem:[#allocation12 + $0x20] sm:$0xf]
    %v3602 = vld [vmem:[#allocation12 + $0x24] sm:$0xff]
    %v3603 = vld [vmem:[#allocation12 + $0x2c] sm:$0xf]
    %v3604 = vld [vmem:[#allocation12 + $0x30] sm:$0xff]
    %v3605 = vld [vmem:[#allocation12 + $0x38] sm:$0xf]
    %v3606 = vld [vmem:[#allocation12 + $0x3c] sm:$0xff]
    %v3607 = vld [vmem:[#allocation12 + $0x44] sm:$0xf]
    %v3608 = vld [vmem:[#allocation12 + $0x48] sm:$0xff]
    %v3609 = vld [vmem:[#allocation12 + $0x50] sm:$0xf]
    %v3610 = vld [vmem:[#allocation12 + $0x54] sm:$0xff]
    %v3611 = vld [vmem:[#allocation12 + $0x5c] sm:$0xf]
    %v3612 = vld [vmem:[#allocation12 + $0x60] sm:$0xff]
    %v3613 = vld [vmem:[#allocation12 + $0x68] sm:$0xf]
    %v3614 = vld [vmem:[#allocation12 + $0x6c] sm:$0xff]
    %v3615 = vld [vmem:[#allocation12 + $0x74] sm:$0xf]
    %v3616 = vld [vmem:[#allocation12 + $0x78] sm:$0xff]
    %v3617 = vld [vmem:[#allocation12 + $0x80] sm:$0xf]
    %v3618 = vld [vmem:[#allocation12 + $0x84] sm:$0xff]
    %v3619 = vld [vmem:[#allocation12 + $0x8c] sm:$0xf]
    %v3620 = vld [vmem:[#allocation12 + $0x90] sm:$0xff]
    %v3621 = vld [vmem:[#allocation12 + $0x98] sm:$0xf]
    %v3622 = vld [vmem:[#allocation12 + $0x9c] sm:$0xff]
    %v3623 = vld [vmem:[#allocation12 + $0xa4] sm:$0xf]
    %v3624 = vld [vmem:[#allocation12 + $0xa8] sm:$0xff]
    %v3625 = vld [vmem:[#allocation12 + $0xb0] sm:$0xf]
    %v3626 = vld [vmem:[#allocation12 + $0xb4] sm:$0xff]
    %v3627 = vld [vmem:[#allocation12 + $0xbc] sm:$0xf]
    %v3628 = vld [vmem:[%s12] sm:$0x7]
    %v3630 = vlaneseq
    %v3631 = vshrl.u32 %v3630, 7
    %v3632 = vsub.s32 0, %v3631
    %v3633 = vrot.slane %v3628, %v3632
    %v3634 = vlaneseq
    %v3635 = vshrl.u32 %v3634, 7
    %v3636 = vsub.s32 1, %v3635
    %v3637 = vrot.slane %v3628, %v3636
    %v3638 = vlaneseq
    %v3639 = vshrl.u32 %v3638, 7
    %v3640 = vsub.s32 2, %v3639
    %v3641 = vrot.slane %v3628, %v3640
    %v3677 = vunpack.c.l.b16 %v3596
    %v3678 = vunpack.c.h.b16 %v3596
    %v3679 = vunpack.c.l.b16 %v3597
    %v3680 = vunpack.c.l.b16 %v3598
    %v3681 = vunpack.c.h.b16 %v3598
    %v3682 = vunpack.c.l.b16 %v3599
    %v3683 = vunpack.c.l.b16 %v3600
    %v3684 = vunpack.c.h.b16 %v3600
    %v3685 = vunpack.c.l.b16 %v3601
    %v3686 = vunpack.c.l.b16 %v3602
    %v3687 = vunpack.c.h.b16 %v3602
    %v3688 = vunpack.c.l.b16 %v3603
    %v3689 = vunpack.c.l.b16 %v3604
    %v3690 = vunpack.c.h.b16 %v3604
    %v3691 = vunpack.c.l.b16 %v3605
    %v3692 = vunpack.c.l.b16 %v3606
    %v3693 = vunpack.c.h.b16 %v3606
    %v3694 = vunpack.c.l.b16 %v3607
    %v3695 = vunpack.c.l.b16 %v3608
    %v3696 = vunpack.c.h.b16 %v3608
    %v3697 = vunpack.c.l.b16 %v3609
    %v3698 = vunpack.c.l.b16 %v3610
    %v3699 = vunpack.c.h.b16 %v3610
    %v3700 = vunpack.c.l.b16 %v3611
    %v3701 = vunpack.c.l.b16 %v3612
    %v3702 = vunpack.c.h.b16 %v3612
    %v3703 = vunpack.c.l.b16 %v3613
    %v3704 = vunpack.c.l.b16 %v3614
    %v3705 = vunpack.c.h.b16 %v3614
    %v3706 = vunpack.c.l.b16 %v3615
    %v3707 = vunpack.c.l.b16 %v3616
    %v3708 = vunpack.c.h.b16 %v3616
    %v3709 = vunpack.c.l.b16 %v3617
    %v3710 = vunpack.c.l.b16 %v3618
    %v3711 = vunpack.c.h.b16 %v3618
    %v3712 = vunpack.c.l.b16 %v3619
    %v3713 = vunpack.c.l.b16 %v3620
    %v3714 = vunpack.c.h.b16 %v3620
    %v3715 = vunpack.c.l.b16 %v3621
    %v3716 = vunpack.c.l.b16 %v3622
    %v3717 = vunpack.c.h.b16 %v3622
    %v3718 = vunpack.c.l.b16 %v3623
    %v3719 = vunpack.c.l.b16 %v3624
    %v3720 = vunpack.c.h.b16 %v3624
    %v3721 = vunpack.c.l.b16 %v3625
    %v3722 = vunpack.c.l.b16 %v3626
    %v3723 = vunpack.c.h.b16 %v3626
    %v3724 = vunpack.c.l.b16 %v3627
    %v3725 = vpack.c.b16 %v3680, %v3677
    %v3726 = vpack.c.b16 %v3681, %v3678
    %v3727 = vpack.c.b16 %v3682, %v3679
    %v3728 = vpack.c.b16 %v3686, %v3683
    %v3729 = vpack.c.b16 %v3687, %v3684
    %v3730 = vpack.c.b16 %v3688, %v3685
    %v3731 = vpack.c.b16 %v3692, %v3689
    %v3732 = vpack.c.b16 %v3693, %v3690
    %v3733 = vpack.c.b16 %v3694, %v3691
    %v3734 = vpack.c.b16 %v3698, %v3695
    %v3735 = vpack.c.b16 %v3699, %v3696
    %v3736 = vpack.c.b16 %v3700, %v3697
    %v3737 = vpack.c.b16 %v3704, %v3701
    %v3738 = vpack.c.b16 %v3705, %v3702
    %v3739 = vpack.c.b16 %v3706, %v3703
    %v3740 = vpack.c.b16 %v3710, %v3707
    %v3741 = vpack.c.b16 %v3711, %v3708
    %v3742 = vpack.c.b16 %v3712, %v3709
    %v3743 = vpack.c.b16 %v3716, %v3713
    %v3744 = vpack.c.b16 %v3717, %v3714
    %v3745 = vpack.c.b16 %v3718, %v3715
    %v3746 = vpack.c.b16 %v3722, %v3719
    %v3747 = vpack.c.b16 %v3723, %v3720
    %v3748 = vpack.c.b16 %v3724, %v3721
    %3773 = vmatprep.subr.bf16.mxu0 %v3726
    %3774 = vmatpush1.bf16.msra.mxu0 %v3725
    %3775 = vmatprep.subr.bf16.mxu0 %v3729
    %3776 = vmatpush1.bf16.msra.mxu0 %v3728
    %3777 = vmatprep.subr.bf16.mxu0 %v3732
    %3778 = vmatpush1.bf16.msra.mxu0 %v3731
    %3779 = vmatprep.subr.bf16.mxu0 %v3735
    %3780 = vmatpush1.bf16.msra.mxu0 %v3734
    %3781 = vmatprep.subr.bf16.mxu0 %v3738
    %3782 = vmatpush1.bf16.msra.mxu0 %v3737
    %3783 = vmatprep.subr.bf16.mxu0 %v3741
    %3784 = vmatpush1.bf16.msra.mxu0 %v3740
    %3785 = vmatprep.subr.bf16.mxu0 %v3744
    %3786 = vmatpush1.bf16.msra.mxu0 %v3743
    %3787 = vmatprep.subr.bf16.mxu0 %v3747
    %3788 = vmatpush1.bf16.msra.mxu0 %v3746
    %3789 = vmatprep.subr.bf16.mxu0 0
    %3790 = vmatpush1.bf16.msra.mxu0 0
    %3791 = vmatprep.subr.bf16.mxu0 0
    %3792 = vmatpush1.bf16.msra.mxu0 0
    %3793 = vmatprep.subr.bf16.mxu0 0
    %3794 = vmatpush1.bf16.msra.mxu0 0
    %3795 = vmatprep.subr.bf16.mxu0 0
    %3796 = vmatpush1.bf16.msra.mxu0 0
    %3797 = vmatprep.subr.bf16.mxu0 0
    %3798 = vmatpush1.bf16.msra.mxu0 0
    %3799 = vmatprep.subr.bf16.mxu0 0
    %3800 = vmatpush1.bf16.msra.mxu0 0
    %3801 = vmatprep.subr.bf16.mxu0 0
    %3802 = vmatpush1.bf16.msra.mxu0 0
    %3803 = vmatprep.subr.bf16.mxu0 0
    %3804 = vmatpush1.bf16.msra.mxu0 0
    %3805 = vmatprep.mubr.bf16.mxu0 0
    %3806 = vmatmul.mubr.bf16.gmra.mrb[0].mxu0 %v3595
    %v3807 = vpop.f32.mrb[0].mxu0
    %v3808 = vadd.f32 %v3633, %v3807
    %v3809 = vpop.f32.mrb[0].mxu0
    %v3810 = vadd.f32 %v3637, %v3809
    %v3811 = vpop.f32.mrb[0].mxu0
    %v3812 = vpop.f32.mrb[0].mxu0
    %3813 = vdwg.mxu0
    %3814 = vmatprep.subr.bf16.mxu0 0
    %3815 = vmatpush1.bf16.msra.mxu0 %v3727
    %3816 = vmatprep.subr.bf16.mxu0 0
    %3817 = vmatpush1.bf16.msra.mxu0 %v3730
    %3818 = vmatprep.subr.bf16.mxu0 0
    %3819 = vmatpush1.bf16.msra.mxu0 %v3733
    %3820 = vmatprep.subr.bf16.mxu0 0
    %3821 = vmatpush1.bf16.msra.mxu0 %v3736
    %3822 = vmatprep.subr.bf16.mxu0 0
    %3823 = vmatpush1.bf16.msra.mxu0 %v3739
    %3824 = vmatprep.subr.bf16.mxu0 0
    %3825 = vmatpush1.bf16.msra.mxu0 %v3742
    %3826 = vmatprep.subr.bf16.mxu0 0
    %3827 = vmatpush1.bf16.msra.mxu0 %v3745
    %3828 = vmatprep.subr.bf16.mxu0 0
    %3829 = vmatpush1.bf16.msra.mxu0 %v3748
    %3830 = vmatprep.subr.bf16.mxu0 0
    %3831 = vmatpush1.bf16.msra.mxu0 0
    %3832 = vmatprep.subr.bf16.mxu0 0
    %3833 = vmatpush1.bf16.msra.mxu0 0
    %3834 = vmatprep.subr.bf16.mxu0 0
    %3835 = vmatpush1.bf16.msra.mxu0 0
    %3836 = vmatprep.subr.bf16.mxu0 0
    %3837 = vmatpush1.bf16.msra.mxu0 0
    %3838 = vmatprep.subr.bf16.mxu0 0
    %3839 = vmatpush1.bf16.msra.mxu0 0
    %3840 = vmatprep.subr.bf16.mxu0 0
    %3841 = vmatpush1.bf16.msra.mxu0 0
    %3842 = vmatprep.subr.bf16.mxu0 0
    %3843 = vmatpush1.bf16.msra.mxu0 0
    %3844 = vmatprep.subr.bf16.mxu0 0
    %3845 = vmatpush1.bf16.msra.mxu0 0
    %3846 = vmatprep.mubr.bf16.mxu0 0
    %3847 = vmatmul.mubr.bf16.gmra.mrb[0].mxu0 %v3595
    %v3848 = vpop.f32.mrb[0].mxu0
    %v3849 = vadd.f32 %v3641, %v3848
    %v3850 = vpop.f32.mrb[0].mxu0
    %v3851 = vpop.f32.mrb[0].mxu0
    %v3852 = vpop.f32.mrb[0].mxu0
    %3853 = vdwg.mxu0
    %v3854 = vadd.f32 %v3549, %v3808
    %v3855 = vxor.u32 %v3854, 2147483648
    %v3856 = vmul.f32 %v3855, 1.442695
    %v3857 = vpow.pop %v3856
    %v3858 = vadd.f32 %v3857, 1.0
    %v3859 = vrcp.pop %v3858
    %v3860 = vmul.f32 1.0, %v3859
    %v3861 = vadd.f32 %v3551, %v3810
    %v3862 = vxor.u32 %v3861, 2147483648
    %v3863 = vmul.f32 %v3862, 1.442695
    %v3864 = vpow.pop %v3863
    %v3865 = vadd.f32 %v3864, 1.0
    %v3866 = vrcp.pop %v3865
    %v3867 = vmul.f32 1.0, %v3866
    %v3868 = vmul.f32 %v3860, %v3849
    %v3869 = vadd.f32 %v3590, %v3868
    %v3870 = vtanh.pop %v3869
    %v3871 = vsub.f32 1.0, %v3867
    %v3872 = vmul.f32 %v3871, %v3870
    %v3873 = vmul.f32 %v3867, %v3049
    %v3874 = vadd.f32 %v3872, %v3873
    %3875 = vst [vmem:[#allocation3 + $0x18] sm:$0xff] %v3874
    %v3876 = vld [vmem:[#allocation2 + $0x60] sm:$0xff]
    %v3877 = vld [vmem:[#allocation2 + $0x68] sm:$0xff]
    %v3878 = vld [vmem:[#allocation2 + $0x70] sm:$0xff]
    %v3879 = vadd.f32 %v3876, %v293
    %v3880 = vadd.f32 %v3877, %v295
    %v3881 = vadd.f32 %v3878, %v334
    %v3882 = vld [vmem:[#allocation9] sm:$0xff]
    %v3883 = vld [vmem:[#allocation9 + $0x8] sm:$0xf]
    %v3884 = vld [vmem:[#allocation9 + $0xc] sm:$0xff]
    %v3885 = vld [vmem:[#allocation9 + $0x14] sm:$0xf]
    %v3886 = vld [vmem:[#allocation9 + $0x18] sm:$0xff]
    %v3887 = vld [vmem:[#allocation9 + $0x20] sm:$0xf]
    %v3888 = vld [vmem:[#allocation9 + $0x24] sm:$0xff]
    %v3889 = vld [vmem:[#allocation9 + $0x2c] sm:$0xf]
    %v3890 = vld [vmem:[#allocation9 + $0x30] sm:$0xff]
    %v3891 = vld [vmem:[#allocation9 + $0x38] sm:$0xf]
    %v3892 = vld [vmem:[#allocation9 + $0x3c] sm:$0xff]
    %v3893 = vld [vmem:[#allocation9 + $0x44] sm:$0xf]
    %v3894 = vld [vmem:[#allocation9 + $0x48] sm:$0xff]
    %v3895 = vld [vmem:[#allocation9 + $0x50] sm:$0xf]
    %v3896 = vld [vmem:[#allocation9 + $0x54] sm:$0xff]
    %v3897 = vld [vmem:[#allocation9 + $0x5c] sm:$0xf]
    %v3898 = vld [vmem:[#allocation9 + $0x60] sm:$0xff]
    %v3899 = vld [vmem:[#allocation9 + $0x68] sm:$0xf]
    %v3900 = vld [vmem:[#allocation9 + $0x6c] sm:$0xff]
    %v3901 = vld [vmem:[#allocation9 + $0x74] sm:$0xf]
    %v3902 = vld [vmem:[#allocation9 + $0x78] sm:$0xff]
    %v3903 = vld [vmem:[#allocation9 + $0x80] sm:$0xf]
    %v3904 = vld [vmem:[#allocation9 + $0x84] sm:$0xff]
    %v3905 = vld [vmem:[#allocation9 + $0x8c] sm:$0xf]
    %v3906 = vld [vmem:[#allocation9 + $0x90] sm:$0xff]
    %v3907 = vld [vmem:[#allocation9 + $0x98] sm:$0xf]
    %v3908 = vld [vmem:[#allocation9 + $0x9c] sm:$0xff]
    %v3909 = vld [vmem:[#allocation9 + $0xa4] sm:$0xf]
    %v3910 = vld [vmem:[#allocation9 + $0xa8] sm:$0xff]
    %v3911 = vld [vmem:[#allocation9 + $0xb0] sm:$0xf]
    %v3912 = vld [vmem:[#allocation9 + $0xb4] sm:$0xff]
    %v3913 = vld [vmem:[#allocation9 + $0xbc] sm:$0xf]
    %v3914 = vld [vmem:[%s8] sm:$0x7]
    %v3916 = vlaneseq
    %v3917 = vshrl.u32 %v3916, 7
    %v3918 = vsub.s32 0, %v3917
    %v3919 = vrot.slane %v3914, %v3918
    %v3920 = vlaneseq
    %v3921 = vshrl.u32 %v3920, 7
    %v3922 = vsub.s32 1, %v3921
    %v3923 = vrot.slane %v3914, %v3922
    %v3924 = vlaneseq
    %v3925 = vshrl.u32 %v3924, 7
    %v3926 = vsub.s32 2, %v3925
    %v3927 = vrot.slane %v3914, %v3926
    %v3963 = vunpack.c.l.b16 %v3882
    %v3964 = vunpack.c.h.b16 %v3882
    %v3965 = vunpack.c.l.b16 %v3883
    %v3966 = vunpack.c.l.b16 %v3884
    %v3967 = vunpack.c.h.b16 %v3884
    %v3968 = vunpack.c.l.b16 %v3885
    %v3969 = vunpack.c.l.b16 %v3886
    %v3970 = vunpack.c.h.b16 %v3886
    %v3971 = vunpack.c.l.b16 %v3887
    %v3972 = vunpack.c.l.b16 %v3888
    %v3973 = vunpack.c.h.b16 %v3888
    %v3974 = vunpack.c.l.b16 %v3889
    %v3975 = vunpack.c.l.b16 %v3890
    %v3976 = vunpack.c.h.b16 %v3890
    %v3977 = vunpack.c.l.b16 %v3891
    %v3978 = vunpack.c.l.b16 %v3892
    %v3979 = vunpack.c.h.b16 %v3892
    %v3980 = vunpack.c.l.b16 %v3893
    %v3981 = vunpack.c.l.b16 %v3894
    %v3982 = vunpack.c.h.b16 %v3894
    %v3983 = vunpack.c.l.b16 %v3895
    %v3984 = vunpack.c.l.b16 %v3896
    %v3985 = vunpack.c.h.b16 %v3896
    %v3986 = vunpack.c.l.b16 %v3897
    %v3987 = vunpack.c.l.b16 %v3898
    %v3988 = vunpack.c.h.b16 %v3898
    %v3989 = vunpack.c.l.b16 %v3899
    %v3990 = vunpack.c.l.b16 %v3900
    %v3991 = vunpack.c.h.b16 %v3900
    %v3992 = vunpack.c.l.b16 %v3901
    %v3993 = vunpack.c.l.b16 %v3902
    %v3994 = vunpack.c.h.b16 %v3902
    %v3995 = vunpack.c.l.b16 %v3903
    %v3996 = vunpack.c.l.b16 %v3904
    %v3997 = vunpack.c.h.b16 %v3904
    %v3998 = vunpack.c.l.b16 %v3905
    %v3999 = vunpack.c.l.b16 %v3906
    %v4000 = vunpack.c.h.b16 %v3906
    %v4001 = vunpack.c.l.b16 %v3907
    %v4002 = vunpack.c.l.b16 %v3908
    %v4003 = vunpack.c.h.b16 %v3908
    %v4004 = vunpack.c.l.b16 %v3909
    %v4005 = vunpack.c.l.b16 %v3910
    %v4006 = vunpack.c.h.b16 %v3910
    %v4007 = vunpack.c.l.b16 %v3911
    %v4008 = vunpack.c.l.b16 %v3912
    %v4009 = vunpack.c.h.b16 %v3912
    %v4010 = vunpack.c.l.b16 %v3913
    %v4011 = vpack.c.b16 %v3966, %v3963
    %v4012 = vpack.c.b16 %v3967, %v3964
    %v4013 = vpack.c.b16 %v3968, %v3965
    %v4014 = vpack.c.b16 %v3972, %v3969
    %v4015 = vpack.c.b16 %v3973, %v3970
    %v4016 = vpack.c.b16 %v3974, %v3971
    %v4017 = vpack.c.b16 %v3978, %v3975
    %v4018 = vpack.c.b16 %v3979, %v3976
    %v4019 = vpack.c.b16 %v3980, %v3977
    %v4020 = vpack.c.b16 %v3984, %v3981
    %v4021 = vpack.c.b16 %v3985, %v3982
    %v4022 = vpack.c.b16 %v3986, %v3983
    %v4023 = vpack.c.b16 %v3990, %v3987
    %v4024 = vpack.c.b16 %v3991, %v3988
    %v4025 = vpack.c.b16 %v3992, %v3989
    %v4026 = vpack.c.b16 %v3996, %v3993
    %v4027 = vpack.c.b16 %v3997, %v3994
    %v4028 = vpack.c.b16 %v3998, %v3995
    %v4029 = vpack.c.b16 %v4002, %v3999
    %v4030 = vpack.c.b16 %v4003, %v4000
    %v4031 = vpack.c.b16 %v4004, %v4001
    %v4032 = vpack.c.b16 %v4008, %v4005
    %v4033 = vpack.c.b16 %v4009, %v4006
    %v4034 = vpack.c.b16 %v4010, %v4007
    %4059 = vmatprep.subr.bf16.mxu0 %v4012
    %4060 = vmatpush1.bf16.msra.mxu0 %v4011
    %4061 = vmatprep.subr.bf16.mxu0 %v4015
    %4062 = vmatpush1.bf16.msra.mxu0 %v4014
    %4063 = vmatprep.subr.bf16.mxu0 %v4018
    %4064 = vmatpush1.bf16.msra.mxu0 %v4017
    %4065 = vmatprep.subr.bf16.mxu0 %v4021
    %4066 = vmatpush1.bf16.msra.mxu0 %v4020
    %4067 = vmatprep.subr.bf16.mxu0 %v4024
    %4068 = vmatpush1.bf16.msra.mxu0 %v4023
    %4069 = vmatprep.subr.bf16.mxu0 %v4027
    %4070 = vmatpush1.bf16.msra.mxu0 %v4026
    %4071 = vmatprep.subr.bf16.mxu0 %v4030
    %4072 = vmatpush1.bf16.msra.mxu0 %v4029
    %4073 = vmatprep.subr.bf16.mxu0 %v4033
    %4074 = vmatpush1.bf16.msra.mxu0 %v4032
    %4075 = vmatprep.subr.bf16.mxu0 0
    %4076 = vmatpush1.bf16.msra.mxu0 0
    %4077 = vmatprep.subr.bf16.mxu0 0
    %4078 = vmatpush1.bf16.msra.mxu0 0
    %4079 = vmatprep.subr.bf16.mxu0 0
    %4080 = vmatpush1.bf16.msra.mxu0 0
    %4081 = vmatprep.subr.bf16.mxu0 0
    %4082 = vmatpush1.bf16.msra.mxu0 0
    %4083 = vmatprep.subr.bf16.mxu0 0
    %4084 = vmatpush1.bf16.msra.mxu0 0
    %4085 = vmatprep.subr.bf16.mxu0 0
    %4086 = vmatpush1.bf16.msra.mxu0 0
    %4087 = vmatprep.subr.bf16.mxu0 0
    %4088 = vmatpush1.bf16.msra.mxu0 0
    %4089 = vmatprep.subr.bf16.mxu0 0
    %4090 = vmatpush1.bf16.msra.mxu0 0
    %4091 = vmatprep.mubr.bf16.mxu0 0
    %4092 = vmatmul.mubr.bf16.gmra.mrb[0].mxu0 %v3336
    %v4093 = vpop.f32.mrb[0].mxu0
    %v4094 = vadd.f32 %v3919, %v4093
    %v4095 = vpop.f32.mrb[0].mxu0
    %v4096 = vadd.f32 %v3923, %v4095
    %v4097 = vpop.f32.mrb[0].mxu0
    %v4098 = vpop.f32.mrb[0].mxu0
    %4099 = vdwg.mxu0
    %4100 = vmatprep.subr.bf16.mxu0 0
    %4101 = vmatpush1.bf16.msra.mxu0 %v4013
    %4102 = vmatprep.subr.bf16.mxu0 0
    %4103 = vmatpush1.bf16.msra.mxu0 %v4016
    %4104 = vmatprep.subr.bf16.mxu0 0
    %4105 = vmatpush1.bf16.msra.mxu0 %v4019
    %4106 = vmatprep.subr.bf16.mxu0 0
    %4107 = vmatpush1.bf16.msra.mxu0 %v4022
    %4108 = vmatprep.subr.bf16.mxu0 0
    %4109 = vmatpush1.bf16.msra.mxu0 %v4025
    %4110 = vmatprep.subr.bf16.mxu0 0
    %4111 = vmatpush1.bf16.msra.mxu0 %v4028
    %4112 = vmatprep.subr.bf16.mxu0 0
    %4113 = vmatpush1.bf16.msra.mxu0 %v4031
    %4114 = vmatprep.subr.bf16.mxu0 0
    %4115 = vmatpush1.bf16.msra.mxu0 %v4034
    %4116 = vmatprep.subr.bf16.mxu0 0
    %4117 = vmatpush1.bf16.msra.mxu0 0
    %4118 = vmatprep.subr.bf16.mxu0 0
    %4119 = vmatpush1.bf16.msra.mxu0 0
    %4120 = vmatprep.subr.bf16.mxu0 0
    %4121 = vmatpush1.bf16.msra.mxu0 0
    %4122 = vmatprep.subr.bf16.mxu0 0
    %4123 = vmatpush1.bf16.msra.mxu0 0
    %4124 = vmatprep.subr.bf16.mxu0 0
    %4125 = vmatpush1.bf16.msra.mxu0 0
    %4126 = vmatprep.subr.bf16.mxu0 0
    %4127 = vmatpush1.bf16.msra.mxu0 0
    %4128 = vmatprep.subr.bf16.mxu0 0
    %4129 = vmatpush1.bf16.msra.mxu0 0
    %4130 = vmatprep.subr.bf16.mxu0 0
    %4131 = vmatpush1.bf16.msra.mxu0 0
    %4132 = vmatprep.mubr.bf16.mxu0 0
    %4133 = vmatmul.mubr.bf16.gmra.mrb[0].mxu0 %v3336
    %v4134 = vpop.f32.mrb[0].mxu0
    %v4135 = vadd.f32 %v3927, %v4134
    %v4136 = vpop.f32.mrb[0].mxu0
    %v4137 = vpop.f32.mrb[0].mxu0
    %v4138 = vpop.f32.mrb[0].mxu0
    %4139 = vdwg.mxu0
    %v4140 = vadd.f32 %v3879, %v4094
    %v4141 = vxor.u32 %v4140, 2147483648
    %v4142 = vmul.f32 %v4141, 1.442695
    %v4143 = vpow.pop %v4142
    %v4144 = vadd.f32 %v4143, 1.0
    %v4145 = vrcp.pop %v4144
    %v4146 = vmul.f32 1.0, %v4145
    %v4147 = vadd.f32 %v3880, %v4096
    %v4148 = vxor.u32 %v4147, 2147483648
    %v4149 = vmul.f32 %v4148, 1.442695
    %v4150 = vpow.pop %v4149
    %v4151 = vadd.f32 %v4150, 1.0
    %v4152 = vrcp.pop %v4151
    %v4153 = vmul.f32 1.0, %v4152
    %v4154 = vmul.f32 %v4146, %v4135
    %v4155 = vadd.f32 %v3881, %v4154
    %v4156 = vtanh.pop %v4155
    %v4157 = vsub.f32 1.0, %v4153
    %v4158 = vmul.f32 %v4157, %v4156
    %v4159 = vmul.f32 %v4153, %v3335
    %v4160 = vadd.f32 %v4158, %v4159
    %v4161 = vpack.c.bf16 %v4160, %v4160
    %v4162 = vld [vmem:[#allocation11] sm:$0xff]
    %v4163 = vld [vmem:[#allocation11 + $0x8] sm:$0xf]
    %v4164 = vld [vmem:[#allocation11 + $0xc] sm:$0xff]
    %v4165 = vld [vmem:[#allocation11 + $0x14] sm:$0xf]
    %v4166 = vld [vmem:[#allocation11 + $0x18] sm:$0xff]
    %v4167 = vld [vmem:[#allocation11 + $0x20] sm:$0xf]
    %v4168 = vld [vmem:[#allocation11 + $0x24] sm:$0xff]
    %v4169 = vld [vmem:[#allocation11 + $0x2c] sm:$0xf]
    %v4170 = vld [vmem:[#allocation11 + $0x30] sm:$0xff]
    %v4171 = vld [vmem:[#allocation11 + $0x38] sm:$0xf]
    %v4172 = vld [vmem:[#allocation11 + $0x3c] sm:$0xff]
    %v4173 = vld [vmem:[#allocation11 + $0x44] sm:$0xf]
    %v4174 = vld [vmem:[#allocation11 + $0x48] sm:$0xff]
    %v4175 = vld [vmem:[#allocation11 + $0x50] sm:$0xf]
    %v4176 = vld [vmem:[#allocation11 + $0x54] sm:$0xff]
    %v4177 = vld [vmem:[#allocation11 + $0x5c] sm:$0xf]
    %v4178 = vld [vmem:[#allocation11 + $0x60] sm:$0xff]
    %v4179 = vld [vmem:[#allocation11 + $0x68] sm:$0xf]
    %v4180 = vld [vmem:[#allocation11 + $0x6c] sm:$0xff]
    %v4181 = vld [vmem:[#allocation11 + $0x74] sm:$0xf]
    %v4182 = vld [vmem:[#allocation11 + $0x78] sm:$0xff]
    %v4183 = vld [vmem:[#allocation11 + $0x80] sm:$0xf]
    %v4184 = vld [vmem:[#allocation11 + $0x84] sm:$0xff]
    %v4185 = vld [vmem:[#allocation11 + $0x8c] sm:$0xf]
    %v4186 = vld [vmem:[#allocation11 + $0x90] sm:$0xff]
    %v4187 = vld [vmem:[#allocation11 + $0x98] sm:$0xf]
    %v4188 = vld [vmem:[#allocation11 + $0x9c] sm:$0xff]
    %v4189 = vld [vmem:[#allocation11 + $0xa4] sm:$0xf]
    %v4190 = vld [vmem:[#allocation11 + $0xa8] sm:$0xff]
    %v4191 = vld [vmem:[#allocation11 + $0xb0] sm:$0xf]
    %v4192 = vld [vmem:[#allocation11 + $0xb4] sm:$0xff]
    %v4193 = vld [vmem:[#allocation11 + $0xbc] sm:$0xf]
    %v4194 = vld [vmem:[%s10] sm:$0x7]
    %v4196 = vlaneseq
    %v4197 = vshrl.u32 %v4196, 7
    %v4198 = vsub.s32 0, %v4197
    %v4199 = vrot.slane %v4194, %v4198
    %v4200 = vlaneseq
    %v4201 = vshrl.u32 %v4200, 7
    %v4202 = vsub.s32 1, %v4201
    %v4203 = vrot.slane %v4194, %v4202
    %v4204 = vlaneseq
    %v4205 = vshrl.u32 %v4204, 7
    %v4206 = vsub.s32 2, %v4205
    %v4207 = vrot.slane %v4194, %v4206
    %v4243 = vunpack.c.l.b16 %v4162
    %v4244 = vunpack.c.h.b16 %v4162
    %v4245 = vunpack.c.l.b16 %v4163
    %v4246 = vunpack.c.l.b16 %v4164
    %v4247 = vunpack.c.h.b16 %v4164
    %v4248 = vunpack.c.l.b16 %v4165
    %v4249 = vunpack.c.l.b16 %v4166
    %v4250 = vunpack.c.h.b16 %v4166
    %v4251 = vunpack.c.l.b16 %v4167
    %v4252 = vunpack.c.l.b16 %v4168
    %v4253 = vunpack.c.h.b16 %v4168
    %v4254 = vunpack.c.l.b16 %v4169
    %v4255 = vunpack.c.l.b16 %v4170
    %v4256 = vunpack.c.h.b16 %v4170
    %v4257 = vunpack.c.l.b16 %v4171
    %v4258 = vunpack.c.l.b16 %v4172
    %v4259 = vunpack.c.h.b16 %v4172
    %v4260 = vunpack.c.l.b16 %v4173
    %v4261 = vunpack.c.l.b16 %v4174
    %v4262 = vunpack.c.h.b16 %v4174
    %v4263 = vunpack.c.l.b16 %v4175
    %v4264 = vunpack.c.l.b16 %v4176
    %v4265 = vunpack.c.h.b16 %v4176
    %v4266 = vunpack.c.l.b16 %v4177
    %v4267 = vunpack.c.l.b16 %v4178
    %v4268 = vunpack.c.h.b16 %v4178
    %v4269 = vunpack.c.l.b16 %v4179
    %v4270 = vunpack.c.l.b16 %v4180
    %v4271 = vunpack.c.h.b16 %v4180
    %v4272 = vunpack.c.l.b16 %v4181
    %v4273 = vunpack.c.l.b16 %v4182
    %v4274 = vunpack.c.h.b16 %v4182
    %v4275 = vunpack.c.l.b16 %v4183
    %v4276 = vunpack.c.l.b16 %v4184
    %v4277 = vunpack.c.h.b16 %v4184
    %v4278 = vunpack.c.l.b16 %v4185
    %v4279 = vunpack.c.l.b16 %v4186
    %v4280 = vunpack.c.h.b16 %v4186
    %v4281 = vunpack.c.l.b16 %v4187
    %v4282 = vunpack.c.l.b16 %v4188
    %v4283 = vunpack.c.h.b16 %v4188
    %v4284 = vunpack.c.l.b16 %v4189
    %v4285 = vunpack.c.l.b16 %v4190
    %v4286 = vunpack.c.h.b16 %v4190
    %v4287 = vunpack.c.l.b16 %v4191
    %v4288 = vunpack.c.l.b16 %v4192
    %v4289 = vunpack.c.h.b16 %v4192
    %v4290 = vunpack.c.l.b16 %v4193
    %v4291 = vpack.c.b16 %v4246, %v4243
    %v4292 = vpack.c.b16 %v4247, %v4244
    %v4293 = vpack.c.b16 %v4248, %v4245
    %v4294 = vpack.c.b16 %v4252, %v4249
    %v4295 = vpack.c.b16 %v4253, %v4250
    %v4296 = vpack.c.b16 %v4254, %v4251
    %v4297 = vpack.c.b16 %v4258, %v4255
    %v4298 = vpack.c.b16 %v4259, %v4256
    %v4299 = vpack.c.b16 %v4260, %v4257
    %v4300 = vpack.c.b16 %v4264, %v4261
    %v4301 = vpack.c.b16 %v4265, %v4262
    %v4302 = vpack.c.b16 %v4266, %v4263
    %v4303 = vpack.c.b16 %v4270, %v4267
    %v4304 = vpack.c.b16 %v4271, %v4268
    %v4305 = vpack.c.b16 %v4272, %v4269
    %v4306 = vpack.c.b16 %v4276, %v4273
    %v4307 = vpack.c.b16 %v4277, %v4274
    %v4308 = vpack.c.b16 %v4278, %v4275
    %v4309 = vpack.c.b16 %v4282, %v4279
    %v4310 = vpack.c.b16 %v4283, %v4280
    %v4311 = vpack.c.b16 %v4284, %v4281
    %v4312 = vpack.c.b16 %v4288, %v4285
    %v4313 = vpack.c.b16 %v4289, %v4286
    %v4314 = vpack.c.b16 %v4290, %v4287
    %4339 = vmatprep.subr.bf16.mxu0 %v4292
    %4340 = vmatpush1.bf16.msra.mxu0 %v4291
    %4341 = vmatprep.subr.bf16.mxu0 %v4295
    %4342 = vmatpush1.bf16.msra.mxu0 %v4294
    %4343 = vmatprep.subr.bf16.mxu0 %v4298
    %4344 = vmatpush1.bf16.msra.mxu0 %v4297
    %4345 = vmatprep.subr.bf16.mxu0 %v4301
    %4346 = vmatpush1.bf16.msra.mxu0 %v4300
    %4347 = vmatprep.subr.bf16.mxu0 %v4304
    %4348 = vmatpush1.bf16.msra.mxu0 %v4303
    %4349 = vmatprep.subr.bf16.mxu0 %v4307
    %4350 = vmatpush1.bf16.msra.mxu0 %v4306
    %4351 = vmatprep.subr.bf16.mxu0 %v4310
    %4352 = vmatpush1.bf16.msra.mxu0 %v4309
    %4353 = vmatprep.subr.bf16.mxu0 %v4313
    %4354 = vmatpush1.bf16.msra.mxu0 %v4312
    %4355 = vmatprep.subr.bf16.mxu0 0
    %4356 = vmatpush1.bf16.msra.mxu0 0
    %4357 = vmatprep.subr.bf16.mxu0 0
    %4358 = vmatpush1.bf16.msra.mxu0 0
    %4359 = vmatprep.subr.bf16.mxu0 0
    %4360 = vmatpush1.bf16.msra.mxu0 0
    %4361 = vmatprep.subr.bf16.mxu0 0
    %4362 = vmatpush1.bf16.msra.mxu0 0
    %4363 = vmatprep.subr.bf16.mxu0 0
    %4364 = vmatpush1.bf16.msra.mxu0 0
    %4365 = vmatprep.subr.bf16.mxu0 0
    %4366 = vmatpush1.bf16.msra.mxu0 0
    %4367 = vmatprep.subr.bf16.mxu0 0
    %4368 = vmatpush1.bf16.msra.mxu0 0
    %4369 = vmatprep.subr.bf16.mxu0 0
    %4370 = vmatpush1.bf16.msra.mxu0 0
    %4371 = vmatprep.mubr.bf16.mxu0 0
    %4372 = vmatmul.mubr.bf16.gmra.mrb[0].mxu0 %v4161
    %v4373 = vpop.f32.mrb[0].mxu0
    %v4374 = vadd.f32 %v4199, %v4373
    %v4375 = vpop.f32.mrb[0].mxu0
    %v4376 = vadd.f32 %v4203, %v4375
    %v4377 = vpop.f32.mrb[0].mxu0
    %v4378 = vpop.f32.mrb[0].mxu0
    %4379 = vdwg.mxu0
    %4380 = vmatprep.subr.bf16.mxu0 0
    %4381 = vmatpush1.bf16.msra.mxu0 %v4293
    %4382 = vmatprep.subr.bf16.mxu0 0
    %4383 = vmatpush1.bf16.msra.mxu0 %v4296
    %4384 = vmatprep.subr.bf16.mxu0 0
    %4385 = vmatpush1.bf16.msra.mxu0 %v4299
    %4386 = vmatprep.subr.bf16.mxu0 0
    %4387 = vmatpush1.bf16.msra.mxu0 %v4302
    %4388 = vmatprep.subr.bf16.mxu0 0
    %4389 = vmatpush1.bf16.msra.mxu0 %v4305
    %4390 = vmatprep.subr.bf16.mxu0 0
    %4391 = vmatpush1.bf16.msra.mxu0 %v4308
    %4392 = vmatprep.subr.bf16.mxu0 0
    %4393 = vmatpush1.bf16.msra.mxu0 %v4311
    %4394 = vmatprep.subr.bf16.mxu0 0
    %4395 = vmatpush1.bf16.msra.mxu0 %v4314
    %4396 = vmatprep.subr.bf16.mxu0 0
    %4397 = vmatpush1.bf16.msra.mxu0 0
    %4398 = vmatprep.subr.bf16.mxu0 0
    %4399 = vmatpush1.bf16.msra.mxu0 0
    %4400 = vmatprep.subr.bf16.mxu0 0
    %4401 = vmatpush1.bf16.msra.mxu0 0
    %4402 = vmatprep.subr.bf16.mxu0 0
    %4403 = vmatpush1.bf16.msra.mxu0 0
    %4404 = vmatprep.subr.bf16.mxu0 0
    %4405 = vmatpush1.bf16.msra.mxu0 0
    %4406 = vmatprep.subr.bf16.mxu0 0
    %4407 = vmatpush1.bf16.msra.mxu0 0
    %4408 = vmatprep.subr.bf16.mxu0 0
    %4409 = vmatpush1.bf16.msra.mxu0 0
    %4410 = vmatprep.subr.bf16.mxu0 0
    %4411 = vmatpush1.bf16.msra.mxu0 0
    %4412 = vmatprep.mubr.bf16.mxu0 0
    %4413 = vmatmul.mubr.bf16.gmra.mrb[0].mxu0 %v4161
    %v4414 = vpop.f32.mrb[0].mxu0
    %v4415 = vadd.f32 %v4207, %v4414
    %v4416 = vpop.f32.mrb[0].mxu0
    %v4417 = vpop.f32.mrb[0].mxu0
    %v4418 = vpop.f32.mrb[0].mxu0
    %4419 = vdwg.mxu0
    %v4420 = vpack.c.bf16 %v3874, %v3874
    %v4421 = vld [vmem:[#allocation12] sm:$0xff]
    %v4422 = vld [vmem:[#allocation12 + $0x8] sm:$0xf]
    %v4423 = vld [vmem:[#allocation12 + $0xc] sm:$0xff]
    %v4424 = vld [vmem:[#allocation12 + $0x14] sm:$0xf]
    %v4425 = vld [vmem:[#allocation12 + $0x18] sm:$0xff]
    %v4426 = vld [vmem:[#allocation12 + $0x20] sm:$0xf]
    %v4427 = vld [vmem:[#allocation12 + $0x24] sm:$0xff]
    %v4428 = vld [vmem:[#allocation12 + $0x2c] sm:$0xf]
    %v4429 = vld [vmem:[#allocation12 + $0x30] sm:$0xff]
    %v4430 = vld [vmem:[#allocation12 + $0x38] sm:$0xf]
    %v4431 = vld [vmem:[#allocation12 + $0x3c] sm:$0xff]
    %v4432 = vld [vmem:[#allocation12 + $0x44] sm:$0xf]
    %v4433 = vld [vmem:[#allocation12 + $0x48] sm:$0xff]
    %v4434 = vld [vmem:[#allocation12 + $0x50] sm:$0xf]
    %v4435 = vld [vmem:[#allocation12 + $0x54] sm:$0xff]
    %v4436 = vld [vmem:[#allocation12 + $0x5c] sm:$0xf]
    %v4437 = vld [vmem:[#allocation12 + $0x60] sm:$0xff]
    %v4438 = vld [vmem:[#allocation12 + $0x68] sm:$0xf]
    %v4439 = vld [vmem:[#allocation12 + $0x6c] sm:$0xff]
    %v4440 = vld [vmem:[#allocation12 + $0x74] sm:$0xf]
    %v4441 = vld [vmem:[#allocation12 + $0x78] sm:$0xff]
    %v4442 = vld [vmem:[#allocation12 + $0x80] sm:$0xf]
    %v4443 = vld [vmem:[#allocation12 + $0x84] sm:$0xff]
    %v4444 = vld [vmem:[#allocation12 + $0x8c] sm:$0xf]
    %v4445 = vld [vmem:[#allocation12 + $0x90] sm:$0xff]
    %v4446 = vld [vmem:[#allocation12 + $0x98] sm:$0xf]
    %v4447 = vld [vmem:[#allocation12 + $0x9c] sm:$0xff]
    %v4448 = vld [vmem:[#allocation12 + $0xa4] sm:$0xf]
    %v4449 = vld [vmem:[#allocation12 + $0xa8] sm:$0xff]
    %v4450 = vld [vmem:[#allocation12 + $0xb0] sm:$0xf]
    %v4451 = vld [vmem:[#allocation12 + $0xb4] sm:$0xff]
    %v4452 = vld [vmem:[#allocation12 + $0xbc] sm:$0xf]
    %v4453 = vld [vmem:[%s12] sm:$0x7]
    %v4455 = vlaneseq
    %v4456 = vshrl.u32 %v4455, 7
    %v4457 = vsub.s32 0, %v4456
    %v4458 = vrot.slane %v4453, %v4457
    %v4459 = vlaneseq
    %v4460 = vshrl.u32 %v4459, 7
    %v4461 = vsub.s32 1, %v4460
    %v4462 = vrot.slane %v4453, %v4461
    %v4463 = vlaneseq
    %v4464 = vshrl.u32 %v4463, 7
    %v4465 = vsub.s32 2, %v4464
    %v4466 = vrot.slane %v4453, %v4465
    %v4502 = vunpack.c.l.b16 %v4421
    %v4503 = vunpack.c.h.b16 %v4421
    %v4504 = vunpack.c.l.b16 %v4422
    %v4505 = vunpack.c.l.b16 %v4423
    %v4506 = vunpack.c.h.b16 %v4423
    %v4507 = vunpack.c.l.b16 %v4424
    %v4508 = vunpack.c.l.b16 %v4425
    %v4509 = vunpack.c.h.b16 %v4425
    %v4510 = vunpack.c.l.b16 %v4426
    %v4511 = vunpack.c.l.b16 %v4427
    %v4512 = vunpack.c.h.b16 %v4427
    %v4513 = vunpack.c.l.b16 %v4428
    %v4514 = vunpack.c.l.b16 %v4429
    %v4515 = vunpack.c.h.b16 %v4429
    %v4516 = vunpack.c.l.b16 %v4430
    %v4517 = vunpack.c.l.b16 %v4431
    %v4518 = vunpack.c.h.b16 %v4431
    %v4519 = vunpack.c.l.b16 %v4432
    %v4520 = vunpack.c.l.b16 %v4433
    %v4521 = vunpack.c.h.b16 %v4433
    %v4522 = vunpack.c.l.b16 %v4434
    %v4523 = vunpack.c.l.b16 %v4435
    %v4524 = vunpack.c.h.b16 %v4435
    %v4525 = vunpack.c.l.b16 %v4436
    %v4526 = vunpack.c.l.b16 %v4437
    %v4527 = vunpack.c.h.b16 %v4437
    %v4528 = vunpack.c.l.b16 %v4438
    %v4529 = vunpack.c.l.b16 %v4439
    %v4530 = vunpack.c.h.b16 %v4439
    %v4531 = vunpack.c.l.b16 %v4440
    %v4532 = vunpack.c.l.b16 %v4441
    %v4533 = vunpack.c.h.b16 %v4441
    %v4534 = vunpack.c.l.b16 %v4442
    %v4535 = vunpack.c.l.b16 %v4443
    %v4536 = vunpack.c.h.b16 %v4443
    %v4537 = vunpack.c.l.b16 %v4444
    %v4538 = vunpack.c.l.b16 %v4445
    %v4539 = vunpack.c.h.b16 %v4445
    %v4540 = vunpack.c.l.b16 %v4446
    %v4541 = vunpack.c.l.b16 %v4447
    %v4542 = vunpack.c.h.b16 %v4447
    %v4543 = vunpack.c.l.b16 %v4448
    %v4544 = vunpack.c.l.b16 %v4449
    %v4545 = vunpack.c.h.b16 %v4449
    %v4546 = vunpack.c.l.b16 %v4450
    %v4547 = vunpack.c.l.b16 %v4451
    %v4548 = vunpack.c.h.b16 %v4451
    %v4549 = vunpack.c.l.b16 %v4452
    %v4550 = vpack.c.b16 %v4505, %v4502
    %v4551 = vpack.c.b16 %v4506, %v4503
    %v4552 = vpack.c.b16 %v4507, %v4504
    %v4553 = vpack.c.b16 %v4511, %v4508
    %v4554 = vpack.c.b16 %v4512, %v4509
    %v4555 = vpack.c.b16 %v4513, %v4510
    %v4556 = vpack.c.b16 %v4517, %v4514
    %v4557 = vpack.c.b16 %v4518, %v4515
    %v4558 = vpack.c.b16 %v4519, %v4516
    %v4559 = vpack.c.b16 %v4523, %v4520
    %v4560 = vpack.c.b16 %v4524, %v4521
    %v4561 = vpack.c.b16 %v4525, %v4522
    %v4562 = vpack.c.b16 %v4529, %v4526
    %v4563 = vpack.c.b16 %v4530, %v4527
    %v4564 = vpack.c.b16 %v4531, %v4528
    %v4565 = vpack.c.b16 %v4535, %v4532
    %v4566 = vpack.c.b16 %v4536, %v4533
    %v4567 = vpack.c.b16 %v4537, %v4534
    %v4568 = vpack.c.b16 %v4541, %v4538
    %v4569 = vpack.c.b16 %v4542, %v4539
    %v4570 = vpack.c.b16 %v4543, %v4540
    %v4571 = vpack.c.b16 %v4547, %v4544
    %v4572 = vpack.c.b16 %v4548, %v4545
    %v4573 = vpack.c.b16 %v4549, %v4546
    %4598 = vmatprep.subr.bf16.mxu0 %v4551
    %4599 = vmatpush1.bf16.msra.mxu0 %v4550
    %4600 = vmatprep.subr.bf16.mxu0 %v4554
    %4601 = vmatpush1.bf16.msra.mxu0 %v4553
    %4602 = vmatprep.subr.bf16.mxu0 %v4557
    %4603 = vmatpush1.bf16.msra.mxu0 %v4556
    %4604 = vmatprep.subr.bf16.mxu0 %v4560
    %4605 = vmatpush1.bf16.msra.mxu0 %v4559
    %4606 = vmatprep.subr.bf16.mxu0 %v4563
    %4607 = vmatpush1.bf16.msra.mxu0 %v4562
    %4608 = vmatprep.subr.bf16.mxu0 %v4566
    %4609 = vmatpush1.bf16.msra.mxu0 %v4565
    %4610 = vmatprep.subr.bf16.mxu0 %v4569
    %4611 = vmatpush1.bf16.msra.mxu0 %v4568
    %4612 = vmatprep.subr.bf16.mxu0 %v4572
    %4613 = vmatpush1.bf16.msra.mxu0 %v4571
    %4614 = vmatprep.subr.bf16.mxu0 0
    %4615 = vmatpush1.bf16.msra.mxu0 0
    %4616 = vmatprep.subr.bf16.mxu0 0
    %4617 = vmatpush1.bf16.msra.mxu0 0
    %4618 = vmatprep.subr.bf16.mxu0 0
    %4619 = vmatpush1.bf16.msra.mxu0 0
    %4620 = vmatprep.subr.bf16.mxu0 0
    %4621 = vmatpush1.bf16.msra.mxu0 0
    %4622 = vmatprep.subr.bf16.mxu0 0
    %4623 = vmatpush1.bf16.msra.mxu0 0
    %4624 = vmatprep.subr.bf16.mxu0 0
    %4625 = vmatpush1.bf16.msra.mxu0 0
    %4626 = vmatprep.subr.bf16.mxu0 0
    %4627 = vmatpush1.bf16.msra.mxu0 0
    %4628 = vmatprep.subr.bf16.mxu0 0
    %4629 = vmatpush1.bf16.msra.mxu0 0
    %4630 = vmatprep.mubr.bf16.mxu0 0
    %4631 = vmatmul.mubr.bf16.gmra.mrb[0].mxu0 %v4420
    %v4632 = vpop.f32.mrb[0].mxu0
    %v4633 = vadd.f32 %v4458, %v4632
    %v4634 = vpop.f32.mrb[0].mxu0
    %v4635 = vadd.f32 %v4462, %v4634
    %v4636 = vpop.f32.mrb[0].mxu0
    %v4637 = vpop.f32.mrb[0].mxu0
    %4638 = vdwg.mxu0
    %4639 = vmatprep.subr.bf16.mxu0 0
    %4640 = vmatpush1.bf16.msra.mxu0 %v4552
    %4641 = vmatprep.subr.bf16.mxu0 0
    %4642 = vmatpush1.bf16.msra.mxu0 %v4555
    %4643 = vmatprep.subr.bf16.mxu0 0
    %4644 = vmatpush1.bf16.msra.mxu0 %v4558
    %4645 = vmatprep.subr.bf16.mxu0 0
    %4646 = vmatpush1.bf16.msra.mxu0 %v4561
    %4647 = vmatprep.subr.bf16.mxu0 0
    %4648 = vmatpush1.bf16.msra.mxu0 %v4564
    %4649 = vmatprep.subr.bf16.mxu0 0
    %4650 = vmatpush1.bf16.msra.mxu0 %v4567
    %4651 = vmatprep.subr.bf16.mxu0 0
    %4652 = vmatpush1.bf16.msra.mxu0 %v4570
    %4653 = vmatprep.subr.bf16.mxu0 0
    %4654 = vmatpush1.bf16.msra.mxu0 %v4573
    %4655 = vmatprep.subr.bf16.mxu0 0
    %4656 = vmatpush1.bf16.msra.mxu0 0
    %4657 = vmatprep.subr.bf16.mxu0 0
    %4658 = vmatpush1.bf16.msra.mxu0 0
    %4659 = vmatprep.subr.bf16.mxu0 0
    %4660 = vmatpush1.bf16.msra.mxu0 0
    %4661 = vmatprep.subr.bf16.mxu0 0
    %4662 = vmatpush1.bf16.msra.mxu0 0
    %4663 = vmatprep.subr.bf16.mxu0 0
    %4664 = vmatpush1.bf16.msra.mxu0 0
    %4665 = vmatprep.subr.bf16.mxu0 0
    %4666 = vmatpush1.bf16.msra.mxu0 0
    %4667 = vmatprep.subr.bf16.mxu0 0
    %4668 = vmatpush1.bf16.msra.mxu0 0
    %4669 = vmatprep.subr.bf16.mxu0 0
    %4670 = vmatpush1.bf16.msra.mxu0 0
    %4671 = vmatprep.mubr.bf16.mxu0 0
    %4672 = vmatmul.mubr.bf16.gmra.mrb[0].mxu0 %v4420
    %v4673 = vpop.f32.mrb[0].mxu0
    %v4674 = vadd.f32 %v4466, %v4673
    %v4675 = vpop.f32.mrb[0].mxu0
    %v4676 = vpop.f32.mrb[0].mxu0
    %v4677 = vpop.f32.mrb[0].mxu0
    %4678 = vdwg.mxu0
    %v4679 = vadd.f32 %v4374, %v4633
    %v4680 = vxor.u32 %v4679, 2147483648
    %v4681 = vmul.f32 %v4680, 1.442695
    %v4682 = vpow.pop %v4681
    %v4683 = vadd.f32 %v4682, 1.0
    %v4684 = vrcp.pop %v4683
    %v4685 = vmul.f32 1.0, %v4684
    %v4686 = vadd.f32 %v4376, %v4635
    %v4687 = vxor.u32 %v4686, 2147483648
    %v4688 = vmul.f32 %v4687, 1.442695
    %v4689 = vpow.pop %v4688
    %v4690 = vadd.f32 %v4689, 1.0
    %v4691 = vrcp.pop %v4690
    %v4692 = vmul.f32 1.0, %v4691
    %v4693 = vmul.f32 %v4685, %v4674
    %v4694 = vadd.f32 %v4415, %v4693
    %v4695 = vtanh.pop %v4694
    %v4696 = vsub.f32 1.0, %v4692
    %v4697 = vmul.f32 %v4696, %v4695
    %v4698 = vmul.f32 %v4692, %v3874
    %v4699 = vadd.f32 %v4697, %v4698
    %4700 = vst [vmem:[#allocation3 + $0x20] sm:$0xff] %v4699
    %v4701 = vld [vmem:[#allocation2 + $0x78] sm:$0xff]
    %v4702 = vld [vmem:[#allocation2 + $0x80] sm:$0xff]
    %v4703 = vld [vmem:[#allocation2 + $0x88] sm:$0xff]
    %v4704 = vadd.f32 %v4701, %v293
    %v4705 = vadd.f32 %v4702, %v295
    %v4706 = vadd.f32 %v4703, %v334
    %v4707 = vld [vmem:[#allocation9] sm:$0xff]
    %v4708 = vld [vmem:[#allocation9 + $0x8] sm:$0xf]
    %v4709 = vld [vmem:[#allocation9 + $0xc] sm:$0xff]
    %v4710 = vld [vmem:[#allocation9 + $0x14] sm:$0xf]
    %v4711 = vld [vmem:[#allocation9 + $0x18] sm:$0xff]
    %v4712 = vld [vmem:[#allocation9 + $0x20] sm:$0xf]
    %v4713 = vld [vmem:[#allocation9 + $0x24] sm:$0xff]
    %v4714 = vld [vmem:[#allocation9 + $0x2c] sm:$0xf]
    %v4715 = vld [vmem:[#allocation9 + $0x30] sm:$0xff]
    %v4716 = vld [vmem:[#allocation9 + $0x38] sm:$0xf]
    %v4717 = vld [vmem:[#allocation9 + $0x3c] sm:$0xff]
    %v4718 = vld [vmem:[#allocation9 + $0x44] sm:$0xf]
    %v4719 = vld [vmem:[#allocation9 + $0x48] sm:$0xff]
    %v4720 = vld [vmem:[#allocation9 + $0x50] sm:$0xf]
    %v4721 = vld [vmem:[#allocation9 + $0x54] sm:$0xff]
    %v4722 = vld [vmem:[#allocation9 + $0x5c] sm:$0xf]
    %v4723 = vld [vmem:[#allocation9 + $0x60] sm:$0xff]
    %v4724 = vld [vmem:[#allocation9 + $0x68] sm:$0xf]
    %v4725 = vld [vmem:[#allocation9 + $0x6c] sm:$0xff]
    %v4726 = vld [vmem:[#allocation9 + $0x74] sm:$0xf]
    %v4727 = vld [vmem:[#allocation9 + $0x78] sm:$0xff]
    %v4728 = vld [vmem:[#allocation9 + $0x80] sm:$0xf]
    %v4729 = vld [vmem:[#allocation9 + $0x84] sm:$0xff]
    %v4730 = vld [vmem:[#allocation9 + $0x8c] sm:$0xf]
    %v4731 = vld [vmem:[#allocation9 + $0x90] sm:$0xff]
    %v4732 = vld [vmem:[#allocation9 + $0x98] sm:$0xf]
    %v4733 = vld [vmem:[#allocation9 + $0x9c] sm:$0xff]
    %v4734 = vld [vmem:[#allocation9 + $0xa4] sm:$0xf]
    %v4735 = vld [vmem:[#allocation9 + $0xa8] sm:$0xff]
    %v4736 = vld [vmem:[#allocation9 + $0xb0] sm:$0xf]
    %v4737 = vld [vmem:[#allocation9 + $0xb4] sm:$0xff]
    %v4738 = vld [vmem:[#allocation9 + $0xbc] sm:$0xf]
    %v4739 = vld [vmem:[%s8] sm:$0x7]
    %v4741 = vlaneseq
    %v4742 = vshrl.u32 %v4741, 7
    %v4743 = vsub.s32 0, %v4742
    %v4744 = vrot.slane %v4739, %v4743
    %v4745 = vlaneseq
    %v4746 = vshrl.u32 %v4745, 7
    %v4747 = vsub.s32 1, %v4746
    %v4748 = vrot.slane %v4739, %v4747
    %v4749 = vlaneseq
    %v4750 = vshrl.u32 %v4749, 7
    %v4751 = vsub.s32 2, %v4750
    %v4752 = vrot.slane %v4739, %v4751
    %v4788 = vunpack.c.l.b16 %v4707
    %v4789 = vunpack.c.h.b16 %v4707
    %v4790 = vunpack.c.l.b16 %v4708
    %v4791 = vunpack.c.l.b16 %v4709
    %v4792 = vunpack.c.h.b16 %v4709
    %v4793 = vunpack.c.l.b16 %v4710
    %v4794 = vunpack.c.l.b16 %v4711
    %v4795 = vunpack.c.h.b16 %v4711
    %v4796 = vunpack.c.l.b16 %v4712
    %v4797 = vunpack.c.l.b16 %v4713
    %v4798 = vunpack.c.h.b16 %v4713
    %v4799 = vunpack.c.l.b16 %v4714
    %v4800 = vunpack.c.l.b16 %v4715
    %v4801 = vunpack.c.h.b16 %v4715
    %v4802 = vunpack.c.l.b16 %v4716
    %v4803 = vunpack.c.l.b16 %v4717
    %v4804 = vunpack.c.h.b16 %v4717
    %v4805 = vunpack.c.l.b16 %v4718
    %v4806 = vunpack.c.l.b16 %v4719
    %v4807 = vunpack.c.h.b16 %v4719
    %v4808 = vunpack.c.l.b16 %v4720
    %v4809 = vunpack.c.l.b16 %v4721
    %v4810 = vunpack.c.h.b16 %v4721
    %v4811 = vunpack.c.l.b16 %v4722
    %v4812 = vunpack.c.l.b16 %v4723
    %v4813 = vunpack.c.h.b16 %v4723
    %v4814 = vunpack.c.l.b16 %v4724
    %v4815 = vunpack.c.l.b16 %v4725
    %v4816 = vunpack.c.h.b16 %v4725
    %v4817 = vunpack.c.l.b16 %v4726
    %v4818 = vunpack.c.l.b16 %v4727
    %v4819 = vunpack.c.h.b16 %v4727
    %v4820 = vunpack.c.l.b16 %v4728
    %v4821 = vunpack.c.l.b16 %v4729
    %v4822 = vunpack.c.h.b16 %v4729
    %v4823 = vunpack.c.l.b16 %v4730
    %v4824 = vunpack.c.l.b16 %v4731
    %v4825 = vunpack.c.h.b16 %v4731
    %v4826 = vunpack.c.l.b16 %v4732
    %v4827 = vunpack.c.l.b16 %v4733
    %v4828 = vunpack.c.h.b16 %v4733
    %v4829 = vunpack.c.l.b16 %v4734
    %v4830 = vunpack.c.l.b16 %v4735
    %v4831 = vunpack.c.h.b16 %v4735
    %v4832 = vunpack.c.l.b16 %v4736
    %v4833 = vunpack.c.l.b16 %v4737
    %v4834 = vunpack.c.h.b16 %v4737
    %v4835 = vunpack.c.l.b16 %v4738
    %v4836 = vpack.c.b16 %v4791, %v4788
    %v4837 = vpack.c.b16 %v4792, %v4789
    %v4838 = vpack.c.b16 %v4793, %v4790
    %v4839 = vpack.c.b16 %v4797, %v4794
    %v4840 = vpack.c.b16 %v4798, %v4795
    %v4841 = vpack.c.b16 %v4799, %v4796
    %v4842 = vpack.c.b16 %v4803, %v4800
    %v4843 = vpack.c.b16 %v4804, %v4801
    %v4844 = vpack.c.b16 %v4805, %v4802
    %v4845 = vpack.c.b16 %v4809, %v4806
    %v4846 = vpack.c.b16 %v4810, %v4807
    %v4847 = vpack.c.b16 %v4811, %v4808
    %v4848 = vpack.c.b16 %v4815, %v4812
    %v4849 = vpack.c.b16 %v4816, %v4813
    %v4850 = vpack.c.b16 %v4817, %v4814
    %v4851 = vpack.c.b16 %v4821, %v4818
    %v4852 = vpack.c.b16 %v4822, %v4819
    %v4853 = vpack.c.b16 %v4823, %v4820
    %v4854 = vpack.c.b16 %v4827, %v4824
    %v4855 = vpack.c.b16 %v4828, %v4825
    %v4856 = vpack.c.b16 %v4829, %v4826
    %v4857 = vpack.c.b16 %v4833, %v4830
    %v4858 = vpack.c.b16 %v4834, %v4831
    %v4859 = vpack.c.b16 %v4835, %v4832
    %4884 = vmatprep.subr.bf16.mxu0 %v4837
    %4885 = vmatpush1.bf16.msra.mxu0 %v4836
    %4886 = vmatprep.subr.bf16.mxu0 %v4840
    %4887 = vmatpush1.bf16.msra.mxu0 %v4839
    %4888 = vmatprep.subr.bf16.mxu0 %v4843
    %4889 = vmatpush1.bf16.msra.mxu0 %v4842
    %4890 = vmatprep.subr.bf16.mxu0 %v4846
    %4891 = vmatpush1.bf16.msra.mxu0 %v4845
    %4892 = vmatprep.subr.bf16.mxu0 %v4849
    %4893 = vmatpush1.bf16.msra.mxu0 %v4848
    %4894 = vmatprep.subr.bf16.mxu0 %v4852
    %4895 = vmatpush1.bf16.msra.mxu0 %v4851
    %4896 = vmatprep.subr.bf16.mxu0 %v4855
    %4897 = vmatpush1.bf16.msra.mxu0 %v4854
    %4898 = vmatprep.subr.bf16.mxu0 %v4858
    %4899 = vmatpush1.bf16.msra.mxu0 %v4857
    %4900 = vmatprep.subr.bf16.mxu0 0
    %4901 = vmatpush1.bf16.msra.mxu0 0
    %4902 = vmatprep.subr.bf16.mxu0 0
    %4903 = vmatpush1.bf16.msra.mxu0 0
    %4904 = vmatprep.subr.bf16.mxu0 0
    %4905 = vmatpush1.bf16.msra.mxu0 0
    %4906 = vmatprep.subr.bf16.mxu0 0
    %4907 = vmatpush1.bf16.msra.mxu0 0
    %4908 = vmatprep.subr.bf16.mxu0 0
    %4909 = vmatpush1.bf16.msra.mxu0 0
    %4910 = vmatprep.subr.bf16.mxu0 0
    %4911 = vmatpush1.bf16.msra.mxu0 0
    %4912 = vmatprep.subr.bf16.mxu0 0
    %4913 = vmatpush1.bf16.msra.mxu0 0
    %4914 = vmatprep.subr.bf16.mxu0 0
    %4915 = vmatpush1.bf16.msra.mxu0 0
    %4916 = vmatprep.mubr.bf16.mxu0 0
    %4917 = vmatmul.mubr.bf16.gmra.mrb[0].mxu0 %v4161
    %v4918 = vpop.f32.mrb[0].mxu0
    %v4919 = vadd.f32 %v4744, %v4918
    %v4920 = vpop.f32.mrb[0].mxu0
    %v4921 = vadd.f32 %v4748, %v4920
    %v4922 = vpop.f32.mrb[0].mxu0
    %v4923 = vpop.f32.mrb[0].mxu0
    %4924 = vdwg.mxu0
    %4925 = vmatprep.subr.bf16.mxu0 0
    %4926 = vmatpush1.bf16.msra.mxu0 %v4838
    %4927 = vmatprep.subr.bf16.mxu0 0
    %4928 = vmatpush1.bf16.msra.mxu0 %v4841
    %4929 = vmatprep.subr.bf16.mxu0 0
    %4930 = vmatpush1.bf16.msra.mxu0 %v4844
    %4931 = vmatprep.subr.bf16.mxu0 0
    %4932 = vmatpush1.bf16.msra.mxu0 %v4847
    %4933 = vmatprep.subr.bf16.mxu0 0
    %4934 = vmatpush1.bf16.msra.mxu0 %v4850
    %4935 = vmatprep.subr.bf16.mxu0 0
    %4936 = vmatpush1.bf16.msra.mxu0 %v4853
    %4937 = vmatprep.subr.bf16.mxu0 0
    %4938 = vmatpush1.bf16.msra.mxu0 %v4856
    %4939 = vmatprep.subr.bf16.mxu0 0
    %4940 = vmatpush1.bf16.msra.mxu0 %v4859
    %4941 = vmatprep.subr.bf16.mxu0 0
    %4942 = vmatpush1.bf16.msra.mxu0 0
    %4943 = vmatprep.subr.bf16.mxu0 0
    %4944 = vmatpush1.bf16.msra.mxu0 0
    %4945 = vmatprep.subr.bf16.mxu0 0
    %4946 = vmatpush1.bf16.msra.mxu0 0
    %4947 = vmatprep.subr.bf16.mxu0 0
    %4948 = vmatpush1.bf16.msra.mxu0 0
    %4949 = vmatprep.subr.bf16.mxu0 0
    %4950 = vmatpush1.bf16.msra.mxu0 0
    %4951 = vmatprep.subr.bf16.mxu0 0
    %4952 = vmatpush1.bf16.msra.mxu0 0
    %4953 = vmatprep.subr.bf16.mxu0 0
    %4954 = vmatpush1.bf16.msra.mxu0 0
    %4955 = vmatprep.subr.bf16.mxu0 0
    %4956 = vmatpush1.bf16.msra.mxu0 0
    %4957 = vmatprep.mubr.bf16.mxu0 0
    %4958 = vmatmul.mubr.bf16.gmra.mrb[0].mxu0 %v4161
    %v4959 = vpop.f32.mrb[0].mxu0
    %v4960 = vadd.f32 %v4752, %v4959
    %v4961 = vpop.f32.mrb[0].mxu0
    %v4962 = vpop.f32.mrb[0].mxu0
    %v4963 = vpop.f32.mrb[0].mxu0
    %4964 = vdwg.mxu0
    %v4965 = vadd.f32 %v4704, %v4919
    %v4966 = vxor.u32 %v4965, 2147483648
    %v4967 = vmul.f32 %v4966, 1.442695
    %v4968 = vpow.pop %v4967
    %v4969 = vadd.f32 %v4968, 1.0
    %v4970 = vrcp.pop %v4969
    %v4971 = vmul.f32 1.0, %v4970
    %v4972 = vadd.f32 %v4705, %v4921
    %v4973 = vxor.u32 %v4972, 2147483648
    %v4974 = vmul.f32 %v4973, 1.442695
    %v4975 = vpow.pop %v4974
    %v4976 = vadd.f32 %v4975, 1.0
    %v4977 = vrcp.pop %v4976
    %v4978 = vmul.f32 1.0, %v4977
    %v4979 = vmul.f32 %v4971, %v4960
    %v4980 = vadd.f32 %v4706, %v4979
    %v4981 = vtanh.pop %v4980
    %v4982 = vsub.f32 1.0, %v4978
    %v4983 = vmul.f32 %v4982, %v4981
    %v4984 = vmul.f32 %v4978, %v4160
    %v4985 = vadd.f32 %v4983, %v4984
    %v4986 = vpack.c.bf16 %v4985, %v4985
    %v4987 = vld [vmem:[#allocation11] sm:$0xff]
    %v4988 = vld [vmem:[#allocation11 + $0x8] sm:$0xf]
    %v4989 = vld [vmem:[#allocation11 + $0xc] sm:$0xff]
    %v4990 = vld [vmem:[#allocation11 + $0x14] sm:$0xf]
    %v4991 = vld [vmem:[#allocation11 + $0x18] sm:$0xff]
    %v4992 = vld [vmem:[#allocation11 + $0x20] sm:$0xf]
    %v4993 = vld [vmem:[#allocation11 + $0x24] sm:$0xff]
    %v4994 = vld [vmem:[#allocation11 + $0x2c] sm:$0xf]
    %v4995 = vld [vmem:[#allocation11 + $0x30] sm:$0xff]
    %v4996 = vld [vmem:[#allocation11 + $0x38] sm:$0xf]
    %v4997 = vld [vmem:[#allocation11 + $0x3c] sm:$0xff]
    %v4998 = vld [vmem:[#allocation11 + $0x44] sm:$0xf]
    %v4999 = vld [vmem:[#allocation11 + $0x48] sm:$0xff]
    %v5000 = vld [vmem:[#allocation11 + $0x50] sm:$0xf]
    %v5001 = vld [vmem:[#allocation11 + $0x54] sm:$0xff]
    %v5002 = vld [vmem:[#allocation11 + $0x5c] sm:$0xf]
    %v5003 = vld [vmem:[#allocation11 + $0x60] sm:$0xff]
    %v5004 = vld [vmem:[#allocation11 + $0x68] sm:$0xf]
    %v5005 = vld [vmem:[#allocation11 + $0x6c] sm:$0xff]
    %v5006 = vld [vmem:[#allocation11 + $0x74] sm:$0xf]
    %v5007 = vld [vmem:[#allocation11 + $0x78] sm:$0xff]
    %v5008 = vld [vmem:[#allocation11 + $0x80] sm:$0xf]
    %v5009 = vld [vmem:[#allocation11 + $0x84] sm:$0xff]
    %v5010 = vld [vmem:[#allocation11 + $0x8c] sm:$0xf]
    %v5011 = vld [vmem:[#allocation11 + $0x90] sm:$0xff]
    %v5012 = vld [vmem:[#allocation11 + $0x98] sm:$0xf]
    %v5013 = vld [vmem:[#allocation11 + $0x9c] sm:$0xff]
    %v5014 = vld [vmem:[#allocation11 + $0xa4] sm:$0xf]
    %v5015 = vld [vmem:[#allocation11 + $0xa8] sm:$0xff]
    %v5016 = vld [vmem:[#allocation11 + $0xb0] sm:$0xf]
    %v5017 = vld [vmem:[#allocation11 + $0xb4] sm:$0xff]
    %v5018 = vld [vmem:[#allocation11 + $0xbc] sm:$0xf]
    %v5019 = vld [vmem:[%s10] sm:$0x7]
    %v5021 = vlaneseq
    %v5022 = vshrl.u32 %v5021, 7
    %v5023 = vsub.s32 0, %v5022
    %v5024 = vrot.slane %v5019, %v5023
    %v5025 = vlaneseq
    %v5026 = vshrl.u32 %v5025, 7
    %v5027 = vsub.s32 1, %v5026
    %v5028 = vrot.slane %v5019, %v5027
    %v5029 = vlaneseq
    %v5030 = vshrl.u32 %v5029, 7
    %v5031 = vsub.s32 2, %v5030
    %v5032 = vrot.slane %v5019, %v5031
    %v5068 = vunpack.c.l.b16 %v4987
    %v5069 = vunpack.c.h.b16 %v4987
    %v5070 = vunpack.c.l.b16 %v4988
    %v5071 = vunpack.c.l.b16 %v4989
    %v5072 = vunpack.c.h.b16 %v4989
    %v5073 = vunpack.c.l.b16 %v4990
    %v5074 = vunpack.c.l.b16 %v4991
    %v5075 = vunpack.c.h.b16 %v4991
    %v5076 = vunpack.c.l.b16 %v4992
    %v5077 = vunpack.c.l.b16 %v4993
    %v5078 = vunpack.c.h.b16 %v4993
    %v5079 = vunpack.c.l.b16 %v4994
    %v5080 = vunpack.c.l.b16 %v4995
    %v5081 = vunpack.c.h.b16 %v4995
    %v5082 = vunpack.c.l.b16 %v4996
    %v5083 = vunpack.c.l.b16 %v4997
    %v5084 = vunpack.c.h.b16 %v4997
    %v5085 = vunpack.c.l.b16 %v4998
    %v5086 = vunpack.c.l.b16 %v4999
    %v5087 = vunpack.c.h.b16 %v4999
    %v5088 = vunpack.c.l.b16 %v5000
    %v5089 = vunpack.c.l.b16 %v5001
    %v5090 = vunpack.c.h.b16 %v5001
    %v5091 = vunpack.c.l.b16 %v5002
    %v5092 = vunpack.c.l.b16 %v5003
    %v5093 = vunpack.c.h.b16 %v5003
    %v5094 = vunpack.c.l.b16 %v5004
    %v5095 = vunpack.c.l.b16 %v5005
    %v5096 = vunpack.c.h.b16 %v5005
    %v5097 = vunpack.c.l.b16 %v5006
    %v5098 = vunpack.c.l.b16 %v5007
    %v5099 = vunpack.c.h.b16 %v5007
    %v5100 = vunpack.c.l.b16 %v5008
    %v5101 = vunpack.c.l.b16 %v5009
    %v5102 = vunpack.c.h.b16 %v5009
    %v5103 = vunpack.c.l.b16 %v5010
    %v5104 = vunpack.c.l.b16 %v5011
    %v5105 = vunpack.c.h.b16 %v5011
    %v5106 = vunpack.c.l.b16 %v5012
    %v5107 = vunpack.c.l.b16 %v5013
    %v5108 = vunpack.c.h.b16 %v5013
    %v5109 = vunpack.c.l.b16 %v5014
    %v5110 = vunpack.c.l.b16 %v5015
    %v5111 = vunpack.c.h.b16 %v5015
    %v5112 = vunpack.c.l.b16 %v5016
    %v5113 = vunpack.c.l.b16 %v5017
    %v5114 = vunpack.c.h.b16 %v5017
    %v5115 = vunpack.c.l.b16 %v5018
    %v5116 = vpack.c.b16 %v5071, %v5068
    %v5117 = vpack.c.b16 %v5072, %v5069
    %v5118 = vpack.c.b16 %v5073, %v5070
    %v5119 = vpack.c.b16 %v5077, %v5074
    %v5120 = vpack.c.b16 %v5078, %v5075
    %v5121 = vpack.c.b16 %v5079, %v5076
    %v5122 = vpack.c.b16 %v5083, %v5080
    %v5123 = vpack.c.b16 %v5084, %v5081
    %v5124 = vpack.c.b16 %v5085, %v5082
    %v5125 = vpack.c.b16 %v5089, %v5086
    %v5126 = vpack.c.b16 %v5090, %v5087
    %v5127 = vpack.c.b16 %v5091, %v5088
    %v5128 = vpack.c.b16 %v5095, %v5092
    %v5129 = vpack.c.b16 %v5096, %v5093
    %v5130 = vpack.c.b16 %v5097, %v5094
    %v5131 = vpack.c.b16 %v5101, %v5098
    %v5132 = vpack.c.b16 %v5102, %v5099
    %v5133 = vpack.c.b16 %v5103, %v5100
    %v5134 = vpack.c.b16 %v5107, %v5104
    %v5135 = vpack.c.b16 %v5108, %v5105
    %v5136 = vpack.c.b16 %v5109, %v5106
    %v5137 = vpack.c.b16 %v5113, %v5110
    %v5138 = vpack.c.b16 %v5114, %v5111
    %v5139 = vpack.c.b16 %v5115, %v5112
    %5164 = vmatprep.subr.bf16.mxu0 %v5117
    %5165 = vmatpush1.bf16.msra.mxu0 %v5116
    %5166 = vmatprep.subr.bf16.mxu0 %v5120
    %5167 = vmatpush1.bf16.msra.mxu0 %v5119
    %5168 = vmatprep.subr.bf16.mxu0 %v5123
    %5169 = vmatpush1.bf16.msra.mxu0 %v5122
    %5170 = vmatprep.subr.bf16.mxu0 %v5126
    %5171 = vmatpush1.bf16.msra.mxu0 %v5125
    %5172 = vmatprep.subr.bf16.mxu0 %v5129
    %5173 = vmatpush1.bf16.msra.mxu0 %v5128
    %5174 = vmatprep.subr.bf16.mxu0 %v5132
    %5175 = vmatpush1.bf16.msra.mxu0 %v5131
    %5176 = vmatprep.subr.bf16.mxu0 %v5135
    %5177 = vmatpush1.bf16.msra.mxu0 %v5134
    %5178 = vmatprep.subr.bf16.mxu0 %v5138
    %5179 = vmatpush1.bf16.msra.mxu0 %v5137
    %5180 = vmatprep.subr.bf16.mxu0 0
    %5181 = vmatpush1.bf16.msra.mxu0 0
    %5182 = vmatprep.subr.bf16.mxu0 0
    %5183 = vmatpush1.bf16.msra.mxu0 0
    %5184 = vmatprep.subr.bf16.mxu0 0
    %5185 = vmatpush1.bf16.msra.mxu0 0
    %5186 = vmatprep.subr.bf16.mxu0 0
    %5187 = vmatpush1.bf16.msra.mxu0 0
    %5188 = vmatprep.subr.bf16.mxu0 0
    %5189 = vmatpush1.bf16.msra.mxu0 0
    %5190 = vmatprep.subr.bf16.mxu0 0
    %5191 = vmatpush1.bf16.msra.mxu0 0
    %5192 = vmatprep.subr.bf16.mxu0 0
    %5193 = vmatpush1.bf16.msra.mxu0 0
    %5194 = vmatprep.subr.bf16.mxu0 0
    %5195 = vmatpush1.bf16.msra.mxu0 0
    %5196 = vmatprep.mubr.bf16.mxu0 0
    %5197 = vmatmul.mubr.bf16.gmra.mrb[0].mxu0 %v4986
    %v5198 = vpop.f32.mrb[0].mxu0
    %v5199 = vadd.f32 %v5024, %v5198
    %v5200 = vpop.f32.mrb[0].mxu0
    %v5201 = vadd.f32 %v5028, %v5200
    %v5202 = vpop.f32.mrb[0].mxu0
    %v5203 = vpop.f32.mrb[0].mxu0
    %5204 = vdwg.mxu0
    %5205 = vmatprep.subr.bf16.mxu0 0
    %5206 = vmatpush1.bf16.msra.mxu0 %v5118
    %5207 = vmatprep.subr.bf16.mxu0 0
    %5208 = vmatpush1.bf16.msra.mxu0 %v5121
    %5209 = vmatprep.subr.bf16.mxu0 0
    %5210 = vmatpush1.bf16.msra.mxu0 %v5124
    %5211 = vmatprep.subr.bf16.mxu0 0
    %5212 = vmatpush1.bf16.msra.mxu0 %v5127
    %5213 = vmatprep.subr.bf16.mxu0 0
    %5214 = vmatpush1.bf16.msra.mxu0 %v5130
    %5215 = vmatprep.subr.bf16.mxu0 0
    %5216 = vmatpush1.bf16.msra.mxu0 %v5133
    %5217 = vmatprep.subr.bf16.mxu0 0
    %5218 = vmatpush1.bf16.msra.mxu0 %v5136
    %5219 = vmatprep.subr.bf16.mxu0 0
    %5220 = vmatpush1.bf16.msra.mxu0 %v5139
    %5221 = vmatprep.subr.bf16.mxu0 0
    %5222 = vmatpush1.bf16.msra.mxu0 0
    %5223 = vmatprep.subr.bf16.mxu0 0
    %5224 = vmatpush1.bf16.msra.mxu0 0
    %5225 = vmatprep.subr.bf16.mxu0 0
    %5226 = vmatpush1.bf16.msra.mxu0 0
    %5227 = vmatprep.subr.bf16.mxu0 0
    %5228 = vmatpush1.bf16.msra.mxu0 0
    %5229 = vmatprep.subr.bf16.mxu0 0
    %5230 = vmatpush1.bf16.msra.mxu0 0
    %5231 = vmatprep.subr.bf16.mxu0 0
    %5232 = vmatpush1.bf16.msra.mxu0 0
    %5233 = vmatprep.subr.bf16.mxu0 0
    %5234 = vmatpush1.bf16.msra.mxu0 0
    %5235 = vmatprep.subr.bf16.mxu0 0
    %5236 = vmatpush1.bf16.msra.mxu0 0
    %5237 = vmatprep.mubr.bf16.mxu0 0
    %5238 = vmatmul.mubr.bf16.gmra.mrb[0].mxu0 %v4986
    %v5239 = vpop.f32.mrb[0].mxu0
    %v5240 = vadd.f32 %v5032, %v5239
    %v5241 = vpop.f32.mrb[0].mxu0
    %v5242 = vpop.f32.mrb[0].mxu0
    %v5243 = vpop.f32.mrb[0].mxu0
    %5244 = vdwg.mxu0
    %v5245 = vpack.c.bf16 %v4699, %v4699
    %v5246 = vld [vmem:[#allocation12] sm:$0xff]
    %v5247 = vld [vmem:[#allocation12 + $0x8] sm:$0xf]
    %v5248 = vld [vmem:[#allocation12 + $0xc] sm:$0xff]
    %v5249 = vld [vmem:[#allocation12 + $0x14] sm:$0xf]
    %v5250 = vld [vmem:[#allocation12 + $0x18] sm:$0xff]
    %v5251 = vld [vmem:[#allocation12 + $0x20] sm:$0xf]
    %v5252 = vld [vmem:[#allocation12 + $0x24] sm:$0xff]
    %v5253 = vld [vmem:[#allocation12 + $0x2c] sm:$0xf]
    %v5254 = vld [vmem:[#allocation12 + $0x30] sm:$0xff]
    %v5255 = vld [vmem:[#allocation12 + $0x38] sm:$0xf]
    %v5256 = vld [vmem:[#allocation12 + $0x3c] sm:$0xff]
    %v5257 = vld [vmem:[#allocation12 + $0x44] sm:$0xf]
    %v5258 = vld [vmem:[#allocation12 + $0x48] sm:$0xff]
    %v5259 = vld [vmem:[#allocation12 + $0x50] sm:$0xf]
    %v5260 = vld [vmem:[#allocation12 + $0x54] sm:$0xff]
    %v5261 = vld [vmem:[#allocation12 + $0x5c] sm:$0xf]
    %v5262 = vld [vmem:[#allocation12 + $0x60] sm:$0xff]
    %v5263 = vld [vmem:[#allocation12 + $0x68] sm:$0xf]
    %v5264 = vld [vmem:[#allocation12 + $0x6c] sm:$0xff]
    %v5265 = vld [vmem:[#allocation12 + $0x74] sm:$0xf]
    %v5266 = vld [vmem:[#allocation12 + $0x78] sm:$0xff]
    %v5267 = vld [vmem:[#allocation12 + $0x80] sm:$0xf]
    %v5268 = vld [vmem:[#allocation12 + $0x84] sm:$0xff]
    %v5269 = vld [vmem:[#allocation12 + $0x8c] sm:$0xf]
    %v5270 = vld [vmem:[#allocation12 + $0x90] sm:$0xff]
    %v5271 = vld [vmem:[#allocation12 + $0x98] sm:$0xf]
    %v5272 = vld [vmem:[#allocation12 + $0x9c] sm:$0xff]
    %v5273 = vld [vmem:[#allocation12 + $0xa4] sm:$0xf]
    %v5274 = vld [vmem:[#allocation12 + $0xa8] sm:$0xff]
    %v5275 = vld [vmem:[#allocation12 + $0xb0] sm:$0xf]
    %v5276 = vld [vmem:[#allocation12 + $0xb4] sm:$0xff]
    %v5277 = vld [vmem:[#allocation12 + $0xbc] sm:$0xf]
    %v5278 = vld [vmem:[%s12] sm:$0x7]
    %v5280 = vlaneseq
    %v5281 = vshrl.u32 %v5280, 7
    %v5282 = vsub.s32 0, %v5281
    %v5283 = vrot.slane %v5278, %v5282
    %v5284 = vlaneseq
    %v5285 = vshrl.u32 %v5284, 7
    %v5286 = vsub.s32 1, %v5285
    %v5287 = vrot.slane %v5278, %v5286
    %v5288 = vlaneseq
    %v5289 = vshrl.u32 %v5288, 7
    %v5290 = vsub.s32 2, %v5289
    %v5291 = vrot.slane %v5278, %v5290
    %v5327 = vunpack.c.l.b16 %v5246
    %v5328 = vunpack.c.h.b16 %v5246
    %v5329 = vunpack.c.l.b16 %v5247
    %v5330 = vunpack.c.l.b16 %v5248
    %v5331 = vunpack.c.h.b16 %v5248
    %v5332 = vunpack.c.l.b16 %v5249
    %v5333 = vunpack.c.l.b16 %v5250
    %v5334 = vunpack.c.h.b16 %v5250
    %v5335 = vunpack.c.l.b16 %v5251
    %v5336 = vunpack.c.l.b16 %v5252
    %v5337 = vunpack.c.h.b16 %v5252
    %v5338 = vunpack.c.l.b16 %v5253
    %v5339 = vunpack.c.l.b16 %v5254
    %v5340 = vunpack.c.h.b16 %v5254
    %v5341 = vunpack.c.l.b16 %v5255
    %v5342 = vunpack.c.l.b16 %v5256
    %v5343 = vunpack.c.h.b16 %v5256
    %v5344 = vunpack.c.l.b16 %v5257
    %v5345 = vunpack.c.l.b16 %v5258
    %v5346 = vunpack.c.h.b16 %v5258
    %v5347 = vunpack.c.l.b16 %v5259
    %v5348 = vunpack.c.l.b16 %v5260
    %v5349 = vunpack.c.h.b16 %v5260
    %v5350 = vunpack.c.l.b16 %v5261
    %v5351 = vunpack.c.l.b16 %v5262
    %v5352 = vunpack.c.h.b16 %v5262
    %v5353 = vunpack.c.l.b16 %v5263
    %v5354 = vunpack.c.l.b16 %v5264
    %v5355 = vunpack.c.h.b16 %v5264
    %v5356 = vunpack.c.l.b16 %v5265
    %v5357 = vunpack.c.l.b16 %v5266
    %v5358 = vunpack.c.h.b16 %v5266
    %v5359 = vunpack.c.l.b16 %v5267
    %v5360 = vunpack.c.l.b16 %v5268
    %v5361 = vunpack.c.h.b16 %v5268
    %v5362 = vunpack.c.l.b16 %v5269
    %v5363 = vunpack.c.l.b16 %v5270
    %v5364 = vunpack.c.h.b16 %v5270
    %v5365 = vunpack.c.l.b16 %v5271
    %v5366 = vunpack.c.l.b16 %v5272
    %v5367 = vunpack.c.h.b16 %v5272
    %v5368 = vunpack.c.l.b16 %v5273
    %v5369 = vunpack.c.l.b16 %v5274
    %v5370 = vunpack.c.h.b16 %v5274
    %v5371 = vunpack.c.l.b16 %v5275
    %v5372 = vunpack.c.l.b16 %v5276
    %v5373 = vunpack.c.h.b16 %v5276
    %v5374 = vunpack.c.l.b16 %v5277
    %v5375 = vpack.c.b16 %v5330, %v5327
    %v5376 = vpack.c.b16 %v5331, %v5328
    %v5377 = vpack.c.b16 %v5332, %v5329
    %v5378 = vpack.c.b16 %v5336, %v5333
    %v5379 = vpack.c.b16 %v5337, %v5334
    %v5380 = vpack.c.b16 %v5338, %v5335
    %v5381 = vpack.c.b16 %v5342, %v5339
    %v5382 = vpack.c.b16 %v5343, %v5340
    %v5383 = vpack.c.b16 %v5344, %v5341
    %v5384 = vpack.c.b16 %v5348, %v5345
    %v5385 = vpack.c.b16 %v5349, %v5346
    %v5386 = vpack.c.b16 %v5350, %v5347
    %v5387 = vpack.c.b16 %v5354, %v5351
    %v5388 = vpack.c.b16 %v5355, %v5352
    %v5389 = vpack.c.b16 %v5356, %v5353
    %v5390 = vpack.c.b16 %v5360, %v5357
    %v5391 = vpack.c.b16 %v5361, %v5358
    %v5392 = vpack.c.b16 %v5362, %v5359
    %v5393 = vpack.c.b16 %v5366, %v5363
    %v5394 = vpack.c.b16 %v5367, %v5364
    %v5395 = vpack.c.b16 %v5368, %v5365
    %v5396 = vpack.c.b16 %v5372, %v5369
    %v5397 = vpack.c.b16 %v5373, %v5370
    %v5398 = vpack.c.b16 %v5374, %v5371
    %5423 = vmatprep.subr.bf16.mxu0 %v5376
    %5424 = vmatpush1.bf16.msra.mxu0 %v5375
    %5425 = vmatprep.subr.bf16.mxu0 %v5379
    %5426 = vmatpush1.bf16.msra.mxu0 %v5378
    %5427 = vmatprep.subr.bf16.mxu0 %v5382
    %5428 = vmatpush1.bf16.msra.mxu0 %v5381
    %5429 = vmatprep.subr.bf16.mxu0 %v5385
    %5430 = vmatpush1.bf16.msra.mxu0 %v5384
    %5431 = vmatprep.subr.bf16.mxu0 %v5388
    %5432 = vmatpush1.bf16.msra.mxu0 %v5387
    %5433 = vmatprep.subr.bf16.mxu0 %v5391
    %5434 = vmatpush1.bf16.msra.mxu0 %v5390
    %5435 = vmatprep.subr.bf16.mxu0 %v5394
    %5436 = vmatpush1.bf16.msra.mxu0 %v5393
    %5437 = vmatprep.subr.bf16.mxu0 %v5397
    %5438 = vmatpush1.bf16.msra.mxu0 %v5396
    %5439 = vmatprep.subr.bf16.mxu0 0
    %5440 = vmatpush1.bf16.msra.mxu0 0
    %5441 = vmatprep.subr.bf16.mxu0 0
    %5442 = vmatpush1.bf16.msra.mxu0 0
    %5443 = vmatprep.subr.bf16.mxu0 0
    %5444 = vmatpush1.bf16.msra.mxu0 0
    %5445 = vmatprep.subr.bf16.mxu0 0
    %5446 = vmatpush1.bf16.msra.mxu0 0
    %5447 = vmatprep.subr.bf16.mxu0 0
    %5448 = vmatpush1.bf16.msra.mxu0 0
    %5449 = vmatprep.subr.bf16.mxu0 0
    %5450 = vmatpush1.bf16.msra.mxu0 0
    %5451 = vmatprep.subr.bf16.mxu0 0
    %5452 = vmatpush1.bf16.msra.mxu0 0
    %5453 = vmatprep.subr.bf16.mxu0 0
    %5454 = vmatpush1.bf16.msra.mxu0 0
    %5455 = vmatprep.mubr.bf16.mxu0 0
    %5456 = vmatmul.mubr.bf16.gmra.mrb[0].mxu0 %v5245
    %v5457 = vpop.f32.mrb[0].mxu0
    %v5458 = vadd.f32 %v5283, %v5457
    %v5459 = vpop.f32.mrb[0].mxu0
    %v5460 = vadd.f32 %v5287, %v5459
    %v5461 = vpop.f32.mrb[0].mxu0
    %v5462 = vpop.f32.mrb[0].mxu0
    %5463 = vdwg.mxu0
    %5464 = vmatprep.subr.bf16.mxu0 0
    %5465 = vmatpush1.bf16.msra.mxu0 %v5377
    %5466 = vmatprep.subr.bf16.mxu0 0
    %5467 = vmatpush1.bf16.msra.mxu0 %v5380
    %5468 = vmatprep.subr.bf16.mxu0 0
    %5469 = vmatpush1.bf16.msra.mxu0 %v5383
    %5470 = vmatprep.subr.bf16.mxu0 0
    %5471 = vmatpush1.bf16.msra.mxu0 %v5386
    %5472 = vmatprep.subr.bf16.mxu0 0
    %5473 = vmatpush1.bf16.msra.mxu0 %v5389
    %5474 = vmatprep.subr.bf16.mxu0 0
    %5475 = vmatpush1.bf16.msra.mxu0 %v5392
    %5476 = vmatprep.subr.bf16.mxu0 0
    %5477 = vmatpush1.bf16.msra.mxu0 %v5395
    %5478 = vmatprep.subr.bf16.mxu0 0
    %5479 = vmatpush1.bf16.msra.mxu0 %v5398
    %5480 = vmatprep.subr.bf16.mxu0 0
    %5481 = vmatpush1.bf16.msra.mxu0 0
    %5482 = vmatprep.subr.bf16.mxu0 0
    %5483 = vmatpush1.bf16.msra.mxu0 0
    %5484 = vmatprep.subr.bf16.mxu0 0
    %5485 = vmatpush1.bf16.msra.mxu0 0
    %5486 = vmatprep.subr.bf16.mxu0 0
    %5487 = vmatpush1.bf16.msra.mxu0 0
    %5488 = vmatprep.subr.bf16.mxu0 0
    %5489 = vmatpush1.bf16.msra.mxu0 0
    %5490 = vmatprep.subr.bf16.mxu0 0
    %5491 = vmatpush1.bf16.msra.mxu0 0
    %5492 = vmatprep.subr.bf16.mxu0 0
    %5493 = vmatpush1.bf16.msra.mxu0 0
    %5494 = vmatprep.subr.bf16.mxu0 0
    %5495 = vmatpush1.bf16.msra.mxu0 0
    %5496 = vmatprep.mubr.bf16.mxu0 0
    %5497 = vmatmul.mubr.bf16.gmra.mrb[0].mxu0 %v5245
    %v5498 = vpop.f32.mrb[0].mxu0
    %v5499 = vadd.f32 %v5291, %v5498
    %v5500 = vpop.f32.mrb[0].mxu0
    %v5501 = vpop.f32.mrb[0].mxu0
    %v5502 = vpop.f32.mrb[0].mxu0
    %5503 = vdwg.mxu0
    %v5504 = vadd.f32 %v5199, %v5458
    %v5505 = vxor.u32 %v5504, 2147483648
    %v5506 = vmul.f32 %v5505, 1.442695
    %v5507 = vpow.pop %v5506
    %v5508 = vadd.f32 %v5507, 1.0
    %v5509 = vrcp.pop %v5508
    %v5510 = vmul.f32 1.0, %v5509
    %v5511 = vadd.f32 %v5201, %v5460
    %v5512 = vxor.u32 %v5511, 2147483648
    %v5513 = vmul.f32 %v5512, 1.442695
    %v5514 = vpow.pop %v5513
    %v5515 = vadd.f32 %v5514, 1.0
    %v5516 = vrcp.pop %v5515
    %v5517 = vmul.f32 1.0, %v5516
    %v5518 = vmul.f32 %v5510, %v5499
    %v5519 = vadd.f32 %v5240, %v5518
    %v5520 = vtanh.pop %v5519
    %v5521 = vsub.f32 1.0, %v5517
    %v5522 = vmul.f32 %v5521, %v5520
    %v5523 = vmul.f32 %v5517, %v4699
    %v5524 = vadd.f32 %v5522, %v5523
    %5525 = vst [vmem:[#allocation3 + $0x28] sm:$0xff] %v5524
    %v5526 = vld [vmem:[#allocation2 + $0x90] sm:$0xff]
    %v5527 = vld [vmem:[#allocation2 + $0x98] sm:$0xff]
    %v5528 = vld [vmem:[#allocation2 + $0xa0] sm:$0xff]
    %v5529 = vadd.f32 %v5526, %v293
    %v5530 = vadd.f32 %v5527, %v295
    %v5531 = vadd.f32 %v5528, %v334
    %v5532 = vld [vmem:[#allocation9] sm:$0xff]
    %v5533 = vld [vmem:[#allocation9 + $0x8] sm:$0xf]
    %v5534 = vld [vmem:[#allocation9 + $0xc] sm:$0xff]
    %v5535 = vld [vmem:[#allocation9 + $0x14] sm:$0xf]
    %v5536 = vld [vmem:[#allocation9 + $0x18] sm:$0xff]
    %v5537 = vld [vmem:[#allocation9 + $0x20] sm:$0xf]
    %v5538 = vld [vmem:[#allocation9 + $0x24] sm:$0xff]
    %v5539 = vld [vmem:[#allocation9 + $0x2c] sm:$0xf]
    %v5540 = vld [vmem:[#allocation9 + $0x30] sm:$0xff]
    %v5541 = vld [vmem:[#allocation9 + $0x38] sm:$0xf]
    %v5542 = vld [vmem:[#allocation9 + $0x3c] sm:$0xff]
    %v5543 = vld [vmem:[#allocation9 + $0x44] sm:$0xf]
    %v5544 = vld [vmem:[#allocation9 + $0x48] sm:$0xff]
    %v5545 = vld [vmem:[#allocation9 + $0x50] sm:$0xf]
    %v5546 = vld [vmem:[#allocation9 + $0x54] sm:$0xff]
    %v5547 = vld [vmem:[#allocation9 + $0x5c] sm:$0xf]
    %v5548 = vld [vmem:[#allocation9 + $0x60] sm:$0xff]
    %v5549 = vld [vmem:[#allocation9 + $0x68] sm:$0xf]
    %v5550 = vld [vmem:[#allocation9 + $0x6c] sm:$0xff]
    %v5551 = vld [vmem:[#allocation9 + $0x74] sm:$0xf]
    %v5552 = vld [vmem:[#allocation9 + $0x78] sm:$0xff]
    %v5553 = vld [vmem:[#allocation9 + $0x80] sm:$0xf]
    %v5554 = vld [vmem:[#allocation9 + $0x84] sm:$0xff]
    %v5555 = vld [vmem:[#allocation9 + $0x8c] sm:$0xf]
    %v5556 = vld [vmem:[#allocation9 + $0x90] sm:$0xff]
    %v5557 = vld [vmem:[#allocation9 + $0x98] sm:$0xf]
    %v5558 = vld [vmem:[#allocation9 + $0x9c] sm:$0xff]
    %v5559 = vld [vmem:[#allocation9 + $0xa4] sm:$0xf]
    %v5560 = vld [vmem:[#allocation9 + $0xa8] sm:$0xff]
    %v5561 = vld [vmem:[#allocation9 + $0xb0] sm:$0xf]
    %v5562 = vld [vmem:[#allocation9 + $0xb4] sm:$0xff]
    %v5563 = vld [vmem:[#allocation9 + $0xbc] sm:$0xf]
    %v5564 = vld [vmem:[%s8] sm:$0x7]
    %v5566 = vlaneseq
    %v5567 = vshrl.u32 %v5566, 7
    %v5568 = vsub.s32 0, %v5567
    %v5569 = vrot.slane %v5564, %v5568
    %v5570 = vlaneseq
    %v5571 = vshrl.u32 %v5570, 7
    %v5572 = vsub.s32 1, %v5571
    %v5573 = vrot.slane %v5564, %v5572
    %v5574 = vlaneseq
    %v5575 = vshrl.u32 %v5574, 7
    %v5576 = vsub.s32 2, %v5575
    %v5577 = vrot.slane %v5564, %v5576
    %v5613 = vunpack.c.l.b16 %v5532
    %v5614 = vunpack.c.h.b16 %v5532
    %v5615 = vunpack.c.l.b16 %v5533
    %v5616 = vunpack.c.l.b16 %v5534
    %v5617 = vunpack.c.h.b16 %v5534
    %v5618 = vunpack.c.l.b16 %v5535
    %v5619 = vunpack.c.l.b16 %v5536
    %v5620 = vunpack.c.h.b16 %v5536
    %v5621 = vunpack.c.l.b16 %v5537
    %v5622 = vunpack.c.l.b16 %v5538
    %v5623 = vunpack.c.h.b16 %v5538
    %v5624 = vunpack.c.l.b16 %v5539
    %v5625 = vunpack.c.l.b16 %v5540
    %v5626 = vunpack.c.h.b16 %v5540
    %v5627 = vunpack.c.l.b16 %v5541
    %v5628 = vunpack.c.l.b16 %v5542
    %v5629 = vunpack.c.h.b16 %v5542
    %v5630 = vunpack.c.l.b16 %v5543
    %v5631 = vunpack.c.l.b16 %v5544
    %v5632 = vunpack.c.h.b16 %v5544
    %v5633 = vunpack.c.l.b16 %v5545
    %v5634 = vunpack.c.l.b16 %v5546
    %v5635 = vunpack.c.h.b16 %v5546
    %v5636 = vunpack.c.l.b16 %v5547
    %v5637 = vunpack.c.l.b16 %v5548
    %v5638 = vunpack.c.h.b16 %v5548
    %v5639 = vunpack.c.l.b16 %v5549
    %v5640 = vunpack.c.l.b16 %v5550
    %v5641 = vunpack.c.h.b16 %v5550
    %v5642 = vunpack.c.l.b16 %v5551
    %v5643 = vunpack.c.l.b16 %v5552
    %v5644 = vunpack.c.h.b16 %v5552
    %v5645 = vunpack.c.l.b16 %v5553
    %v5646 = vunpack.c.l.b16 %v5554
    %v5647 = vunpack.c.h.b16 %v5554
    %v5648 = vunpack.c.l.b16 %v5555
    %v5649 = vunpack.c.l.b16 %v5556
    %v5650 = vunpack.c.h.b16 %v5556
    %v5651 = vunpack.c.l.b16 %v5557
    %v5652 = vunpack.c.l.b16 %v5558
    %v5653 = vunpack.c.h.b16 %v5558
    %v5654 = vunpack.c.l.b16 %v5559
    %v5655 = vunpack.c.l.b16 %v5560
    %v5656 = vunpack.c.h.b16 %v5560
    %v5657 = vunpack.c.l.b16 %v5561
    %v5658 = vunpack.c.l.b16 %v5562
    %v5659 = vunpack.c.h.b16 %v5562
    %v5660 = vunpack.c.l.b16 %v5563
    %v5661 = vpack.c.b16 %v5616, %v5613
    %v5662 = vpack.c.b16 %v5617, %v5614
    %v5663 = vpack.c.b16 %v5618, %v5615
    %v5664 = vpack.c.b16 %v5622, %v5619
    %v5665 = vpack.c.b16 %v5623, %v5620
    %v5666 = vpack.c.b16 %v5624, %v5621
    %v5667 = vpack.c.b16 %v5628, %v5625
    %v5668 = vpack.c.b16 %v5629, %v5626
    %v5669 = vpack.c.b16 %v5630, %v5627
    %v5670 = vpack.c.b16 %v5634, %v5631
    %v5671 = vpack.c.b16 %v5635, %v5632
    %v5672 = vpack.c.b16 %v5636, %v5633
    %v5673 = vpack.c.b16 %v5640, %v5637
    %v5674 = vpack.c.b16 %v5641, %v5638
    %v5675 = vpack.c.b16 %v5642, %v5639
    %v5676 = vpack.c.b16 %v5646, %v5643
    %v5677 = vpack.c.b16 %v5647, %v5644
    %v5678 = vpack.c.b16 %v5648, %v5645
    %v5679 = vpack.c.b16 %v5652, %v5649
    %v5680 = vpack.c.b16 %v5653, %v5650
    %v5681 = vpack.c.b16 %v5654, %v5651
    %v5682 = vpack.c.b16 %v5658, %v5655
    %v5683 = vpack.c.b16 %v5659, %v5656
    %v5684 = vpack.c.b16 %v5660, %v5657
    %5709 = vmatprep.subr.bf16.mxu0 %v5662
    %5710 = vmatpush1.bf16.msra.mxu0 %v5661
    %5711 = vmatprep.subr.bf16.mxu0 %v5665
    %5712 = vmatpush1.bf16.msra.mxu0 %v5664
    %5713 = vmatprep.subr.bf16.mxu0 %v5668
    %5714 = vmatpush1.bf16.msra.mxu0 %v5667
    %5715 = vmatprep.subr.bf16.mxu0 %v5671
    %5716 = vmatpush1.bf16.msra.mxu0 %v5670
    %5717 = vmatprep.subr.bf16.mxu0 %v5674
    %5718 = vmatpush1.bf16.msra.mxu0 %v5673
    %5719 = vmatprep.subr.bf16.mxu0 %v5677
    %5720 = vmatpush1.bf16.msra.mxu0 %v5676
    %5721 = vmatprep.subr.bf16.mxu0 %v5680
    %5722 = vmatpush1.bf16.msra.mxu0 %v5679
    %5723 = vmatprep.subr.bf16.mxu0 %v5683
    %5724 = vmatpush1.bf16.msra.mxu0 %v5682
    %5725 = vmatprep.subr.bf16.mxu0 0
    %5726 = vmatpush1.bf16.msra.mxu0 0
    %5727 = vmatprep.subr.bf16.mxu0 0
    %5728 = vmatpush1.bf16.msra.mxu0 0
    %5729 = vmatprep.subr.bf16.mxu0 0
    %5730 = vmatpush1.bf16.msra.mxu0 0
    %5731 = vmatprep.subr.bf16.mxu0 0
    %5732 = vmatpush1.bf16.msra.mxu0 0
    %5733 = vmatprep.subr.bf16.mxu0 0
    %5734 = vmatpush1.bf16.msra.mxu0 0
    %5735 = vmatprep.subr.bf16.mxu0 0
    %5736 = vmatpush1.bf16.msra.mxu0 0
    %5737 = vmatprep.subr.bf16.mxu0 0
    %5738 = vmatpush1.bf16.msra.mxu0 0
    %5739 = vmatprep.subr.bf16.mxu0 0
    %5740 = vmatpush1.bf16.msra.mxu0 0
    %5741 = vmatprep.mubr.bf16.mxu0 0
    %5742 = vmatmul.mubr.bf16.gmra.mrb[0].mxu0 %v4986
    %v5743 = vpop.f32.mrb[0].mxu0
    %v5744 = vadd.f32 %v5569, %v5743
    %v5745 = vpop.f32.mrb[0].mxu0
    %v5746 = vadd.f32 %v5573, %v5745
    %v5747 = vpop.f32.mrb[0].mxu0
    %v5748 = vpop.f32.mrb[0].mxu0
    %5749 = vdwg.mxu0
    %5750 = vmatprep.subr.bf16.mxu0 0
    %5751 = vmatpush1.bf16.msra.mxu0 %v5663
    %5752 = vmatprep.subr.bf16.mxu0 0
    %5753 = vmatpush1.bf16.msra.mxu0 %v5666
    %5754 = vmatprep.subr.bf16.mxu0 0
    %5755 = vmatpush1.bf16.msra.mxu0 %v5669
    %5756 = vmatprep.subr.bf16.mxu0 0
    %5757 = vmatpush1.bf16.msra.mxu0 %v5672
    %5758 = vmatprep.subr.bf16.mxu0 0
    %5759 = vmatpush1.bf16.msra.mxu0 %v5675
    %5760 = vmatprep.subr.bf16.mxu0 0
    %5761 = vmatpush1.bf16.msra.mxu0 %v5678
    %5762 = vmatprep.subr.bf16.mxu0 0
    %5763 = vmatpush1.bf16.msra.mxu0 %v5681
    %5764 = vmatprep.subr.bf16.mxu0 0
    %5765 = vmatpush1.bf16.msra.mxu0 %v5684
    %5766 = vmatprep.subr.bf16.mxu0 0
    %5767 = vmatpush1.bf16.msra.mxu0 0
    %5768 = vmatprep.subr.bf16.mxu0 0
    %5769 = vmatpush1.bf16.msra.mxu0 0
    %5770 = vmatprep.subr.bf16.mxu0 0
    %5771 = vmatpush1.bf16.msra.mxu0 0
    %5772 = vmatprep.subr.bf16.mxu0 0
    %5773 = vmatpush1.bf16.msra.mxu0 0
    %5774 = vmatprep.subr.bf16.mxu0 0
    %5775 = vmatpush1.bf16.msra.mxu0 0
    %5776 = vmatprep.subr.bf16.mxu0 0
    %5777 = vmatpush1.bf16.msra.mxu0 0
    %5778 = vmatprep.subr.bf16.mxu0 0
    %5779 = vmatpush1.bf16.msra.mxu0 0
    %5780 = vmatprep.subr.bf16.mxu0 0
    %5781 = vmatpush1.bf16.msra.mxu0 0
    %5782 = vmatprep.mubr.bf16.mxu0 0
    %5783 = vmatmul.mubr.bf16.gmra.mrb[0].mxu0 %v4986
    %v5784 = vpop.f32.mrb[0].mxu0
    %v5785 = vadd.f32 %v5577, %v5784
    %v5786 = vpop.f32.mrb[0].mxu0
    %v5787 = vpop.f32.mrb[0].mxu0
    %v5788 = vpop.f32.mrb[0].mxu0
    %5789 = vdwg.mxu0
    %v5790 = vadd.f32 %v5529, %v5744
    %v5791 = vxor.u32 %v5790, 2147483648
    %v5792 = vmul.f32 %v5791, 1.442695
    %v5793 = vpow.pop %v5792
    %v5794 = vadd.f32 %v5793, 1.0
    %v5795 = vrcp.pop %v5794
    %v5796 = vmul.f32 1.0, %v5795
    %v5797 = vadd.f32 %v5530, %v5746
    %v5798 = vxor.u32 %v5797, 2147483648
    %v5799 = vmul.f32 %v5798, 1.442695
    %v5800 = vpow.pop %v5799
    %v5801 = vadd.f32 %v5800, 1.0
    %v5802 = vrcp.pop %v5801
    %v5803 = vmul.f32 1.0, %v5802
    %v5804 = vmul.f32 %v5796, %v5785
    %v5805 = vadd.f32 %v5531, %v5804
    %v5806 = vtanh.pop %v5805
    %v5807 = vsub.f32 1.0, %v5803
    %v5808 = vmul.f32 %v5807, %v5806
    %v5809 = vmul.f32 %v5803, %v4985
    %v5810 = vadd.f32 %v5808, %v5809
    %v5811 = vpack.c.bf16 %v5810, %v5810
    %v5812 = vld [vmem:[#allocation11] sm:$0xff]
    %v5813 = vld [vmem:[#allocation11 + $0x8] sm:$0xf]
    %v5814 = vld [vmem:[#allocation11 + $0xc] sm:$0xff]
    %v5815 = vld [vmem:[#allocation11 + $0x14] sm:$0xf]
    %v5816 = vld [vmem:[#allocation11 + $0x18] sm:$0xff]
    %v5817 = vld [vmem:[#allocation11 + $0x20] sm:$0xf]
    %v5818 = vld [vmem:[#allocation11 + $0x24] sm:$0xff]
    %v5819 = vld [vmem:[#allocation11 + $0x2c] sm:$0xf]
    %v5820 = vld [vmem:[#allocation11 + $0x30] sm:$0xff]
    %v5821 = vld [vmem:[#allocation11 + $0x38] sm:$0xf]
    %v5822 = vld [vmem:[#allocation11 + $0x3c] sm:$0xff]
    %v5823 = vld [vmem:[#allocation11 + $0x44] sm:$0xf]
    %v5824 = vld [vmem:[#allocation11 + $0x48] sm:$0xff]
    %v5825 = vld [vmem:[#allocation11 + $0x50] sm:$0xf]
    %v5826 = vld [vmem:[#allocation11 + $0x54] sm:$0xff]
    %v5827 = vld [vmem:[#allocation11 + $0x5c] sm:$0xf]
    %v5828 = vld [vmem:[#allocation11 + $0x60] sm:$0xff]
    %v5829 = vld [vmem:[#allocation11 + $0x68] sm:$0xf]
    %v5830 = vld [vmem:[#allocation11 + $0x6c] sm:$0xff]
    %v5831 = vld [vmem:[#allocation11 + $0x74] sm:$0xf]
    %v5832 = vld [vmem:[#allocation11 + $0x78] sm:$0xff]
    %v5833 = vld [vmem:[#allocation11 + $0x80] sm:$0xf]
    %v5834 = vld [vmem:[#allocation11 + $0x84] sm:$0xff]
    %v5835 = vld [vmem:[#allocation11 + $0x8c] sm:$0xf]
    %v5836 = vld [vmem:[#allocation11 + $0x90] sm:$0xff]
    %v5837 = vld [vmem:[#allocation11 + $0x98] sm:$0xf]
    %v5838 = vld [vmem:[#allocation11 + $0x9c] sm:$0xff]
    %v5839 = vld [vmem:[#allocation11 + $0xa4] sm:$0xf]
    %v5840 = vld [vmem:[#allocation11 + $0xa8] sm:$0xff]
    %v5841 = vld [vmem:[#allocation11 + $0xb0] sm:$0xf]
    %v5842 = vld [vmem:[#allocation11 + $0xb4] sm:$0xff]
    %v5843 = vld [vmem:[#allocation11 + $0xbc] sm:$0xf]
    %v5844 = vld [vmem:[%s10] sm:$0x7]
    %v5846 = vlaneseq
    %v5847 = vshrl.u32 %v5846, 7
    %v5848 = vsub.s32 0, %v5847
    %v5849 = vrot.slane %v5844, %v5848
    %v5850 = vlaneseq
    %v5851 = vshrl.u32 %v5850, 7
    %v5852 = vsub.s32 1, %v5851
    %v5853 = vrot.slane %v5844, %v5852
    %v5854 = vlaneseq
    %v5855 = vshrl.u32 %v5854, 7
    %v5856 = vsub.s32 2, %v5855
    %v5857 = vrot.slane %v5844, %v5856
    %v5893 = vunpack.c.l.b16 %v5812
    %v5894 = vunpack.c.h.b16 %v5812
    %v5895 = vunpack.c.l.b16 %v5813
    %v5896 = vunpack.c.l.b16 %v5814
    %v5897 = vunpack.c.h.b16 %v5814
    %v5898 = vunpack.c.l.b16 %v5815
    %v5899 = vunpack.c.l.b16 %v5816
    %v5900 = vunpack.c.h.b16 %v5816
    %v5901 = vunpack.c.l.b16 %v5817
    %v5902 = vunpack.c.l.b16 %v5818
    %v5903 = vunpack.c.h.b16 %v5818
    %v5904 = vunpack.c.l.b16 %v5819
    %v5905 = vunpack.c.l.b16 %v5820
    %v5906 = vunpack.c.h.b16 %v5820
    %v5907 = vunpack.c.l.b16 %v5821
    %v5908 = vunpack.c.l.b16 %v5822
    %v5909 = vunpack.c.h.b16 %v5822
    %v5910 = vunpack.c.l.b16 %v5823
    %v5911 = vunpack.c.l.b16 %v5824
    %v5912 = vunpack.c.h.b16 %v5824
    %v5913 = vunpack.c.l.b16 %v5825
    %v5914 = vunpack.c.l.b16 %v5826
    %v5915 = vunpack.c.h.b16 %v5826
    %v5916 = vunpack.c.l.b16 %v5827
    %v5917 = vunpack.c.l.b16 %v5828
    %v5918 = vunpack.c.h.b16 %v5828
    %v5919 = vunpack.c.l.b16 %v5829
    %v5920 = vunpack.c.l.b16 %v5830
    %v5921 = vunpack.c.h.b16 %v5830
    %v5922 = vunpack.c.l.b16 %v5831
    %v5923 = vunpack.c.l.b16 %v5832
    %v5924 = vunpack.c.h.b16 %v5832
    %v5925 = vunpack.c.l.b16 %v5833
    %v5926 = vunpack.c.l.b16 %v5834
    %v5927 = vunpack.c.h.b16 %v5834
    %v5928 = vunpack.c.l.b16 %v5835
    %v5929 = vunpack.c.l.b16 %v5836
    %v5930 = vunpack.c.h.b16 %v5836
    %v5931 = vunpack.c.l.b16 %v5837
    %v5932 = vunpack.c.l.b16 %v5838
    %v5933 = vunpack.c.h.b16 %v5838
    %v5934 = vunpack.c.l.b16 %v5839
    %v5935 = vunpack.c.l.b16 %v5840
    %v5936 = vunpack.c.h.b16 %v5840
    %v5937 = vunpack.c.l.b16 %v5841
    %v5938 = vunpack.c.l.b16 %v5842
    %v5939 = vunpack.c.h.b16 %v5842
    %v5940 = vunpack.c.l.b16 %v5843
    %v5941 = vpack.c.b16 %v5896, %v5893
    %v5942 = vpack.c.b16 %v5897, %v5894
    %v5943 = vpack.c.b16 %v5898, %v5895
    %v5944 = vpack.c.b16 %v5902, %v5899
    %v5945 = vpack.c.b16 %v5903, %v5900
    %v5946 = vpack.c.b16 %v5904, %v5901
    %v5947 = vpack.c.b16 %v5908, %v5905
    %v5948 = vpack.c.b16 %v5909, %v5906
    %v5949 = vpack.c.b16 %v5910, %v5907
    %v5950 = vpack.c.b16 %v5914, %v5911
    %v5951 = vpack.c.b16 %v5915, %v5912
    %v5952 = vpack.c.b16 %v5916, %v5913
    %v5953 = vpack.c.b16 %v5920, %v5917
    %v5954 = vpack.c.b16 %v5921, %v5918
    %v5955 = vpack.c.b16 %v5922, %v5919
    %v5956 = vpack.c.b16 %v5926, %v5923
    %v5957 = vpack.c.b16 %v5927, %v5924
    %v5958 = vpack.c.b16 %v5928, %v5925
    %v5959 = vpack.c.b16 %v5932, %v5929
    %v5960 = vpack.c.b16 %v5933, %v5930
    %v5961 = vpack.c.b16 %v5934, %v5931
    %v5962 = vpack.c.b16 %v5938, %v5935
    %v5963 = vpack.c.b16 %v5939, %v5936
    %v5964 = vpack.c.b16 %v5940, %v5937
    %5989 = vmatprep.subr.bf16.mxu0 %v5942
    %5990 = vmatpush1.bf16.msra.mxu0 %v5941
    %5991 = vmatprep.subr.bf16.mxu0 %v5945
    %5992 = vmatpush1.bf16.msra.mxu0 %v5944
    %5993 = vmatprep.subr.bf16.mxu0 %v5948
    %5994 = vmatpush1.bf16.msra.mxu0 %v5947
    %5995 = vmatprep.subr.bf16.mxu0 %v5951
    %5996 = vmatpush1.bf16.msra.mxu0 %v5950
    %5997 = vmatprep.subr.bf16.mxu0 %v5954
    %5998 = vmatpush1.bf16.msra.mxu0 %v5953
    %5999 = vmatprep.subr.bf16.mxu0 %v5957
    %6000 = vmatpush1.bf16.msra.mxu0 %v5956
    %6001 = vmatprep.subr.bf16.mxu0 %v5960
    %6002 = vmatpush1.bf16.msra.mxu0 %v5959
    %6003 = vmatprep.subr.bf16.mxu0 %v5963
    %6004 = vmatpush1.bf16.msra.mxu0 %v5962
    %6005 = vmatprep.subr.bf16.mxu0 0
    %6006 = vmatpush1.bf16.msra.mxu0 0
    %6007 = vmatprep.subr.bf16.mxu0 0
    %6008 = vmatpush1.bf16.msra.mxu0 0
    %6009 = vmatprep.subr.bf16.mxu0 0
    %6010 = vmatpush1.bf16.msra.mxu0 0
    %6011 = vmatprep.subr.bf16.mxu0 0
    %6012 = vmatpush1.bf16.msra.mxu0 0
    %6013 = vmatprep.subr.bf16.mxu0 0
    %6014 = vmatpush1.bf16.msra.mxu0 0
    %6015 = vmatprep.subr.bf16.mxu0 0
    %6016 = vmatpush1.bf16.msra.mxu0 0
    %6017 = vmatprep.subr.bf16.mxu0 0
    %6018 = vmatpush1.bf16.msra.mxu0 0
    %6019 = vmatprep.subr.bf16.mxu0 0
    %6020 = vmatpush1.bf16.msra.mxu0 0
    %6021 = vmatprep.mubr.bf16.mxu0 0
    %6022 = vmatmul.mubr.bf16.gmra.mrb[0].mxu0 %v5811
    %v6023 = vpop.f32.mrb[0].mxu0
    %v6024 = vadd.f32 %v5849, %v6023
    %v6025 = vpop.f32.mrb[0].mxu0
    %v6026 = vadd.f32 %v5853, %v6025
    %v6027 = vpop.f32.mrb[0].mxu0
    %v6028 = vpop.f32.mrb[0].mxu0
    %6029 = vdwg.mxu0
    %6030 = vmatprep.subr.bf16.mxu0 0
    %6031 = vmatpush1.bf16.msra.mxu0 %v5943
    %6032 = vmatprep.subr.bf16.mxu0 0
    %6033 = vmatpush1.bf16.msra.mxu0 %v5946
    %6034 = vmatprep.subr.bf16.mxu0 0
    %6035 = vmatpush1.bf16.msra.mxu0 %v5949
    %6036 = vmatprep.subr.bf16.mxu0 0
    %6037 = vmatpush1.bf16.msra.mxu0 %v5952
    %6038 = vmatprep.subr.bf16.mxu0 0
    %6039 = vmatpush1.bf16.msra.mxu0 %v5955
    %6040 = vmatprep.subr.bf16.mxu0 0
    %6041 = vmatpush1.bf16.msra.mxu0 %v5958
    %6042 = vmatprep.subr.bf16.mxu0 0
    %6043 = vmatpush1.bf16.msra.mxu0 %v5961
    %6044 = vmatprep.subr.bf16.mxu0 0
    %6045 = vmatpush1.bf16.msra.mxu0 %v5964
    %6046 = vmatprep.subr.bf16.mxu0 0
    %6047 = vmatpush1.bf16.msra.mxu0 0
    %6048 = vmatprep.subr.bf16.mxu0 0
    %6049 = vmatpush1.bf16.msra.mxu0 0
    %6050 = vmatprep.subr.bf16.mxu0 0
    %6051 = vmatpush1.bf16.msra.mxu0 0
    %6052 = vmatprep.subr.bf16.mxu0 0
    %6053 = vmatpush1.bf16.msra.mxu0 0
    %6054 = vmatprep.subr.bf16.mxu0 0
    %6055 = vmatpush1.bf16.msra.mxu0 0
    %6056 = vmatprep.subr.bf16.mxu0 0
    %6057 = vmatpush1.bf16.msra.mxu0 0
    %6058 = vmatprep.subr.bf16.mxu0 0
    %6059 = vmatpush1.bf16.msra.mxu0 0
    %6060 = vmatprep.subr.bf16.mxu0 0
    %6061 = vmatpush1.bf16.msra.mxu0 0
    %6062 = vmatprep.mubr.bf16.mxu0 0
    %6063 = vmatmul.mubr.bf16.gmra.mrb[0].mxu0 %v5811
    %v6064 = vpop.f32.mrb[0].mxu0
    %v6065 = vadd.f32 %v5857, %v6064
    %v6066 = vpop.f32.mrb[0].mxu0
    %v6067 = vpop.f32.mrb[0].mxu0
    %v6068 = vpop.f32.mrb[0].mxu0
    %6069 = vdwg.mxu0
    %v6070 = vpack.c.bf16 %v5524, %v5524
    %v6071 = vld [vmem:[#allocation12] sm:$0xff]
    %v6072 = vld [vmem:[#allocation12 + $0x8] sm:$0xf]
    %v6073 = vld [vmem:[#allocation12 + $0xc] sm:$0xff]
    %v6074 = vld [vmem:[#allocation12 + $0x14] sm:$0xf]
    %v6075 = vld [vmem:[#allocation12 + $0x18] sm:$0xff]
    %v6076 = vld [vmem:[#allocation12 + $0x20] sm:$0xf]
    %v6077 = vld [vmem:[#allocation12 + $0x24] sm:$0xff]
    %v6078 = vld [vmem:[#allocation12 + $0x2c] sm:$0xf]
    %v6079 = vld [vmem:[#allocation12 + $0x30] sm:$0xff]
    %v6080 = vld [vmem:[#allocation12 + $0x38] sm:$0xf]
    %v6081 = vld [vmem:[#allocation12 + $0x3c] sm:$0xff]
    %v6082 = vld [vmem:[#allocation12 + $0x44] sm:$0xf]
    %v6083 = vld [vmem:[#allocation12 + $0x48] sm:$0xff]
    %v6084 = vld [vmem:[#allocation12 + $0x50] sm:$0xf]
    %v6085 = vld [vmem:[#allocation12 + $0x54] sm:$0xff]
    %v6086 = vld [vmem:[#allocation12 + $0x5c] sm:$0xf]
    %v6087 = vld [vmem:[#allocation12 + $0x60] sm:$0xff]
    %v6088 = vld [vmem:[#allocation12 + $0x68] sm:$0xf]
    %v6089 = vld [vmem:[#allocation12 + $0x6c] sm:$0xff]
    %v6090 = vld [vmem:[#allocation12 + $0x74] sm:$0xf]
    %v6091 = vld [vmem:[#allocation12 + $0x78] sm:$0xff]
    %v6092 = vld [vmem:[#allocation12 + $0x80] sm:$0xf]
    %v6093 = vld [vmem:[#allocation12 + $0x84] sm:$0xff]
    %v6094 = vld [vmem:[#allocation12 + $0x8c] sm:$0xf]
    %v6095 = vld [vmem:[#allocation12 + $0x90] sm:$0xff]
    %v6096 = vld [vmem:[#allocation12 + $0x98] sm:$0xf]
    %v6097 = vld [vmem:[#allocation12 + $0x9c] sm:$0xff]
    %v6098 = vld [vmem:[#allocation12 + $0xa4] sm:$0xf]
    %v6099 = vld [vmem:[#allocation12 + $0xa8] sm:$0xff]
    %v6100 = vld [vmem:[#allocation12 + $0xb0] sm:$0xf]
    %v6101 = vld [vmem:[#allocation12 + $0xb4] sm:$0xff]
    %v6102 = vld [vmem:[#allocation12 + $0xbc] sm:$0xf]
    %v6103 = vld [vmem:[%s12] sm:$0x7]
    %v6105 = vlaneseq
    %v6106 = vshrl.u32 %v6105, 7
    %v6107 = vsub.s32 0, %v6106
    %v6108 = vrot.slane %v6103, %v6107
    %v6109 = vlaneseq
    %v6110 = vshrl.u32 %v6109, 7
    %v6111 = vsub.s32 1, %v6110
    %v6112 = vrot.slane %v6103, %v6111
    %v6113 = vlaneseq
    %v6114 = vshrl.u32 %v6113, 7
    %v6115 = vsub.s32 2, %v6114
    %v6116 = vrot.slane %v6103, %v6115
    %v6152 = vunpack.c.l.b16 %v6071
    %v6153 = vunpack.c.h.b16 %v6071
    %v6154 = vunpack.c.l.b16 %v6072
    %v6155 = vunpack.c.l.b16 %v6073
    %v6156 = vunpack.c.h.b16 %v6073
    %v6157 = vunpack.c.l.b16 %v6074
    %v6158 = vunpack.c.l.b16 %v6075
    %v6159 = vunpack.c.h.b16 %v6075
    %v6160 = vunpack.c.l.b16 %v6076
    %v6161 = vunpack.c.l.b16 %v6077
    %v6162 = vunpack.c.h.b16 %v6077
    %v6163 = vunpack.c.l.b16 %v6078
    %v6164 = vunpack.c.l.b16 %v6079
    %v6165 = vunpack.c.h.b16 %v6079
    %v6166 = vunpack.c.l.b16 %v6080
    %v6167 = vunpack.c.l.b16 %v6081
    %v6168 = vunpack.c.h.b16 %v6081
    %v6169 = vunpack.c.l.b16 %v6082
    %v6170 = vunpack.c.l.b16 %v6083
    %v6171 = vunpack.c.h.b16 %v6083
    %v6172 = vunpack.c.l.b16 %v6084
    %v6173 = vunpack.c.l.b16 %v6085
    %v6174 = vunpack.c.h.b16 %v6085
    %v6175 = vunpack.c.l.b16 %v6086
    %v6176 = vunpack.c.l.b16 %v6087
    %v6177 = vunpack.c.h.b16 %v6087
    %v6178 = vunpack.c.l.b16 %v6088
    %v6179 = vunpack.c.l.b16 %v6089
    %v6180 = vunpack.c.h.b16 %v6089
    %v6181 = vunpack.c.l.b16 %v6090
    %v6182 = vunpack.c.l.b16 %v6091
    %v6183 = vunpack.c.h.b16 %v6091
    %v6184 = vunpack.c.l.b16 %v6092
    %v6185 = vunpack.c.l.b16 %v6093
    %v6186 = vunpack.c.h.b16 %v6093
    %v6187 = vunpack.c.l.b16 %v6094
    %v6188 = vunpack.c.l.b16 %v6095
    %v6189 = vunpack.c.h.b16 %v6095
    %v6190 = vunpack.c.l.b16 %v6096
    %v6191 = vunpack.c.l.b16 %v6097
    %v6192 = vunpack.c.h.b16 %v6097
    %v6193 = vunpack.c.l.b16 %v6098
    %v6194 = vunpack.c.l.b16 %v6099
    %v6195 = vunpack.c.h.b16 %v6099
    %v6196 = vunpack.c.l.b16 %v6100
    %v6197 = vunpack.c.l.b16 %v6101
    %v6198 = vunpack.c.h.b16 %v6101
    %v6199 = vunpack.c.l.b16 %v6102
    %v6200 = vpack.c.b16 %v6155, %v6152
    %v6201 = vpack.c.b16 %v6156, %v6153
    %v6202 = vpack.c.b16 %v6157, %v6154
    %v6203 = vpack.c.b16 %v6161, %v6158
    %v6204 = vpack.c.b16 %v6162, %v6159
    %v6205 = vpack.c.b16 %v6163, %v6160
    %v6206 = vpack.c.b16 %v6167, %v6164
    %v6207 = vpack.c.b16 %v6168, %v6165
    %v6208 = vpack.c.b16 %v6169, %v6166
    %v6209 = vpack.c.b16 %v6173, %v6170
    %v6210 = vpack.c.b16 %v6174, %v6171
    %v6211 = vpack.c.b16 %v6175, %v6172
    %v6212 = vpack.c.b16 %v6179, %v6176
    %v6213 = vpack.c.b16 %v6180, %v6177
    %v6214 = vpack.c.b16 %v6181, %v6178
    %v6215 = vpack.c.b16 %v6185, %v6182
    %v6216 = vpack.c.b16 %v6186, %v6183
    %v6217 = vpack.c.b16 %v6187, %v6184
    %v6218 = vpack.c.b16 %v6191, %v6188
    %v6219 = vpack.c.b16 %v6192, %v6189
    %v6220 = vpack.c.b16 %v6193, %v6190
    %v6221 = vpack.c.b16 %v6197, %v6194
    %v6222 = vpack.c.b16 %v6198, %v6195
    %v6223 = vpack.c.b16 %v6199, %v6196
    %6248 = vmatprep.subr.bf16.mxu0 %v6201
    %6249 = vmatpush1.bf16.msra.mxu0 %v6200
    %6250 = vmatprep.subr.bf16.mxu0 %v6204
    %6251 = vmatpush1.bf16.msra.mxu0 %v6203
    %6252 = vmatprep.subr.bf16.mxu0 %v6207
    %6253 = vmatpush1.bf16.msra.mxu0 %v6206
    %6254 = vmatprep.subr.bf16.mxu0 %v6210
    %6255 = vmatpush1.bf16.msra.mxu0 %v6209
    %6256 = vmatprep.subr.bf16.mxu0 %v6213
    %6257 = vmatpush1.bf16.msra.mxu0 %v6212
    %6258 = vmatprep.subr.bf16.mxu0 %v6216
    %6259 = vmatpush1.bf16.msra.mxu0 %v6215
    %6260 = vmatprep.subr.bf16.mxu0 %v6219
    %6261 = vmatpush1.bf16.msra.mxu0 %v6218
    %6262 = vmatprep.subr.bf16.mxu0 %v6222
    %6263 = vmatpush1.bf16.msra.mxu0 %v6221
    %6264 = vmatprep.subr.bf16.mxu0 0
    %6265 = vmatpush1.bf16.msra.mxu0 0
    %6266 = vmatprep.subr.bf16.mxu0 0
    %6267 = vmatpush1.bf16.msra.mxu0 0
    %6268 = vmatprep.subr.bf16.mxu0 0
    %6269 = vmatpush1.bf16.msra.mxu0 0
    %6270 = vmatprep.subr.bf16.mxu0 0
    %6271 = vmatpush1.bf16.msra.mxu0 0
    %6272 = vmatprep.subr.bf16.mxu0 0
    %6273 = vmatpush1.bf16.msra.mxu0 0
    %6274 = vmatprep.subr.bf16.mxu0 0
    %6275 = vmatpush1.bf16.msra.mxu0 0
    %6276 = vmatprep.subr.bf16.mxu0 0
    %6277 = vmatpush1.bf16.msra.mxu0 0
    %6278 = vmatprep.subr.bf16.mxu0 0
    %6279 = vmatpush1.bf16.msra.mxu0 0
    %6280 = vmatprep.mubr.bf16.mxu0 0
    %6281 = vmatmul.mubr.bf16.gmra.mrb[0].mxu0 %v6070
    %v6282 = vpop.f32.mrb[0].mxu0
    %v6283 = vadd.f32 %v6108, %v6282
    %v6284 = vpop.f32.mrb[0].mxu0
    %v6285 = vadd.f32 %v6112, %v6284
    %v6286 = vpop.f32.mrb[0].mxu0
    %v6287 = vpop.f32.mrb[0].mxu0
    %6288 = vdwg.mxu0
    %6289 = vmatprep.subr.bf16.mxu0 0
    %6290 = vmatpush1.bf16.msra.mxu0 %v6202
    %6291 = vmatprep.subr.bf16.mxu0 0
    %6292 = vmatpush1.bf16.msra.mxu0 %v6205
    %6293 = vmatprep.subr.bf16.mxu0 0
    %6294 = vmatpush1.bf16.msra.mxu0 %v6208
    %6295 = vmatprep.subr.bf16.mxu0 0
    %6296 = vmatpush1.bf16.msra.mxu0 %v6211
    %6297 = vmatprep.subr.bf16.mxu0 0
    %6298 = vmatpush1.bf16.msra.mxu0 %v6214
    %6299 = vmatprep.subr.bf16.mxu0 0
    %6300 = vmatpush1.bf16.msra.mxu0 %v6217
    %6301 = vmatprep.subr.bf16.mxu0 0
    %6302 = vmatpush1.bf16.msra.mxu0 %v6220
    %6303 = vmatprep.subr.bf16.mxu0 0
    %6304 = vmatpush1.bf16.msra.mxu0 %v6223
    %6305 = vmatprep.subr.bf16.mxu0 0
    %6306 = vmatpush1.bf16.msra.mxu0 0
    %6307 = vmatprep.subr.bf16.mxu0 0
    %6308 = vmatpush1.bf16.msra.mxu0 0
    %6309 = vmatprep.subr.bf16.mxu0 0
    %6310 = vmatpush1.bf16.msra.mxu0 0
    %6311 = vmatprep.subr.bf16.mxu0 0
    %6312 = vmatpush1.bf16.msra.mxu0 0
    %6313 = vmatprep.subr.bf16.mxu0 0
    %6314 = vmatpush1.bf16.msra.mxu0 0
    %6315 = vmatprep.subr.bf16.mxu0 0
    %6316 = vmatpush1.bf16.msra.mxu0 0
    %6317 = vmatprep.subr.bf16.mxu0 0
    %6318 = vmatpush1.bf16.msra.mxu0 0
    %6319 = vmatprep.subr.bf16.mxu0 0
    %6320 = vmatpush1.bf16.msra.mxu0 0
    %6321 = vmatprep.mubr.bf16.mxu0 0
    %6322 = vmatmul.mubr.bf16.gmra.mrb[0].mxu0 %v6070
    %v6323 = vpop.f32.mrb[0].mxu0
    %v6324 = vadd.f32 %v6116, %v6323
    %v6325 = vpop.f32.mrb[0].mxu0
    %v6326 = vpop.f32.mrb[0].mxu0
    %v6327 = vpop.f32.mrb[0].mxu0
    %6328 = vdwg.mxu0
    %v6329 = vadd.f32 %v6024, %v6283
    %v6330 = vxor.u32 %v6329, 2147483648
    %v6331 = vmul.f32 %v6330, 1.442695
    %v6332 = vpow.pop %v6331
    %v6333 = vadd.f32 %v6332, 1.0
    %v6334 = vrcp.pop %v6333
    %v6335 = vmul.f32 1.0, %v6334
    %v6336 = vadd.f32 %v6026, %v6285
    %v6337 = vxor.u32 %v6336, 2147483648
    %v6338 = vmul.f32 %v6337, 1.442695
    %v6339 = vpow.pop %v6338
    %v6340 = vadd.f32 %v6339, 1.0
    %v6341 = vrcp.pop %v6340
    %v6342 = vmul.f32 1.0, %v6341
    %v6343 = vmul.f32 %v6335, %v6324
    %v6344 = vadd.f32 %v6065, %v6343
    %v6345 = vtanh.pop %v6344
    %v6346 = vsub.f32 1.0, %v6342
    %v6347 = vmul.f32 %v6346, %v6345
    %v6348 = vmul.f32 %v6342, %v5524
    %v6349 = vadd.f32 %v6347, %v6348
    %6350 = vst [vmem:[#allocation3 + $0x30] sm:$0xff] %v6349
    %v6351 = vld [vmem:[#allocation2 + $0xa8] sm:$0xff]
    %v6352 = vld [vmem:[#allocation2 + $0xb0] sm:$0xff]
    %v6353 = vld [vmem:[#allocation2 + $0xb8] sm:$0xff]
    %v6354 = vadd.f32 %v6351, %v293
    %v6355 = vadd.f32 %v6352, %v295
    %v6356 = vadd.f32 %v6353, %v334
    %v6357 = vld [vmem:[#allocation9] sm:$0xff]
    %v6358 = vld [vmem:[#allocation9 + $0x8] sm:$0xf]
    %v6359 = vld [vmem:[#allocation9 + $0xc] sm:$0xff]
    %v6360 = vld [vmem:[#allocation9 + $0x14] sm:$0xf]
    %v6361 = vld [vmem:[#allocation9 + $0x18] sm:$0xff]
    %v6362 = vld [vmem:[#allocation9 + $0x20] sm:$0xf]
    %v6363 = vld [vmem:[#allocation9 + $0x24] sm:$0xff]
    %v6364 = vld [vmem:[#allocation9 + $0x2c] sm:$0xf]
    %v6365 = vld [vmem:[#allocation9 + $0x30] sm:$0xff]
    %v6366 = vld [vmem:[#allocation9 + $0x38] sm:$0xf]
    %v6367 = vld [vmem:[#allocation9 + $0x3c] sm:$0xff]
    %v6368 = vld [vmem:[#allocation9 + $0x44] sm:$0xf]
    %v6369 = vld [vmem:[#allocation9 + $0x48] sm:$0xff]
    %v6370 = vld [vmem:[#allocation9 + $0x50] sm:$0xf]
    %v6371 = vld [vmem:[#allocation9 + $0x54] sm:$0xff]
    %v6372 = vld [vmem:[#allocation9 + $0x5c] sm:$0xf]
    %v6373 = vld [vmem:[#allocation9 + $0x60] sm:$0xff]
    %v6374 = vld [vmem:[#allocation9 + $0x68] sm:$0xf]
    %v6375 = vld [vmem:[#allocation9 + $0x6c] sm:$0xff]
    %v6376 = vld [vmem:[#allocation9 + $0x74] sm:$0xf]
    %v6377 = vld [vmem:[#allocation9 + $0x78] sm:$0xff]
    %v6378 = vld [vmem:[#allocation9 + $0x80] sm:$0xf]
    %v6379 = vld [vmem:[#allocation9 + $0x84] sm:$0xff]
    %v6380 = vld [vmem:[#allocation9 + $0x8c] sm:$0xf]
    %v6381 = vld [vmem:[#allocation9 + $0x90] sm:$0xff]
    %v6382 = vld [vmem:[#allocation9 + $0x98] sm:$0xf]
    %v6383 = vld [vmem:[#allocation9 + $0x9c] sm:$0xff]
    %v6384 = vld [vmem:[#allocation9 + $0xa4] sm:$0xf]
    %v6385 = vld [vmem:[#allocation9 + $0xa8] sm:$0xff]
    %v6386 = vld [vmem:[#allocation9 + $0xb0] sm:$0xf]
    %v6387 = vld [vmem:[#allocation9 + $0xb4] sm:$0xff]
    %v6388 = vld [vmem:[#allocation9 + $0xbc] sm:$0xf]
    %v6389 = vld [vmem:[%s8] sm:$0x7]
    %v6391 = vlaneseq
    %v6392 = vshrl.u32 %v6391, 7
    %v6393 = vsub.s32 0, %v6392
    %v6394 = vrot.slane %v6389, %v6393
    %v6395 = vlaneseq
    %v6396 = vshrl.u32 %v6395, 7
    %v6397 = vsub.s32 1, %v6396
    %v6398 = vrot.slane %v6389, %v6397
    %v6399 = vlaneseq
    %v6400 = vshrl.u32 %v6399, 7
    %v6401 = vsub.s32 2, %v6400
    %v6402 = vrot.slane %v6389, %v6401
    %v6438 = vunpack.c.l.b16 %v6357
    %v6439 = vunpack.c.h.b16 %v6357
    %v6440 = vunpack.c.l.b16 %v6358
    %v6441 = vunpack.c.l.b16 %v6359
    %v6442 = vunpack.c.h.b16 %v6359
    %v6443 = vunpack.c.l.b16 %v6360
    %v6444 = vunpack.c.l.b16 %v6361
    %v6445 = vunpack.c.h.b16 %v6361
    %v6446 = vunpack.c.l.b16 %v6362
    %v6447 = vunpack.c.l.b16 %v6363
    %v6448 = vunpack.c.h.b16 %v6363
    %v6449 = vunpack.c.l.b16 %v6364
    %v6450 = vunpack.c.l.b16 %v6365
    %v6451 = vunpack.c.h.b16 %v6365
    %v6452 = vunpack.c.l.b16 %v6366
    %v6453 = vunpack.c.l.b16 %v6367
    %v6454 = vunpack.c.h.b16 %v6367
    %v6455 = vunpack.c.l.b16 %v6368
    %v6456 = vunpack.c.l.b16 %v6369
    %v6457 = vunpack.c.h.b16 %v6369
    %v6458 = vunpack.c.l.b16 %v6370
    %v6459 = vunpack.c.l.b16 %v6371
    %v6460 = vunpack.c.h.b16 %v6371
    %v6461 = vunpack.c.l.b16 %v6372
    %v6462 = vunpack.c.l.b16 %v6373
    %v6463 = vunpack.c.h.b16 %v6373
    %v6464 = vunpack.c.l.b16 %v6374
    %v6465 = vunpack.c.l.b16 %v6375
    %v6466 = vunpack.c.h.b16 %v6375
    %v6467 = vunpack.c.l.b16 %v6376
    %v6468 = vunpack.c.l.b16 %v6377
    %v6469 = vunpack.c.h.b16 %v6377
    %v6470 = vunpack.c.l.b16 %v6378
    %v6471 = vunpack.c.l.b16 %v6379
    %v6472 = vunpack.c.h.b16 %v6379
    %v6473 = vunpack.c.l.b16 %v6380
    %v6474 = vunpack.c.l.b16 %v6381
    %v6475 = vunpack.c.h.b16 %v6381
    %v6476 = vunpack.c.l.b16 %v6382
    %v6477 = vunpack.c.l.b16 %v6383
    %v6478 = vunpack.c.h.b16 %v6383
    %v6479 = vunpack.c.l.b16 %v6384
    %v6480 = vunpack.c.l.b16 %v6385
    %v6481 = vunpack.c.h.b16 %v6385
    %v6482 = vunpack.c.l.b16 %v6386
    %v6483 = vunpack.c.l.b16 %v6387
    %v6484 = vunpack.c.h.b16 %v6387
    %v6485 = vunpack.c.l.b16 %v6388
    %v6486 = vpack.c.b16 %v6441, %v6438
    %v6487 = vpack.c.b16 %v6442, %v6439
    %v6488 = vpack.c.b16 %v6443, %v6440
    %v6489 = vpack.c.b16 %v6447, %v6444
    %v6490 = vpack.c.b16 %v6448, %v6445
    %v6491 = vpack.c.b16 %v6449, %v6446
    %v6492 = vpack.c.b16 %v6453, %v6450
    %v6493 = vpack.c.b16 %v6454, %v6451
    %v6494 = vpack.c.b16 %v6455, %v6452
    %v6495 = vpack.c.b16 %v6459, %v6456
    %v6496 = vpack.c.b16 %v6460, %v6457
    %v6497 = vpack.c.b16 %v6461, %v6458
    %v6498 = vpack.c.b16 %v6465, %v6462
    %v6499 = vpack.c.b16 %v6466, %v6463
    %v6500 = vpack.c.b16 %v6467, %v6464
    %v6501 = vpack.c.b16 %v6471, %v6468
    %v6502 = vpack.c.b16 %v6472, %v6469
    %v6503 = vpack.c.b16 %v6473, %v6470
    %v6504 = vpack.c.b16 %v6477, %v6474
    %v6505 = vpack.c.b16 %v6478, %v6475
    %v6506 = vpack.c.b16 %v6479, %v6476
    %v6507 = vpack.c.b16 %v6483, %v6480
    %v6508 = vpack.c.b16 %v6484, %v6481
    %v6509 = vpack.c.b16 %v6485, %v6482
    %6534 = vmatprep.subr.bf16.mxu0 %v6487
    %6535 = vmatpush1.bf16.msra.mxu0 %v6486
    %6536 = vmatprep.subr.bf16.mxu0 %v6490
    %6537 = vmatpush1.bf16.msra.mxu0 %v6489
    %6538 = vmatprep.subr.bf16.mxu0 %v6493
    %6539 = vmatpush1.bf16.msra.mxu0 %v6492
    %6540 = vmatprep.subr.bf16.mxu0 %v6496
    %6541 = vmatpush1.bf16.msra.mxu0 %v6495
    %6542 = vmatprep.subr.bf16.mxu0 %v6499
    %6543 = vmatpush1.bf16.msra.mxu0 %v6498
    %6544 = vmatprep.subr.bf16.mxu0 %v6502
    %6545 = vmatpush1.bf16.msra.mxu0 %v6501
    %6546 = vmatprep.subr.bf16.mxu0 %v6505
    %6547 = vmatpush1.bf16.msra.mxu0 %v6504
    %6548 = vmatprep.subr.bf16.mxu0 %v6508
    %6549 = vmatpush1.bf16.msra.mxu0 %v6507
    %6550 = vmatprep.subr.bf16.mxu0 0
    %6551 = vmatpush1.bf16.msra.mxu0 0
    %6552 = vmatprep.subr.bf16.mxu0 0
    %6553 = vmatpush1.bf16.msra.mxu0 0
    %6554 = vmatprep.subr.bf16.mxu0 0
    %6555 = vmatpush1.bf16.msra.mxu0 0
    %6556 = vmatprep.subr.bf16.mxu0 0
    %6557 = vmatpush1.bf16.msra.mxu0 0
    %6558 = vmatprep.subr.bf16.mxu0 0
    %6559 = vmatpush1.bf16.msra.mxu0 0
    %6560 = vmatprep.subr.bf16.mxu0 0
    %6561 = vmatpush1.bf16.msra.mxu0 0
    %6562 = vmatprep.subr.bf16.mxu0 0
    %6563 = vmatpush1.bf16.msra.mxu0 0
    %6564 = vmatprep.subr.bf16.mxu0 0
    %6565 = vmatpush1.bf16.msra.mxu0 0
    %6566 = vmatprep.mubr.bf16.mxu0 0
    %6567 = vmatmul.mubr.bf16.gmra.mrb[0].mxu0 %v5811
    %v6568 = vpop.f32.mrb[0].mxu0
    %v6569 = vadd.f32 %v6394, %v6568
    %v6570 = vpop.f32.mrb[0].mxu0
    %v6571 = vadd.f32 %v6398, %v6570
    %v6572 = vpop.f32.mrb[0].mxu0
    %v6573 = vpop.f32.mrb[0].mxu0
    %6574 = vdwg.mxu0
    %6575 = vmatprep.subr.bf16.mxu0 0
    %6576 = vmatpush1.bf16.msra.mxu0 %v6488
    %6577 = vmatprep.subr.bf16.mxu0 0
    %6578 = vmatpush1.bf16.msra.mxu0 %v6491
    %6579 = vmatprep.subr.bf16.mxu0 0
    %6580 = vmatpush1.bf16.msra.mxu0 %v6494
    %6581 = vmatprep.subr.bf16.mxu0 0
    %6582 = vmatpush1.bf16.msra.mxu0 %v6497
    %6583 = vmatprep.subr.bf16.mxu0 0
    %6584 = vmatpush1.bf16.msra.mxu0 %v6500
    %6585 = vmatprep.subr.bf16.mxu0 0
    %6586 = vmatpush1.bf16.msra.mxu0 %v6503
    %6587 = vmatprep.subr.bf16.mxu0 0
    %6588 = vmatpush1.bf16.msra.mxu0 %v6506
    %6589 = vmatprep.subr.bf16.mxu0 0
    %6590 = vmatpush1.bf16.msra.mxu0 %v6509
    %6591 = vmatprep.subr.bf16.mxu0 0
    %6592 = vmatpush1.bf16.msra.mxu0 0
    %6593 = vmatprep.subr.bf16.mxu0 0
    %6594 = vmatpush1.bf16.msra.mxu0 0
    %6595 = vmatprep.subr.bf16.mxu0 0
    %6596 = vmatpush1.bf16.msra.mxu0 0
    %6597 = vmatprep.subr.bf16.mxu0 0
    %6598 = vmatpush1.bf16.msra.mxu0 0
    %6599 = vmatprep.subr.bf16.mxu0 0
    %6600 = vmatpush1.bf16.msra.mxu0 0
    %6601 = vmatprep.subr.bf16.mxu0 0
    %6602 = vmatpush1.bf16.msra.mxu0 0
    %6603 = vmatprep.subr.bf16.mxu0 0
    %6604 = vmatpush1.bf16.msra.mxu0 0
    %6605 = vmatprep.subr.bf16.mxu0 0
    %6606 = vmatpush1.bf16.msra.mxu0 0
    %6607 = vmatprep.mubr.bf16.mxu0 0
    %6608 = vmatmul.mubr.bf16.gmra.mrb[0].mxu0 %v5811
    %v6609 = vpop.f32.mrb[0].mxu0
    %v6610 = vadd.f32 %v6402, %v6609
    %v6611 = vpop.f32.mrb[0].mxu0
    %v6612 = vpop.f32.mrb[0].mxu0
    %v6613 = vpop.f32.mrb[0].mxu0
    %6614 = vdwg.mxu0
    %v6615 = vadd.f32 %v6354, %v6569
    %v6616 = vxor.u32 %v6615, 2147483648
    %v6617 = vmul.f32 %v6616, 1.442695
    %v6618 = vpow.pop %v6617
    %v6619 = vadd.f32 %v6618, 1.0
    %v6620 = vrcp.pop %v6619
    %v6621 = vmul.f32 1.0, %v6620
    %v6622 = vadd.f32 %v6355, %v6571
    %v6623 = vxor.u32 %v6622, 2147483648
    %v6624 = vmul.f32 %v6623, 1.442695
    %v6625 = vpow.pop %v6624
    %v6626 = vadd.f32 %v6625, 1.0
    %v6627 = vrcp.pop %v6626
    %v6628 = vmul.f32 1.0, %v6627
    %v6629 = vmul.f32 %v6621, %v6610
    %v6630 = vadd.f32 %v6356, %v6629
    %v6631 = vtanh.pop %v6630
    %v6632 = vsub.f32 1.0, %v6628
    %v6633 = vmul.f32 %v6632, %v6631
    %v6634 = vmul.f32 %v6628, %v5810
    %v6635 = vadd.f32 %v6633, %v6634
    %v6636 = vpack.c.bf16 %v6635, %v6635
    %v6637 = vld [vmem:[#allocation11] sm:$0xff]
    %v6638 = vld [vmem:[#allocation11 + $0x8] sm:$0xf]
    %v6639 = vld [vmem:[#allocation11 + $0xc] sm:$0xff]
    %v6640 = vld [vmem:[#allocation11 + $0x14] sm:$0xf]
    %v6641 = vld [vmem:[#allocation11 + $0x18] sm:$0xff]
    %v6642 = vld [vmem:[#allocation11 + $0x20] sm:$0xf]
    %v6643 = vld [vmem:[#allocation11 + $0x24] sm:$0xff]
    %v6644 = vld [vmem:[#allocation11 + $0x2c] sm:$0xf]
    %v6645 = vld [vmem:[#allocation11 + $0x30] sm:$0xff]
    %v6646 = vld [vmem:[#allocation11 + $0x38] sm:$0xf]
    %v6647 = vld [vmem:[#allocation11 + $0x3c] sm:$0xff]
    %v6648 = vld [vmem:[#allocation11 + $0x44] sm:$0xf]
    %v6649 = vld [vmem:[#allocation11 + $0x48] sm:$0xff]
    %v6650 = vld [vmem:[#allocation11 + $0x50] sm:$0xf]
    %v6651 = vld [vmem:[#allocation11 + $0x54] sm:$0xff]
    %v6652 = vld [vmem:[#allocation11 + $0x5c] sm:$0xf]
    %v6653 = vld [vmem:[#allocation11 + $0x60] sm:$0xff]
    %v6654 = vld [vmem:[#allocation11 + $0x68] sm:$0xf]
    %v6655 = vld [vmem:[#allocation11 + $0x6c] sm:$0xff]
    %v6656 = vld [vmem:[#allocation11 + $0x74] sm:$0xf]
    %v6657 = vld [vmem:[#allocation11 + $0x78] sm:$0xff]
    %v6658 = vld [vmem:[#allocation11 + $0x80] sm:$0xf]
    %v6659 = vld [vmem:[#allocation11 + $0x84] sm:$0xff]
    %v6660 = vld [vmem:[#allocation11 + $0x8c] sm:$0xf]
    %v6661 = vld [vmem:[#allocation11 + $0x90] sm:$0xff]
    %v6662 = vld [vmem:[#allocation11 + $0x98] sm:$0xf]
    %v6663 = vld [vmem:[#allocation11 + $0x9c] sm:$0xff]
    %v6664 = vld [vmem:[#allocation11 + $0xa4] sm:$0xf]
    %v6665 = vld [vmem:[#allocation11 + $0xa8] sm:$0xff]
    %v6666 = vld [vmem:[#allocation11 + $0xb0] sm:$0xf]
    %v6667 = vld [vmem:[#allocation11 + $0xb4] sm:$0xff]
    %v6668 = vld [vmem:[#allocation11 + $0xbc] sm:$0xf]
    %v6669 = vld [vmem:[%s10] sm:$0x7]
    %v6671 = vlaneseq
    %v6672 = vshrl.u32 %v6671, 7
    %v6673 = vsub.s32 0, %v6672
    %v6674 = vrot.slane %v6669, %v6673
    %v6675 = vlaneseq
    %v6676 = vshrl.u32 %v6675, 7
    %v6677 = vsub.s32 1, %v6676
    %v6678 = vrot.slane %v6669, %v6677
    %v6679 = vlaneseq
    %v6680 = vshrl.u32 %v6679, 7
    %v6681 = vsub.s32 2, %v6680
    %v6682 = vrot.slane %v6669, %v6681
    %v6718 = vunpack.c.l.b16 %v6637
    %v6719 = vunpack.c.h.b16 %v6637
    %v6720 = vunpack.c.l.b16 %v6638
    %v6721 = vunpack.c.l.b16 %v6639
    %v6722 = vunpack.c.h.b16 %v6639
    %v6723 = vunpack.c.l.b16 %v6640
    %v6724 = vunpack.c.l.b16 %v6641
    %v6725 = vunpack.c.h.b16 %v6641
    %v6726 = vunpack.c.l.b16 %v6642
    %v6727 = vunpack.c.l.b16 %v6643
    %v6728 = vunpack.c.h.b16 %v6643
    %v6729 = vunpack.c.l.b16 %v6644
    %v6730 = vunpack.c.l.b16 %v6645
    %v6731 = vunpack.c.h.b16 %v6645
    %v6732 = vunpack.c.l.b16 %v6646
    %v6733 = vunpack.c.l.b16 %v6647
    %v6734 = vunpack.c.h.b16 %v6647
    %v6735 = vunpack.c.l.b16 %v6648
    %v6736 = vunpack.c.l.b16 %v6649
    %v6737 = vunpack.c.h.b16 %v6649
    %v6738 = vunpack.c.l.b16 %v6650
    %v6739 = vunpack.c.l.b16 %v6651
    %v6740 = vunpack.c.h.b16 %v6651
    %v6741 = vunpack.c.l.b16 %v6652
    %v6742 = vunpack.c.l.b16 %v6653
    %v6743 = vunpack.c.h.b16 %v6653
    %v6744 = vunpack.c.l.b16 %v6654
    %v6745 = vunpack.c.l.b16 %v6655
    %v6746 = vunpack.c.h.b16 %v6655
    %v6747 = vunpack.c.l.b16 %v6656
    %v6748 = vunpack.c.l.b16 %v6657
    %v6749 = vunpack.c.h.b16 %v6657
    %v6750 = vunpack.c.l.b16 %v6658
    %v6751 = vunpack.c.l.b16 %v6659
    %v6752 = vunpack.c.h.b16 %v6659
    %v6753 = vunpack.c.l.b16 %v6660
    %v6754 = vunpack.c.l.b16 %v6661
    %v6755 = vunpack.c.h.b16 %v6661
    %v6756 = vunpack.c.l.b16 %v6662
    %v6757 = vunpack.c.l.b16 %v6663
    %v6758 = vunpack.c.h.b16 %v6663
    %v6759 = vunpack.c.l.b16 %v6664
    %v6760 = vunpack.c.l.b16 %v6665
    %v6761 = vunpack.c.h.b16 %v6665
    %v6762 = vunpack.c.l.b16 %v6666
    %v6763 = vunpack.c.l.b16 %v6667
    %v6764 = vunpack.c.h.b16 %v6667
    %v6765 = vunpack.c.l.b16 %v6668
    %v6766 = vpack.c.b16 %v6721, %v6718
    %v6767 = vpack.c.b16 %v6722, %v6719
    %v6768 = vpack.c.b16 %v6723, %v6720
    %v6769 = vpack.c.b16 %v6727, %v6724
    %v6770 = vpack.c.b16 %v6728, %v6725
    %v6771 = vpack.c.b16 %v6729, %v6726
    %v6772 = vpack.c.b16 %v6733, %v6730
    %v6773 = vpack.c.b16 %v6734, %v6731
    %v6774 = vpack.c.b16 %v6735, %v6732
    %v6775 = vpack.c.b16 %v6739, %v6736
    %v6776 = vpack.c.b16 %v6740, %v6737
    %v6777 = vpack.c.b16 %v6741, %v6738
    %v6778 = vpack.c.b16 %v6745, %v6742
    %v6779 = vpack.c.b16 %v6746, %v6743
    %v6780 = vpack.c.b16 %v6747, %v6744
    %v6781 = vpack.c.b16 %v6751, %v6748
    %v6782 = vpack.c.b16 %v6752, %v6749
    %v6783 = vpack.c.b16 %v6753, %v6750
    %v6784 = vpack.c.b16 %v6757, %v6754
    %v6785 = vpack.c.b16 %v6758, %v6755
    %v6786 = vpack.c.b16 %v6759, %v6756
    %v6787 = vpack.c.b16 %v6763, %v6760
    %v6788 = vpack.c.b16 %v6764, %v6761
    %v6789 = vpack.c.b16 %v6765, %v6762
    %6814 = vmatprep.subr.bf16.mxu0 %v6767
    %6815 = vmatpush1.bf16.msra.mxu0 %v6766
    %6816 = vmatprep.subr.bf16.mxu0 %v6770
    %6817 = vmatpush1.bf16.msra.mxu0 %v6769
    %6818 = vmatprep.subr.bf16.mxu0 %v6773
    %6819 = vmatpush1.bf16.msra.mxu0 %v6772
    %6820 = vmatprep.subr.bf16.mxu0 %v6776
    %6821 = vmatpush1.bf16.msra.mxu0 %v6775
    %6822 = vmatprep.subr.bf16.mxu0 %v6779
    %6823 = vmatpush1.bf16.msra.mxu0 %v6778
    %6824 = vmatprep.subr.bf16.mxu0 %v6782
    %6825 = vmatpush1.bf16.msra.mxu0 %v6781
    %6826 = vmatprep.subr.bf16.mxu0 %v6785
    %6827 = vmatpush1.bf16.msra.mxu0 %v6784
    %6828 = vmatprep.subr.bf16.mxu0 %v6788
    %6829 = vmatpush1.bf16.msra.mxu0 %v6787
    %6830 = vmatprep.subr.bf16.mxu0 0
    %6831 = vmatpush1.bf16.msra.mxu0 0
    %6832 = vmatprep.subr.bf16.mxu0 0
    %6833 = vmatpush1.bf16.msra.mxu0 0
    %6834 = vmatprep.subr.bf16.mxu0 0
    %6835 = vmatpush1.bf16.msra.mxu0 0
    %6836 = vmatprep.subr.bf16.mxu0 0
    %6837 = vmatpush1.bf16.msra.mxu0 0
    %6838 = vmatprep.subr.bf16.mxu0 0
    %6839 = vmatpush1.bf16.msra.mxu0 0
    %6840 = vmatprep.subr.bf16.mxu0 0
    %6841 = vmatpush1.bf16.msra.mxu0 0
    %6842 = vmatprep.subr.bf16.mxu0 0
    %6843 = vmatpush1.bf16.msra.mxu0 0
    %6844 = vmatprep.subr.bf16.mxu0 0
    %6845 = vmatpush1.bf16.msra.mxu0 0
    %6846 = vmatprep.mubr.bf16.mxu0 0
    %6847 = vmatmul.mubr.bf16.gmra.mrb[0].mxu0 %v6636
    %v6848 = vpop.f32.mrb[0].mxu0
    %v6849 = vadd.f32 %v6674, %v6848
    %v6850 = vpop.f32.mrb[0].mxu0
    %v6851 = vadd.f32 %v6678, %v6850
    %v6852 = vpop.f32.mrb[0].mxu0
    %v6853 = vpop.f32.mrb[0].mxu0
    %6854 = vdwg.mxu0
    %6855 = vmatprep.subr.bf16.mxu0 0
    %6856 = vmatpush1.bf16.msra.mxu0 %v6768
    %6857 = vmatprep.subr.bf16.mxu0 0
    %6858 = vmatpush1.bf16.msra.mxu0 %v6771
    %6859 = vmatprep.subr.bf16.mxu0 0
    %6860 = vmatpush1.bf16.msra.mxu0 %v6774
    %6861 = vmatprep.subr.bf16.mxu0 0
    %6862 = vmatpush1.bf16.msra.mxu0 %v6777
    %6863 = vmatprep.subr.bf16.mxu0 0
    %6864 = vmatpush1.bf16.msra.mxu0 %v6780
    %6865 = vmatprep.subr.bf16.mxu0 0
    %6866 = vmatpush1.bf16.msra.mxu0 %v6783
    %6867 = vmatprep.subr.bf16.mxu0 0
    %6868 = vmatpush1.bf16.msra.mxu0 %v6786
    %6869 = vmatprep.subr.bf16.mxu0 0
    %6870 = vmatpush1.bf16.msra.mxu0 %v6789
    %6871 = vmatprep.subr.bf16.mxu0 0
    %6872 = vmatpush1.bf16.msra.mxu0 0
    %6873 = vmatprep.subr.bf16.mxu0 0
    %6874 = vmatpush1.bf16.msra.mxu0 0
    %6875 = vmatprep.subr.bf16.mxu0 0
    %6876 = vmatpush1.bf16.msra.mxu0 0
    %6877 = vmatprep.subr.bf16.mxu0 0
    %6878 = vmatpush1.bf16.msra.mxu0 0
    %6879 = vmatprep.subr.bf16.mxu0 0
    %6880 = vmatpush1.bf16.msra.mxu0 0
    %6881 = vmatprep.subr.bf16.mxu0 0
    %6882 = vmatpush1.bf16.msra.mxu0 0
    %6883 = vmatprep.subr.bf16.mxu0 0
    %6884 = vmatpush1.bf16.msra.mxu0 0
    %6885 = vmatprep.subr.bf16.mxu0 0
    %6886 = vmatpush1.bf16.msra.mxu0 0
    %6887 = vmatprep.mubr.bf16.mxu0 0
    %6888 = vmatmul.mubr.bf16.gmra.mrb[0].mxu0 %v6636
    %v6889 = vpop.f32.mrb[0].mxu0
    %v6890 = vadd.f32 %v6682, %v6889
    %v6891 = vpop.f32.mrb[0].mxu0
    %v6892 = vpop.f32.mrb[0].mxu0
    %v6893 = vpop.f32.mrb[0].mxu0
    %6894 = vdwg.mxu0
    %v6895 = vpack.c.bf16 %v6349, %v6349
    %v6896 = vld [vmem:[#allocation12] sm:$0xff]
    %v6897 = vld [vmem:[#allocation12 + $0x8] sm:$0xf]
    %v6898 = vld [vmem:[#allocation12 + $0xc] sm:$0xff]
    %v6899 = vld [vmem:[#allocation12 + $0x14] sm:$0xf]
    %v6900 = vld [vmem:[#allocation12 + $0x18] sm:$0xff]
    %v6901 = vld [vmem:[#allocation12 + $0x20] sm:$0xf]
    %v6902 = vld [vmem:[#allocation12 + $0x24] sm:$0xff]
    %v6903 = vld [vmem:[#allocation12 + $0x2c] sm:$0xf]
    %v6904 = vld [vmem:[#allocation12 + $0x30] sm:$0xff]
    %v6905 = vld [vmem:[#allocation12 + $0x38] sm:$0xf]
    %v6906 = vld [vmem:[#allocation12 + $0x3c] sm:$0xff]
    %v6907 = vld [vmem:[#allocation12 + $0x44] sm:$0xf]
    %v6908 = vld [vmem:[#allocation12 + $0x48] sm:$0xff]
    %v6909 = vld [vmem:[#allocation12 + $0x50] sm:$0xf]
    %v6910 = vld [vmem:[#allocation12 + $0x54] sm:$0xff]
    %v6911 = vld [vmem:[#allocation12 + $0x5c] sm:$0xf]
    %v6912 = vld [vmem:[#allocation12 + $0x60] sm:$0xff]
    %v6913 = vld [vmem:[#allocation12 + $0x68] sm:$0xf]
    %v6914 = vld [vmem:[#allocation12 + $0x6c] sm:$0xff]
    %v6915 = vld [vmem:[#allocation12 + $0x74] sm:$0xf]
    %v6916 = vld [vmem:[#allocation12 + $0x78] sm:$0xff]
    %v6917 = vld [vmem:[#allocation12 + $0x80] sm:$0xf]
    %v6918 = vld [vmem:[#allocation12 + $0x84] sm:$0xff]
    %v6919 = vld [vmem:[#allocation12 + $0x8c] sm:$0xf]
    %v6920 = vld [vmem:[#allocation12 + $0x90] sm:$0xff]
    %v6921 = vld [vmem:[#allocation12 + $0x98] sm:$0xf]
    %v6922 = vld [vmem:[#allocation12 + $0x9c] sm:$0xff]
    %v6923 = vld [vmem:[#allocation12 + $0xa4] sm:$0xf]
    %v6924 = vld [vmem:[#allocation12 + $0xa8] sm:$0xff]
    %v6925 = vld [vmem:[#allocation12 + $0xb0] sm:$0xf]
    %v6926 = vld [vmem:[#allocation12 + $0xb4] sm:$0xff]
    %v6927 = vld [vmem:[#allocation12 + $0xbc] sm:$0xf]
    %v6928 = vld [vmem:[%s12] sm:$0x7]
    %v6930 = vlaneseq
    %v6931 = vshrl.u32 %v6930, 7
    %v6932 = vsub.s32 0, %v6931
    %v6933 = vrot.slane %v6928, %v6932
    %v6934 = vlaneseq
    %v6935 = vshrl.u32 %v6934, 7
    %v6936 = vsub.s32 1, %v6935
    %v6937 = vrot.slane %v6928, %v6936
    %v6938 = vlaneseq
    %v6939 = vshrl.u32 %v6938, 7
    %v6940 = vsub.s32 2, %v6939
    %v6941 = vrot.slane %v6928, %v6940
    %v6977 = vunpack.c.l.b16 %v6896
    %v6978 = vunpack.c.h.b16 %v6896
    %v6979 = vunpack.c.l.b16 %v6897
    %v6980 = vunpack.c.l.b16 %v6898
    %v6981 = vunpack.c.h.b16 %v6898
    %v6982 = vunpack.c.l.b16 %v6899
    %v6983 = vunpack.c.l.b16 %v6900
    %v6984 = vunpack.c.h.b16 %v6900
    %v6985 = vunpack.c.l.b16 %v6901
    %v6986 = vunpack.c.l.b16 %v6902
    %v6987 = vunpack.c.h.b16 %v6902
    %v6988 = vunpack.c.l.b16 %v6903
    %v6989 = vunpack.c.l.b16 %v6904
    %v6990 = vunpack.c.h.b16 %v6904
    %v6991 = vunpack.c.l.b16 %v6905
    %v6992 = vunpack.c.l.b16 %v6906
    %v6993 = vunpack.c.h.b16 %v6906
    %v6994 = vunpack.c.l.b16 %v6907
    %v6995 = vunpack.c.l.b16 %v6908
    %v6996 = vunpack.c.h.b16 %v6908
    %v6997 = vunpack.c.l.b16 %v6909
    %v6998 = vunpack.c.l.b16 %v6910
    %v6999 = vunpack.c.h.b16 %v6910
    %v7000 = vunpack.c.l.b16 %v6911
    %v7001 = vunpack.c.l.b16 %v6912
    %v7002 = vunpack.c.h.b16 %v6912
    %v7003 = vunpack.c.l.b16 %v6913
    %v7004 = vunpack.c.l.b16 %v6914
    %v7005 = vunpack.c.h.b16 %v6914
    %v7006 = vunpack.c.l.b16 %v6915
    %v7007 = vunpack.c.l.b16 %v6916
    %v7008 = vunpack.c.h.b16 %v6916
    %v7009 = vunpack.c.l.b16 %v6917
    %v7010 = vunpack.c.l.b16 %v6918
    %v7011 = vunpack.c.h.b16 %v6918
    %v7012 = vunpack.c.l.b16 %v6919
    %v7013 = vunpack.c.l.b16 %v6920
    %v7014 = vunpack.c.h.b16 %v6920
    %v7015 = vunpack.c.l.b16 %v6921
    %v7016 = vunpack.c.l.b16 %v6922
    %v7017 = vunpack.c.h.b16 %v6922
    %v7018 = vunpack.c.l.b16 %v6923
    %v7019 = vunpack.c.l.b16 %v6924
    %v7020 = vunpack.c.h.b16 %v6924
    %v7021 = vunpack.c.l.b16 %v6925
    %v7022 = vunpack.c.l.b16 %v6926
    %v7023 = vunpack.c.h.b16 %v6926
    %v7024 = vunpack.c.l.b16 %v6927
    %v7025 = vpack.c.b16 %v6980, %v6977
    %v7026 = vpack.c.b16 %v6981, %v6978
    %v7027 = vpack.c.b16 %v6982, %v6979
    %v7028 = vpack.c.b16 %v6986, %v6983
    %v7029 = vpack.c.b16 %v6987, %v6984
    %v7030 = vpack.c.b16 %v6988, %v6985
    %v7031 = vpack.c.b16 %v6992, %v6989
    %v7032 = vpack.c.b16 %v6993, %v6990
    %v7033 = vpack.c.b16 %v6994, %v6991
    %v7034 = vpack.c.b16 %v6998, %v6995
    %v7035 = vpack.c.b16 %v6999, %v6996
    %v7036 = vpack.c.b16 %v7000, %v6997
    %v7037 = vpack.c.b16 %v7004, %v7001
    %v7038 = vpack.c.b16 %v7005, %v7002
    %v7039 = vpack.c.b16 %v7006, %v7003
    %v7040 = vpack.c.b16 %v7010, %v7007
    %v7041 = vpack.c.b16 %v7011, %v7008
    %v7042 = vpack.c.b16 %v7012, %v7009
    %v7043 = vpack.c.b16 %v7016, %v7013
    %v7044 = vpack.c.b16 %v7017, %v7014
    %v7045 = vpack.c.b16 %v7018, %v7015
    %v7046 = vpack.c.b16 %v7022, %v7019
    %v7047 = vpack.c.b16 %v7023, %v7020
    %v7048 = vpack.c.b16 %v7024, %v7021
    %7073 = vmatprep.subr.bf16.mxu0 %v7026
    %7074 = vmatpush1.bf16.msra.mxu0 %v7025
    %7075 = vmatprep.subr.bf16.mxu0 %v7029
    %7076 = vmatpush1.bf16.msra.mxu0 %v7028
    %7077 = vmatprep.subr.bf16.mxu0 %v7032
    %7078 = vmatpush1.bf16.msra.mxu0 %v7031
    %7079 = vmatprep.subr.bf16.mxu0 %v7035
    %7080 = vmatpush1.bf16.msra.mxu0 %v7034
    %7081 = vmatprep.subr.bf16.mxu0 %v7038
    %7082 = vmatpush1.bf16.msra.mxu0 %v7037
    %7083 = vmatprep.subr.bf16.mxu0 %v7041
    %7084 = vmatpush1.bf16.msra.mxu0 %v7040
    %7085 = vmatprep.subr.bf16.mxu0 %v7044
    %7086 = vmatpush1.bf16.msra.mxu0 %v7043
    %7087 = vmatprep.subr.bf16.mxu0 %v7047
    %7088 = vmatpush1.bf16.msra.mxu0 %v7046
    %7089 = vmatprep.subr.bf16.mxu0 0
    %7090 = vmatpush1.bf16.msra.mxu0 0
    %7091 = vmatprep.subr.bf16.mxu0 0
    %7092 = vmatpush1.bf16.msra.mxu0 0
    %7093 = vmatprep.subr.bf16.mxu0 0
    %7094 = vmatpush1.bf16.msra.mxu0 0
    %7095 = vmatprep.subr.bf16.mxu0 0
    %7096 = vmatpush1.bf16.msra.mxu0 0
    %7097 = vmatprep.subr.bf16.mxu0 0
    %7098 = vmatpush1.bf16.msra.mxu0 0
    %7099 = vmatprep.subr.bf16.mxu0 0
    %7100 = vmatpush1.bf16.msra.mxu0 0
    %7101 = vmatprep.subr.bf16.mxu0 0
    %7102 = vmatpush1.bf16.msra.mxu0 0
    %7103 = vmatprep.subr.bf16.mxu0 0
    %7104 = vmatpush1.bf16.msra.mxu0 0
    %7105 = vmatprep.mubr.bf16.mxu0 0
    %7106 = vmatmul.mubr.bf16.gmra.mrb[0].mxu0 %v6895
    %v7107 = vpop.f32.mrb[0].mxu0
    %v7108 = vadd.f32 %v6933, %v7107
    %v7109 = vpop.f32.mrb[0].mxu0
    %v7110 = vadd.f32 %v6937, %v7109
    %v7111 = vpop.f32.mrb[0].mxu0
    %v7112 = vpop.f32.mrb[0].mxu0
    %7113 = vdwg.mxu0
    %7114 = vmatprep.subr.bf16.mxu0 0
    %7115 = vmatpush1.bf16.msra.mxu0 %v7027
    %7116 = vmatprep.subr.bf16.mxu0 0
    %7117 = vmatpush1.bf16.msra.mxu0 %v7030
    %7118 = vmatprep.subr.bf16.mxu0 0
    %7119 = vmatpush1.bf16.msra.mxu0 %v7033
    %7120 = vmatprep.subr.bf16.mxu0 0
    %7121 = vmatpush1.bf16.msra.mxu0 %v7036
    %7122 = vmatprep.subr.bf16.mxu0 0
    %7123 = vmatpush1.bf16.msra.mxu0 %v7039
    %7124 = vmatprep.subr.bf16.mxu0 0
    %7125 = vmatpush1.bf16.msra.mxu0 %v7042
    %7126 = vmatprep.subr.bf16.mxu0 0
    %7127 = vmatpush1.bf16.msra.mxu0 %v7045
    %7128 = vmatprep.subr.bf16.mxu0 0
    %7129 = vmatpush1.bf16.msra.mxu0 %v7048
    %7130 = vmatprep.subr.bf16.mxu0 0
    %7131 = vmatpush1.bf16.msra.mxu0 0
    %7132 = vmatprep.subr.bf16.mxu0 0
    %7133 = vmatpush1.bf16.msra.mxu0 0
    %7134 = vmatprep.subr.bf16.mxu0 0
    %7135 = vmatpush1.bf16.msra.mxu0 0
    %7136 = vmatprep.subr.bf16.mxu0 0
    %7137 = vmatpush1.bf16.msra.mxu0 0
    %7138 = vmatprep.subr.bf16.mxu0 0
    %7139 = vmatpush1.bf16.msra.mxu0 0
    %7140 = vmatprep.subr.bf16.mxu0 0
    %7141 = vmatpush1.bf16.msra.mxu0 0
    %7142 = vmatprep.subr.bf16.mxu0 0
    %7143 = vmatpush1.bf16.msra.mxu0 0
    %7144 = vmatprep.subr.bf16.mxu0 0
    %7145 = vmatpush1.bf16.msra.mxu0 0
    %7146 = vmatprep.mubr.bf16.mxu0 0
    %7147 = vmatmul.mubr.bf16.gmra.mrb[0].mxu0 %v6895
    %v7148 = vpop.f32.mrb[0].mxu0
    %v7149 = vadd.f32 %v6941, %v7148
    %v7150 = vpop.f32.mrb[0].mxu0
    %v7151 = vpop.f32.mrb[0].mxu0
    %v7152 = vpop.f32.mrb[0].mxu0
    %7153 = vdwg.mxu0
    %v7154 = vadd.f32 %v6849, %v7108
    %v7155 = vxor.u32 %v7154, 2147483648
    %v7156 = vmul.f32 %v7155, 1.442695
    %v7157 = vpow.pop %v7156
    %v7158 = vadd.f32 %v7157, 1.0
    %v7159 = vrcp.pop %v7158
    %v7160 = vmul.f32 1.0, %v7159
    %v7161 = vadd.f32 %v6851, %v7110
    %v7162 = vxor.u32 %v7161, 2147483648
    %v7163 = vmul.f32 %v7162, 1.442695
    %v7164 = vpow.pop %v7163
    %v7165 = vadd.f32 %v7164, 1.0
    %v7166 = vrcp.pop %v7165
    %v7167 = vmul.f32 1.0, %v7166
    %v7168 = vmul.f32 %v7160, %v7149
    %v7169 = vadd.f32 %v6890, %v7168
    %v7170 = vtanh.pop %v7169
    %v7171 = vsub.f32 1.0, %v7167
    %v7172 = vmul.f32 %v7171, %v7170
    %v7173 = vmul.f32 %v7167, %v6349
    %v7174 = vadd.f32 %v7172, %v7173
    %7175 = vst [vmem:[#allocation3 + $0x38] sm:$0xff] %v7174
    %v7176 = vld [vmem:[#allocation3] sm:$0xff]
    %v7177 = vld [vmem:[#allocation3 + $0x8] sm:$0xff]
    %v7178 = vld [vmem:[#allocation3 + $0x10] sm:$0xff]
    %v7179 = vld [vmem:[#allocation3 + $0x18] sm:$0xff]
    %v7180 = vld [vmem:[#allocation3 + $0x20] sm:$0xff]
    %v7181 = vld [vmem:[#allocation3 + $0x28] sm:$0xff]
    %v7182 = vld [vmem:[#allocation3 + $0x30] sm:$0xff]
    %v7183 = vld [vmem:[#allocation3 + $0x38] sm:$0xff]
    %v7184 = vpack.c.bf16 %v7177, %v7176
    %v7185 = vpack.c.bf16 %v7179, %v7178
    %v7186 = vpack.c.bf16 %v7181, %v7180
    %v7187 = vpack.c.bf16 %v7183, %v7182
    %v7188 = vld [vmem:[%s13] sm:$0xf]
    %v7189 = vld [vmem:[%s13 + $0x4] sm:$0xf]
    %v7190 = vld [vmem:[%s13 + $0x8] sm:$0xf]
    %v7191 = vld [vmem:[%s13 + $0xc] sm:$0xf]
    %v7192 = vld [vmem:[%s13 + $0x10] sm:$0xf]
    %v7193 = vld [vmem:[%s13 + $0x14] sm:$0xf]
    %v7194 = vld [vmem:[%s13 + $0x18] sm:$0xf]
    %v7195 = vld [vmem:[%s13 + $0x1c] sm:$0xf]
    %v7196 = vld [vmem:[%s13 + $0x20] sm:$0xf]
    %v7197 = vld [vmem:[%s13 + $0x24] sm:$0xf]
    %v7198 = vld [vmem:[%s13 + $0x28] sm:$0xf]
    %v7199 = vld [vmem:[%s13 + $0x2c] sm:$0xf]
    %v7200 = vld [vmem:[%s13 + $0x30] sm:$0xf]
    %v7201 = vld [vmem:[%s13 + $0x34] sm:$0xf]
    %v7202 = vld [vmem:[%s13 + $0x38] sm:$0xf]
    %v7203 = vld [vmem:[%s13 + $0x3c] sm:$0xf]
    %v7204 = vld [vmem:[%s14] sm:$0x1]
    %v7206 = vlaneseq
    %v7207 = vshrl.u32 %v7206, 7
    %v7208 = vsub.s32 0, %v7207
    %v7209 = vrot.slane %v7204, %v7208
    %v7227 = vunpack.c.l.b16 %v7188
    %v7228 = vunpack.c.l.b16 %v7189
    %v7229 = vunpack.c.l.b16 %v7190
    %v7230 = vunpack.c.l.b16 %v7191
    %v7231 = vunpack.c.l.b16 %v7192
    %v7232 = vunpack.c.l.b16 %v7193
    %v7233 = vunpack.c.l.b16 %v7194
    %v7234 = vunpack.c.l.b16 %v7195
    %v7235 = vunpack.c.l.b16 %v7196
    %v7236 = vunpack.c.l.b16 %v7197
    %v7237 = vunpack.c.l.b16 %v7198
    %v7238 = vunpack.c.l.b16 %v7199
    %v7239 = vunpack.c.l.b16 %v7200
    %v7240 = vunpack.c.l.b16 %v7201
    %v7241 = vunpack.c.l.b16 %v7202
    %v7242 = vunpack.c.l.b16 %v7203
    %v7243 = vpack.c.b16 %v7228, %v7227
    %v7244 = vpack.c.b16 %v7230, %v7229
    %v7245 = vpack.c.b16 %v7232, %v7231
    %v7246 = vpack.c.b16 %v7234, %v7233
    %v7247 = vpack.c.b16 %v7236, %v7235
    %v7248 = vpack.c.b16 %v7238, %v7237
    %v7249 = vpack.c.b16 %v7240, %v7239
    %v7250 = vpack.c.b16 %v7242, %v7241
    %7259 = vmatprep.subr.bf16.mxu0 0
    %7260 = vmatpush1.bf16.msra.mxu0 %v7243
    %7261 = vmatprep.subr.bf16.mxu0 0
    %7262 = vmatpush1.bf16.msra.mxu0 %v7244
    %7263 = vmatprep.subr.bf16.mxu0 0
    %7264 = vmatpush1.bf16.msra.mxu0 %v7245
    %7265 = vmatprep.subr.bf16.mxu0 0
    %7266 = vmatpush1.bf16.msra.mxu0 %v7246
    %7267 = vmatprep.subr.bf16.mxu0 0
    %7268 = vmatpush1.bf16.msra.mxu0 %v7247
    %7269 = vmatprep.subr.bf16.mxu0 0
    %7270 = vmatpush1.bf16.msra.mxu0 %v7248
    %7271 = vmatprep.subr.bf16.mxu0 0
    %7272 = vmatpush1.bf16.msra.mxu0 %v7249
    %7273 = vmatprep.subr.bf16.mxu0 0
    %7274 = vmatpush1.bf16.msra.mxu0 %v7250
    %7275 = vmatprep.subr.bf16.mxu0 0
    %7276 = vmatpush1.bf16.msra.mxu0 0
    %7277 = vmatprep.subr.bf16.mxu0 0
    %7278 = vmatpush1.bf16.msra.mxu0 0
    %7279 = vmatprep.subr.bf16.mxu0 0
    %7280 = vmatpush1.bf16.msra.mxu0 0
    %7281 = vmatprep.subr.bf16.mxu0 0
    %7282 = vmatpush1.bf16.msra.mxu0 0
    %7283 = vmatprep.subr.bf16.mxu0 0
    %7284 = vmatpush1.bf16.msra.mxu0 0
    %7285 = vmatprep.subr.bf16.mxu0 0
    %7286 = vmatpush1.bf16.msra.mxu0 0
    %7287 = vmatprep.subr.bf16.mxu0 0
    %7288 = vmatpush1.bf16.msra.mxu0 0
    %7289 = vmatprep.subr.bf16.mxu0 0
    %7290 = vmatpush1.bf16.msra.mxu0 0
    %7291 = vmatprep.mubr.bf16.mxu0 0
    %7292 = vmatmul.mubr.bf16.gmra.mrb[0].mxu0 %v7184
    %v7293 = vpop.f32.mrb[0].mxu0
    %v7294 = vadd.f32 %v7209, %v7293
    %v7295 = vpop.f32.mrb[0].mxu0
    %v7296 = vpop.f32.mrb[0].mxu0
    %v7297 = vadd.f32 %v7209, %v7296
    %v7298 = vpop.f32.mrb[0].mxu0
    %7299 = vmatprep.mubr.bf16.mxu0 0
    %7300 = vmatmul.mubr.bf16.gmra.mrb[0].mxu0 %v7185
    %v7301 = vpop.f32.mrb[0].mxu0
    %v7302 = vadd.f32 %v7209, %v7301
    %v7303 = vpop.f32.mrb[0].mxu0
    %v7304 = vpop.f32.mrb[0].mxu0
    %v7305 = vadd.f32 %v7209, %v7304
    %v7306 = vpop.f32.mrb[0].mxu0
    %7307 = vmatprep.mubr.bf16.mxu0 0
    %7308 = vmatmul.mubr.bf16.gmra.mrb[0].mxu0 %v7186
    %v7309 = vpop.f32.mrb[0].mxu0
    %v7310 = vadd.f32 %v7209, %v7309
    %v7311 = vpop.f32.mrb[0].mxu0
    %v7312 = vpop.f32.mrb[0].mxu0
    %v7313 = vadd.f32 %v7209, %v7312
    %v7314 = vpop.f32.mrb[0].mxu0
    %7315 = vmatprep.mubr.bf16.mxu0 0
    %7316 = vmatmul.mubr.bf16.gmra.mrb[0].mxu0 %v7187
    %v7317 = vpop.f32.mrb[0].mxu0
    %v7318 = vadd.f32 %v7209, %v7317
    %v7319 = vpop.f32.mrb[0].mxu0
    %v7320 = vpop.f32.mrb[0].mxu0
    %v7321 = vadd.f32 %v7209, %v7320
    %v7322 = vpop.f32.mrb[0].mxu0
    %7323 = vdwg.mxu0
    %v7324 = vmax.f32 %v7294, 0.0
    %v7325 = vmax.f32 %v7297, 0.0
    %v7326 = vmax.f32 %v7302, 0.0
    %v7327 = vmax.f32 %v7305, 0.0
    %v7328 = vmax.f32 %v7310, 0.0
    %v7329 = vmax.f32 %v7313, 0.0
    %v7330 = vmax.f32 %v7318, 0.0
    %v7331 = vmax.f32 %v7321, 0.0
    %v7332 = vpack.c.bf16 %v7325, %v7324
    %v7333 = vpack.c.bf16 %v7327, %v7326
    %v7334 = vpack.c.bf16 %v7329, %v7328
    %v7335 = vpack.c.bf16 %v7331, %v7330
    %v7336 = vld [vmem:[%s15] sm:$0xf]
    %v7337 = vld [vmem:[%s15 + $0x4] sm:$0xf]
    %v7338 = vld [vmem:[%s15 + $0x8] sm:$0xf]
    %v7339 = vld [vmem:[%s15 + $0xc] sm:$0xf]
    %v7340 = vld [vmem:[%s15 + $0x10] sm:$0xf]
    %v7341 = vld [vmem:[%s15 + $0x14] sm:$0xf]
    %v7342 = vld [vmem:[%s15 + $0x18] sm:$0xf]
    %v7343 = vld [vmem:[%s15 + $0x1c] sm:$0xf]
    %v7344 = vld [vmem:[%s15 + $0x20] sm:$0xf]
    %v7345 = vld [vmem:[%s15 + $0x24] sm:$0xf]
    %v7346 = vld [vmem:[%s15 + $0x28] sm:$0xf]
    %v7347 = vld [vmem:[%s15 + $0x2c] sm:$0xf]
    %v7348 = vld [vmem:[%s15 + $0x30] sm:$0xf]
    %v7349 = vld [vmem:[%s15 + $0x34] sm:$0xf]
    %v7350 = vld [vmem:[%s15 + $0x38] sm:$0xf]
    %v7351 = vld [vmem:[%s15 + $0x3c] sm:$0xf]
    %v7352 = vld [vmem:[%s16] sm:$0x1]
    %v7354 = vlaneseq
    %v7355 = vshrl.u32 %v7354, 7
    %v7356 = vsub.s32 0, %v7355
    %v7357 = vrot.slane %v7352, %v7356
    %v7375 = vunpack.c.l.b16 %v7336
    %v7376 = vunpack.c.l.b16 %v7337
    %v7377 = vunpack.c.l.b16 %v7338
    %v7378 = vunpack.c.l.b16 %v7339
    %v7379 = vunpack.c.l.b16 %v7340
    %v7380 = vunpack.c.l.b16 %v7341
    %v7381 = vunpack.c.l.b16 %v7342
    %v7382 = vunpack.c.l.b16 %v7343
    %v7383 = vunpack.c.l.b16 %v7344
    %v7384 = vunpack.c.l.b16 %v7345
    %v7385 = vunpack.c.l.b16 %v7346
    %v7386 = vunpack.c.l.b16 %v7347
    %v7387 = vunpack.c.l.b16 %v7348
    %v7388 = vunpack.c.l.b16 %v7349
    %v7389 = vunpack.c.l.b16 %v7350
    %v7390 = vunpack.c.l.b16 %v7351
    %v7391 = vpack.c.b16 %v7376, %v7375
    %v7392 = vpack.c.b16 %v7378, %v7377
    %v7393 = vpack.c.b16 %v7380, %v7379
    %v7394 = vpack.c.b16 %v7382, %v7381
    %v7395 = vpack.c.b16 %v7384, %v7383
    %v7396 = vpack.c.b16 %v7386, %v7385
    %v7397 = vpack.c.b16 %v7388, %v7387
    %v7398 = vpack.c.b16 %v7390, %v7389
    %7407 = vmatprep.subr.bf16.mxu0 0
    %7408 = vmatpush1.bf16.msra.mxu0 %v7391
    %7409 = vmatprep.subr.bf16.mxu0 0
    %7410 = vmatpush1.bf16.msra.mxu0 %v7392
    %7411 = vmatprep.subr.bf16.mxu0 0
    %7412 = vmatpush1.bf16.msra.mxu0 %v7393
    %7413 = vmatprep.subr.bf16.mxu0 0
    %7414 = vmatpush1.bf16.msra.mxu0 %v7394
    %7415 = vmatprep.subr.bf16.mxu0 0
    %7416 = vmatpush1.bf16.msra.mxu0 %v7395
    %7417 = vmatprep.subr.bf16.mxu0 0
    %7418 = vmatpush1.bf16.msra.mxu0 %v7396
    %7419 = vmatprep.subr.bf16.mxu0 0
    %7420 = vmatpush1.bf16.msra.mxu0 %v7397
    %7421 = vmatprep.subr.bf16.mxu0 0
    %7422 = vmatpush1.bf16.msra.mxu0 %v7398
    %7423 = vmatprep.subr.bf16.mxu0 0
    %7424 = vmatpush1.bf16.msra.mxu0 0
    %7425 = vmatprep.subr.bf16.mxu0 0
    %7426 = vmatpush1.bf16.msra.mxu0 0
    %7427 = vmatprep.subr.bf16.mxu0 0
    %7428 = vmatpush1.bf16.msra.mxu0 0
    %7429 = vmatprep.subr.bf16.mxu0 0
    %7430 = vmatpush1.bf16.msra.mxu0 0
    %7431 = vmatprep.subr.bf16.mxu0 0
    %7432 = vmatpush1.bf16.msra.mxu0 0
    %7433 = vmatprep.subr.bf16.mxu0 0
    %7434 = vmatpush1.bf16.msra.mxu0 0
    %7435 = vmatprep.subr.bf16.mxu0 0
    %7436 = vmatpush1.bf16.msra.mxu0 0
    %7437 = vmatprep.subr.bf16.mxu0 0
    %7438 = vmatpush1.bf16.msra.mxu0 0
    %7439 = vmatprep.mubr.bf16.mxu0 0
    %7440 = vmatmul.mubr.bf16.gmra.mrb[0].mxu0 %v7332
    %v7441 = vpop.f32.mrb[0].mxu0
    %v7442 = vadd.f32 %v7357, %v7441
    %v7443 = vpop.f32.mrb[0].mxu0
    %v7444 = vpop.f32.mrb[0].mxu0
    %v7445 = vadd.f32 %v7357, %v7444
    %v7446 = vpop.f32.mrb[0].mxu0
    %7447 = vmatprep.mubr.bf16.mxu0 0
    %7448 = vmatmul.mubr.bf16.gmra.mrb[0].mxu0 %v7333
    %v7449 = vpop.f32.mrb[0].mxu0
    %v7450 = vadd.f32 %v7357, %v7449
    %v7451 = vpop.f32.mrb[0].mxu0
    %v7452 = vpop.f32.mrb[0].mxu0
    %v7453 = vadd.f32 %v7357, %v7452
    %v7454 = vpop.f32.mrb[0].mxu0
    %7455 = vmatprep.mubr.bf16.mxu0 0
    %7456 = vmatmul.mubr.bf16.gmra.mrb[0].mxu0 %v7334
    %v7457 = vpop.f32.mrb[0].mxu0
    %v7458 = vadd.f32 %v7357, %v7457
    %v7459 = vpop.f32.mrb[0].mxu0
    %v7460 = vpop.f32.mrb[0].mxu0
    %v7461 = vadd.f32 %v7357, %v7460
    %v7462 = vpop.f32.mrb[0].mxu0
    %7463 = vmatprep.mubr.bf16.mxu0 0
    %7464 = vmatmul.mubr.bf16.gmra.mrb[0].mxu0 %v7335
    %v7465 = vpop.f32.mrb[0].mxu0
    %v7466 = vadd.f32 %v7357, %v7465
    %v7467 = vpop.f32.mrb[0].mxu0
    %v7468 = vpop.f32.mrb[0].mxu0
    %v7469 = vadd.f32 %v7357, %v7468
    %v7470 = vpop.f32.mrb[0].mxu0
    %7471 = vdwg.mxu0
    %vm7472 = vcmask 64512
    %v7473 = vsel %vm7472, %v7442, -inf
    %7474 = vmax.xlane.f32.xlu0 %v7473
    %v7475 = vpop.xlane.xlu0 %7474
    %v7476 = vsel %vm7472, %v7445, -inf
    %7477 = vmax.xlane.f32.xlu0 %v7476
    %v7478 = vpop.xlane.xlu0 %7477
    %v7479 = vsel %vm7472, %v7450, -inf
    %7480 = vmax.xlane.f32.xlu0 %v7479
    %v7481 = vpop.xlane.xlu0 %7480
    %v7482 = vsel %vm7472, %v7453, -inf
    %7483 = vmax.xlane.f32.xlu0 %v7482
    %v7484 = vpop.xlane.xlu0 %7483
    %v7485 = vsel %vm7472, %v7458, -inf
    %7486 = vmax.xlane.f32.xlu0 %v7485
    %v7487 = vpop.xlane.xlu0 %7486
    %v7488 = vsel %vm7472, %v7461, -inf
    %7489 = vmax.xlane.f32.xlu0 %v7488
    %v7490 = vpop.xlane.xlu0 %7489
    %v7491 = vsel %vm7472, %v7466, -inf
    %7492 = vmax.xlane.f32.xlu0 %v7491
    %v7493 = vpop.xlane.xlu0 %7492
    %v7494 = vsel %vm7472, %v7469, -inf
    %7495 = vmax.xlane.f32.xlu0 %v7494
    %v7496 = vpop.xlane.xlu0 %7495
    %v7497 = vsub.f32 %v7442, %v7475
    %v7498 = vsub.f32 %v7445, %v7478
    %v7499 = vsub.f32 %v7450, %v7481
    %v7500 = vsub.f32 %v7453, %v7484
    %v7501 = vsub.f32 %v7458, %v7487
    %v7502 = vsub.f32 %v7461, %v7490
    %v7503 = vsub.f32 %v7466, %v7493
    %v7504 = vsub.f32 %v7469, %v7496
    %v7505 = vmul.f32 %v7497, 1.442695
    %v7506 = vpow.pop %v7505
    %v7507 = vmul.f32 %v7498, 1.442695
    %v7508 = vpow.pop %v7507
    %v7509 = vmul.f32 %v7499, 1.442695
    %v7510 = vpow.pop %v7509
    %v7511 = vmul.f32 %v7500, 1.442695
    %v7512 = vpow.pop %v7511
    %v7513 = vmul.f32 %v7501, 1.442695
    %v7514 = vpow.pop %v7513
    %v7515 = vmul.f32 %v7502, 1.442695
    %v7516 = vpow.pop %v7515
    %v7517 = vmul.f32 %v7503, 1.442695
    %v7518 = vpow.pop %v7517
    %v7519 = vmul.f32 %v7504, 1.442695
    %v7520 = vpow.pop %v7519
    %v7521 = vsel %vm7472, %v7506, 0.0
    %7522 = vadd.xlane.f32.xlu0 %v7521
    %v7523 = vpop.xlane.xlu0 %7522
    %v7524 = vsel %vm7472, %v7508, 0.0
    %7525 = vadd.xlane.f32.xlu0 %v7524
    %v7526 = vpop.xlane.xlu0 %7525
    %v7527 = vsel %vm7472, %v7510, 0.0
    %7528 = vadd.xlane.f32.xlu0 %v7527
    %v7529 = vpop.xlane.xlu0 %7528
    %v7530 = vsel %vm7472, %v7512, 0.0
    %7531 = vadd.xlane.f32.xlu0 %v7530
    %v7532 = vpop.xlane.xlu0 %7531
    %v7533 = vsel %vm7472, %v7514, 0.0
    %7534 = vadd.xlane.f32.xlu0 %v7533
    %v7535 = vpop.xlane.xlu0 %7534
    %v7536 = vsel %vm7472, %v7516, 0.0
    %7537 = vadd.xlane.f32.xlu0 %v7536
    %v7538 = vpop.xlane.xlu0 %7537
    %v7539 = vsel %vm7472, %v7518, 0.0
    %7540 = vadd.xlane.f32.xlu0 %v7539
    %v7541 = vpop.xlane.xlu0 %7540
    %v7542 = vsel %vm7472, %v7520, 0.0
    %7543 = vadd.xlane.f32.xlu0 %v7542
    %v7544 = vpop.xlane.xlu0 %7543
    %v7545 = vrcp.pop %v7523
    %v7546 = vrcp.pop %v7526
    %v7547 = vrcp.pop %v7529
    %v7548 = vrcp.pop %v7532
    %v7549 = vrcp.pop %v7535
    %v7550 = vrcp.pop %v7538
    %v7551 = vrcp.pop %v7541
    %v7552 = vrcp.pop %v7544
    %v7553 = vmul.f32 %v7506, %v7545
    %v7554 = vmul.f32 %v7508, %v7546
    %v7555 = vmul.f32 %v7510, %v7547
    %v7556 = vmul.f32 %v7512, %v7548
    %v7557 = vmul.f32 %v7514, %v7549
    %v7558 = vmul.f32 %v7516, %v7550
    %v7559 = vmul.f32 %v7518, %v7551
    %v7560 = vmul.f32 %v7520, %v7552
    %7561 = vst.msk [vmem:[%s17] sm:$0xff] %vm7472, %v7553
    %7562 = vst.msk [vmem:[%s17 + $0x8] sm:$0xff] %vm7472, %v7554
    %7563 = vst.msk [vmem:[%s17 + $0x10] sm:$0xff] %vm7472, %v7555
    %7564 = vst.msk [vmem:[%s17 + $0x18] sm:$0xff] %vm7472, %v7556
    %7565 = vst.msk [vmem:[%s17 + $0x20] sm:$0xff] %vm7472, %v7557
    %7566 = vst.msk [vmem:[%s17 + $0x28] sm:$0xff] %vm7472, %v7558
    %7567 = vst.msk [vmem:[%s17 + $0x30] sm:$0xff] %vm7472, %v7559
    %7568 = vst.msk [vmem:[%s17 + $0x38] sm:$0xff] %vm7472, %v7560
    %vm7569 = vcmask 195648
    %7570 = vst.msk [vmem:[%s17] sm:$0xff] %vm7569, %v7442
    %7571 = vst.msk [vmem:[%s17 + $0x8] sm:$0xff] %vm7569, %v7445
    %7572 = vst.msk [vmem:[%s17 + $0x10] sm:$0xff] %vm7569, %v7450
    %7573 = vst.msk [vmem:[%s17 + $0x18] sm:$0xff] %vm7569, %v7453
    %7574 = vst.msk [vmem:[%s17 + $0x20] sm:$0xff] %vm7569, %v7458
    %7575 = vst.msk [vmem:[%s17 + $0x28] sm:$0xff] %vm7569, %v7461
    %7576 = vst.msk [vmem:[%s17 + $0x30] sm:$0xff] %vm7569, %v7466
    %7577 = vst.msk [vmem:[%s17 + $0x38] sm:$0xff] %vm7569, %v7469
    %v7578 = vmax.f32 %v7442, 0.0
    %v7579 = vmax.f32 %v7445, 0.0
    %v7580 = vmax.f32 %v7450, 0.0
    %v7581 = vmax.f32 %v7453, 0.0
    %v7582 = vmax.f32 %v7458, 0.0
    %v7583 = vmax.f32 %v7461, 0.0
    %v7584 = vmax.f32 %v7466, 0.0
    %v7585 = vmax.f32 %v7469, 0.0
    %vm7586 = vcmp.ne.f32.partialorder %v7442, %v7442
    %vm7587 = vcmp.ne.f32.partialorder %v7445, %v7445
    %vm7588 = vcmp.ne.f32.partialorder %v7450, %v7450
    %vm7589 = vcmp.ne.f32.partialorder %v7453, %v7453
    %vm7590 = vcmp.ne.f32.partialorder %v7458, %v7458
    %vm7591 = vcmp.ne.f32.partialorder %v7461, %v7461
    %vm7592 = vcmp.ne.f32.partialorder %v7466, %v7466
    %vm7593 = vcmp.ne.f32.partialorder %v7469, %v7469
    %v7594 = vadd.f32 %v7442, 0.0
    %v7595 = vadd.f32 %v7445, 0.0
    %v7596 = vadd.f32 %v7450, 0.0
    %v7597 = vadd.f32 %v7453, 0.0
    %v7598 = vadd.f32 %v7458, 0.0
    %v7599 = vadd.f32 %v7461, 0.0
    %v7600 = vadd.f32 %v7466, 0.0
    %v7601 = vadd.f32 %v7469, 0.0
    %v7602 = vand.u32 2147483647, %v7442
    %v7603 = vand.u32 2147483647, %v7445
    %v7604 = vand.u32 2147483647, %v7450
    %v7605 = vand.u32 2147483647, %v7453
    %v7606 = vand.u32 2147483647, %v7458
    %v7607 = vand.u32 2147483647, %v7461
    %v7608 = vand.u32 2147483647, %v7466
    %v7609 = vand.u32 2147483647, %v7469
    %v7610 = vsub.f32 0.0, %v7602
    %v7611 = vsub.f32 0.0, %v7603
    %v7612 = vsub.f32 0.0, %v7604
    %v7613 = vsub.f32 0.0, %v7605
    %v7614 = vsub.f32 0.0, %v7606
    %v7615 = vsub.f32 0.0, %v7607
    %v7616 = vsub.f32 0.0, %v7608
    %v7617 = vsub.f32 0.0, %v7609
    %v7618 = vmul.f32 %v7610, 1.442695
    %v7619 = vpow.pop %v7618
    %v7620 = vmul.f32 %v7611, 1.442695
    %v7621 = vpow.pop %v7620
    %v7622 = vmul.f32 %v7612, 1.442695
    %v7623 = vpow.pop %v7622
    %v7624 = vmul.f32 %v7613, 1.442695
    %v7625 = vpow.pop %v7624
    %v7626 = vmul.f32 %v7614, 1.442695
    %v7627 = vpow.pop %v7626
    %v7628 = vmul.f32 %v7615, 1.442695
    %v7629 = vpow.pop %v7628
    %v7630 = vmul.f32 %v7616, 1.442695
    %v7631 = vpow.pop %v7630
    %v7632 = vmul.f32 %v7617, 1.442695
    %v7633 = vpow.pop %v7632
    %v7634 = vadd.f32 %v7619, 1.0
    %v7635 = vlog2.pop %v7634
    %v7636 = vmul.f32 %v7635, 0.6931472
    %v7637 = vmul.f32 -0.5, %v7619
    %v7638 = vadd.f32 %v7637, 1.0
    %v7639 = vmul.f32 %v7638, %v7619
    %v7640 = vand.u32 2147483647, %v7619
    %vm7641 = vcmp.lt.f32.partialorder %v7640, 0.0004427343
    %v7642 = vsel %vm7641, %v7639, %v7636
    %v7643 = vadd.f32 %v7621, 1.0
    %v7644 = vlog2.pop %v7643
    %v7645 = vmul.f32 %v7644, 0.6931472
    %v7646 = vmul.f32 -0.5, %v7621
    %v7647 = vadd.f32 %v7646, 1.0
    %v7648 = vmul.f32 %v7647, %v7621
    %v7649 = vand.u32 2147483647, %v7621
    %vm7650 = vcmp.lt.f32.partialorder %v7649, 0.0004427343
    %v7651 = vsel %vm7650, %v7648, %v7645
    %v7652 = vadd.f32 %v7623, 1.0
    %v7653 = vlog2.pop %v7652
    %v7654 = vmul.f32 %v7653, 0.6931472
    %v7655 = vmul.f32 -0.5, %v7623
    %v7656 = vadd.f32 %v7655, 1.0
    %v7657 = vmul.f32 %v7656, %v7623
    %v7658 = vand.u32 2147483647, %v7623
    %vm7659 = vcmp.lt.f32.partialorder %v7658, 0.0004427343
    %v7660 = vsel %vm7659, %v7657, %v7654
    %v7661 = vadd.f32 %v7625, 1.0
    %v7662 = vlog2.pop %v7661
    %v7663 = vmul.f32 %v7662, 0.6931472
    %v7664 = vmul.f32 -0.5, %v7625
    %v7665 = vadd.f32 %v7664, 1.0
    %v7666 = vmul.f32 %v7665, %v7625
    %v7667 = vand.u32 2147483647, %v7625
    %vm7668 = vcmp.lt.f32.partialorder %v7667, 0.0004427343
    %v7669 = vsel %vm7668, %v7666, %v7663
    %v7670 = vadd.f32 %v7627, 1.0
    %v7671 = vlog2.pop %v7670
    %v7672 = vmul.f32 %v7671, 0.6931472
    %v7673 = vmul.f32 -0.5, %v7627
    %v7674 = vadd.f32 %v7673, 1.0
    %v7675 = vmul.f32 %v7674, %v7627
    %v7676 = vand.u32 2147483647, %v7627
    %vm7677 = vcmp.lt.f32.partialorder %v7676, 0.0004427343
    %v7678 = vsel %vm7677, %v7675, %v7672
    %v7679 = vadd.f32 %v7629, 1.0
    %v7680 = vlog2.pop %v7679
    %v7681 = vmul.f32 %v7680, 0.6931472
    %v7682 = vmul.f32 -0.5, %v7629
    %v7683 = vadd.f32 %v7682, 1.0
    %v7684 = vmul.f32 %v7683, %v7629
    %v7685 = vand.u32 2147483647, %v7629
    %vm7686 = vcmp.lt.f32.partialorder %v7685, 0.0004427343
    %v7687 = vsel %vm7686, %v7684, %v7681
    %v7688 = vadd.f32 %v7631, 1.0
    %v7689 = vlog2.pop %v7688
    %v7690 = vmul.f32 %v7689, 0.6931472
    %v7691 = vmul.f32 -0.5, %v7631
    %v7692 = vadd.f32 %v7691, 1.0
    %v7693 = vmul.f32 %v7692, %v7631
    %v7694 = vand.u32 2147483647, %v7631
    %vm7695 = vcmp.lt.f32.partialorder %v7694, 0.0004427343
    %v7696 = vsel %vm7695, %v7693, %v7690
    %v7697 = vadd.f32 %v7633, 1.0
    %v7698 = vlog2.pop %v7697
    %v7699 = vmul.f32 %v7698, 0.6931472
    %v7700 = vmul.f32 -0.5, %v7633
    %v7701 = vadd.f32 %v7700, 1.0
    %v7702 = vmul.f32 %v7701, %v7633
    %v7703 = vand.u32 2147483647, %v7633
    %vm7704 = vcmp.lt.f32.partialorder %v7703, 0.0004427343
    %v7705 = vsel %vm7704, %v7702, %v7699
    %v7706 = vadd.f32 %v7578, %v7642
    %v7707 = vadd.f32 %v7579, %v7651
    %v7708 = vadd.f32 %v7580, %v7660
    %v7709 = vadd.f32 %v7581, %v7669
    %v7710 = vadd.f32 %v7582, %v7678
    %v7711 = vadd.f32 %v7583, %v7687
    %v7712 = vadd.f32 %v7584, %v7696
    %v7713 = vadd.f32 %v7585, %v7705
    %v7714 = vsel %vm7586, %v7594, %v7706
    %v7715 = vsel %vm7587, %v7595, %v7707
    %v7716 = vsel %vm7588, %v7596, %v7708
    %v7717 = vsel %vm7589, %v7597, %v7709
    %v7718 = vsel %vm7590, %v7598, %v7710
    %v7719 = vsel %vm7591, %v7599, %v7711
    %v7720 = vsel %vm7592, %v7600, %v7712
    %v7721 = vsel %vm7593, %v7601, %v7713
    %v7722 = vadd.f32 %v7714, 2.220446e-16
    %v7723 = vadd.f32 %v7715, 2.220446e-16
    %v7724 = vadd.f32 %v7716, 2.220446e-16
    %v7725 = vadd.f32 %v7717, 2.220446e-16
    %v7726 = vadd.f32 %v7718, 2.220446e-16
    %v7727 = vadd.f32 %v7719, 2.220446e-16
    %v7728 = vadd.f32 %v7720, 2.220446e-16
    %v7729 = vadd.f32 %v7721, 2.220446e-16
    %vm7730 = vcmask 392384
    %7731 = vst.msk [vmem:[%s17] sm:$0xff] %vm7730, %v7722
    %7732 = vst.msk [vmem:[%s17 + $0x8] sm:$0xff] %vm7730, %v7723
    %7733 = vst.msk [vmem:[%s17 + $0x10] sm:$0xff] %vm7730, %v7724
    %7734 = vst.msk [vmem:[%s17 + $0x18] sm:$0xff] %vm7730, %v7725
    %7735 = vst.msk [vmem:[%s17 + $0x20] sm:$0xff] %vm7730, %v7726
    %7736 = vst.msk [vmem:[%s17 + $0x28] sm:$0xff] %vm7730, %v7727
    %7737 = vst.msk [vmem:[%s17 + $0x30] sm:$0xff] %vm7730, %v7728
    %7738 = vst.msk [vmem:[%s17 + $0x38] sm:$0xff] %vm7730, %v7729
    // Predicated region
    $region94: #{tpu_custom_call.1} parent=1 // pred_check
      _
    $region95: #{tpu_custom_call.1} parent=1 // pred_check_branch
      %7740 = sbr.rel (0) target = $region97
    $region96: #{tpu_custom_call.1} parent=1 // pred_region
      _
    $region97: #{tpu_custom_call.1} parent=1 // pred_fallthru
      _
    // Predicated region
    $region98: #{tpu_custom_call.1} parent=1 // pred_check
      _
    $region99: #{tpu_custom_call.1} parent=1 // pred_check_branch
      %7742 = sbr.rel (0) target = $region101
    $region100: #{tpu_custom_call.1} parent=1 // pred_region
      _
    $region101: #{tpu_custom_call.1} parent=1 // pred_fallthru
      _
    %7743 = vsyncpa [#allocation5], 1
    %7744 = vsyncpa [#allocation7], 1
    %7745 = vsyncpa [#allocation10], 1
    %7746 = vsyncpa [#allocation13], 1

</llo_original>
